<compile_context>
chip_gen: v5e
topology: v5e:2x2
jax: 0.10.0
libtpu: 0.0.40
codegen_flags: <defaults>
</compile_context>

<pallas_src>
import math

import jax
import jax.numpy as jnp
import numpy as np
from jax.experimental import pallas as pl
from jax.experimental.pallas import tpu as pltpu

# Pin f32 matmul precision so the in-kernel MXU dots and the pure-JAX reference
# use the same (full f32) algorithm.
jax.config.update("jax_default_matmul_precision", "highest")


def _layernorm(x, gamma, beta, eps=1e-5):
    mu = jnp.mean(x, axis=-1, keepdims=True)
    var = jnp.mean(jnp.square(x - mu), axis=-1, keepdims=True)
    return (x - mu) * jax.lax.rsqrt(var + eps) * gamma + beta


def _make_kernel(n_heads, head_dim, embed_dim):
    inv_scale = 1.0 / math.sqrt(embed_dim)   # module divides by sqrt(embed_dim)
    masked_fill = -1e20 * inv_scale          # = masked_fill(-1e20) then /sqrt(E)

    def kernel(k_ref, q_ref, v_ref, m_ref,
               wqbd_ref, wkbd_ref, wvbd_ref,
               wo_ref, bo_ref,
               g1_ref, be1_ref,
               w1_ref, b1_ref, w2_ref, b2_ref,
               g2_ref, be2_ref,
               o_ref):
        f32 = jnp.float32
        k = k_ref[0]                    # (Sk, E)
        q = q_ref[0]                    # (Sq, E)
        v = v_ref[0]                    # (Sk, E)
        mask_zero = m_ref[0] == 0.0     # (Sq, Sk) bool, shared by all heads

        # Per-head Q/K/V projections as one block-diagonal matmul each.
        # Scale folded into Q once (instead of per-head, per-score multiplies).
        qp = jnp.dot(q, wqbd_ref[...], preferred_element_type=f32) * inv_scale
        kp = jnp.dot(k, wkbd_ref[...], preferred_element_type=f32)
        vp = jnp.dot(v, wvbd_ref[...], preferred_element_type=f32)

        wo = wo_ref[...]                # (E, E)
        sq = q.shape[0]
        attn = jnp.zeros((sq, embed_dim), dtype=f32)

        # Static unroll over heads; concat + output projection folded:
        #   concat @ Wo == sum_h head_h @ Wo[h*Dh:(h+1)*Dh, :]
        for h in range(n_heads):
            lo = h * head_dim
            qh = qp[:, lo:lo + head_dim]          # (Sq, Dh) (already scaled)
            kh = kp[:, lo:lo + head_dim]          # (Sk, Dh)
            vh = vp[:, lo:lo + head_dim]          # (Sk, Dh)
            s = jax.lax.dot_general(qh, kh, (((1,), (1,)), ((), ())),
                                    preferred_element_type=f32)  # (Sq, Sk)
            s = jnp.where(mask_zero, masked_fill, s)
            s = s - jnp.max(s, axis=-1, keepdims=True)
            e = jnp.exp(s)
            p = e / jnp.sum(e, axis=-1, keepdims=True)
            ah = jnp.dot(p, vh, preferred_element_type=f32)       # (Sq, Dh)
            attn = attn + jnp.dot(ah, wo[lo:lo + head_dim, :],
                                  preferred_element_type=f32)     # (Sq, E)

        attn_out = attn + bo_ref[...]
        x = attn_out + q                                  # residual with query
        x = _layernorm(x, g1_ref[...], be1_ref[...])      # norm1
        # TODO(synk): nn.Dropout(0.1) is treated as identity (eval-mode forward).

        h1 = jnp.dot(x, w1_ref[...], preferred_element_type=f32) + b1_ref[...]
        h1 = jnp.maximum(h1, 0.0)                         # ReLU
        ff = jnp.dot(h1, w2_ref[...], preferred_element_type=f32) + b2_ref[...]
        y = _layernorm(ff + x, g2_ref[...], be2_ref[...]) # norm2 (+ residual)
        o_ref[0] = y.astype(o_ref.dtype)

    return kernel


def transformer_block_forward(key, query, value, params, mask=None, *, n_heads):
    """Pallas equivalent of TransformerBlock.forward(key, query, value, mask)."""
    B, Sk, E = key.shape
    Sq = query.shape[1]
    assert E % n_heads == 0
    head_dim = E // n_heads

    if mask is None:
        mask = jnp.ones((B, Sq, Sk), dtype=jnp.float32)
    else:
        mask = jnp.broadcast_to(mask.astype(jnp.float32), (B, Sq, Sk))

    # Block-diagonal per-head projection matrices (x @ W applied per head slice).
    eye = jnp.eye(n_heads, dtype=query.dtype)
    wq_bd = jnp.kron(eye, params["wq"])
    wk_bd = jnp.kron(eye, params["wk"])
    wv_bd = jnp.kron(eye, params["wv"])

    row = lambda a: a.reshape(1, -1)
    weights = [
        wq_bd, wk_bd, wv_bd,
        params["wo"], row(params["bo"]),
        row(params["ln1_g"]), row(params["ln1_b"]),
        params["w1"], row(params["b1"]),
        params["w2"], row(params["b2"]),
        row(params["ln2_g"]), row(params["ln2_b"]),
    ]

    def const2d(shape):
        return pl.BlockSpec(shape, lambda b: (0, 0))

    in_specs = [
        pl.BlockSpec((1, Sk, E), lambda b: (b, 0, 0)),   # key
        pl.BlockSpec((1, Sq, E), lambda b: (b, 0, 0)),   # query
        pl.BlockSpec((1, Sk, E), lambda b: (b, 0, 0)),   # value
        pl.BlockSpec((1, Sq, Sk), lambda b: (b, 0, 0)),  # mask
    ] + [const2d(w.shape) for w in weights]

    kernel = _make_kernel(n_heads, head_dim, E)
    out = pl.pallas_call(
        kernel,
        out_shape=jax.ShapeDtypeStruct((B, Sq, E), query.dtype),
        grid_spec=pltpu.PrefetchScalarGridSpec(
            num_scalar_prefetch=0,
            grid=(B,),
            in_specs=in_specs,
            out_specs=pl.BlockSpec((1, Sq, E), lambda b: (b, 0, 0)),
        ),
        compiler_params=pltpu.CompilerParams(
            dimension_semantics=("parallel",),   # shard batch across TCs (v7x)
        ),
    )(key, query, value, mask, *weights)
    return out


def transformer_block_ref(key, query, value, params, mask, n_heads):
    """Pure-JAX reference reproducing the PyTorch forward exactly."""
    B, Sk, E = key.shape
    Sq = query.shape[1]
    Dh = E // n_heads
    k = key.reshape(B, Sk, n_heads, Dh) @ params["wk"]
    q = query.reshape(B, Sq, n_heads, Dh) @ params["wq"]
    v = value.reshape(B, Sk, n_heads, Dh) @ params["wv"]
    k = jnp.transpose(k, (0, 2, 1, 3))
    q = jnp.transpose(q, (0, 2, 1, 3))
    v = jnp.transpose(v, (0, 2, 1, 3))
    scores = q @ jnp.transpose(k, (0, 1, 3, 2))                 # (B,H,Sq,Sk)
    scores = jnp.where(mask[:, None, :, :] == 0, -1e20, scores)
    scores = scores / math.sqrt(E)
    probs = jax.nn.softmax(scores, axis=-1)
    attn = probs @ v                                            # (B,H,Sq,Dh)
    concat = jnp.transpose(attn, (0, 2, 1, 3)).reshape(B, Sq, E)
    attn_out = concat @ params["wo"] + params["bo"]
    x = attn_out + query
    x = _layernorm(x, params["ln1_g"], params["ln1_b"])
    h1 = jnp.maximum(x @ params["w1"] + params["b1"], 0.0)
    ff = h1 @ params["w2"] + params["b2"]
    return _layernorm(ff + x, params["ln2_g"], params["ln2_b"])


if __name__ == "__main__":
    # Small but lane-dense shapes consistent with the module.
    batch, seq = 2, 8
    embed_dim, n_heads, expansion = 128, 8, 4
    head_dim = embed_dim // n_heads
    hidden = embed_dim * expansion

    key0 = jax.random.PRNGKey(0)
    ks = jax.random.split(key0, 16)
    f32 = jnp.float32

    def init(k, shape, scale):
        return (scale * jax.random.normal(k, shape)).astype(f32)

    params = {
        "wq": init(ks[0], (head_dim, head_dim), head_dim ** -0.5),
        "wk": init(ks[1], (head_dim, head_dim), head_dim ** -0.5),
        "wv": init(ks[2], (head_dim, head_dim), head_dim ** -0.5),
        "wo": init(ks[3], (embed_dim, embed_dim), embed_dim ** -0.5),
        "bo": init(ks[4], (embed_dim,), 0.02),
        "ln1_g": (1.0 + init(ks[5], (embed_dim,), 0.1)).astype(f32),
        "ln1_b": init(ks[6], (embed_dim,), 0.1),
        "w1": init(ks[7], (embed_dim, hidden), embed_dim ** -0.5),
        "b1": init(ks[8], (hidden,), 0.02),
        "w2": init(ks[9], (hidden, embed_dim), hidden ** -0.5),
        "b2": init(ks[10], (embed_dim,), 0.02),
        "ln2_g": (1.0 + init(ks[11], (embed_dim,), 0.1)).astype(f32),
        "ln2_b": init(ks[12], (embed_dim,), 0.1),
    }

    k_in = jax.random.normal(ks[13], (batch, seq, embed_dim), dtype=f32)
    q_in = jax.random.normal(ks[14], (batch, seq, embed_dim), dtype=f32)
    v_in = jax.random.normal(ks[15], (batch, seq, embed_dim), dtype=f32)

    # Causal mask (broadcast over heads), exercising the masked_fill path.
    causal = jnp.tril(jnp.ones((seq, seq), dtype=f32))
    mask = jnp.broadcast_to(causal, (batch, seq, seq))

    out = transformer_block_forward(k_in, q_in, v_in, params, mask=mask,
                                    n_heads=n_heads)
    out = jax.block_until_ready(out)

    ref = transformer_block_ref(k_in, q_in, v_in, params, mask, n_heads)
    assert out.shape == (batch, seq, embed_dim)
    np.testing.assert_allclose(np.asarray(out), np.asarray(ref),
                               rtol=2e-3, atol=2e-3)

    print("KERNEL_OK")
</pallas_src>

<mosaic_0001>
module attributes {stable_mosaic.version = 11 : i64} {
  func.func @kernel(%arg0: i32, %arg1: memref<1x8x128xf32, #tpu.memory_space<vmem>>, %arg2: memref<1x8x128xf32, #tpu.memory_space<vmem>>, %arg3: memref<1x8x128xf32, #tpu.memory_space<vmem>>, %arg4: memref<1x8x8xf32, #tpu.memory_space<vmem>>, %arg5: memref<128x128xf32, #tpu.memory_space<vmem>>, %arg6: memref<128x128xf32, #tpu.memory_space<vmem>>, %arg7: memref<128x128xf32, #tpu.memory_space<vmem>>, %arg8: memref<128x128xf32, #tpu.memory_space<vmem>>, %arg9: memref<1x128xf32, #tpu.memory_space<vmem>>, %arg10: memref<1x128xf32, #tpu.memory_space<vmem>>, %arg11: memref<1x128xf32, #tpu.memory_space<vmem>>, %arg12: memref<128x512xf32, #tpu.memory_space<vmem>>, %arg13: memref<1x512xf32, #tpu.memory_space<vmem>>, %arg14: memref<512x128xf32, #tpu.memory_space<vmem>>, %arg15: memref<1x128xf32, #tpu.memory_space<vmem>>, %arg16: memref<1x128xf32, #tpu.memory_space<vmem>>, %arg17: memref<1x128xf32, #tpu.memory_space<vmem>>, %arg18: memref<1x8x128xf32, #tpu.memory_space<vmem>>) attributes {dimension_semantics = [#tpu.dimension_semantics<parallel>], iteration_bounds = array<i64: 2>, scalar_prefetch = 0 : i64, scratch_operands = 0 : i64, tpu.core_type = #tpu.core_type<tc>, window_params = [{transform_indices = @transform_0, window_bounds = array<i64: 1, 8, 128>}, {transform_indices = @transform_1, window_bounds = array<i64: 1, 8, 128>}, {transform_indices = @transform_2, window_bounds = array<i64: 1, 8, 128>}, {transform_indices = @transform_3, window_bounds = array<i64: 1, 8, 8>}, {pipeline_mode = #tpu.pipeline_mode<synchronous>, transform_indices = @transform_4, window_bounds = array<i64: 128, 128>}, {pipeline_mode = #tpu.pipeline_mode<synchronous>, transform_indices = @transform_5, window_bounds = array<i64: 128, 128>}, {pipeline_mode = #tpu.pipeline_mode<synchronous>, transform_indices = @transform_6, window_bounds = array<i64: 128, 128>}, {pipeline_mode = #tpu.pipeline_mode<synchronous>, transform_indices = @transform_7, window_bounds = array<i64: 128, 128>}, {pipeline_mode = #tpu.pipeline_mode<synchronous>, transform_indices = @transform_8, window_bounds = array<i64: 1, 128>}, {pipeline_mode = #tpu.pipeline_mode<synchronous>, transform_indices = @transform_9, window_bounds = array<i64: 1, 128>}, {pipeline_mode = #tpu.pipeline_mode<synchronous>, transform_indices = @transform_10, window_bounds = array<i64: 1, 128>}, {pipeline_mode = #tpu.pipeline_mode<synchronous>, transform_indices = @transform_11, window_bounds = array<i64: 128, 512>}, {pipeline_mode = #tpu.pipeline_mode<synchronous>, transform_indices = @transform_12, window_bounds = array<i64: 1, 512>}, {pipeline_mode = #tpu.pipeline_mode<synchronous>, transform_indices = @transform_13, window_bounds = array<i64: 512, 128>}, {pipeline_mode = #tpu.pipeline_mode<synchronous>, transform_indices = @transform_14, window_bounds = array<i64: 1, 128>}, {pipeline_mode = #tpu.pipeline_mode<synchronous>, transform_indices = @transform_15, window_bounds = array<i64: 1, 128>}, {pipeline_mode = #tpu.pipeline_mode<synchronous>, transform_indices = @transform_16, window_bounds = array<i64: 1, 128>}, {transform_indices = @transform_17, window_bounds = array<i64: 1, 8, 128>}]} {
    %c0 = arith.constant 0 : index
    %c0_0 = arith.constant 0 : index
    %c0_1 = arith.constant 0 : index
    %0 = vector.load %arg1[%c0, %c0_0, %c0_1] : memref<1x8x128xf32, #tpu.memory_space<vmem>>, vector<1x8x128xf32>
    %1 = vector.shape_cast %0 : vector<1x8x128xf32> to vector<8x128xf32>
    %c0_2 = arith.constant 0 : index
    %c0_3 = arith.constant 0 : index
    %c0_4 = arith.constant 0 : index
    %2 = vector.load %arg2[%c0_2, %c0_3, %c0_4] : memref<1x8x128xf32, #tpu.memory_space<vmem>>, vector<1x8x128xf32>
    %3 = vector.shape_cast %2 : vector<1x8x128xf32> to vector<8x128xf32>
    %c0_5 = arith.constant 0 : index
    %c0_6 = arith.constant 0 : index
    %c0_7 = arith.constant 0 : index
    %4 = vector.load %arg3[%c0_5, %c0_6, %c0_7] : memref<1x8x128xf32, #tpu.memory_space<vmem>>, vector<1x8x128xf32>
    %5 = vector.shape_cast %4 : vector<1x8x128xf32> to vector<8x128xf32>
    %c0_8 = arith.constant 0 : index
    %c0_9 = arith.constant 0 : index
    %c0_10 = arith.constant 0 : index
    %6 = vector.load %arg4[%c0_8, %c0_9, %c0_10] : memref<1x8x8xf32, #tpu.memory_space<vmem>>, vector<1x8x8xf32>
    %7 = vector.shape_cast %6 : vector<1x8x8xf32> to vector<8x8xf32>
    %cst = arith.constant 0.000000e+00 : f32
    %8 = vector.broadcast %cst : f32 to vector<8x8xf32>
    %9 = arith.cmpf oeq, %7, %8 : vector<8x8xf32>
    %c0_11 = arith.constant 0 : index
    %c0_12 = arith.constant 0 : index
    %10 = vector.load %arg5[%c0_11, %c0_12] : memref<128x128xf32, #tpu.memory_space<vmem>>, vector<128x128xf32>
    %cst_13 = arith.constant dense<0.000000e+00> : vector<8x128xf32>
    %11 = tpu.matmul %3, %10, %cst_13 {dimension_numbers = #tpu.dot_dimension_numbers<[1], [0], [0], [1], [0, 0, 1, 1], [], []>, precision = #tpu.contract_precision<fp32>} : vector<8x128xf32>, vector<128x128xf32>, vector<8x128xf32> -> vector<8x128xf32>
    %cst_14 = arith.constant 0.0883883461 : f32
    %12 = vector.broadcast %cst_14 : f32 to vector<8x128xf32>
    %13 = arith.mulf %11, %12 : vector<8x128xf32>
    %c0_15 = arith.constant 0 : index
    %c0_16 = arith.constant 0 : index
    %14 = vector.load %arg6[%c0_15, %c0_16] : memref<128x128xf32, #tpu.memory_space<vmem>>, vector<128x128xf32>
    %cst_17 = arith.constant dense<0.000000e+00> : vector<8x128xf32>
    %15 = tpu.matmul %1, %14, %cst_17 {dimension_numbers = #tpu.dot_dimension_numbers<[1], [0], [0], [1], [0, 0, 1, 1], [], []>, precision = #tpu.contract_precision<fp32>} : vector<8x128xf32>, vector<128x128xf32>, vector<8x128xf32> -> vector<8x128xf32>
    %c0_18 = arith.constant 0 : index
    %c0_19 = arith.constant 0 : index
    %16 = vector.load %arg7[%c0_18, %c0_19] : memref<128x128xf32, #tpu.memory_space<vmem>>, vector<128x128xf32>
    %cst_20 = arith.constant dense<0.000000e+00> : vector<8x128xf32>
    %17 = tpu.matmul %5, %16, %cst_20 {dimension_numbers = #tpu.dot_dimension_numbers<[1], [0], [0], [1], [0, 0, 1, 1], [], []>, precision = #tpu.contract_precision<fp32>} : vector<8x128xf32>, vector<128x128xf32>, vector<8x128xf32> -> vector<8x128xf32>
    %c0_21 = arith.constant 0 : index
    %c0_22 = arith.constant 0 : index
    %18 = vector.load %arg8[%c0_21, %c0_22] : memref<128x128xf32, #tpu.memory_space<vmem>>, vector<128x128xf32>
    %cst_23 = arith.constant 0.000000e+00 : f32
    %19 = vector.broadcast %cst_23 : f32 to vector<8x128xf32>
    %20 = vector.extract_strided_slice %13 {offsets = [0, 0], sizes = [8, 16], strides = [1, 1]} : vector<8x128xf32> to vector<8x16xf32>
    %21 = vector.extract_strided_slice %15 {offsets = [0, 0], sizes = [8, 16], strides = [1, 1]} : vector<8x128xf32> to vector<8x16xf32>
    %22 = vector.extract_strided_slice %17 {offsets = [0, 0], sizes = [8, 16], strides = [1, 1]} : vector<8x128xf32> to vector<8x16xf32>
    %cst_24 = arith.constant dense<0.000000e+00> : vector<8x8xf32>
    %23 = tpu.matmul %20, %21, %cst_24 {dimension_numbers = #tpu.dot_dimension_numbers<[1], [1], [0], [0], [0, 0, 1, 0], [], []>, precision = #tpu.contract_precision<fp32>} : vector<8x16xf32>, vector<8x16xf32>, vector<8x8xf32> -> vector<8x8xf32>
    %cst_25 = arith.constant -8.83883489E+18 : f32
    %24 = vector.broadcast %cst_25 : f32 to vector<8x8xf32>
    %25 = arith.select %9, %24, %23 : vector<8x8xi1>, vector<8x8xf32>
    %cst_26 = arith.constant dense<0xFF800000> : vector<8xf32>
    %26 = vector.multi_reduction <maximumf>, %25, %cst_26 [1] : vector<8x8xf32> to vector<8xf32>
    %27 = vector.shape_cast %26 : vector<8xf32> to vector<8x1xf32>
    %28 = vector.broadcast %27 : vector<8x1xf32> to vector<8x8xf32>
    %29 = arith.subf %25, %28 : vector<8x8xf32>
    %30 = math.exp %29 : vector<8x8xf32>
    %cst_27 = arith.constant dense<0.000000e+00> : vector<8xf32>
    %31 = vector.multi_reduction <add>, %30, %cst_27 [1] : vector<8x8xf32> to vector<8xf32>
    %32 = vector.shape_cast %31 : vector<8xf32> to vector<8x1xf32>
    %33 = vector.broadcast %32 : vector<8x1xf32> to vector<8x8xf32>
    %34 = arith.divf %30, %33 : vector<8x8xf32>
    %cst_28 = arith.constant dense<0.000000e+00> : vector<8x16xf32>
    %35 = tpu.matmul %34, %22, %cst_28 {dimension_numbers = #tpu.dot_dimension_numbers<[1], [0], [0], [1], [0, 0, 1, 1], [], []>, precision = #tpu.contract_precision<fp32>} : vector<8x8xf32>, vector<8x16xf32>, vector<8x16xf32> -> vector<8x16xf32>
    %36 = vector.extract_strided_slice %18 {offsets = [0, 0], sizes = [16, 128], strides = [1, 1]} : vector<128x128xf32> to vector<16x128xf32>
    %cst_29 = arith.constant dense<0.000000e+00> : vector<8x128xf32>
    %37 = tpu.matmul %35, %36, %cst_29 {dimension_numbers = #tpu.dot_dimension_numbers<[1], [0], [0], [1], [0, 0, 1, 1], [], []>, precision = #tpu.contract_precision<fp32>} : vector<8x16xf32>, vector<16x128xf32>, vector<8x128xf32> -> vector<8x128xf32>
    %38 = arith.addf %19, %37 : vector<8x128xf32>
    %39 = vector.extract_strided_slice %13 {offsets = [0, 16], sizes = [8, 16], strides = [1, 1]} : vector<8x128xf32> to vector<8x16xf32>
    %40 = vector.extract_strided_slice %15 {offsets = [0, 16], sizes = [8, 16], strides = [1, 1]} : vector<8x128xf32> to vector<8x16xf32>
    %41 = vector.extract_strided_slice %17 {offsets = [0, 16], sizes = [8, 16], strides = [1, 1]} : vector<8x128xf32> to vector<8x16xf32>
    %cst_30 = arith.constant dense<0.000000e+00> : vector<8x8xf32>
    %42 = tpu.matmul %39, %40, %cst_30 {dimension_numbers = #tpu.dot_dimension_numbers<[1], [1], [0], [0], [0, 0, 1, 0], [], []>, precision = #tpu.contract_precision<fp32>} : vector<8x16xf32>, vector<8x16xf32>, vector<8x8xf32> -> vector<8x8xf32>
    %cst_31 = arith.constant -8.83883489E+18 : f32
    %43 = vector.broadcast %cst_31 : f32 to vector<8x8xf32>
    %44 = arith.select %9, %43, %42 : vector<8x8xi1>, vector<8x8xf32>
    %cst_32 = arith.constant dense<0xFF800000> : vector<8xf32>
    %45 = vector.multi_reduction <maximumf>, %44, %cst_32 [1] : vector<8x8xf32> to vector<8xf32>
    %46 = vector.shape_cast %45 : vector<8xf32> to vector<8x1xf32>
    %47 = vector.broadcast %46 : vector<8x1xf32> to vector<8x8xf32>
    %48 = arith.subf %44, %47 : vector<8x8xf32>
    %49 = math.exp %48 : vector<8x8xf32>
    %cst_33 = arith.constant dense<0.000000e+00> : vector<8xf32>
    %50 = vector.multi_reduction <add>, %49, %cst_33 [1] : vector<8x8xf32> to vector<8xf32>
    %51 = vector.shape_cast %50 : vector<8xf32> to vector<8x1xf32>
    %52 = vector.broadcast %51 : vector<8x1xf32> to vector<8x8xf32>
    %53 = arith.divf %49, %52 : vector<8x8xf32>
    %cst_34 = arith.constant dense<0.000000e+00> : vector<8x16xf32>
    %54 = tpu.matmul %53, %41, %cst_34 {dimension_numbers = #tpu.dot_dimension_numbers<[1], [0], [0], [1], [0, 0, 1, 1], [], []>, precision = #tpu.contract_precision<fp32>} : vector<8x8xf32>, vector<8x16xf32>, vector<8x16xf32> -> vector<8x16xf32>
    %55 = vector.extract_strided_slice %18 {offsets = [16, 0], sizes = [16, 128], strides = [1, 1]} : vector<128x128xf32> to vector<16x128xf32>
    %cst_35 = arith.constant dense<0.000000e+00> : vector<8x128xf32>
    %56 = tpu.matmul %54, %55, %cst_35 {dimension_numbers = #tpu.dot_dimension_numbers<[1], [0], [0], [1], [0, 0, 1, 1], [], []>, precision = #tpu.contract_precision<fp32>} : vector<8x16xf32>, vector<16x128xf32>, vector<8x128xf32> -> vector<8x128xf32>
    %57 = arith.addf %38, %56 : vector<8x128xf32>
    %58 = vector.extract_strided_slice %13 {offsets = [0, 32], sizes = [8, 16], strides = [1, 1]} : vector<8x128xf32> to vector<8x16xf32>
    %59 = vector.extract_strided_slice %15 {offsets = [0, 32], sizes = [8, 16], strides = [1, 1]} : vector<8x128xf32> to vector<8x16xf32>
    %60 = vector.extract_strided_slice %17 {offsets = [0, 32], sizes = [8, 16], strides = [1, 1]} : vector<8x128xf32> to vector<8x16xf32>
    %cst_36 = arith.constant dense<0.000000e+00> : vector<8x8xf32>
    %61 = tpu.matmul %58, %59, %cst_36 {dimension_numbers = #tpu.dot_dimension_numbers<[1], [1], [0], [0], [0, 0, 1, 0], [], []>, precision = #tpu.contract_precision<fp32>} : vector<8x16xf32>, vector<8x16xf32>, vector<8x8xf32> -> vector<8x8xf32>
    %cst_37 = arith.constant -8.83883489E+18 : f32
    %62 = vector.broadcast %cst_37 : f32 to vector<8x8xf32>
    %63 = arith.select %9, %62, %61 : vector<8x8xi1>, vector<8x8xf32>
    %cst_38 = arith.constant dense<0xFF800000> : vector<8xf32>
    %64 = vector.multi_reduction <maximumf>, %63, %cst_38 [1] : vector<8x8xf32> to vector<8xf32>
    %65 = vector.shape_cast %64 : vector<8xf32> to vector<8x1xf32>
    %66 = vector.broadcast %65 : vector<8x1xf32> to vector<8x8xf32>
    %67 = arith.subf %63, %66 : vector<8x8xf32>
    %68 = math.exp %67 : vector<8x8xf32>
    %cst_39 = arith.constant dense<0.000000e+00> : vector<8xf32>
    %69 = vector.multi_reduction <add>, %68, %cst_39 [1] : vector<8x8xf32> to vector<8xf32>
    %70 = vector.shape_cast %69 : vector<8xf32> to vector<8x1xf32>
    %71 = vector.broadcast %70 : vector<8x1xf32> to vector<8x8xf32>
    %72 = arith.divf %68, %71 : vector<8x8xf32>
    %cst_40 = arith.constant dense<0.000000e+00> : vector<8x16xf32>
    %73 = tpu.matmul %72, %60, %cst_40 {dimension_numbers = #tpu.dot_dimension_numbers<[1], [0], [0], [1], [0, 0, 1, 1], [], []>, precision = #tpu.contract_precision<fp32>} : vector<8x8xf32>, vector<8x16xf32>, vector<8x16xf32> -> vector<8x16xf32>
    %74 = vector.extract_strided_slice %18 {offsets = [32, 0], sizes = [16, 128], strides = [1, 1]} : vector<128x128xf32> to vector<16x128xf32>
    %cst_41 = arith.constant dense<0.000000e+00> : vector<8x128xf32>
    %75 = tpu.matmul %73, %74, %cst_41 {dimension_numbers = #tpu.dot_dimension_numbers<[1], [0], [0], [1], [0, 0, 1, 1], [], []>, precision = #tpu.contract_precision<fp32>} : vector<8x16xf32>, vector<16x128xf32>, vector<8x128xf32> -> vector<8x128xf32>
    %76 = arith.addf %57, %75 : vector<8x128xf32>
    %77 = vector.extract_strided_slice %13 {offsets = [0, 48], sizes = [8, 16], strides = [1, 1]} : vector<8x128xf32> to vector<8x16xf32>
    %78 = vector.extract_strided_slice %15 {offsets = [0, 48], sizes = [8, 16], strides = [1, 1]} : vector<8x128xf32> to vector<8x16xf32>
    %79 = vector.extract_strided_slice %17 {offsets = [0, 48], sizes = [8, 16], strides = [1, 1]} : vector<8x128xf32> to vector<8x16xf32>
    %cst_42 = arith.constant dense<0.000000e+00> : vector<8x8xf32>
    %80 = tpu.matmul %77, %78, %cst_42 {dimension_numbers = #tpu.dot_dimension_numbers<[1], [1], [0], [0], [0, 0, 1, 0], [], []>, precision = #tpu.contract_precision<fp32>} : vector<8x16xf32>, vector<8x16xf32>, vector<8x8xf32> -> vector<8x8xf32>
    %cst_43 = arith.constant -8.83883489E+18 : f32
    %81 = vector.broadcast %cst_43 : f32 to vector<8x8xf32>
    %82 = arith.select %9, %81, %80 : vector<8x8xi1>, vector<8x8xf32>
    %cst_44 = arith.constant dense<0xFF800000> : vector<8xf32>
    %83 = vector.multi_reduction <maximumf>, %82, %cst_44 [1] : vector<8x8xf32> to vector<8xf32>
    %84 = vector.shape_cast %83 : vector<8xf32> to vector<8x1xf32>
    %85 = vector.broadcast %84 : vector<8x1xf32> to vector<8x8xf32>
    %86 = arith.subf %82, %85 : vector<8x8xf32>
    %87 = math.exp %86 : vector<8x8xf32>
    %cst_45 = arith.constant dense<0.000000e+00> : vector<8xf32>
    %88 = vector.multi_reduction <add>, %87, %cst_45 [1] : vector<8x8xf32> to vector<8xf32>
    %89 = vector.shape_cast %88 : vector<8xf32> to vector<8x1xf32>
    %90 = vector.broadcast %89 : vector<8x1xf32> to vector<8x8xf32>
    %91 = arith.divf %87, %90 : vector<8x8xf32>
    %cst_46 = arith.constant dense<0.000000e+00> : vector<8x16xf32>
    %92 = tpu.matmul %91, %79, %cst_46 {dimension_numbers = #tpu.dot_dimension_numbers<[1], [0], [0], [1], [0, 0, 1, 1], [], []>, precision = #tpu.contract_precision<fp32>} : vector<8x8xf32>, vector<8x16xf32>, vector<8x16xf32> -> vector<8x16xf32>
    %93 = vector.extract_strided_slice %18 {offsets = [48, 0], sizes = [16, 128], strides = [1, 1]} : vector<128x128xf32> to vector<16x128xf32>
    %cst_47 = arith.constant dense<0.000000e+00> : vector<8x128xf32>
    %94 = tpu.matmul %92, %93, %cst_47 {dimension_numbers = #tpu.dot_dimension_numbers<[1], [0], [0], [1], [0, 0, 1, 1], [], []>, precision = #tpu.contract_precision<fp32>} : vector<8x16xf32>, vector<16x128xf32>, vector<8x128xf32> -> vector<8x128xf32>
    %95 = arith.addf %76, %94 : vector<8x128xf32>
    %96 = vector.extract_strided_slice %13 {offsets = [0, 64], sizes = [8, 16], strides = [1, 1]} : vector<8x128xf32> to vector<8x16xf32>
    %97 = vector.extract_strided_slice %15 {offsets = [0, 64], sizes = [8, 16], strides = [1, 1]} : vector<8x128xf32> to vector<8x16xf32>
    %98 = vector.extract_strided_slice %17 {offsets = [0, 64], sizes = [8, 16], strides = [1, 1]} : vector<8x128xf32> to vector<8x16xf32>
    %cst_48 = arith.constant dense<0.000000e+00> : vector<8x8xf32>
    %99 = tpu.matmul %96, %97, %cst_48 {dimension_numbers = #tpu.dot_dimension_numbers<[1], [1], [0], [0], [0, 0, 1, 0], [], []>, precision = #tpu.contract_precision<fp32>} : vector<8x16xf32>, vector<8x16xf32>, vector<8x8xf32> -> vector<8x8xf32>
    %cst_49 = arith.constant -8.83883489E+18 : f32
    %100 = vector.broadcast %cst_49 : f32 to vector<8x8xf32>
    %101 = arith.select %9, %100, %99 : vector<8x8xi1>, vector<8x8xf32>
    %cst_50 = arith.constant dense<0xFF800000> : vector<8xf32>
    %102 = vector.multi_reduction <maximumf>, %101, %cst_50 [1] : vector<8x8xf32> to vector<8xf32>
    %103 = vector.shape_cast %102 : vector<8xf32> to vector<8x1xf32>
    %104 = vector.broadcast %103 : vector<8x1xf32> to vector<8x8xf32>
    %105 = arith.subf %101, %104 : vector<8x8xf32>
    %106 = math.exp %105 : vector<8x8xf32>
    %cst_51 = arith.constant dense<0.000000e+00> : vector<8xf32>
    %107 = vector.multi_reduction <add>, %106, %cst_51 [1] : vector<8x8xf32> to vector<8xf32>
    %108 = vector.shape_cast %107 : vector<8xf32> to vector<8x1xf32>
    %109 = vector.broadcast %108 : vector<8x1xf32> to vector<8x8xf32>
    %110 = arith.divf %106, %109 : vector<8x8xf32>
    %cst_52 = arith.constant dense<0.000000e+00> : vector<8x16xf32>
    %111 = tpu.matmul %110, %98, %cst_52 {dimension_numbers = #tpu.dot_dimension_numbers<[1], [0], [0], [1], [0, 0, 1, 1], [], []>, precision = #tpu.contract_precision<fp32>} : vector<8x8xf32>, vector<8x16xf32>, vector<8x16xf32> -> vector<8x16xf32>
    %112 = vector.extract_strided_slice %18 {offsets = [64, 0], sizes = [16, 128], strides = [1, 1]} : vector<128x128xf32> to vector<16x128xf32>
    %cst_53 = arith.constant dense<0.000000e+00> : vector<8x128xf32>
    %113 = tpu.matmul %111, %112, %cst_53 {dimension_numbers = #tpu.dot_dimension_numbers<[1], [0], [0], [1], [0, 0, 1, 1], [], []>, precision = #tpu.contract_precision<fp32>} : vector<8x16xf32>, vector<16x128xf32>, vector<8x128xf32> -> vector<8x128xf32>
    %114 = arith.addf %95, %113 : vector<8x128xf32>
    %115 = vector.extract_strided_slice %13 {offsets = [0, 80], sizes = [8, 16], strides = [1, 1]} : vector<8x128xf32> to vector<8x16xf32>
    %116 = vector.extract_strided_slice %15 {offsets = [0, 80], sizes = [8, 16], strides = [1, 1]} : vector<8x128xf32> to vector<8x16xf32>
    %117 = vector.extract_strided_slice %17 {offsets = [0, 80], sizes = [8, 16], strides = [1, 1]} : vector<8x128xf32> to vector<8x16xf32>
    %cst_54 = arith.constant dense<0.000000e+00> : vector<8x8xf32>
    %118 = tpu.matmul %115, %116, %cst_54 {dimension_numbers = #tpu.dot_dimension_numbers<[1], [1], [0], [0], [0, 0, 1, 0], [], []>, precision = #tpu.contract_precision<fp32>} : vector<8x16xf32>, vector<8x16xf32>, vector<8x8xf32> -> vector<8x8xf32>
    %cst_55 = arith.constant -8.83883489E+18 : f32
    %119 = vector.broadcast %cst_55 : f32 to vector<8x8xf32>
    %120 = arith.select %9, %119, %118 : vector<8x8xi1>, vector<8x8xf32>
    %cst_56 = arith.constant dense<0xFF800000> : vector<8xf32>
    %121 = vector.multi_reduction <maximumf>, %120, %cst_56 [1] : vector<8x8xf32> to vector<8xf32>
    %122 = vector.shape_cast %121 : vector<8xf32> to vector<8x1xf32>
    %123 = vector.broadcast %122 : vector<8x1xf32> to vector<8x8xf32>
    %124 = arith.subf %120, %123 : vector<8x8xf32>
    %125 = math.exp %124 : vector<8x8xf32>
    %cst_57 = arith.constant dense<0.000000e+00> : vector<8xf32>
    %126 = vector.multi_reduction <add>, %125, %cst_57 [1] : vector<8x8xf32> to vector<8xf32>
    %127 = vector.shape_cast %126 : vector<8xf32> to vector<8x1xf32>
    %128 = vector.broadcast %127 : vector<8x1xf32> to vector<8x8xf32>
    %129 = arith.divf %125, %128 : vector<8x8xf32>
    %cst_58 = arith.constant dense<0.000000e+00> : vector<8x16xf32>
    %130 = tpu.matmul %129, %117, %cst_58 {dimension_numbers = #tpu.dot_dimension_numbers<[1], [0], [0], [1], [0, 0, 1, 1], [], []>, precision = #tpu.contract_precision<fp32>} : vector<8x8xf32>, vector<8x16xf32>, vector<8x16xf32> -> vector<8x16xf32>
    %131 = vector.extract_strided_slice %18 {offsets = [80, 0], sizes = [16, 128], strides = [1, 1]} : vector<128x128xf32> to vector<16x128xf32>
    %cst_59 = arith.constant dense<0.000000e+00> : vector<8x128xf32>
    %132 = tpu.matmul %130, %131, %cst_59 {dimension_numbers = #tpu.dot_dimension_numbers<[1], [0], [0], [1], [0, 0, 1, 1], [], []>, precision = #tpu.contract_precision<fp32>} : vector<8x16xf32>, vector<16x128xf32>, vector<8x128xf32> -> vector<8x128xf32>
    %133 = arith.addf %114, %132 : vector<8x128xf32>
    %134 = vector.extract_strided_slice %13 {offsets = [0, 96], sizes = [8, 16], strides = [1, 1]} : vector<8x128xf32> to vector<8x16xf32>
    %135 = vector.extract_strided_slice %15 {offsets = [0, 96], sizes = [8, 16], strides = [1, 1]} : vector<8x128xf32> to vector<8x16xf32>
    %136 = vector.extract_strided_slice %17 {offsets = [0, 96], sizes = [8, 16], strides = [1, 1]} : vector<8x128xf32> to vector<8x16xf32>
    %cst_60 = arith.constant dense<0.000000e+00> : vector<8x8xf32>
    %137 = tpu.matmul %134, %135, %cst_60 {dimension_numbers = #tpu.dot_dimension_numbers<[1], [1], [0], [0], [0, 0, 1, 0], [], []>, precision = #tpu.contract_precision<fp32>} : vector<8x16xf32>, vector<8x16xf32>, vector<8x8xf32> -> vector<8x8xf32>
    %cst_61 = arith.constant -8.83883489E+18 : f32
    %138 = vector.broadcast %cst_61 : f32 to vector<8x8xf32>
    %139 = arith.select %9, %138, %137 : vector<8x8xi1>, vector<8x8xf32>
    %cst_62 = arith.constant dense<0xFF800000> : vector<8xf32>
    %140 = vector.multi_reduction <maximumf>, %139, %cst_62 [1] : vector<8x8xf32> to vector<8xf32>
    %141 = vector.shape_cast %140 : vector<8xf32> to vector<8x1xf32>
    %142 = vector.broadcast %141 : vector<8x1xf32> to vector<8x8xf32>
    %143 = arith.subf %139, %142 : vector<8x8xf32>
    %144 = math.exp %143 : vector<8x8xf32>
    %cst_63 = arith.constant dense<0.000000e+00> : vector<8xf32>
    %145 = vector.multi_reduction <add>, %144, %cst_63 [1] : vector<8x8xf32> to vector<8xf32>
    %146 = vector.shape_cast %145 : vector<8xf32> to vector<8x1xf32>
    %147 = vector.broadcast %146 : vector<8x1xf32> to vector<8x8xf32>
    %148 = arith.divf %144, %147 : vector<8x8xf32>
    %cst_64 = arith.constant dense<0.000000e+00> : vector<8x16xf32>
    %149 = tpu.matmul %148, %136, %cst_64 {dimension_numbers = #tpu.dot_dimension_numbers<[1], [0], [0], [1], [0, 0, 1, 1], [], []>, precision = #tpu.contract_precision<fp32>} : vector<8x8xf32>, vector<8x16xf32>, vector<8x16xf32> -> vector<8x16xf32>
    %150 = vector.extract_strided_slice %18 {offsets = [96, 0], sizes = [16, 128], strides = [1, 1]} : vector<128x128xf32> to vector<16x128xf32>
    %cst_65 = arith.constant dense<0.000000e+00> : vector<8x128xf32>
    %151 = tpu.matmul %149, %150, %cst_65 {dimension_numbers = #tpu.dot_dimension_numbers<[1], [0], [0], [1], [0, 0, 1, 1], [], []>, precision = #tpu.contract_precision<fp32>} : vector<8x16xf32>, vector<16x128xf32>, vector<8x128xf32> -> vector<8x128xf32>
    %152 = arith.addf %133, %151 : vector<8x128xf32>
    %153 = vector.extract_strided_slice %13 {offsets = [0, 112], sizes = [8, 16], strides = [1, 1]} : vector<8x128xf32> to vector<8x16xf32>
    %154 = vector.extract_strided_slice %15 {offsets = [0, 112], sizes = [8, 16], strides = [1, 1]} : vector<8x128xf32> to vector<8x16xf32>
    %155 = vector.extract_strided_slice %17 {offsets = [0, 112], sizes = [8, 16], strides = [1, 1]} : vector<8x128xf32> to vector<8x16xf32>
    %cst_66 = arith.constant dense<0.000000e+00> : vector<8x8xf32>
    %156 = tpu.matmul %153, %154, %cst_66 {dimension_numbers = #tpu.dot_dimension_numbers<[1], [1], [0], [0], [0, 0, 1, 0], [], []>, precision = #tpu.contract_precision<fp32>} : vector<8x16xf32>, vector<8x16xf32>, vector<8x8xf32> -> vector<8x8xf32>
    %cst_67 = arith.constant -8.83883489E+18 : f32
    %157 = vector.broadcast %cst_67 : f32 to vector<8x8xf32>
    %158 = arith.select %9, %157, %156 : vector<8x8xi1>, vector<8x8xf32>
    %cst_68 = arith.constant dense<0xFF800000> : vector<8xf32>
    %159 = vector.multi_reduction <maximumf>, %158, %cst_68 [1] : vector<8x8xf32> to vector<8xf32>
    %160 = vector.shape_cast %159 : vector<8xf32> to vector<8x1xf32>
    %161 = vector.broadcast %160 : vector<8x1xf32> to vector<8x8xf32>
    %162 = arith.subf %158, %161 : vector<8x8xf32>
    %163 = math.exp %162 : vector<8x8xf32>
    %cst_69 = arith.constant dense<0.000000e+00> : vector<8xf32>
    %164 = vector.multi_reduction <add>, %163, %cst_69 [1] : vector<8x8xf32> to vector<8xf32>
    %165 = vector.shape_cast %164 : vector<8xf32> to vector<8x1xf32>
    %166 = vector.broadcast %165 : vector<8x1xf32> to vector<8x8xf32>
    %167 = arith.divf %163, %166 : vector<8x8xf32>
    %cst_70 = arith.constant dense<0.000000e+00> : vector<8x16xf32>
    %168 = tpu.matmul %167, %155, %cst_70 {dimension_numbers = #tpu.dot_dimension_numbers<[1], [0], [0], [1], [0, 0, 1, 1], [], []>, precision = #tpu.contract_precision<fp32>} : vector<8x8xf32>, vector<8x16xf32>, vector<8x16xf32> -> vector<8x16xf32>
    %169 = vector.extract_strided_slice %18 {offsets = [112, 0], sizes = [16, 128], strides = [1, 1]} : vector<128x128xf32> to vector<16x128xf32>
    %cst_71 = arith.constant dense<0.000000e+00> : vector<8x128xf32>
    %170 = tpu.matmul %168, %169, %cst_71 {dimension_numbers = #tpu.dot_dimension_numbers<[1], [0], [0], [1], [0, 0, 1, 1], [], []>, precision = #tpu.contract_precision<fp32>} : vector<8x16xf32>, vector<16x128xf32>, vector<8x128xf32> -> vector<8x128xf32>
    %171 = arith.addf %152, %170 : vector<8x128xf32>
    %c0_72 = arith.constant 0 : index
    %c0_73 = arith.constant 0 : index
    %172 = vector.load %arg9[%c0_72, %c0_73] : memref<1x128xf32, #tpu.memory_space<vmem>>, vector<1x128xf32>
    %173 = vector.broadcast %172 : vector<1x128xf32> to vector<8x128xf32>
    %174 = arith.addf %171, %173 : vector<8x128xf32>
    %175 = arith.addf %174, %3 : vector<8x128xf32>
    %c0_74 = arith.constant 0 : index
    %c0_75 = arith.constant 0 : index
    %176 = vector.load %arg10[%c0_74, %c0_75] : memref<1x128xf32, #tpu.memory_space<vmem>>, vector<1x128xf32>
    %c0_76 = arith.constant 0 : index
    %c0_77 = arith.constant 0 : index
    %177 = vector.load %arg11[%c0_76, %c0_77] : memref<1x128xf32, #tpu.memory_space<vmem>>, vector<1x128xf32>
    %cst_78 = arith.constant dense<0.000000e+00> : vector<8xf32>
    %178 = vector.multi_reduction <add>, %175, %cst_78 [1] : vector<8x128xf32> to vector<8xf32>
    %179 = vector.shape_cast %178 : vector<8xf32> to vector<8x1xf32>
    %cst_79 = arith.constant 1.280000e+02 : f32
    %180 = vector.broadcast %cst_79 : f32 to vector<8x1xf32>
    %181 = arith.divf %179, %180 : vector<8x1xf32>
    %182 = vector.broadcast %181 : vector<8x1xf32> to vector<8x128xf32>
    %183 = arith.subf %175, %182 : vector<8x128xf32>
    %184 = arith.mulf %183, %183 : vector<8x128xf32>
    %cst_80 = arith.constant dense<0.000000e+00> : vector<8xf32>
    %185 = vector.multi_reduction <add>, %184, %cst_80 [1] : vector<8x128xf32> to vector<8xf32>
    %186 = vector.shape_cast %185 : vector<8xf32> to vector<8x1xf32>
    %cst_81 = arith.constant 1.280000e+02 : f32
    %187 = vector.broadcast %cst_81 : f32 to vector<8x1xf32>
    %188 = arith.divf %186, %187 : vector<8x1xf32>
    %189 = vector.broadcast %181 : vector<8x1xf32> to vector<8x128xf32>
    %190 = arith.subf %175, %189 : vector<8x128xf32>
    %cst_82 = arith.constant 9.99999974E-6 : f32
    %191 = vector.broadcast %cst_82 : f32 to vector<8x1xf32>
    %192 = arith.addf %188, %191 : vector<8x1xf32>
    %193 = math.rsqrt %192 : vector<8x1xf32>
    %194 = vector.broadcast %193 : vector<8x1xf32> to vector<8x128xf32>
    %195 = arith.mulf %190, %194 : vector<8x128xf32>
    %196 = vector.broadcast %176 : vector<1x128xf32> to vector<8x128xf32>
    %197 = arith.mulf %195, %196 : vector<8x128xf32>
    %198 = vector.broadcast %177 : vector<1x128xf32> to vector<8x128xf32>
    %199 = arith.addf %197, %198 : vector<8x128xf32>
    %c0_83 = arith.constant 0 : index
    %c0_84 = arith.constant 0 : index
    %200 = vector.load %arg12[%c0_83, %c0_84] : memref<128x512xf32, #tpu.memory_space<vmem>>, vector<128x512xf32>
    %cst_85 = arith.constant dense<0.000000e+00> : vector<8x512xf32>
    %201 = tpu.matmul %199, %200, %cst_85 {dimension_numbers = #tpu.dot_dimension_numbers<[1], [0], [0], [1], [0, 0, 1, 1], [], []>, precision = #tpu.contract_precision<fp32>} : vector<8x128xf32>, vector<128x512xf32>, vector<8x512xf32> -> vector<8x512xf32>
    %c0_86 = arith.constant 0 : index
    %c0_87 = arith.constant 0 : index
    %202 = vector.load %arg13[%c0_86, %c0_87] : memref<1x512xf32, #tpu.memory_space<vmem>>, vector<1x512xf32>
    %203 = vector.broadcast %202 : vector<1x512xf32> to vector<8x512xf32>
    %204 = arith.addf %201, %203 : vector<8x512xf32>
    %cst_88 = arith.constant 0.000000e+00 : f32
    %205 = vector.broadcast %cst_88 : f32 to vector<8x512xf32>
    %206 = arith.maximumf %204, %205 : vector<8x512xf32>
    %c0_89 = arith.constant 0 : index
    %c0_90 = arith.constant 0 : index
    %207 = vector.load %arg14[%c0_89, %c0_90] : memref<512x128xf32, #tpu.memory_space<vmem>>, vector<512x128xf32>
    %cst_91 = arith.constant dense<0.000000e+00> : vector<8x128xf32>
    %208 = tpu.matmul %206, %207, %cst_91 {dimension_numbers = #tpu.dot_dimension_numbers<[1], [0], [0], [1], [0, 0, 1, 1], [], []>, precision = #tpu.contract_precision<fp32>} : vector<8x512xf32>, vector<512x128xf32>, vector<8x128xf32> -> vector<8x128xf32>
    %c0_92 = arith.constant 0 : index
    %c0_93 = arith.constant 0 : index
    %209 = vector.load %arg15[%c0_92, %c0_93] : memref<1x128xf32, #tpu.memory_space<vmem>>, vector<1x128xf32>
    %210 = vector.broadcast %209 : vector<1x128xf32> to vector<8x128xf32>
    %211 = arith.addf %208, %210 : vector<8x128xf32>
    %212 = arith.addf %211, %199 : vector<8x128xf32>
    %c0_94 = arith.constant 0 : index
    %c0_95 = arith.constant 0 : index
    %213 = vector.load %arg16[%c0_94, %c0_95] : memref<1x128xf32, #tpu.memory_space<vmem>>, vector<1x128xf32>
    %c0_96 = arith.constant 0 : index
    %c0_97 = arith.constant 0 : index
    %214 = vector.load %arg17[%c0_96, %c0_97] : memref<1x128xf32, #tpu.memory_space<vmem>>, vector<1x128xf32>
    %cst_98 = arith.constant dense<0.000000e+00> : vector<8xf32>
    %215 = vector.multi_reduction <add>, %212, %cst_98 [1] : vector<8x128xf32> to vector<8xf32>
    %216 = vector.shape_cast %215 : vector<8xf32> to vector<8x1xf32>
    %cst_99 = arith.constant 1.280000e+02 : f32
    %217 = vector.broadcast %cst_99 : f32 to vector<8x1xf32>
    %218 = arith.divf %216, %217 : vector<8x1xf32>
    %219 = vector.broadcast %218 : vector<8x1xf32> to vector<8x128xf32>
    %220 = arith.subf %212, %219 : vector<8x128xf32>
    %221 = arith.mulf %220, %220 : vector<8x128xf32>
    %cst_100 = arith.constant dense<0.000000e+00> : vector<8xf32>
    %222 = vector.multi_reduction <add>, %221, %cst_100 [1] : vector<8x128xf32> to vector<8xf32>
    %223 = vector.shape_cast %222 : vector<8xf32> to vector<8x1xf32>
    %cst_101 = arith.constant 1.280000e+02 : f32
    %224 = vector.broadcast %cst_101 : f32 to vector<8x1xf32>
    %225 = arith.divf %223, %224 : vector<8x1xf32>
    %226 = vector.broadcast %218 : vector<8x1xf32> to vector<8x128xf32>
    %227 = arith.subf %212, %226 : vector<8x128xf32>
    %cst_102 = arith.constant 9.99999974E-6 : f32
    %228 = vector.broadcast %cst_102 : f32 to vector<8x1xf32>
    %229 = arith.addf %225, %228 : vector<8x1xf32>
    %230 = math.rsqrt %229 : vector<8x1xf32>
    %231 = vector.broadcast %230 : vector<8x1xf32> to vector<8x128xf32>
    %232 = arith.mulf %227, %231 : vector<8x128xf32>
    %233 = vector.broadcast %213 : vector<1x128xf32> to vector<8x128xf32>
    %234 = arith.mulf %232, %233 : vector<8x128xf32>
    %235 = vector.broadcast %214 : vector<1x128xf32> to vector<8x128xf32>
    %236 = arith.addf %234, %235 : vector<8x128xf32>
    %c0_103 = arith.constant 0 : index
    %c0_104 = arith.constant 0 : index
    %c0_105 = arith.constant 0 : index
    %237 = vector.load %arg18[%c0_103, %c0_104, %c0_105] : memref<1x8x128xf32, #tpu.memory_space<vmem>>, vector<1x8x128xf32>
    %238 = vector.shape_cast %237 : vector<1x8x128xf32> to vector<8x128xf32>
    %239 = vector.shape_cast %236 : vector<8x128xf32> to vector<1x8x128xf32>
    tpu.vector_store %arg18[%c0_103, %c0_104, %c0_105], %239 {strides = array<i32>} : memref<1x8x128xf32, #tpu.memory_space<vmem>>, vector<1x8x128xf32>,
    return
  }
  func.func @transform_0(%arg0: i32) -> (i32, i32, i32) {
    %c0_i32 = arith.constant 0 : i32
    %c0_i32_0 = arith.constant 0 : i32
    %c0_i32_1 = arith.constant 0 : i32
    return %arg0, %c0_i32, %c0_i32_0 : i32, i32, i32
  }
  func.func @transform_1(%arg0: i32) -> (i32, i32, i32) {
    %c0_i32 = arith.constant 0 : i32
    %c0_i32_0 = arith.constant 0 : i32
    %c0_i32_1 = arith.constant 0 : i32
    return %arg0, %c0_i32, %c0_i32_0 : i32, i32, i32
  }
  func.func @transform_2(%arg0: i32) -> (i32, i32, i32) {
    %c0_i32 = arith.constant 0 : i32
    %c0_i32_0 = arith.constant 0 : i32
    %c0_i32_1 = arith.constant 0 : i32
    return %arg0, %c0_i32, %c0_i32_0 : i32, i32, i32
  }
  func.func @transform_3(%arg0: i32) -> (i32, i32, i32) {
    %c0_i32 = arith.constant 0 : i32
    %c0_i32_0 = arith.constant 0 : i32
    %c0_i32_1 = arith.constant 0 : i32
    return %arg0, %c0_i32, %c0_i32_0 : i32, i32, i32
  }
  func.func @transform_4(%arg0: i32) -> (i32, i32) {
    %c0_i32 = arith.constant 0 : i32
    %c0_i32_0 = arith.constant 0 : i32
    %c0_i32_1 = arith.constant 0 : i32
    return %c0_i32, %c0_i32_0 : i32, i32
  }
  func.func @transform_5(%arg0: i32) -> (i32, i32) {
    %c0_i32 = arith.constant 0 : i32
    %c0_i32_0 = arith.constant 0 : i32
    %c0_i32_1 = arith.constant 0 : i32
    return %c0_i32, %c0_i32_0 : i32, i32
  }
  func.func @transform_6(%arg0: i32) -> (i32, i32) {
    %c0_i32 = arith.constant 0 : i32
    %c0_i32_0 = arith.constant 0 : i32
    %c0_i32_1 = arith.constant 0 : i32
    return %c0_i32, %c0_i32_0 : i32, i32
  }
  func.func @transform_7(%arg0: i32) -> (i32, i32) {
    %c0_i32 = arith.constant 0 : i32
    %c0_i32_0 = arith.constant 0 : i32
    %c0_i32_1 = arith.constant 0 : i32
    return %c0_i32, %c0_i32_0 : i32, i32
  }
  func.func @transform_8(%arg0: i32) -> (i32, i32) {
    %c0_i32 = arith.constant 0 : i32
    %c0_i32_0 = arith.constant 0 : i32
    %c0_i32_1 = arith.constant 0 : i32
    return %c0_i32, %c0_i32_0 : i32, i32
  }
  func.func @transform_9(%arg0: i32) -> (i32, i32) {
    %c0_i32 = arith.constant 0 : i32
    %c0_i32_0 = arith.constant 0 : i32
    %c0_i32_1 = arith.constant 0 : i32
    return %c0_i32, %c0_i32_0 : i32, i32
  }
  func.func @transform_10(%arg0: i32) -> (i32, i32) {
    %c0_i32 = arith.constant 0 : i32
    %c0_i32_0 = arith.constant 0 : i32
    %c0_i32_1 = arith.constant 0 : i32
    return %c0_i32, %c0_i32_0 : i32, i32
  }
  func.func @transform_11(%arg0: i32) -> (i32, i32) {
    %c0_i32 = arith.constant 0 : i32
    %c0_i32_0 = arith.constant 0 : i32
    %c0_i32_1 = arith.constant 0 : i32
    return %c0_i32, %c0_i32_0 : i32, i32
  }
  func.func @transform_12(%arg0: i32) -> (i32, i32) {
    %c0_i32 = arith.constant 0 : i32
    %c0_i32_0 = arith.constant 0 : i32
    %c0_i32_1 = arith.constant 0 : i32
    return %c0_i32, %c0_i32_0 : i32, i32
  }
  func.func @transform_13(%arg0: i32) -> (i32, i32) {
    %c0_i32 = arith.constant 0 : i32
    %c0_i32_0 = arith.constant 0 : i32
    %c0_i32_1 = arith.constant 0 : i32
    return %c0_i32, %c0_i32_0 : i32, i32
  }
  func.func @transform_14(%arg0: i32) -> (i32, i32) {
    %c0_i32 = arith.constant 0 : i32
    %c0_i32_0 = arith.constant 0 : i32
    %c0_i32_1 = arith.constant 0 : i32
    return %c0_i32, %c0_i32_0 : i32, i32
  }
  func.func @transform_15(%arg0: i32) -> (i32, i32) {
    %c0_i32 = arith.constant 0 : i32
    %c0_i32_0 = arith.constant 0 : i32
    %c0_i32_1 = arith.constant 0 : i32
    return %c0_i32, %c0_i32_0 : i32, i32
  }
  func.func @transform_16(%arg0: i32) -> (i32, i32) {
    %c0_i32 = arith.constant 0 : i32
    %c0_i32_0 = arith.constant 0 : i32
    %c0_i32_1 = arith.constant 0 : i32
    return %c0_i32, %c0_i32_0 : i32, i32
  }
  func.func @transform_17(%arg0: i32) -> (i32, i32, i32) {
    %c0_i32 = arith.constant 0 : i32
    %c0_i32_0 = arith.constant 0 : i32
    %c0_i32_1 = arith.constant 0 : i32
    return %arg0, %c0_i32, %c0_i32_0 : i32, i32, i32
  }
}

</mosaic_0001>

<llo_original>
// kernel: tpu_custom_call.1
$region0: #{tpu_custom_call.1}
  #allocation0 [shape = 'u32[]', space=smem, size = 0x4, offset = 0x4, fixed_abs, tag = 'smem constant byte address 0x4 - core index']
  #allocation1 [shape = 'u32[72,128]{1,0:T(1,128)}', space=vmem, size = 0x9000, scoped, tag = 'internal scratch']
  %s0 = inlined_call_operand.hbm [shape: f32[2,8,128], index: 0, kind: input, shape index: {}]
  %s1 = inlined_call_operand.hbm [shape: f32[2,8,128], index: 1, kind: input, shape index: {}]
  %s2 = inlined_call_operand.hbm [shape: f32[2,8,128], index: 2, kind: input, shape index: {}]
  %s3 = inlined_call_operand.hbm [shape: f32[2,8,8], index: 3, kind: input, shape index: {}]
  %s4 = inlined_call_operand.hbm [shape: f32[128,128], index: 4, kind: input, shape index: {}]
  %s5 = inlined_call_operand.hbm [shape: f32[128,128], index: 5, kind: input, shape index: {}]
  %s6 = inlined_call_operand.hbm [shape: f32[128,128], index: 6, kind: input, shape index: {}]
  %s7 = inlined_call_operand.hbm [shape: f32[128,128], index: 7, kind: input, shape index: {}]
  %s8 = inlined_call_operand.vmem [shape: f32[1,128], index: 8, kind: input, shape index: {}]
  %s9 = inlined_call_operand.vmem [shape: f32[1,128], index: 9, kind: input, shape index: {}]
  %s10 = inlined_call_operand.vmem [shape: f32[1,128], index: 10, kind: input, shape index: {}]
  %s11 = inlined_call_operand.hbm [shape: f32[128,512], index: 11, kind: input, shape index: {}]
  %s12 = inlined_call_operand.vmem [shape: f32[1,512], index: 12, kind: input, shape index: {}]
  %s13 = inlined_call_operand.hbm [shape: f32[512,128], index: 13, kind: input, shape index: {}]
  %s14 = inlined_call_operand.vmem [shape: f32[1,128], index: 14, kind: input, shape index: {}]
  %s15 = inlined_call_operand.vmem [shape: f32[1,128], index: 15, kind: input, shape index: {}]
  %s16 = inlined_call_operand.vmem [shape: f32[1,128], index: 16, kind: input, shape index: {}]
  %s17 = inlined_call_operand.hbm [shape: f32[2,8,128], index: 17, kind: output, shape index: {}]
  %s18 = sld [smem:[#allocation0]]
  $region141: #{tpu_custom_call.1} parent=0
    _
  %s20 = ssub.s32 1, %s18
  %s21 = scalar_select 0, %s20, %s18
  $region1: #{tpu_custom_call.1} parent=0
    #allocation2 [shape = 'u8[8192]{0}', space=vmem, size = 0x2000, scoped, tag = 'input window, operand 0']
    #allocation3 [shape = 's32[2]{0}', space=sflag, size = 0x8, scoped, tag = 'scoped memory for tpu_custom_call.1']
    #allocation4 [shape = 's32[2]{0}', space=sflag, size = 0x8, scoped, tag = 'scoped memory for tpu_custom_call.1']
    #allocation5 [shape = 'u8[8192]{0}', space=vmem, size = 0x2000, scoped, tag = 'input window, operand 1']
    #allocation6 [shape = 's32[2]{0}', space=sflag, size = 0x8, scoped, tag = 'scoped memory for tpu_custom_call.1']
    #allocation7 [shape = 'u8[8192]{0}', space=vmem, size = 0x2000, scoped, tag = 'input window, operand 2']
    #allocation8 [shape = 'u8[8192]{0}', space=vmem, size = 0x2000, scoped, tag = 'input window, operand 3']
    #allocation9 [shape = 's32[2]{0}', space=sflag, size = 0x8, scoped, tag = 'scoped memory for tpu_custom_call.1']
    #allocation10 [shape = 'u8[65536]{0}', space=vmem, size = 0x10000, scoped, tag = 'input window, operand 4, single buffered']
    #allocation11 [shape = 'u8[65536]{0}', space=vmem, size = 0x10000, scoped, tag = 'input window, operand 5, single buffered']
    #allocation12 [shape = 's32[1]{0}', space=sflag, size = 0x4, scoped, tag = 'scoped memory for tpu_custom_call.1']
    #allocation13 [shape = 'u8[65536]{0}', space=vmem, size = 0x10000, scoped, tag = 'input window, operand 6, single buffered']
    #allocation14 [shape = 'u8[65536]{0}', space=vmem, size = 0x10000, scoped, tag = 'input window, operand 7, single buffered']
    #allocation15 [shape = 's32[1]{0}', space=sflag, size = 0x4, scoped, tag = 'scoped memory for tpu_custom_call.1']
    #allocation16 [shape = 'u8[262144]{0}', space=vmem, size = 0x40000, scoped, tag = 'input window, operand 11, single buffered']
    #allocation17 [shape = 'u8[262144]{0}', space=vmem, size = 0x40000, scoped, tag = 'input window, operand 13, single buffered']
    #allocation18 [shape = 's32[1]{0}', space=sflag, size = 0x4, scoped, tag = 'scoped memory for tpu_custom_call.1']
    #allocation19 [shape = 'u8[8192]{0}', space=vmem, size = 0x2000, scoped, tag = 'output window, operand 0']
    %22 = vsyncpa [#allocation3], 0
    %s23 = scalar_lea.sflag [#allocation3], 1
    %24 = vsyncpa %s23, 0
    %25 = vsyncpa [#allocation6], 0
    %s26 = scalar_lea.sflag [#allocation6], 1
    %27 = vsyncpa %s26, 0
    %28 = vsyncpa [#allocation9], 0
    %s29 = scalar_lea.sflag [#allocation9], 1
    %30 = vsyncpa %s29, 0
    %31 = vsyncpa [#allocation12], 0
    %32 = vsyncpa [#allocation15], 0
    %33 = vsyncpa [#allocation18], 0
    %34 = vsyncpa [#allocation4], 0
    %s35 = scalar_lea.sflag [#allocation4], 1
    %36 = vsyncpa %s35, 0
    loop: start=0, step=1, limit=4
    $region2: #{tpu_custom_call.1} parent=1 // loop_pre_header
      _
    $region3: #{tpu_custom_call.1} parent=1 // loop_header
      %s38 = sphi 0, %s42
      %p39 = scmp.ge.s32.totalorder %s38, 4
      %s48 = sphi 0, %s50
      %s51 = sphi 0, %s48
      %s52 = sphi 0, %s51
      %s68 = sphi 0, %s52
      %s74 = sphi 0, %s76
      %s77 = sphi 0, %s74
      %s78 = sphi 0, %s77
      %s94 = sphi 0, %s78
      %s100 = sphi 0, %s102
      %s103 = sphi 0, %s100
      %s104 = sphi 0, %s103
      %s120 = sphi 0, %s104
      %s126 = sphi 0, %s128
      %s129 = sphi 0, %s126
      %s130 = sphi 0, %s129
      %s146 = sphi 0, %s130
      %s150 = sphi 0, %s150
      %s152 = sphi 0, %s150
      %s153 = sphi 0, %s152
      %s167 = sphi 0, %s153
      %s171 = sphi 0, %s171
      %s173 = sphi 0, %s171
      %s174 = sphi 0, %s173
      %s188 = sphi 0, %s174
      %s192 = sphi 0, %s192
      %s194 = sphi 0, %s192
      %s195 = sphi 0, %s194
      %s209 = sphi 0, %s195
      %s213 = sphi 0, %s213
      %s215 = sphi 0, %s213
      %s216 = sphi 0, %s215
      %s230 = sphi 0, %s216
      %s234 = sphi 0, %s234
      %s236 = sphi 0, %s234
      %s237 = sphi 0, %s236
      %s251 = sphi 0, %s237
      %s255 = sphi 0, %s255
      %s257 = sphi 0, %s255
      %s258 = sphi 0, %s257
      %s272 = sphi 0, %s258
      %s276 = sphi 0, %s276
      %s278 = sphi 0, %s276
      %s279 = sphi 0, %s278
      %s293 = sphi 0, %s279
      %s297 = sphi 0, %s297
      %s299 = sphi 0, %s297
      %s300 = sphi 0, %s299
      %s314 = sphi 0, %s300
      %s318 = sphi 0, %s318
      %s320 = sphi 0, %s318
      %s321 = sphi 0, %s320
      %s335 = sphi 0, %s321
      %s339 = sphi 0, %s339
      %s341 = sphi 0, %s339
      %s342 = sphi 0, %s341
      %s356 = sphi 0, %s342
      %s360 = sphi 0, %s360
      %s362 = sphi 0, %s360
      %s363 = sphi 0, %s362
      %s377 = sphi 0, %s363
      %s381 = sphi 0, %s381
      %s383 = sphi 0, %s381
      %s384 = sphi 0, %s383
      %s398 = sphi 0, %s384
      %s402 = sphi 0, %s402
      %s404 = sphi 0, %s402
      %s405 = sphi 0, %s404
      %s419 = sphi 0, %s405
      %s425 = sphi 0, %s427
      %s428 = sphi 0, %s425
      %s429 = sphi 0, %s428
      %s445 = sphi 0, %s429
    $region4: #{tpu_custom_call.1} parent=1 // loop_header_branch
      %41 = sbr.rel (%p39) target = $region8
    $region5: #{tpu_custom_call.1} parent=1 // loop_body
      %s43 = ssub.s32 %s38, 1
      %s44 = ssub.s32 %s38, 2
      %s45 = sadd.s32 %s38, 1
      %s46 = ssub.s32 %s38, %s45
      %p47 = scmp.eq.s32.totalorder %s46, 0
      %s49 = sadd.s32 %s48, 1
      %s50 = scalar_select %p47, %s48, %s49
      %p53 = pneg %p47
      %p54 = scmp.eq.s32.totalorder %s38, 1
      %p55 = por %p53, %p54
      %p56 = scmp.ne.s32.totalorder %s48, %s51
      %p57 = scmp.eq.s32.totalorder %s38, 0
      %p58 = por %p56, %p57
      %p59 = scmp.ne.s32.totalorder %s48, %s51
      %p60 = scmp.eq.s32.totalorder %s43, 1
      %p61 = por %p59, %p60
      %p62 = scmp.ne.s32.totalorder %s51, %s52
      %p63 = scmp.eq.s32.totalorder %s43, 0
      %p64 = por %p62, %p63
      %p65 = scmp.ne.s32.totalorder %s51, %s52
      %p66 = scmp.eq.s32.totalorder %s44, 1
      %p67 = por %p65, %p66
      %p69 = scmp.ne.s32.totalorder %s52, %s68
      %p70 = scmp.eq.s32.totalorder %s44, 0
      %p71 = por %p69, %p70
      %s72 = ssub.s32 %s38, %s45
      %p73 = scmp.eq.s32.totalorder %s72, 0
      %s75 = sadd.s32 %s74, 1
      %s76 = scalar_select %p73, %s74, %s75
      %p79 = pneg %p73
      %p80 = scmp.eq.s32.totalorder %s38, 1
      %p81 = por %p79, %p80
      %p82 = scmp.ne.s32.totalorder %s74, %s77
      %p83 = scmp.eq.s32.totalorder %s38, 0
      %p84 = por %p82, %p83
      %p85 = scmp.ne.s32.totalorder %s74, %s77
      %p86 = scmp.eq.s32.totalorder %s43, 1
      %p87 = por %p85, %p86
      %p88 = scmp.ne.s32.totalorder %s77, %s78
      %p89 = scmp.eq.s32.totalorder %s43, 0
      %p90 = por %p88, %p89
      %p91 = scmp.ne.s32.totalorder %s77, %s78
      %p92 = scmp.eq.s32.totalorder %s44, 1
      %p93 = por %p91, %p92
      %p95 = scmp.ne.s32.totalorder %s78, %s94
      %p96 = scmp.eq.s32.totalorder %s44, 0
      %p97 = por %p95, %p96
      %s98 = ssub.s32 %s38, %s45
      %p99 = scmp.eq.s32.totalorder %s98, 0
      %s101 = sadd.s32 %s100, 1
      %s102 = scalar_select %p99, %s100, %s101
      %p105 = pneg %p99
      %p106 = scmp.eq.s32.totalorder %s38, 1
      %p107 = por %p105, %p106
      %p108 = scmp.ne.s32.totalorder %s100, %s103
      %p109 = scmp.eq.s32.totalorder %s38, 0
      %p110 = por %p108, %p109
      %p111 = scmp.ne.s32.totalorder %s100, %s103
      %p112 = scmp.eq.s32.totalorder %s43, 1
      %p113 = por %p111, %p112
      %p114 = scmp.ne.s32.totalorder %s103, %s104
      %p115 = scmp.eq.s32.totalorder %s43, 0
      %p116 = por %p114, %p115
      %p117 = scmp.ne.s32.totalorder %s103, %s104
      %p118 = scmp.eq.s32.totalorder %s44, 1
      %p119 = por %p117, %p118
      %p121 = scmp.ne.s32.totalorder %s104, %s120
      %p122 = scmp.eq.s32.totalorder %s44, 0
      %p123 = por %p121, %p122
      %s124 = ssub.s32 %s38, %s45
      %p125 = scmp.eq.s32.totalorder %s124, 0
      %s127 = sadd.s32 %s126, 1
      %s128 = scalar_select %p125, %s126, %s127
      %p131 = pneg %p125
      %p132 = scmp.eq.s32.totalorder %s38, 1
      %p133 = por %p131, %p132
      %p134 = scmp.ne.s32.totalorder %s126, %s129
      %p135 = scmp.eq.s32.totalorder %s38, 0
      %p136 = por %p134, %p135
      %p137 = scmp.ne.s32.totalorder %s126, %s129
      %p138 = scmp.eq.s32.totalorder %s43, 1
      %p139 = por %p137, %p138
      %p140 = scmp.ne.s32.totalorder %s129, %s130
      %p141 = scmp.eq.s32.totalorder %s43, 0
      %p142 = por %p140, %p141
      %p143 = scmp.ne.s32.totalorder %s129, %s130
      %p144 = scmp.eq.s32.totalorder %s44, 1
      %p145 = por %p143, %p144
      %p147 = scmp.ne.s32.totalorder %s130, %s146
      %p148 = scmp.eq.s32.totalorder %s44, 0
      %p149 = por %p147, %p148
      %s151 = sadd.s32 %s150, 1
      %p154 = scmp.eq.s32.totalorder %s38, 1
      %p155 = scmp.ne.s32.totalorder %s150, %s152
      %p156 = scmp.eq.s32.totalorder %s38, 0
      %p157 = por %p155, %p156
      %p158 = scmp.ne.s32.totalorder %s150, %s152
      %p159 = scmp.eq.s32.totalorder %s43, 1
      %p160 = por %p158, %p159
      %p161 = scmp.ne.s32.totalorder %s152, %s153
      %p162 = scmp.eq.s32.totalorder %s43, 0
      %p163 = por %p161, %p162
      %p164 = scmp.ne.s32.totalorder %s152, %s153
      %p165 = scmp.eq.s32.totalorder %s44, 1
      %p166 = por %p164, %p165
      %p168 = scmp.ne.s32.totalorder %s153, %s167
      %p169 = scmp.eq.s32.totalorder %s44, 0
      %p170 = por %p168, %p169
      %s172 = sadd.s32 %s171, 1
      %p175 = scmp.eq.s32.totalorder %s38, 1
      %p176 = scmp.ne.s32.totalorder %s171, %s173
      %p177 = scmp.eq.s32.totalorder %s38, 0
      %p178 = por %p176, %p177
      %p179 = scmp.ne.s32.totalorder %s171, %s173
      %p180 = scmp.eq.s32.totalorder %s43, 1
      %p181 = por %p179, %p180
      %p182 = scmp.ne.s32.totalorder %s173, %s174
      %p183 = scmp.eq.s32.totalorder %s43, 0
      %p184 = por %p182, %p183
      %p185 = scmp.ne.s32.totalorder %s173, %s174
      %p186 = scmp.eq.s32.totalorder %s44, 1
      %p187 = por %p185, %p186
      %p189 = scmp.ne.s32.totalorder %s174, %s188
      %p190 = scmp.eq.s32.totalorder %s44, 0
      %p191 = por %p189, %p190
      %s193 = sadd.s32 %s192, 1
      %p196 = scmp.eq.s32.totalorder %s38, 1
      %p197 = scmp.ne.s32.totalorder %s192, %s194
      %p198 = scmp.eq.s32.totalorder %s38, 0
      %p199 = por %p197, %p198
      %p200 = scmp.ne.s32.totalorder %s192, %s194
      %p201 = scmp.eq.s32.totalorder %s43, 1
      %p202 = por %p200, %p201
      %p203 = scmp.ne.s32.totalorder %s194, %s195
      %p204 = scmp.eq.s32.totalorder %s43, 0
      %p205 = por %p203, %p204
      %p206 = scmp.ne.s32.totalorder %s194, %s195
      %p207 = scmp.eq.s32.totalorder %s44, 1
      %p208 = por %p206, %p207
      %p210 = scmp.ne.s32.totalorder %s195, %s209
      %p211 = scmp.eq.s32.totalorder %s44, 0
      %p212 = por %p210, %p211
      %s214 = sadd.s32 %s213, 1
      %p217 = scmp.eq.s32.totalorder %s38, 1
      %p218 = scmp.ne.s32.totalorder %s213, %s215
      %p219 = scmp.eq.s32.totalorder %s38, 0
      %p220 = por %p218, %p219
      %p221 = scmp.ne.s32.totalorder %s213, %s215
      %p222 = scmp.eq.s32.totalorder %s43, 1
      %p223 = por %p221, %p222
      %p224 = scmp.ne.s32.totalorder %s215, %s216
      %p225 = scmp.eq.s32.totalorder %s43, 0
      %p226 = por %p224, %p225
      %p227 = scmp.ne.s32.totalorder %s215, %s216
      %p228 = scmp.eq.s32.totalorder %s44, 1
      %p229 = por %p227, %p228
      %p231 = scmp.ne.s32.totalorder %s216, %s230
      %p232 = scmp.eq.s32.totalorder %s44, 0
      %p233 = por %p231, %p232
      %s235 = sadd.s32 %s234, 1
      %p238 = scmp.eq.s32.totalorder %s38, 1
      %p239 = scmp.ne.s32.totalorder %s234, %s236
      %p240 = scmp.eq.s32.totalorder %s38, 0
      %p241 = por %p239, %p240
      %p242 = scmp.ne.s32.totalorder %s234, %s236
      %p243 = scmp.eq.s32.totalorder %s43, 1
      %p244 = por %p242, %p243
      %p245 = scmp.ne.s32.totalorder %s236, %s237
      %p246 = scmp.eq.s32.totalorder %s43, 0
      %p247 = por %p245, %p246
      %p248 = scmp.ne.s32.totalorder %s236, %s237
      %p249 = scmp.eq.s32.totalorder %s44, 1
      %p250 = por %p248, %p249
      %p252 = scmp.ne.s32.totalorder %s237, %s251
      %p253 = scmp.eq.s32.totalorder %s44, 0
      %p254 = por %p252, %p253
      %s256 = sadd.s32 %s255, 1
      %p259 = scmp.eq.s32.totalorder %s38, 1
      %p260 = scmp.ne.s32.totalorder %s255, %s257
      %p261 = scmp.eq.s32.totalorder %s38, 0
      %p262 = por %p260, %p261
      %p263 = scmp.ne.s32.totalorder %s255, %s257
      %p264 = scmp.eq.s32.totalorder %s43, 1
      %p265 = por %p263, %p264
      %p266 = scmp.ne.s32.totalorder %s257, %s258
      %p267 = scmp.eq.s32.totalorder %s43, 0
      %p268 = por %p266, %p267
      %p269 = scmp.ne.s32.totalorder %s257, %s258
      %p270 = scmp.eq.s32.totalorder %s44, 1
      %p271 = por %p269, %p270
      %p273 = scmp.ne.s32.totalorder %s258, %s272
      %p274 = scmp.eq.s32.totalorder %s44, 0
      %p275 = por %p273, %p274
      %s277 = sadd.s32 %s276, 1
      %p280 = scmp.eq.s32.totalorder %s38, 1
      %p281 = scmp.ne.s32.totalorder %s276, %s278
      %p282 = scmp.eq.s32.totalorder %s38, 0
      %p283 = por %p281, %p282
      %p284 = scmp.ne.s32.totalorder %s276, %s278
      %p285 = scmp.eq.s32.totalorder %s43, 1
      %p286 = por %p284, %p285
      %p287 = scmp.ne.s32.totalorder %s278, %s279
      %p288 = scmp.eq.s32.totalorder %s43, 0
      %p289 = por %p287, %p288
      %p290 = scmp.ne.s32.totalorder %s278, %s279
      %p291 = scmp.eq.s32.totalorder %s44, 1
      %p292 = por %p290, %p291
      %p294 = scmp.ne.s32.totalorder %s279, %s293
      %p295 = scmp.eq.s32.totalorder %s44, 0
      %p296 = por %p294, %p295
      %s298 = sadd.s32 %s297, 1
      %p301 = scmp.eq.s32.totalorder %s38, 1
      %p302 = scmp.ne.s32.totalorder %s297, %s299
      %p303 = scmp.eq.s32.totalorder %s38, 0
      %p304 = por %p302, %p303
      %p305 = scmp.ne.s32.totalorder %s297, %s299
      %p306 = scmp.eq.s32.totalorder %s43, 1
      %p307 = por %p305, %p306
      %p308 = scmp.ne.s32.totalorder %s299, %s300
      %p309 = scmp.eq.s32.totalorder %s43, 0
      %p310 = por %p308, %p309
      %p311 = scmp.ne.s32.totalorder %s299, %s300
      %p312 = scmp.eq.s32.totalorder %s44, 1
      %p313 = por %p311, %p312
      %p315 = scmp.ne.s32.totalorder %s300, %s314
      %p316 = scmp.eq.s32.totalorder %s44, 0
      %p317 = por %p315, %p316
      %s319 = sadd.s32 %s318, 1
      %p322 = scmp.eq.s32.totalorder %s38, 1
      %p323 = scmp.ne.s32.totalorder %s318, %s320
      %p324 = scmp.eq.s32.totalorder %s38, 0
      %p325 = por %p323, %p324
      %p326 = scmp.ne.s32.totalorder %s318, %s320
      %p327 = scmp.eq.s32.totalorder %s43, 1
      %p328 = por %p326, %p327
      %p329 = scmp.ne.s32.totalorder %s320, %s321
      %p330 = scmp.eq.s32.totalorder %s43, 0
      %p331 = por %p329, %p330
      %p332 = scmp.ne.s32.totalorder %s320, %s321
      %p333 = scmp.eq.s32.totalorder %s44, 1
      %p334 = por %p332, %p333
      %p336 = scmp.ne.s32.totalorder %s321, %s335
      %p337 = scmp.eq.s32.totalorder %s44, 0
      %p338 = por %p336, %p337
      %s340 = sadd.s32 %s339, 1
      %p343 = scmp.eq.s32.totalorder %s38, 1
      %p344 = scmp.ne.s32.totalorder %s339, %s341
      %p345 = scmp.eq.s32.totalorder %s38, 0
      %p346 = por %p344, %p345
      %p347 = scmp.ne.s32.totalorder %s339, %s341
      %p348 = scmp.eq.s32.totalorder %s43, 1
      %p349 = por %p347, %p348
      %p350 = scmp.ne.s32.totalorder %s341, %s342
      %p351 = scmp.eq.s32.totalorder %s43, 0
      %p352 = por %p350, %p351
      %p353 = scmp.ne.s32.totalorder %s341, %s342
      %p354 = scmp.eq.s32.totalorder %s44, 1
      %p355 = por %p353, %p354
      %p357 = scmp.ne.s32.totalorder %s342, %s356
      %p358 = scmp.eq.s32.totalorder %s44, 0
      %p359 = por %p357, %p358
      %s361 = sadd.s32 %s360, 1
      %p364 = scmp.eq.s32.totalorder %s38, 1
      %p365 = scmp.ne.s32.totalorder %s360, %s362
      %p366 = scmp.eq.s32.totalorder %s38, 0
      %p367 = por %p365, %p366
      %p368 = scmp.ne.s32.totalorder %s360, %s362
      %p369 = scmp.eq.s32.totalorder %s43, 1
      %p370 = por %p368, %p369
      %p371 = scmp.ne.s32.totalorder %s362, %s363
      %p372 = scmp.eq.s32.totalorder %s43, 0
      %p373 = por %p371, %p372
      %p374 = scmp.ne.s32.totalorder %s362, %s363
      %p375 = scmp.eq.s32.totalorder %s44, 1
      %p376 = por %p374, %p375
      %p378 = scmp.ne.s32.totalorder %s363, %s377
      %p379 = scmp.eq.s32.totalorder %s44, 0
      %p380 = por %p378, %p379
      %s382 = sadd.s32 %s381, 1
      %p385 = scmp.eq.s32.totalorder %s38, 1
      %p386 = scmp.ne.s32.totalorder %s381, %s383
      %p387 = scmp.eq.s32.totalorder %s38, 0
      %p388 = por %p386, %p387
      %p389 = scmp.ne.s32.totalorder %s381, %s383
      %p390 = scmp.eq.s32.totalorder %s43, 1
      %p391 = por %p389, %p390
      %p392 = scmp.ne.s32.totalorder %s383, %s384
      %p393 = scmp.eq.s32.totalorder %s43, 0
      %p394 = por %p392, %p393
      %p395 = scmp.ne.s32.totalorder %s383, %s384
      %p396 = scmp.eq.s32.totalorder %s44, 1
      %p397 = por %p395, %p396
      %p399 = scmp.ne.s32.totalorder %s384, %s398
      %p400 = scmp.eq.s32.totalorder %s44, 0
      %p401 = por %p399, %p400
      %s403 = sadd.s32 %s402, 1
      %p406 = scmp.eq.s32.totalorder %s38, 1
      %p407 = scmp.ne.s32.totalorder %s402, %s404
      %p408 = scmp.eq.s32.totalorder %s38, 0
      %p409 = por %p407, %p408
      %p410 = scmp.ne.s32.totalorder %s402, %s404
      %p411 = scmp.eq.s32.totalorder %s43, 1
      %p412 = por %p410, %p411
      %p413 = scmp.ne.s32.totalorder %s404, %s405
      %p414 = scmp.eq.s32.totalorder %s43, 0
      %p415 = por %p413, %p414
      %p416 = scmp.ne.s32.totalorder %s404, %s405
      %p417 = scmp.eq.s32.totalorder %s44, 1
      %p418 = por %p416, %p417
      %p420 = scmp.ne.s32.totalorder %s405, %s419
      %p421 = scmp.eq.s32.totalorder %s44, 0
      %p422 = por %p420, %p421
      %s423 = ssub.s32 %s38, %s45
      %p424 = scmp.eq.s32.totalorder %s423, 0
      %s426 = sadd.s32 %s425, 1
      %s427 = scalar_select %p424, %s425, %s426
      %p430 = pneg %p424
      %p431 = scmp.eq.s32.totalorder %s38, 1
      %p432 = por %p430, %p431
      %p433 = scmp.ne.s32.totalorder %s425, %s428
      %p434 = scmp.eq.s32.totalorder %s38, 0
      %p435 = por %p433, %p434
      %p436 = scmp.ne.s32.totalorder %s425, %s428
      %p437 = scmp.eq.s32.totalorder %s43, 1
      %p438 = por %p436, %p437
      %p439 = scmp.ne.s32.totalorder %s428, %s429
      %p440 = scmp.eq.s32.totalorder %s43, 0
      %p441 = por %p439, %p440
      %p442 = scmp.ne.s32.totalorder %s428, %s429
      %p443 = scmp.eq.s32.totalorder %s44, 1
      %p444 = por %p442, %p443
      %p446 = scmp.ne.s32.totalorder %s429, %s445
      %p447 = scmp.eq.s32.totalorder %s44, 0
      %p448 = por %p446, %p447
      %p449 = scmp.le.s32.totalorder 1, %s38
      %p450 = scmp.lt.s32.totalorder %s38, 3
      %p451 = pnand %p449, %p450
      %p452 = pneg %p451
      // Predicated region
      $region9: #{tpu_custom_call.1} parent=5 // pred_check
        _
      $region10: #{tpu_custom_call.1} parent=5 // pred_check_branch
        %454 = sbr.rel (%p451) target = $region12
      $region11: #{tpu_custom_call.1} parent=5 // pred_region
        %s455 = ssub.s32 %s38, 1
        // Predicated region
        $region13: #{tpu_custom_call.1} parent=11 // pred_check
          %p456 = pneg %p163
        $region14: #{tpu_custom_call.1} parent=11 // pred_check_branch
          %458 = sbr.rel (%p456) target = $region16
        $region15: #{tpu_custom_call.1} parent=11 // pred_region
          %460 = vsyncadd [#allocation9], 0
          %s461 = sshll.u32 %s4, 4
          %s462 = int_to_ptr.hbm [resolvable:$true] %s461
          %s463 = sshll.u32 [#allocation10], 4
          %s464 = int_to_ptr.vmem [resolvable:$true] %s463
          %469 = dma.hbm_to_vmem [thread:$0]  %s462, 2048, %s464, [#allocation9], 128, 128, 8
        $region16: #{tpu_custom_call.1} parent=11 // pred_fallthru
          _
        // Predicated region
        $region17: #{tpu_custom_call.1} parent=11 // pred_check
          %p470 = pneg %p184
        $region18: #{tpu_custom_call.1} parent=11 // pred_check_branch
          %472 = sbr.rel (%p470) target = $region20
        $region19: #{tpu_custom_call.1} parent=11 // pred_region
          %474 = vsyncadd [#allocation12], 0
          %s475 = sshll.u32 %s5, 4
          %s476 = int_to_ptr.hbm [resolvable:$true] %s475
          %s477 = sshll.u32 [#allocation11], 4
          %s478 = int_to_ptr.vmem [resolvable:$true] %s477
          %483 = dma.hbm_to_vmem [thread:$0]  %s476, 2048, %s478, [#allocation12], 128, 128, 8
        $region20: #{tpu_custom_call.1} parent=11 // pred_fallthru
          _
        // Predicated region
        $region21: #{tpu_custom_call.1} parent=11 // pred_check
          %p484 = pneg %p205
        $region22: #{tpu_custom_call.1} parent=11 // pred_check_branch
          %486 = sbr.rel (%p484) target = $region24
        $region23: #{tpu_custom_call.1} parent=11 // pred_region
          %488 = vsyncadd [#allocation12], 0
          %s489 = sshll.u32 %s6, 4
          %s490 = int_to_ptr.hbm [resolvable:$true] %s489
          %s491 = sshll.u32 [#allocation13], 4
          %s492 = int_to_ptr.vmem [resolvable:$true] %s491
          %497 = dma.hbm_to_vmem [thread:$0]  %s490, 2048, %s492, [#allocation12], 128, 128, 8
        $region24: #{tpu_custom_call.1} parent=11 // pred_fallthru
          _
        // Predicated region
        $region25: #{tpu_custom_call.1} parent=11 // pred_check
          %p498 = pneg %p226
        $region26: #{tpu_custom_call.1} parent=11 // pred_check_branch
          %500 = sbr.rel (%p498) target = $region28
        $region27: #{tpu_custom_call.1} parent=11 // pred_region
          %502 = vsyncadd [#allocation15], 0
          %s503 = sshll.u32 %s7, 4
          %s504 = int_to_ptr.hbm [resolvable:$true] %s503
          %s505 = sshll.u32 [#allocation14], 4
          %s506 = int_to_ptr.vmem [resolvable:$true] %s505
          %511 = dma.hbm_to_vmem [thread:$0]  %s504, 2048, %s506, [#allocation15], 128, 128, 8
        $region28: #{tpu_custom_call.1} parent=11 // pred_fallthru
          _
        // Predicated region
        $region29: #{tpu_custom_call.1} parent=11 // pred_check
          %p512 = pneg %p247
        $region30: #{tpu_custom_call.1} parent=11 // pred_check_branch
          %514 = sbr.rel (%p512) target = $region32
        $region31: #{tpu_custom_call.1} parent=11 // pred_region
          _
        $region32: #{tpu_custom_call.1} parent=11 // pred_fallthru
          _
        // Predicated region
        $region33: #{tpu_custom_call.1} parent=11 // pred_check
          %p515 = pneg %p268
        $region34: #{tpu_custom_call.1} parent=11 // pred_check_branch
          %517 = sbr.rel (%p515) target = $region36
        $region35: #{tpu_custom_call.1} parent=11 // pred_region
          _
        $region36: #{tpu_custom_call.1} parent=11 // pred_fallthru
          _
        // Predicated region
        $region37: #{tpu_custom_call.1} parent=11 // pred_check
          %p518 = pneg %p289
        $region38: #{tpu_custom_call.1} parent=11 // pred_check_branch
          %520 = sbr.rel (%p518) target = $region40
        $region39: #{tpu_custom_call.1} parent=11 // pred_region
          _
        $region40: #{tpu_custom_call.1} parent=11 // pred_fallthru
          _
        // Predicated region
        $region41: #{tpu_custom_call.1} parent=11 // pred_check
          %p521 = pneg %p310
        $region42: #{tpu_custom_call.1} parent=11 // pred_check_branch
          %523 = sbr.rel (%p521) target = $region44
        $region43: #{tpu_custom_call.1} parent=11 // pred_region
          %525 = vsyncadd [#allocation15], 0
          %s526 = sshll.u32 %s11, 4
          %s527 = int_to_ptr.hbm [resolvable:$true] %s526
          %s528 = sshll.u32 [#allocation16], 4
          %s529 = int_to_ptr.vmem [resolvable:$true] %s528
          %534 = dma.hbm_to_vmem [thread:$0]  %s527, 8192, %s529, [#allocation15], 512, 512, 32
        $region44: #{tpu_custom_call.1} parent=11 // pred_fallthru
          _
        // Predicated region
        $region45: #{tpu_custom_call.1} parent=11 // pred_check
          %p535 = pneg %p331
        $region46: #{tpu_custom_call.1} parent=11 // pred_check_branch
          %537 = sbr.rel (%p535) target = $region48
        $region47: #{tpu_custom_call.1} parent=11 // pred_region
          _
        $region48: #{tpu_custom_call.1} parent=11 // pred_fallthru
          _
        // Predicated region
        $region49: #{tpu_custom_call.1} parent=11 // pred_check
          %p538 = pneg %p352
        $region50: #{tpu_custom_call.1} parent=11 // pred_check_branch
          %540 = sbr.rel (%p538) target = $region52
        $region51: #{tpu_custom_call.1} parent=11 // pred_region
          %542 = vsyncadd [#allocation18], 0
          %s543 = sshll.u32 %s13, 4
          %s544 = int_to_ptr.hbm [resolvable:$true] %s543
          %s545 = sshll.u32 [#allocation17], 4
          %s546 = int_to_ptr.vmem [resolvable:$true] %s545
          %551 = dma.hbm_to_vmem [thread:$0]  %s544, 8192, %s546, [#allocation18], 128, 128, 8
        $region52: #{tpu_custom_call.1} parent=11 // pred_fallthru
          _
        // Predicated region
        $region53: #{tpu_custom_call.1} parent=11 // pred_check
          %p552 = pneg %p373
        $region54: #{tpu_custom_call.1} parent=11 // pred_check_branch
          %554 = sbr.rel (%p552) target = $region56
        $region55: #{tpu_custom_call.1} parent=11 // pred_region
          _
        $region56: #{tpu_custom_call.1} parent=11 // pred_fallthru
          _
        // Predicated region
        $region57: #{tpu_custom_call.1} parent=11 // pred_check
          %p555 = pneg %p394
        $region58: #{tpu_custom_call.1} parent=11 // pred_check_branch
          %557 = sbr.rel (%p555) target = $region60
        $region59: #{tpu_custom_call.1} parent=11 // pred_region
          _
        $region60: #{tpu_custom_call.1} parent=11 // pred_fallthru
          _
        // Predicated region
        $region61: #{tpu_custom_call.1} parent=11 // pred_check
          %p558 = pneg %p415
        $region62: #{tpu_custom_call.1} parent=11 // pred_check_branch
          %560 = sbr.rel (%p558) target = $region64
        $region63: #{tpu_custom_call.1} parent=11 // pred_region
          _
        $region64: #{tpu_custom_call.1} parent=11 // pred_fallthru
          _
      $region12: #{tpu_custom_call.1} parent=5 // pred_fallthru
        _
      %p561 = scmp.lt.s32.totalorder %s38, 2
      // Predicated region
      $region65: #{tpu_custom_call.1} parent=5 // pred_check
        %p562 = pneg %p561
      $region66: #{tpu_custom_call.1} parent=5 // pred_check_branch
        %564 = sbr.rel (%p562) target = $region68
      $region67: #{tpu_custom_call.1} parent=5 // pred_region
        // Predicated region
        $region69: #{tpu_custom_call.1} parent=67 // pred_check
          %p565 = pneg %p58
        $region70: #{tpu_custom_call.1} parent=67 // pred_check_branch
          %567 = sbr.rel (%p565) target = $region72
        $region71: #{tpu_custom_call.1} parent=67 // pred_region
          %s568 = sand.u32 %s48, 1
          %s569 = scalar_lea.sflag [#allocation3], %s568
          %s570 = sand.u32 %s48, 1
          %s571 = smul.addr %s570, 8
          %s572 = scalar_lea.vmem [#allocation2], %s571
          %574 = vsyncadd %s569, 0
          %s575 = smul.addr %s38, 8
          %s576 = scalar_lea.hbm %s0, %s575
          %s578 = sshll.u32 %s576, 4
          %s579 = int_to_ptr.hbm [resolvable:$true] %s578
          %s580 = sshll.u32 %s572, 4
          %s581 = int_to_ptr.vmem [resolvable:$true] %s580
          %583 = dma.hbm_to_vmem [thread:$0]  %s579, 128, %s581, %s569
        $region72: #{tpu_custom_call.1} parent=67 // pred_fallthru
          _
        // Predicated region
        $region73: #{tpu_custom_call.1} parent=67 // pred_check
          %p584 = pneg %p84
        $region74: #{tpu_custom_call.1} parent=67 // pred_check_branch
          %586 = sbr.rel (%p584) target = $region76
        $region75: #{tpu_custom_call.1} parent=67 // pred_region
          %s587 = sand.u32 %s38, 1
          %s588 = scalar_lea.sflag [#allocation6], %s587
          %s589 = sand.u32 %s74, 1
          %s590 = smul.addr %s589, 8
          %s591 = scalar_lea.vmem [#allocation5], %s590
          %593 = vsyncadd %s588, 0
          %s594 = smul.addr %s38, 8
          %s595 = scalar_lea.hbm %s1, %s594
          %s597 = sshll.u32 %s595, 4
          %s598 = int_to_ptr.hbm [resolvable:$true] %s597
          %s599 = sshll.u32 %s591, 4
          %s600 = int_to_ptr.vmem [resolvable:$true] %s599
          %602 = dma.hbm_to_vmem [thread:$0]  %s598, 128, %s600, %s588
        $region76: #{tpu_custom_call.1} parent=67 // pred_fallthru
          _
        // Predicated region
        $region77: #{tpu_custom_call.1} parent=67 // pred_check
          %p603 = pneg %p110
        $region78: #{tpu_custom_call.1} parent=67 // pred_check_branch
          %605 = sbr.rel (%p603) target = $region80
        $region79: #{tpu_custom_call.1} parent=67 // pred_region
          %s606 = sand.u32 %s38, 1
          %s607 = scalar_lea.sflag [#allocation6], %s606
          %s608 = sand.u32 %s100, 1
          %s609 = smul.addr %s608, 8
          %s610 = scalar_lea.vmem [#allocation7], %s609
          %612 = vsyncadd %s607, 0
          %s613 = smul.addr %s38, 8
          %s614 = scalar_lea.hbm %s2, %s613
          %s616 = sshll.u32 %s614, 4
          %s617 = int_to_ptr.hbm [resolvable:$true] %s616
          %s618 = sshll.u32 %s610, 4
          %s619 = int_to_ptr.vmem [resolvable:$true] %s618
          %621 = dma.hbm_to_vmem [thread:$0]  %s617, 128, %s619, %s607
        $region80: #{tpu_custom_call.1} parent=67 // pred_fallthru
          _
        // Predicated region
        $region81: #{tpu_custom_call.1} parent=67 // pred_check
          %p622 = pneg %p136
        $region82: #{tpu_custom_call.1} parent=67 // pred_check_branch
          %624 = sbr.rel (%p622) target = $region84
        $region83: #{tpu_custom_call.1} parent=67 // pred_region
          %s625 = sand.u32 %s38, 1
          %s626 = scalar_lea.sflag [#allocation9], %s625
          %s627 = sand.u32 %s126, 1
          %s628 = smul.addr %s627, 8
          %s629 = scalar_lea.vmem [#allocation8], %s628
          %631 = vsyncadd %s626, 0
          %s632 = smul.addr %s38, 8
          %s633 = scalar_lea.hbm %s3, %s632
          %s635 = sshll.u32 %s633, 4
          %s636 = int_to_ptr.hbm [resolvable:$true] %s635
          %s637 = sshll.u32 %s629, 4
          %s638 = int_to_ptr.vmem [resolvable:$true] %s637
          %640 = dma.hbm_to_vmem [thread:$0]  %s636, 128, %s638, %s626
        $region84: #{tpu_custom_call.1} parent=67 // pred_fallthru
          _
      $region68: #{tpu_custom_call.1} parent=5 // pred_fallthru
        _
      %p641 = scmp.le.s32.totalorder 1, %s38
      %p642 = scmp.lt.s32.totalorder %s38, 3
      %p643 = pnand %p641, %p642
      %p644 = pneg %p643
      // Predicated region
      $region85: #{tpu_custom_call.1} parent=5 // pred_check
        _
      $region86: #{tpu_custom_call.1} parent=5 // pred_check_branch
        %646 = sbr.rel (%p643) target = $region88
      $region87: #{tpu_custom_call.1} parent=5 // pred_region
        %s647 = ssub.s32 %s38, 1
        %s648 = sand.u32 %s51, 1
        %s649 = scalar_lea.sflag [#allocation3], %s648
        %s650 = sand.u32 %s51, 1
        %s651 = smul.addr %s650, 8
        %s652 = scalar_lea.vmem [#allocation2], %s651
        // Predicated region
        $region89: #{tpu_custom_call.1} parent=87 // pred_check
          %p653 = pneg %p64
        $region90: #{tpu_custom_call.1} parent=87 // pred_check_branch
          %655 = sbr.rel (%p653) target = $region92
        $region91: #{tpu_custom_call.1} parent=87 // pred_region
          %657 = dma.done %s649, 128
        $region92: #{tpu_custom_call.1} parent=87 // pred_fallthru
          _
        %s658 = sand.u32 %s43, 1
        %s659 = scalar_lea.sflag [#allocation6], %s658
        %s660 = sand.u32 %s77, 1
        %s661 = smul.addr %s660, 8
        %s662 = scalar_lea.vmem [#allocation5], %s661
        // Predicated region
        $region93: #{tpu_custom_call.1} parent=87 // pred_check
          %p663 = pneg %p90
        $region94: #{tpu_custom_call.1} parent=87 // pred_check_branch
          %665 = sbr.rel (%p663) target = $region96
        $region95: #{tpu_custom_call.1} parent=87 // pred_region
          %667 = dma.done %s659, 128
        $region96: #{tpu_custom_call.1} parent=87 // pred_fallthru
          _
        %s668 = sand.u32 %s43, 1
        %s669 = scalar_lea.sflag [#allocation6], %s668
        %s670 = sand.u32 %s103, 1
        %s671 = smul.addr %s670, 8
        %s672 = scalar_lea.vmem [#allocation7], %s671
        // Predicated region
        $region97: #{tpu_custom_call.1} parent=87 // pred_check
          %p673 = pneg %p116
        $region98: #{tpu_custom_call.1} parent=87 // pred_check_branch
          %675 = sbr.rel (%p673) target = $region100
        $region99: #{tpu_custom_call.1} parent=87 // pred_region
          %677 = dma.done %s669, 128
        $region100: #{tpu_custom_call.1} parent=87 // pred_fallthru
          _
        %s678 = sand.u32 %s43, 1
        %s679 = scalar_lea.sflag [#allocation9], %s678
        %s680 = sand.u32 %s129, 1
        %s681 = smul.addr %s680, 8
        %s682 = scalar_lea.vmem [#allocation8], %s681
        // Predicated region
        $region101: #{tpu_custom_call.1} parent=87 // pred_check
          %p683 = pneg %p142
        $region102: #{tpu_custom_call.1} parent=87 // pred_check_branch
          %685 = sbr.rel (%p683) target = $region104
        $region103: #{tpu_custom_call.1} parent=87 // pred_region
          %687 = dma.done %s679, 128
        $region104: #{tpu_custom_call.1} parent=87 // pred_fallthru
          _
        // Predicated region
        $region105: #{tpu_custom_call.1} parent=87 // pred_check
          %p688 = pneg %p163
        $region106: #{tpu_custom_call.1} parent=87 // pred_check_branch
          %690 = sbr.rel (%p688) target = $region108
        $region107: #{tpu_custom_call.1} parent=87 // pred_region
          %692 = dma.done [#allocation9], 2048
        $region108: #{tpu_custom_call.1} parent=87 // pred_fallthru
          _
        // Predicated region
        $region109: #{tpu_custom_call.1} parent=87 // pred_check
          %p693 = pneg %p184
        $region110: #{tpu_custom_call.1} parent=87 // pred_check_branch
          %695 = sbr.rel (%p693) target = $region112
        $region111: #{tpu_custom_call.1} parent=87 // pred_region
          %697 = dma.done [#allocation12], 2048
        $region112: #{tpu_custom_call.1} parent=87 // pred_fallthru
          _
        // Predicated region
        $region113: #{tpu_custom_call.1} parent=87 // pred_check
          %p698 = pneg %p205
        $region114: #{tpu_custom_call.1} parent=87 // pred_check_branch
          %700 = sbr.rel (%p698) target = $region116
        $region115: #{tpu_custom_call.1} parent=87 // pred_region
          %702 = dma.done [#allocation12], 2048
        $region116: #{tpu_custom_call.1} parent=87 // pred_fallthru
          _
        // Predicated region
        $region117: #{tpu_custom_call.1} parent=87 // pred_check
          %p703 = pneg %p226
        $region118: #{tpu_custom_call.1} parent=87 // pred_check_branch
          %705 = sbr.rel (%p703) target = $region120
        $region119: #{tpu_custom_call.1} parent=87 // pred_region
          %707 = dma.done [#allocation15], 2048
        $region120: #{tpu_custom_call.1} parent=87 // pred_fallthru
          _
        // Predicated region
        $region121: #{tpu_custom_call.1} parent=87 // pred_check
          %p708 = pneg %p310
        $region122: #{tpu_custom_call.1} parent=87 // pred_check_branch
          %710 = sbr.rel (%p708) target = $region124
        $region123: #{tpu_custom_call.1} parent=87 // pred_region
          %712 = dma.done [#allocation15], 8192
        $region124: #{tpu_custom_call.1} parent=87 // pred_fallthru
          _
        // Predicated region
        $region125: #{tpu_custom_call.1} parent=87 // pred_check
          %p713 = pneg %p352
        $region126: #{tpu_custom_call.1} parent=87 // pred_check_branch
          %715 = sbr.rel (%p713) target = $region128
        $region127: #{tpu_custom_call.1} parent=87 // pred_region
          %717 = dma.done [#allocation18], 8192
        $region128: #{tpu_custom_call.1} parent=87 // pred_fallthru
          _
        %s718 = sand.u32 %s51, 1
        %s719 = scalar_lea.sflag [#allocation3], %s718
        %s720 = sand.u32 %s51, 1
        %s721 = smul.addr %s720, 8
        %s722 = scalar_lea.vmem [#allocation2], %s721
        %p723 = pneg %p64
        %p724 = pneg %p61
        %s725 = sand.u32 %s43, 1
        %s726 = scalar_lea.sflag [#allocation6], %s725
        %s727 = sand.u32 %s77, 1
        %s728 = smul.addr %s727, 8
        %s729 = scalar_lea.vmem [#allocation5], %s728
        %p730 = pneg %p90
        %p731 = pneg %p87
        %s732 = sand.u32 %s43, 1
        %s733 = scalar_lea.sflag [#allocation6], %s732
        %s734 = sand.u32 %s103, 1
        %s735 = smul.addr %s734, 8
        %s736 = scalar_lea.vmem [#allocation7], %s735
        %p737 = pneg %p116
        %p738 = pneg %p113
        %s739 = sand.u32 %s43, 1
        %s740 = scalar_lea.sflag [#allocation9], %s739
        %s741 = sand.u32 %s129, 1
        %s742 = smul.addr %s741, 8
        %s743 = scalar_lea.vmem [#allocation8], %s742
        %p744 = pneg %p142
        %p745 = pneg %p139
        %p746 = pneg %p163
        %p747 = pneg %p160
        %p748 = pneg %p184
        %p749 = pneg %p181
        %p750 = pneg %p205
        %p751 = pneg %p202
        %p752 = pneg %p226
        %p753 = pneg %p223
        %p754 = pneg %p247
        %p755 = pneg %p244
        %p756 = pneg %p268
        %p757 = pneg %p265
        %p758 = pneg %p289
        %p759 = pneg %p286
        %p760 = pneg %p310
        %p761 = pneg %p307
        %p762 = pneg %p331
        %p763 = pneg %p328
        %p764 = pneg %p352
        %p765 = pneg %p349
        %p766 = pneg %p373
        %p767 = pneg %p370
        %p768 = pneg %p394
        %p769 = pneg %p391
        %p770 = pneg %p415
        %p771 = pneg %p412
        %p772 = pneg %p441
        %p773 = pneg %p438
        %s774 = sand.u32 %s428, 1
        %s775 = scalar_lea.sflag [#allocation4], %s774
        %s776 = sand.u32 %s428, 1
        %s777 = smul.addr %s776, 8
        %s778 = scalar_lea.vmem [#allocation19], %s777
        %v779 = vld [vmem:[%s652] sm:$0xff]
        %v780 = vld [vmem:[%s662] sm:$0xff]
        %v781 = vld [vmem:[%s672] sm:$0xff]
        %v782 = vld [vmem:[%s682] sm:$0xff]
        %vm783 = vcmp.eq.f32.partialorder %v782, 0.0
        %v784 = vld [vmem:[#allocation10] sm:$0xff]
        %v785 = vld [vmem:[#allocation10 + $0x8] sm:$0xff]
        %v786 = vld [vmem:[#allocation10 + $0x10] sm:$0xff]
        %v787 = vld [vmem:[#allocation10 + $0x18] sm:$0xff]
        %v788 = vld [vmem:[#allocation10 + $0x20] sm:$0xff]
        %v789 = vld [vmem:[#allocation10 + $0x28] sm:$0xff]
        %v790 = vld [vmem:[#allocation10 + $0x30] sm:$0xff]
        %v791 = vld [vmem:[#allocation10 + $0x38] sm:$0xff]
        %v792 = vld [vmem:[#allocation10 + $0x40] sm:$0xff]
        %v793 = vld [vmem:[#allocation10 + $0x48] sm:$0xff]
        %v794 = vld [vmem:[#allocation10 + $0x50] sm:$0xff]
        %v795 = vld [vmem:[#allocation10 + $0x58] sm:$0xff]
        %v796 = vld [vmem:[#allocation10 + $0x60] sm:$0xff]
        %v797 = vld [vmem:[#allocation10 + $0x68] sm:$0xff]
        %v798 = vld [vmem:[#allocation10 + $0x70] sm:$0xff]
        %v799 = vld [vmem:[#allocation10 + $0x78] sm:$0xff]
        %v800 = vand.u32 %v799, 4294901760
        %801 = vmatpush.msra.mxu0 %v800
        %v802 = vand.u32 %v798, 4294901760
        %803 = vmatpush.msra.mxu0 %v802
        %v804 = vand.u32 %v797, 4294901760
        %805 = vmatpush.msra.mxu0 %v804
        %v806 = vand.u32 %v796, 4294901760
        %807 = vmatpush.msra.mxu0 %v806
        %v808 = vand.u32 %v795, 4294901760
        %809 = vmatpush.msra.mxu0 %v808
        %v810 = vand.u32 %v794, 4294901760
        %811 = vmatpush.msra.mxu0 %v810
        %v812 = vand.u32 %v793, 4294901760
        %813 = vmatpush.msra.mxu0 %v812
        %v814 = vand.u32 %v792, 4294901760
        %815 = vmatpush.msra.mxu0 %v814
        %v816 = vand.u32 %v791, 4294901760
        %817 = vmatpush.msra.mxu0 %v816
        %v818 = vand.u32 %v790, 4294901760
        %819 = vmatpush.msra.mxu0 %v818
        %v820 = vand.u32 %v789, 4294901760
        %821 = vmatpush.msra.mxu0 %v820
        %v822 = vand.u32 %v788, 4294901760
        %823 = vmatpush.msra.mxu0 %v822
        %v824 = vand.u32 %v787, 4294901760
        %825 = vmatpush.msra.mxu0 %v824
        %v826 = vand.u32 %v786, 4294901760
        %827 = vmatpush.msra.mxu0 %v826
        %v828 = vand.u32 %v785, 4294901760
        %829 = vmatpush.msra.mxu0 %v828
        %v830 = vand.u32 %v784, 4294901760
        %831 = vmatpush.msra.mxu0 %v830
        %v832 = vand.u32 %v780, 4294901760
        %v833 = vsub.f32 %v780, %v832
        %v834 = vand.u32 %v833, 4294901760
        %v835 = vsub.f32 %v833, %v834
        %v836 = vand.u32 %v835, 4294901760
        %837 = vmatmul.f32.gmra.mxu0 %v836
        %v838 = vpop.f32.mrf.mxu0
        %v839 = vadd.f32 0.0, %v838
        %840 = vdwg.mxu0
        %v841 = vand.u32 %v799, 4294901760
        %v842 = vsub.f32 %v799, %v841
        %v843 = vand.u32 %v842, 4294901760
        %v844 = vsub.f32 %v842, %v843
        %v845 = vand.u32 %v844, 4294901760
        %846 = vmatpush.msra.mxu0 %v845
        %v847 = vand.u32 %v798, 4294901760
        %v848 = vsub.f32 %v798, %v847
        %v849 = vand.u32 %v848, 4294901760
        %v850 = vsub.f32 %v848, %v849
        %v851 = vand.u32 %v850, 4294901760
        %852 = vmatpush.msra.mxu0 %v851
        %v853 = vand.u32 %v797, 4294901760
        %v854 = vsub.f32 %v797, %v853
        %v855 = vand.u32 %v854, 4294901760
        %v856 = vsub.f32 %v854, %v855
        %v857 = vand.u32 %v856, 4294901760
        %858 = vmatpush.msra.mxu0 %v857
        %v859 = vand.u32 %v796, 4294901760
        %v860 = vsub.f32 %v796, %v859
        %v861 = vand.u32 %v860, 4294901760
        %v862 = vsub.f32 %v860, %v861
        %v863 = vand.u32 %v862, 4294901760
        %864 = vmatpush.msra.mxu0 %v863
        %v865 = vand.u32 %v795, 4294901760
        %v866 = vsub.f32 %v795, %v865
        %v867 = vand.u32 %v866, 4294901760
        %v868 = vsub.f32 %v866, %v867
        %v869 = vand.u32 %v868, 4294901760
        %870 = vmatpush.msra.mxu0 %v869
        %v871 = vand.u32 %v794, 4294901760
        %v872 = vsub.f32 %v794, %v871
        %v873 = vand.u32 %v872, 4294901760
        %v874 = vsub.f32 %v872, %v873
        %v875 = vand.u32 %v874, 4294901760
        %876 = vmatpush.msra.mxu0 %v875
        %v877 = vand.u32 %v793, 4294901760
        %v878 = vsub.f32 %v793, %v877
        %v879 = vand.u32 %v878, 4294901760
        %v880 = vsub.f32 %v878, %v879
        %v881 = vand.u32 %v880, 4294901760
        %882 = vmatpush.msra.mxu0 %v881
        %v883 = vand.u32 %v792, 4294901760
        %v884 = vsub.f32 %v792, %v883
        %v885 = vand.u32 %v884, 4294901760
        %v886 = vsub.f32 %v884, %v885
        %v887 = vand.u32 %v886, 4294901760
        %888 = vmatpush.msra.mxu0 %v887
        %v889 = vand.u32 %v791, 4294901760
        %v890 = vsub.f32 %v791, %v889
        %v891 = vand.u32 %v890, 4294901760
        %v892 = vsub.f32 %v890, %v891
        %v893 = vand.u32 %v892, 4294901760
        %894 = vmatpush.msra.mxu0 %v893
        %v895 = vand.u32 %v790, 4294901760
        %v896 = vsub.f32 %v790, %v895
        %v897 = vand.u32 %v896, 4294901760
        %v898 = vsub.f32 %v896, %v897
        %v899 = vand.u32 %v898, 4294901760
        %900 = vmatpush.msra.mxu0 %v899
        %v901 = vand.u32 %v789, 4294901760
        %v902 = vsub.f32 %v789, %v901
        %v903 = vand.u32 %v902, 4294901760
        %v904 = vsub.f32 %v902, %v903
        %v905 = vand.u32 %v904, 4294901760
        %906 = vmatpush.msra.mxu0 %v905
        %v907 = vand.u32 %v788, 4294901760
        %v908 = vsub.f32 %v788, %v907
        %v909 = vand.u32 %v908, 4294901760
        %v910 = vsub.f32 %v908, %v909
        %v911 = vand.u32 %v910, 4294901760
        %912 = vmatpush.msra.mxu0 %v911
        %v913 = vand.u32 %v787, 4294901760
        %v914 = vsub.f32 %v787, %v913
        %v915 = vand.u32 %v914, 4294901760
        %v916 = vsub.f32 %v914, %v915
        %v917 = vand.u32 %v916, 4294901760
        %918 = vmatpush.msra.mxu0 %v917
        %v919 = vand.u32 %v786, 4294901760
        %v920 = vsub.f32 %v786, %v919
        %v921 = vand.u32 %v920, 4294901760
        %v922 = vsub.f32 %v920, %v921
        %v923 = vand.u32 %v922, 4294901760
        %924 = vmatpush.msra.mxu0 %v923
        %v925 = vand.u32 %v785, 4294901760
        %v926 = vsub.f32 %v785, %v925
        %v927 = vand.u32 %v926, 4294901760
        %v928 = vsub.f32 %v926, %v927
        %v929 = vand.u32 %v928, 4294901760
        %930 = vmatpush.msra.mxu0 %v929
        %v931 = vand.u32 %v784, 4294901760
        %v932 = vsub.f32 %v784, %v931
        %v933 = vand.u32 %v932, 4294901760
        %v934 = vsub.f32 %v932, %v933
        %v935 = vand.u32 %v934, 4294901760
        %936 = vmatpush.msra.mxu0 %v935
        %v937 = vand.u32 %v780, 4294901760
        %938 = vmatmul.f32.gmra.mxu0 %v937
        %v939 = vpop.f32.mrf.mxu0
        %v940 = vadd.f32 %v839, %v939
        %941 = vdwg.mxu0
        %v942 = vand.u32 %v799, 4294901760
        %v943 = vsub.f32 %v799, %v942
        %944 = vmatpush.msra.mxu0 %v943
        %v945 = vand.u32 %v798, 4294901760
        %v946 = vsub.f32 %v798, %v945
        %947 = vmatpush.msra.mxu0 %v946
        %v948 = vand.u32 %v797, 4294901760
        %v949 = vsub.f32 %v797, %v948
        %950 = vmatpush.msra.mxu0 %v949
        %v951 = vand.u32 %v796, 4294901760
        %v952 = vsub.f32 %v796, %v951
        %953 = vmatpush.msra.mxu0 %v952
        %v954 = vand.u32 %v795, 4294901760
        %v955 = vsub.f32 %v795, %v954
        %956 = vmatpush.msra.mxu0 %v955
        %v957 = vand.u32 %v794, 4294901760
        %v958 = vsub.f32 %v794, %v957
        %959 = vmatpush.msra.mxu0 %v958
        %v960 = vand.u32 %v793, 4294901760
        %v961 = vsub.f32 %v793, %v960
        %962 = vmatpush.msra.mxu0 %v961
        %v963 = vand.u32 %v792, 4294901760
        %v964 = vsub.f32 %v792, %v963
        %965 = vmatpush.msra.mxu0 %v964
        %v966 = vand.u32 %v791, 4294901760
        %v967 = vsub.f32 %v791, %v966
        %968 = vmatpush.msra.mxu0 %v967
        %v969 = vand.u32 %v790, 4294901760
        %v970 = vsub.f32 %v790, %v969
        %971 = vmatpush.msra.mxu0 %v970
        %v972 = vand.u32 %v789, 4294901760
        %v973 = vsub.f32 %v789, %v972
        %974 = vmatpush.msra.mxu0 %v973
        %v975 = vand.u32 %v788, 4294901760
        %v976 = vsub.f32 %v788, %v975
        %977 = vmatpush.msra.mxu0 %v976
        %v978 = vand.u32 %v787, 4294901760
        %v979 = vsub.f32 %v787, %v978
        %980 = vmatpush.msra.mxu0 %v979
        %v981 = vand.u32 %v786, 4294901760
        %v982 = vsub.f32 %v786, %v981
        %983 = vmatpush.msra.mxu0 %v982
        %v984 = vand.u32 %v785, 4294901760
        %v985 = vsub.f32 %v785, %v984
        %986 = vmatpush.msra.mxu0 %v985
        %v987 = vand.u32 %v784, 4294901760
        %v988 = vsub.f32 %v784, %v987
        %989 = vmatpush.msra.mxu0 %v988
        %v990 = vand.u32 %v780, 4294901760
        %v991 = vsub.f32 %v780, %v990
        %992 = vmatmul.f32.gmra.mxu0 %v991
        %v993 = vpop.f32.mrf.mxu0
        %v994 = vadd.f32 %v940, %v993
        %995 = vdwg.mxu0
        %v996 = vand.u32 %v799, 4294901760
        %997 = vmatpush.msra.mxu0 %v996
        %v998 = vand.u32 %v798, 4294901760
        %999 = vmatpush.msra.mxu0 %v998
        %v1000 = vand.u32 %v797, 4294901760
        %1001 = vmatpush.msra.mxu0 %v1000
        %v1002 = vand.u32 %v796, 4294901760
        %1003 = vmatpush.msra.mxu0 %v1002
        %v1004 = vand.u32 %v795, 4294901760
        %1005 = vmatpush.msra.mxu0 %v1004
        %v1006 = vand.u32 %v794, 4294901760
        %1007 = vmatpush.msra.mxu0 %v1006
        %v1008 = vand.u32 %v793, 4294901760
        %1009 = vmatpush.msra.mxu0 %v1008
        %v1010 = vand.u32 %v792, 4294901760
        %1011 = vmatpush.msra.mxu0 %v1010
        %v1012 = vand.u32 %v791, 4294901760
        %1013 = vmatpush.msra.mxu0 %v1012
        %v1014 = vand.u32 %v790, 4294901760
        %1015 = vmatpush.msra.mxu0 %v1014
        %v1016 = vand.u32 %v789, 4294901760
        %1017 = vmatpush.msra.mxu0 %v1016
        %v1018 = vand.u32 %v788, 4294901760
        %1019 = vmatpush.msra.mxu0 %v1018
        %v1020 = vand.u32 %v787, 4294901760
        %1021 = vmatpush.msra.mxu0 %v1020
        %v1022 = vand.u32 %v786, 4294901760
        %1023 = vmatpush.msra.mxu0 %v1022
        %v1024 = vand.u32 %v785, 4294901760
        %1025 = vmatpush.msra.mxu0 %v1024
        %v1026 = vand.u32 %v784, 4294901760
        %1027 = vmatpush.msra.mxu0 %v1026
        %v1028 = vand.u32 %v780, 4294901760
        %v1029 = vsub.f32 %v780, %v1028
        %v1030 = vand.u32 %v1029, 4294901760
        %1031 = vmatmul.f32.gmra.mxu0 %v1030
        %v1032 = vpop.f32.mrf.mxu0
        %v1033 = vadd.f32 %v994, %v1032
        %1034 = vdwg.mxu0
        %v1035 = vand.u32 %v799, 4294901760
        %v1036 = vsub.f32 %v799, %v1035
        %v1037 = vand.u32 %v1036, 4294901760
        %1038 = vmatpush.msra.mxu0 %v1037
        %v1039 = vand.u32 %v798, 4294901760
        %v1040 = vsub.f32 %v798, %v1039
        %v1041 = vand.u32 %v1040, 4294901760
        %1042 = vmatpush.msra.mxu0 %v1041
        %v1043 = vand.u32 %v797, 4294901760
        %v1044 = vsub.f32 %v797, %v1043
        %v1045 = vand.u32 %v1044, 4294901760
        %1046 = vmatpush.msra.mxu0 %v1045
        %v1047 = vand.u32 %v796, 4294901760
        %v1048 = vsub.f32 %v796, %v1047
        %v1049 = vand.u32 %v1048, 4294901760
        %1050 = vmatpush.msra.mxu0 %v1049
        %v1051 = vand.u32 %v795, 4294901760
        %v1052 = vsub.f32 %v795, %v1051
        %v1053 = vand.u32 %v1052, 4294901760
        %1054 = vmatpush.msra.mxu0 %v1053
        %v1055 = vand.u32 %v794, 4294901760
        %v1056 = vsub.f32 %v794, %v1055
        %v1057 = vand.u32 %v1056, 4294901760
        %1058 = vmatpush.msra.mxu0 %v1057
        %v1059 = vand.u32 %v793, 4294901760
        %v1060 = vsub.f32 %v793, %v1059
        %v1061 = vand.u32 %v1060, 4294901760
        %1062 = vmatpush.msra.mxu0 %v1061
        %v1063 = vand.u32 %v792, 4294901760
        %v1064 = vsub.f32 %v792, %v1063
        %v1065 = vand.u32 %v1064, 4294901760
        %1066 = vmatpush.msra.mxu0 %v1065
        %v1067 = vand.u32 %v791, 4294901760
        %v1068 = vsub.f32 %v791, %v1067
        %v1069 = vand.u32 %v1068, 4294901760
        %1070 = vmatpush.msra.mxu0 %v1069
        %v1071 = vand.u32 %v790, 4294901760
        %v1072 = vsub.f32 %v790, %v1071
        %v1073 = vand.u32 %v1072, 4294901760
        %1074 = vmatpush.msra.mxu0 %v1073
        %v1075 = vand.u32 %v789, 4294901760
        %v1076 = vsub.f32 %v789, %v1075
        %v1077 = vand.u32 %v1076, 4294901760
        %1078 = vmatpush.msra.mxu0 %v1077
        %v1079 = vand.u32 %v788, 4294901760
        %v1080 = vsub.f32 %v788, %v1079
        %v1081 = vand.u32 %v1080, 4294901760
        %1082 = vmatpush.msra.mxu0 %v1081
        %v1083 = vand.u32 %v787, 4294901760
        %v1084 = vsub.f32 %v787, %v1083
        %v1085 = vand.u32 %v1084, 4294901760
        %1086 = vmatpush.msra.mxu0 %v1085
        %v1087 = vand.u32 %v786, 4294901760
        %v1088 = vsub.f32 %v786, %v1087
        %v1089 = vand.u32 %v1088, 4294901760
        %1090 = vmatpush.msra.mxu0 %v1089
        %v1091 = vand.u32 %v785, 4294901760
        %v1092 = vsub.f32 %v785, %v1091
        %v1093 = vand.u32 %v1092, 4294901760
        %1094 = vmatpush.msra.mxu0 %v1093
        %v1095 = vand.u32 %v784, 4294901760
        %v1096 = vsub.f32 %v784, %v1095
        %v1097 = vand.u32 %v1096, 4294901760
        %1098 = vmatpush.msra.mxu0 %v1097
        %v1099 = vand.u32 %v780, 4294901760
        %1100 = vmatmul.f32.gmra.mxu0 %v1099
        %v1101 = vpop.f32.mrf.mxu0
        %v1102 = vadd.f32 %v1033, %v1101
        %1103 = vdwg.mxu0
        %v1104 = vand.u32 %v799, 4294901760
        %1105 = vmatpush.msra.mxu0 %v1104
        %v1106 = vand.u32 %v798, 4294901760
        %1107 = vmatpush.msra.mxu0 %v1106
        %v1108 = vand.u32 %v797, 4294901760
        %1109 = vmatpush.msra.mxu0 %v1108
        %v1110 = vand.u32 %v796, 4294901760
        %1111 = vmatpush.msra.mxu0 %v1110
        %v1112 = vand.u32 %v795, 4294901760
        %1113 = vmatpush.msra.mxu0 %v1112
        %v1114 = vand.u32 %v794, 4294901760
        %1115 = vmatpush.msra.mxu0 %v1114
        %v1116 = vand.u32 %v793, 4294901760
        %1117 = vmatpush.msra.mxu0 %v1116
        %v1118 = vand.u32 %v792, 4294901760
        %1119 = vmatpush.msra.mxu0 %v1118
        %v1120 = vand.u32 %v791, 4294901760
        %1121 = vmatpush.msra.mxu0 %v1120
        %v1122 = vand.u32 %v790, 4294901760
        %1123 = vmatpush.msra.mxu0 %v1122
        %v1124 = vand.u32 %v789, 4294901760
        %1125 = vmatpush.msra.mxu0 %v1124
        %v1126 = vand.u32 %v788, 4294901760
        %1127 = vmatpush.msra.mxu0 %v1126
        %v1128 = vand.u32 %v787, 4294901760
        %1129 = vmatpush.msra.mxu0 %v1128
        %v1130 = vand.u32 %v786, 4294901760
        %1131 = vmatpush.msra.mxu0 %v1130
        %v1132 = vand.u32 %v785, 4294901760
        %1133 = vmatpush.msra.mxu0 %v1132
        %v1134 = vand.u32 %v784, 4294901760
        %1135 = vmatpush.msra.mxu0 %v1134
        %v1136 = vand.u32 %v780, 4294901760
        %1137 = vmatmul.f32.gmra.mxu0 %v1136
        %v1138 = vpop.f32.mrf.mxu0
        %v1139 = vadd.f32 %v1102, %v1138
        %1140 = vdwg.mxu0
        %v1141 = vmul.f32 %v1139, 0.088388346
        %v1142 = vld [vmem:[#allocation11] sm:$0xff]
        %v1143 = vld [vmem:[#allocation11 + $0x8] sm:$0xff]
        %v1144 = vld [vmem:[#allocation11 + $0x10] sm:$0xff]
        %v1145 = vld [vmem:[#allocation11 + $0x18] sm:$0xff]
        %v1146 = vld [vmem:[#allocation11 + $0x20] sm:$0xff]
        %v1147 = vld [vmem:[#allocation11 + $0x28] sm:$0xff]
        %v1148 = vld [vmem:[#allocation11 + $0x30] sm:$0xff]
        %v1149 = vld [vmem:[#allocation11 + $0x38] sm:$0xff]
        %v1150 = vld [vmem:[#allocation11 + $0x40] sm:$0xff]
        %v1151 = vld [vmem:[#allocation11 + $0x48] sm:$0xff]
        %v1152 = vld [vmem:[#allocation11 + $0x50] sm:$0xff]
        %v1153 = vld [vmem:[#allocation11 + $0x58] sm:$0xff]
        %v1154 = vld [vmem:[#allocation11 + $0x60] sm:$0xff]
        %v1155 = vld [vmem:[#allocation11 + $0x68] sm:$0xff]
        %v1156 = vld [vmem:[#allocation11 + $0x70] sm:$0xff]
        %v1157 = vld [vmem:[#allocation11 + $0x78] sm:$0xff]
        %v1158 = vand.u32 %v1157, 4294901760
        %1159 = vmatpush.msra.mxu0 %v1158
        %v1160 = vand.u32 %v1156, 4294901760
        %1161 = vmatpush.msra.mxu0 %v1160
        %v1162 = vand.u32 %v1155, 4294901760
        %1163 = vmatpush.msra.mxu0 %v1162
        %v1164 = vand.u32 %v1154, 4294901760
        %1165 = vmatpush.msra.mxu0 %v1164
        %v1166 = vand.u32 %v1153, 4294901760
        %1167 = vmatpush.msra.mxu0 %v1166
        %v1168 = vand.u32 %v1152, 4294901760
        %1169 = vmatpush.msra.mxu0 %v1168
        %v1170 = vand.u32 %v1151, 4294901760
        %1171 = vmatpush.msra.mxu0 %v1170
        %v1172 = vand.u32 %v1150, 4294901760
        %1173 = vmatpush.msra.mxu0 %v1172
        %v1174 = vand.u32 %v1149, 4294901760
        %1175 = vmatpush.msra.mxu0 %v1174
        %v1176 = vand.u32 %v1148, 4294901760
        %1177 = vmatpush.msra.mxu0 %v1176
        %v1178 = vand.u32 %v1147, 4294901760
        %1179 = vmatpush.msra.mxu0 %v1178
        %v1180 = vand.u32 %v1146, 4294901760
        %1181 = vmatpush.msra.mxu0 %v1180
        %v1182 = vand.u32 %v1145, 4294901760
        %1183 = vmatpush.msra.mxu0 %v1182
        %v1184 = vand.u32 %v1144, 4294901760
        %1185 = vmatpush.msra.mxu0 %v1184
        %v1186 = vand.u32 %v1143, 4294901760
        %1187 = vmatpush.msra.mxu0 %v1186
        %v1188 = vand.u32 %v1142, 4294901760
        %1189 = vmatpush.msra.mxu0 %v1188
        %v1190 = vand.u32 %v779, 4294901760
        %v1191 = vsub.f32 %v779, %v1190
        %v1192 = vand.u32 %v1191, 4294901760
        %v1193 = vsub.f32 %v1191, %v1192
        %v1194 = vand.u32 %v1193, 4294901760
        %1195 = vmatmul.f32.gmra.mxu0 %v1194
        %v1196 = vpop.f32.mrf.mxu0
        %v1197 = vadd.f32 0.0, %v1196
        %1198 = vdwg.mxu0
        %v1199 = vand.u32 %v1157, 4294901760
        %v1200 = vsub.f32 %v1157, %v1199
        %v1201 = vand.u32 %v1200, 4294901760
        %v1202 = vsub.f32 %v1200, %v1201
        %v1203 = vand.u32 %v1202, 4294901760
        %1204 = vmatpush.msra.mxu0 %v1203
        %v1205 = vand.u32 %v1156, 4294901760
        %v1206 = vsub.f32 %v1156, %v1205
        %v1207 = vand.u32 %v1206, 4294901760
        %v1208 = vsub.f32 %v1206, %v1207
        %v1209 = vand.u32 %v1208, 4294901760
        %1210 = vmatpush.msra.mxu0 %v1209
        %v1211 = vand.u32 %v1155, 4294901760
        %v1212 = vsub.f32 %v1155, %v1211
        %v1213 = vand.u32 %v1212, 4294901760
        %v1214 = vsub.f32 %v1212, %v1213
        %v1215 = vand.u32 %v1214, 4294901760
        %1216 = vmatpush.msra.mxu0 %v1215
        %v1217 = vand.u32 %v1154, 4294901760
        %v1218 = vsub.f32 %v1154, %v1217
        %v1219 = vand.u32 %v1218, 4294901760
        %v1220 = vsub.f32 %v1218, %v1219
        %v1221 = vand.u32 %v1220, 4294901760
        %1222 = vmatpush.msra.mxu0 %v1221
        %v1223 = vand.u32 %v1153, 4294901760
        %v1224 = vsub.f32 %v1153, %v1223
        %v1225 = vand.u32 %v1224, 4294901760
        %v1226 = vsub.f32 %v1224, %v1225
        %v1227 = vand.u32 %v1226, 4294901760
        %1228 = vmatpush.msra.mxu0 %v1227
        %v1229 = vand.u32 %v1152, 4294901760
        %v1230 = vsub.f32 %v1152, %v1229
        %v1231 = vand.u32 %v1230, 4294901760
        %v1232 = vsub.f32 %v1230, %v1231
        %v1233 = vand.u32 %v1232, 4294901760
        %1234 = vmatpush.msra.mxu0 %v1233
        %v1235 = vand.u32 %v1151, 4294901760
        %v1236 = vsub.f32 %v1151, %v1235
        %v1237 = vand.u32 %v1236, 4294901760
        %v1238 = vsub.f32 %v1236, %v1237
        %v1239 = vand.u32 %v1238, 4294901760
        %1240 = vmatpush.msra.mxu0 %v1239
        %v1241 = vand.u32 %v1150, 4294901760
        %v1242 = vsub.f32 %v1150, %v1241
        %v1243 = vand.u32 %v1242, 4294901760
        %v1244 = vsub.f32 %v1242, %v1243
        %v1245 = vand.u32 %v1244, 4294901760
        %1246 = vmatpush.msra.mxu0 %v1245
        %v1247 = vand.u32 %v1149, 4294901760
        %v1248 = vsub.f32 %v1149, %v1247
        %v1249 = vand.u32 %v1248, 4294901760
        %v1250 = vsub.f32 %v1248, %v1249
        %v1251 = vand.u32 %v1250, 4294901760
        %1252 = vmatpush.msra.mxu0 %v1251
        %v1253 = vand.u32 %v1148, 4294901760
        %v1254 = vsub.f32 %v1148, %v1253
        %v1255 = vand.u32 %v1254, 4294901760
        %v1256 = vsub.f32 %v1254, %v1255
        %v1257 = vand.u32 %v1256, 4294901760
        %1258 = vmatpush.msra.mxu0 %v1257
        %v1259 = vand.u32 %v1147, 4294901760
        %v1260 = vsub.f32 %v1147, %v1259
        %v1261 = vand.u32 %v1260, 4294901760
        %v1262 = vsub.f32 %v1260, %v1261
        %v1263 = vand.u32 %v1262, 4294901760
        %1264 = vmatpush.msra.mxu0 %v1263
        %v1265 = vand.u32 %v1146, 4294901760
        %v1266 = vsub.f32 %v1146, %v1265
        %v1267 = vand.u32 %v1266, 4294901760
        %v1268 = vsub.f32 %v1266, %v1267
        %v1269 = vand.u32 %v1268, 4294901760
        %1270 = vmatpush.msra.mxu0 %v1269
        %v1271 = vand.u32 %v1145, 4294901760
        %v1272 = vsub.f32 %v1145, %v1271
        %v1273 = vand.u32 %v1272, 4294901760
        %v1274 = vsub.f32 %v1272, %v1273
        %v1275 = vand.u32 %v1274, 4294901760
        %1276 = vmatpush.msra.mxu0 %v1275
        %v1277 = vand.u32 %v1144, 4294901760
        %v1278 = vsub.f32 %v1144, %v1277
        %v1279 = vand.u32 %v1278, 4294901760
        %v1280 = vsub.f32 %v1278, %v1279
        %v1281 = vand.u32 %v1280, 4294901760
        %1282 = vmatpush.msra.mxu0 %v1281
        %v1283 = vand.u32 %v1143, 4294901760
        %v1284 = vsub.f32 %v1143, %v1283
        %v1285 = vand.u32 %v1284, 4294901760
        %v1286 = vsub.f32 %v1284, %v1285
        %v1287 = vand.u32 %v1286, 4294901760
        %1288 = vmatpush.msra.mxu0 %v1287
        %v1289 = vand.u32 %v1142, 4294901760
        %v1290 = vsub.f32 %v1142, %v1289
        %v1291 = vand.u32 %v1290, 4294901760
        %v1292 = vsub.f32 %v1290, %v1291
        %v1293 = vand.u32 %v1292, 4294901760
        %1294 = vmatpush.msra.mxu0 %v1293
        %v1295 = vand.u32 %v779, 4294901760
        %1296 = vmatmul.f32.gmra.mxu0 %v1295
        %v1297 = vpop.f32.mrf.mxu0
        %v1298 = vadd.f32 %v1197, %v1297
        %1299 = vdwg.mxu0
        %v1300 = vand.u32 %v1157, 4294901760
        %v1301 = vsub.f32 %v1157, %v1300
        %1302 = vmatpush.msra.mxu0 %v1301
        %v1303 = vand.u32 %v1156, 4294901760
        %v1304 = vsub.f32 %v1156, %v1303
        %1305 = vmatpush.msra.mxu0 %v1304
        %v1306 = vand.u32 %v1155, 4294901760
        %v1307 = vsub.f32 %v1155, %v1306
        %1308 = vmatpush.msra.mxu0 %v1307
        %v1309 = vand.u32 %v1154, 4294901760
        %v1310 = vsub.f32 %v1154, %v1309
        %1311 = vmatpush.msra.mxu0 %v1310
        %v1312 = vand.u32 %v1153, 4294901760
        %v1313 = vsub.f32 %v1153, %v1312
        %1314 = vmatpush.msra.mxu0 %v1313
        %v1315 = vand.u32 %v1152, 4294901760
        %v1316 = vsub.f32 %v1152, %v1315
        %1317 = vmatpush.msra.mxu0 %v1316
        %v1318 = vand.u32 %v1151, 4294901760
        %v1319 = vsub.f32 %v1151, %v1318
        %1320 = vmatpush.msra.mxu0 %v1319
        %v1321 = vand.u32 %v1150, 4294901760
        %v1322 = vsub.f32 %v1150, %v1321
        %1323 = vmatpush.msra.mxu0 %v1322
        %v1324 = vand.u32 %v1149, 4294901760
        %v1325 = vsub.f32 %v1149, %v1324
        %1326 = vmatpush.msra.mxu0 %v1325
        %v1327 = vand.u32 %v1148, 4294901760
        %v1328 = vsub.f32 %v1148, %v1327
        %1329 = vmatpush.msra.mxu0 %v1328
        %v1330 = vand.u32 %v1147, 4294901760
        %v1331 = vsub.f32 %v1147, %v1330
        %1332 = vmatpush.msra.mxu0 %v1331
        %v1333 = vand.u32 %v1146, 4294901760
        %v1334 = vsub.f32 %v1146, %v1333
        %1335 = vmatpush.msra.mxu0 %v1334
        %v1336 = vand.u32 %v1145, 4294901760
        %v1337 = vsub.f32 %v1145, %v1336
        %1338 = vmatpush.msra.mxu0 %v1337
        %v1339 = vand.u32 %v1144, 4294901760
        %v1340 = vsub.f32 %v1144, %v1339
        %1341 = vmatpush.msra.mxu0 %v1340
        %v1342 = vand.u32 %v1143, 4294901760
        %v1343 = vsub.f32 %v1143, %v1342
        %1344 = vmatpush.msra.mxu0 %v1343
        %v1345 = vand.u32 %v1142, 4294901760
        %v1346 = vsub.f32 %v1142, %v1345
        %1347 = vmatpush.msra.mxu0 %v1346
        %v1348 = vand.u32 %v779, 4294901760
        %v1349 = vsub.f32 %v779, %v1348
        %1350 = vmatmul.f32.gmra.mxu0 %v1349
        %v1351 = vpop.f32.mrf.mxu0
        %v1352 = vadd.f32 %v1298, %v1351
        %1353 = vdwg.mxu0
        %v1354 = vand.u32 %v1157, 4294901760
        %1355 = vmatpush.msra.mxu0 %v1354
        %v1356 = vand.u32 %v1156, 4294901760
        %1357 = vmatpush.msra.mxu0 %v1356
        %v1358 = vand.u32 %v1155, 4294901760
        %1359 = vmatpush.msra.mxu0 %v1358
        %v1360 = vand.u32 %v1154, 4294901760
        %1361 = vmatpush.msra.mxu0 %v1360
        %v1362 = vand.u32 %v1153, 4294901760
        %1363 = vmatpush.msra.mxu0 %v1362
        %v1364 = vand.u32 %v1152, 4294901760
        %1365 = vmatpush.msra.mxu0 %v1364
        %v1366 = vand.u32 %v1151, 4294901760
        %1367 = vmatpush.msra.mxu0 %v1366
        %v1368 = vand.u32 %v1150, 4294901760
        %1369 = vmatpush.msra.mxu0 %v1368
        %v1370 = vand.u32 %v1149, 4294901760
        %1371 = vmatpush.msra.mxu0 %v1370
        %v1372 = vand.u32 %v1148, 4294901760
        %1373 = vmatpush.msra.mxu0 %v1372
        %v1374 = vand.u32 %v1147, 4294901760
        %1375 = vmatpush.msra.mxu0 %v1374
        %v1376 = vand.u32 %v1146, 4294901760
        %1377 = vmatpush.msra.mxu0 %v1376
        %v1378 = vand.u32 %v1145, 4294901760
        %1379 = vmatpush.msra.mxu0 %v1378
        %v1380 = vand.u32 %v1144, 4294901760
        %1381 = vmatpush.msra.mxu0 %v1380
        %v1382 = vand.u32 %v1143, 4294901760
        %1383 = vmatpush.msra.mxu0 %v1382
        %v1384 = vand.u32 %v1142, 4294901760
        %1385 = vmatpush.msra.mxu0 %v1384
        %v1386 = vand.u32 %v779, 4294901760
        %v1387 = vsub.f32 %v779, %v1386
        %v1388 = vand.u32 %v1387, 4294901760
        %1389 = vmatmul.f32.gmra.mxu0 %v1388
        %v1390 = vpop.f32.mrf.mxu0
        %v1391 = vadd.f32 %v1352, %v1390
        %1392 = vdwg.mxu0
        %v1393 = vand.u32 %v1157, 4294901760
        %v1394 = vsub.f32 %v1157, %v1393
        %v1395 = vand.u32 %v1394, 4294901760
        %1396 = vmatpush.msra.mxu0 %v1395
        %v1397 = vand.u32 %v1156, 4294901760
        %v1398 = vsub.f32 %v1156, %v1397
        %v1399 = vand.u32 %v1398, 4294901760
        %1400 = vmatpush.msra.mxu0 %v1399
        %v1401 = vand.u32 %v1155, 4294901760
        %v1402 = vsub.f32 %v1155, %v1401
        %v1403 = vand.u32 %v1402, 4294901760
        %1404 = vmatpush.msra.mxu0 %v1403
        %v1405 = vand.u32 %v1154, 4294901760
        %v1406 = vsub.f32 %v1154, %v1405
        %v1407 = vand.u32 %v1406, 4294901760
        %1408 = vmatpush.msra.mxu0 %v1407
        %v1409 = vand.u32 %v1153, 4294901760
        %v1410 = vsub.f32 %v1153, %v1409
        %v1411 = vand.u32 %v1410, 4294901760
        %1412 = vmatpush.msra.mxu0 %v1411
        %v1413 = vand.u32 %v1152, 4294901760
        %v1414 = vsub.f32 %v1152, %v1413
        %v1415 = vand.u32 %v1414, 4294901760
        %1416 = vmatpush.msra.mxu0 %v1415
        %v1417 = vand.u32 %v1151, 4294901760
        %v1418 = vsub.f32 %v1151, %v1417
        %v1419 = vand.u32 %v1418, 4294901760
        %1420 = vmatpush.msra.mxu0 %v1419
        %v1421 = vand.u32 %v1150, 4294901760
        %v1422 = vsub.f32 %v1150, %v1421
        %v1423 = vand.u32 %v1422, 4294901760
        %1424 = vmatpush.msra.mxu0 %v1423
        %v1425 = vand.u32 %v1149, 4294901760
        %v1426 = vsub.f32 %v1149, %v1425
        %v1427 = vand.u32 %v1426, 4294901760
        %1428 = vmatpush.msra.mxu0 %v1427
        %v1429 = vand.u32 %v1148, 4294901760
        %v1430 = vsub.f32 %v1148, %v1429
        %v1431 = vand.u32 %v1430, 4294901760
        %1432 = vmatpush.msra.mxu0 %v1431
        %v1433 = vand.u32 %v1147, 4294901760
        %v1434 = vsub.f32 %v1147, %v1433
        %v1435 = vand.u32 %v1434, 4294901760
        %1436 = vmatpush.msra.mxu0 %v1435
        %v1437 = vand.u32 %v1146, 4294901760
        %v1438 = vsub.f32 %v1146, %v1437
        %v1439 = vand.u32 %v1438, 4294901760
        %1440 = vmatpush.msra.mxu0 %v1439
        %v1441 = vand.u32 %v1145, 4294901760
        %v1442 = vsub.f32 %v1145, %v1441
        %v1443 = vand.u32 %v1442, 4294901760
        %1444 = vmatpush.msra.mxu0 %v1443
        %v1445 = vand.u32 %v1144, 4294901760
        %v1446 = vsub.f32 %v1144, %v1445
        %v1447 = vand.u32 %v1446, 4294901760
        %1448 = vmatpush.msra.mxu0 %v1447
        %v1449 = vand.u32 %v1143, 4294901760
        %v1450 = vsub.f32 %v1143, %v1449
        %v1451 = vand.u32 %v1450, 4294901760
        %1452 = vmatpush.msra.mxu0 %v1451
        %v1453 = vand.u32 %v1142, 4294901760
        %v1454 = vsub.f32 %v1142, %v1453
        %v1455 = vand.u32 %v1454, 4294901760
        %1456 = vmatpush.msra.mxu0 %v1455
        %v1457 = vand.u32 %v779, 4294901760
        %1458 = vmatmul.f32.gmra.mxu0 %v1457
        %v1459 = vpop.f32.mrf.mxu0
        %v1460 = vadd.f32 %v1391, %v1459
        %1461 = vdwg.mxu0
        %v1462 = vand.u32 %v1157, 4294901760
        %1463 = vmatpush.msra.mxu0 %v1462
        %v1464 = vand.u32 %v1156, 4294901760
        %1465 = vmatpush.msra.mxu0 %v1464
        %v1466 = vand.u32 %v1155, 4294901760
        %1467 = vmatpush.msra.mxu0 %v1466
        %v1468 = vand.u32 %v1154, 4294901760
        %1469 = vmatpush.msra.mxu0 %v1468
        %v1470 = vand.u32 %v1153, 4294901760
        %1471 = vmatpush.msra.mxu0 %v1470
        %v1472 = vand.u32 %v1152, 4294901760
        %1473 = vmatpush.msra.mxu0 %v1472
        %v1474 = vand.u32 %v1151, 4294901760
        %1475 = vmatpush.msra.mxu0 %v1474
        %v1476 = vand.u32 %v1150, 4294901760
        %1477 = vmatpush.msra.mxu0 %v1476
        %v1478 = vand.u32 %v1149, 4294901760
        %1479 = vmatpush.msra.mxu0 %v1478
        %v1480 = vand.u32 %v1148, 4294901760
        %1481 = vmatpush.msra.mxu0 %v1480
        %v1482 = vand.u32 %v1147, 4294901760
        %1483 = vmatpush.msra.mxu0 %v1482
        %v1484 = vand.u32 %v1146, 4294901760
        %1485 = vmatpush.msra.mxu0 %v1484
        %v1486 = vand.u32 %v1145, 4294901760
        %1487 = vmatpush.msra.mxu0 %v1486
        %v1488 = vand.u32 %v1144, 4294901760
        %1489 = vmatpush.msra.mxu0 %v1488
        %v1490 = vand.u32 %v1143, 4294901760
        %1491 = vmatpush.msra.mxu0 %v1490
        %v1492 = vand.u32 %v1142, 4294901760
        %1493 = vmatpush.msra.mxu0 %v1492
        %v1494 = vand.u32 %v779, 4294901760
        %1495 = vmatmul.f32.gmra.mxu0 %v1494
        %v1496 = vpop.f32.mrf.mxu0
        %v1497 = vadd.f32 %v1460, %v1496
        %1498 = vdwg.mxu0
        %v1499 = vld [vmem:[#allocation13] sm:$0xff]
        %v1500 = vld [vmem:[#allocation13 + $0x8] sm:$0xff]
        %v1501 = vld [vmem:[#allocation13 + $0x10] sm:$0xff]
        %v1502 = vld [vmem:[#allocation13 + $0x18] sm:$0xff]
        %v1503 = vld [vmem:[#allocation13 + $0x20] sm:$0xff]
        %v1504 = vld [vmem:[#allocation13 + $0x28] sm:$0xff]
        %v1505 = vld [vmem:[#allocation13 + $0x30] sm:$0xff]
        %v1506 = vld [vmem:[#allocation13 + $0x38] sm:$0xff]
        %v1507 = vld [vmem:[#allocation13 + $0x40] sm:$0xff]
        %v1508 = vld [vmem:[#allocation13 + $0x48] sm:$0xff]
        %v1509 = vld [vmem:[#allocation13 + $0x50] sm:$0xff]
        %v1510 = vld [vmem:[#allocation13 + $0x58] sm:$0xff]
        %v1511 = vld [vmem:[#allocation13 + $0x60] sm:$0xff]
        %v1512 = vld [vmem:[#allocation13 + $0x68] sm:$0xff]
        %v1513 = vld [vmem:[#allocation13 + $0x70] sm:$0xff]
        %v1514 = vld [vmem:[#allocation13 + $0x78] sm:$0xff]
        %v1515 = vand.u32 %v1514, 4294901760
        %1516 = vmatpush.msra.mxu0 %v1515
        %v1517 = vand.u32 %v1513, 4294901760
        %1518 = vmatpush.msra.mxu0 %v1517
        %v1519 = vand.u32 %v1512, 4294901760
        %1520 = vmatpush.msra.mxu0 %v1519
        %v1521 = vand.u32 %v1511, 4294901760
        %1522 = vmatpush.msra.mxu0 %v1521
        %v1523 = vand.u32 %v1510, 4294901760
        %1524 = vmatpush.msra.mxu0 %v1523
        %v1525 = vand.u32 %v1509, 4294901760
        %1526 = vmatpush.msra.mxu0 %v1525
        %v1527 = vand.u32 %v1508, 4294901760
        %1528 = vmatpush.msra.mxu0 %v1527
        %v1529 = vand.u32 %v1507, 4294901760
        %1530 = vmatpush.msra.mxu0 %v1529
        %v1531 = vand.u32 %v1506, 4294901760
        %1532 = vmatpush.msra.mxu0 %v1531
        %v1533 = vand.u32 %v1505, 4294901760
        %1534 = vmatpush.msra.mxu0 %v1533
        %v1535 = vand.u32 %v1504, 4294901760
        %1536 = vmatpush.msra.mxu0 %v1535
        %v1537 = vand.u32 %v1503, 4294901760
        %1538 = vmatpush.msra.mxu0 %v1537
        %v1539 = vand.u32 %v1502, 4294901760
        %1540 = vmatpush.msra.mxu0 %v1539
        %v1541 = vand.u32 %v1501, 4294901760
        %1542 = vmatpush.msra.mxu0 %v1541
        %v1543 = vand.u32 %v1500, 4294901760
        %1544 = vmatpush.msra.mxu0 %v1543
        %v1545 = vand.u32 %v1499, 4294901760
        %1546 = vmatpush.msra.mxu0 %v1545
        %v1547 = vand.u32 %v781, 4294901760
        %v1548 = vsub.f32 %v781, %v1547
        %v1549 = vand.u32 %v1548, 4294901760
        %v1550 = vsub.f32 %v1548, %v1549
        %v1551 = vand.u32 %v1550, 4294901760
        %1552 = vmatmul.f32.gmra.mxu0 %v1551
        %v1553 = vpop.f32.mrf.mxu0
        %v1554 = vadd.f32 0.0, %v1553
        %1555 = vdwg.mxu0
        %v1556 = vand.u32 %v1514, 4294901760
        %v1557 = vsub.f32 %v1514, %v1556
        %v1558 = vand.u32 %v1557, 4294901760
        %v1559 = vsub.f32 %v1557, %v1558
        %v1560 = vand.u32 %v1559, 4294901760
        %1561 = vmatpush.msra.mxu0 %v1560
        %v1562 = vand.u32 %v1513, 4294901760
        %v1563 = vsub.f32 %v1513, %v1562
        %v1564 = vand.u32 %v1563, 4294901760
        %v1565 = vsub.f32 %v1563, %v1564
        %v1566 = vand.u32 %v1565, 4294901760
        %1567 = vmatpush.msra.mxu0 %v1566
        %v1568 = vand.u32 %v1512, 4294901760
        %v1569 = vsub.f32 %v1512, %v1568
        %v1570 = vand.u32 %v1569, 4294901760
        %v1571 = vsub.f32 %v1569, %v1570
        %v1572 = vand.u32 %v1571, 4294901760
        %1573 = vmatpush.msra.mxu0 %v1572
        %v1574 = vand.u32 %v1511, 4294901760
        %v1575 = vsub.f32 %v1511, %v1574
        %v1576 = vand.u32 %v1575, 4294901760
        %v1577 = vsub.f32 %v1575, %v1576
        %v1578 = vand.u32 %v1577, 4294901760
        %1579 = vmatpush.msra.mxu0 %v1578
        %v1580 = vand.u32 %v1510, 4294901760
        %v1581 = vsub.f32 %v1510, %v1580
        %v1582 = vand.u32 %v1581, 4294901760
        %v1583 = vsub.f32 %v1581, %v1582
        %v1584 = vand.u32 %v1583, 4294901760
        %1585 = vmatpush.msra.mxu0 %v1584
        %v1586 = vand.u32 %v1509, 4294901760
        %v1587 = vsub.f32 %v1509, %v1586
        %v1588 = vand.u32 %v1587, 4294901760
        %v1589 = vsub.f32 %v1587, %v1588
        %v1590 = vand.u32 %v1589, 4294901760
        %1591 = vmatpush.msra.mxu0 %v1590
        %v1592 = vand.u32 %v1508, 4294901760
        %v1593 = vsub.f32 %v1508, %v1592
        %v1594 = vand.u32 %v1593, 4294901760
        %v1595 = vsub.f32 %v1593, %v1594
        %v1596 = vand.u32 %v1595, 4294901760
        %1597 = vmatpush.msra.mxu0 %v1596
        %v1598 = vand.u32 %v1507, 4294901760
        %v1599 = vsub.f32 %v1507, %v1598
        %v1600 = vand.u32 %v1599, 4294901760
        %v1601 = vsub.f32 %v1599, %v1600
        %v1602 = vand.u32 %v1601, 4294901760
        %1603 = vmatpush.msra.mxu0 %v1602
        %v1604 = vand.u32 %v1506, 4294901760
        %v1605 = vsub.f32 %v1506, %v1604
        %v1606 = vand.u32 %v1605, 4294901760
        %v1607 = vsub.f32 %v1605, %v1606
        %v1608 = vand.u32 %v1607, 4294901760
        %1609 = vmatpush.msra.mxu0 %v1608
        %v1610 = vand.u32 %v1505, 4294901760
        %v1611 = vsub.f32 %v1505, %v1610
        %v1612 = vand.u32 %v1611, 4294901760
        %v1613 = vsub.f32 %v1611, %v1612
        %v1614 = vand.u32 %v1613, 4294901760
        %1615 = vmatpush.msra.mxu0 %v1614
        %v1616 = vand.u32 %v1504, 4294901760
        %v1617 = vsub.f32 %v1504, %v1616
        %v1618 = vand.u32 %v1617, 4294901760
        %v1619 = vsub.f32 %v1617, %v1618
        %v1620 = vand.u32 %v1619, 4294901760
        %1621 = vmatpush.msra.mxu0 %v1620
        %v1622 = vand.u32 %v1503, 4294901760
        %v1623 = vsub.f32 %v1503, %v1622
        %v1624 = vand.u32 %v1623, 4294901760
        %v1625 = vsub.f32 %v1623, %v1624
        %v1626 = vand.u32 %v1625, 4294901760
        %1627 = vmatpush.msra.mxu0 %v1626
        %v1628 = vand.u32 %v1502, 4294901760
        %v1629 = vsub.f32 %v1502, %v1628
        %v1630 = vand.u32 %v1629, 4294901760
        %v1631 = vsub.f32 %v1629, %v1630
        %v1632 = vand.u32 %v1631, 4294901760
        %1633 = vmatpush.msra.mxu0 %v1632
        %v1634 = vand.u32 %v1501, 4294901760
        %v1635 = vsub.f32 %v1501, %v1634
        %v1636 = vand.u32 %v1635, 4294901760
        %v1637 = vsub.f32 %v1635, %v1636
        %v1638 = vand.u32 %v1637, 4294901760
        %1639 = vmatpush.msra.mxu0 %v1638
        %v1640 = vand.u32 %v1500, 4294901760
        %v1641 = vsub.f32 %v1500, %v1640
        %v1642 = vand.u32 %v1641, 4294901760
        %v1643 = vsub.f32 %v1641, %v1642
        %v1644 = vand.u32 %v1643, 4294901760
        %1645 = vmatpush.msra.mxu0 %v1644
        %v1646 = vand.u32 %v1499, 4294901760
        %v1647 = vsub.f32 %v1499, %v1646
        %v1648 = vand.u32 %v1647, 4294901760
        %v1649 = vsub.f32 %v1647, %v1648
        %v1650 = vand.u32 %v1649, 4294901760
        %1651 = vmatpush.msra.mxu0 %v1650
        %v1652 = vand.u32 %v781, 4294901760
        %1653 = vmatmul.f32.gmra.mxu0 %v1652
        %v1654 = vpop.f32.mrf.mxu0
        %v1655 = vadd.f32 %v1554, %v1654
        %1656 = vdwg.mxu0
        %v1657 = vand.u32 %v1514, 4294901760
        %v1658 = vsub.f32 %v1514, %v1657
        %1659 = vmatpush.msra.mxu0 %v1658
        %v1660 = vand.u32 %v1513, 4294901760
        %v1661 = vsub.f32 %v1513, %v1660
        %1662 = vmatpush.msra.mxu0 %v1661
        %v1663 = vand.u32 %v1512, 4294901760
        %v1664 = vsub.f32 %v1512, %v1663
        %1665 = vmatpush.msra.mxu0 %v1664
        %v1666 = vand.u32 %v1511, 4294901760
        %v1667 = vsub.f32 %v1511, %v1666
        %1668 = vmatpush.msra.mxu0 %v1667
        %v1669 = vand.u32 %v1510, 4294901760
        %v1670 = vsub.f32 %v1510, %v1669
        %1671 = vmatpush.msra.mxu0 %v1670
        %v1672 = vand.u32 %v1509, 4294901760
        %v1673 = vsub.f32 %v1509, %v1672
        %1674 = vmatpush.msra.mxu0 %v1673
        %v1675 = vand.u32 %v1508, 4294901760
        %v1676 = vsub.f32 %v1508, %v1675
        %1677 = vmatpush.msra.mxu0 %v1676
        %v1678 = vand.u32 %v1507, 4294901760
        %v1679 = vsub.f32 %v1507, %v1678
        %1680 = vmatpush.msra.mxu0 %v1679
        %v1681 = vand.u32 %v1506, 4294901760
        %v1682 = vsub.f32 %v1506, %v1681
        %1683 = vmatpush.msra.mxu0 %v1682
        %v1684 = vand.u32 %v1505, 4294901760
        %v1685 = vsub.f32 %v1505, %v1684
        %1686 = vmatpush.msra.mxu0 %v1685
        %v1687 = vand.u32 %v1504, 4294901760
        %v1688 = vsub.f32 %v1504, %v1687
        %1689 = vmatpush.msra.mxu0 %v1688
        %v1690 = vand.u32 %v1503, 4294901760
        %v1691 = vsub.f32 %v1503, %v1690
        %1692 = vmatpush.msra.mxu0 %v1691
        %v1693 = vand.u32 %v1502, 4294901760
        %v1694 = vsub.f32 %v1502, %v1693
        %1695 = vmatpush.msra.mxu0 %v1694
        %v1696 = vand.u32 %v1501, 4294901760
        %v1697 = vsub.f32 %v1501, %v1696
        %1698 = vmatpush.msra.mxu0 %v1697
        %v1699 = vand.u32 %v1500, 4294901760
        %v1700 = vsub.f32 %v1500, %v1699
        %1701 = vmatpush.msra.mxu0 %v1700
        %v1702 = vand.u32 %v1499, 4294901760
        %v1703 = vsub.f32 %v1499, %v1702
        %1704 = vmatpush.msra.mxu0 %v1703
        %v1705 = vand.u32 %v781, 4294901760
        %v1706 = vsub.f32 %v781, %v1705
        %1707 = vmatmul.f32.gmra.mxu0 %v1706
        %v1708 = vpop.f32.mrf.mxu0
        %v1709 = vadd.f32 %v1655, %v1708
        %1710 = vdwg.mxu0
        %v1711 = vand.u32 %v1514, 4294901760
        %1712 = vmatpush.msra.mxu0 %v1711
        %v1713 = vand.u32 %v1513, 4294901760
        %1714 = vmatpush.msra.mxu0 %v1713
        %v1715 = vand.u32 %v1512, 4294901760
        %1716 = vmatpush.msra.mxu0 %v1715
        %v1717 = vand.u32 %v1511, 4294901760
        %1718 = vmatpush.msra.mxu0 %v1717
        %v1719 = vand.u32 %v1510, 4294901760
        %1720 = vmatpush.msra.mxu0 %v1719
        %v1721 = vand.u32 %v1509, 4294901760
        %1722 = vmatpush.msra.mxu0 %v1721
        %v1723 = vand.u32 %v1508, 4294901760
        %1724 = vmatpush.msra.mxu0 %v1723
        %v1725 = vand.u32 %v1507, 4294901760
        %1726 = vmatpush.msra.mxu0 %v1725
        %v1727 = vand.u32 %v1506, 4294901760
        %1728 = vmatpush.msra.mxu0 %v1727
        %v1729 = vand.u32 %v1505, 4294901760
        %1730 = vmatpush.msra.mxu0 %v1729
        %v1731 = vand.u32 %v1504, 4294901760
        %1732 = vmatpush.msra.mxu0 %v1731
        %v1733 = vand.u32 %v1503, 4294901760
        %1734 = vmatpush.msra.mxu0 %v1733
        %v1735 = vand.u32 %v1502, 4294901760
        %1736 = vmatpush.msra.mxu0 %v1735
        %v1737 = vand.u32 %v1501, 4294901760
        %1738 = vmatpush.msra.mxu0 %v1737
        %v1739 = vand.u32 %v1500, 4294901760
        %1740 = vmatpush.msra.mxu0 %v1739
        %v1741 = vand.u32 %v1499, 4294901760
        %1742 = vmatpush.msra.mxu0 %v1741
        %v1743 = vand.u32 %v781, 4294901760
        %v1744 = vsub.f32 %v781, %v1743
        %v1745 = vand.u32 %v1744, 4294901760
        %1746 = vmatmul.f32.gmra.mxu0 %v1745
        %v1747 = vpop.f32.mrf.mxu0
        %v1748 = vadd.f32 %v1709, %v1747
        %1749 = vdwg.mxu0
        %v1750 = vand.u32 %v1514, 4294901760
        %v1751 = vsub.f32 %v1514, %v1750
        %v1752 = vand.u32 %v1751, 4294901760
        %1753 = vmatpush.msra.mxu0 %v1752
        %v1754 = vand.u32 %v1513, 4294901760
        %v1755 = vsub.f32 %v1513, %v1754
        %v1756 = vand.u32 %v1755, 4294901760
        %1757 = vmatpush.msra.mxu0 %v1756
        %v1758 = vand.u32 %v1512, 4294901760
        %v1759 = vsub.f32 %v1512, %v1758
        %v1760 = vand.u32 %v1759, 4294901760
        %1761 = vmatpush.msra.mxu0 %v1760
        %v1762 = vand.u32 %v1511, 4294901760
        %v1763 = vsub.f32 %v1511, %v1762
        %v1764 = vand.u32 %v1763, 4294901760
        %1765 = vmatpush.msra.mxu0 %v1764
        %v1766 = vand.u32 %v1510, 4294901760
        %v1767 = vsub.f32 %v1510, %v1766
        %v1768 = vand.u32 %v1767, 4294901760
        %1769 = vmatpush.msra.mxu0 %v1768
        %v1770 = vand.u32 %v1509, 4294901760
        %v1771 = vsub.f32 %v1509, %v1770
        %v1772 = vand.u32 %v1771, 4294901760
        %1773 = vmatpush.msra.mxu0 %v1772
        %v1774 = vand.u32 %v1508, 4294901760
        %v1775 = vsub.f32 %v1508, %v1774
        %v1776 = vand.u32 %v1775, 4294901760
        %1777 = vmatpush.msra.mxu0 %v1776
        %v1778 = vand.u32 %v1507, 4294901760
        %v1779 = vsub.f32 %v1507, %v1778
        %v1780 = vand.u32 %v1779, 4294901760
        %1781 = vmatpush.msra.mxu0 %v1780
        %v1782 = vand.u32 %v1506, 4294901760
        %v1783 = vsub.f32 %v1506, %v1782
        %v1784 = vand.u32 %v1783, 4294901760
        %1785 = vmatpush.msra.mxu0 %v1784
        %v1786 = vand.u32 %v1505, 4294901760
        %v1787 = vsub.f32 %v1505, %v1786
        %v1788 = vand.u32 %v1787, 4294901760
        %1789 = vmatpush.msra.mxu0 %v1788
        %v1790 = vand.u32 %v1504, 4294901760
        %v1791 = vsub.f32 %v1504, %v1790
        %v1792 = vand.u32 %v1791, 4294901760
        %1793 = vmatpush.msra.mxu0 %v1792
        %v1794 = vand.u32 %v1503, 4294901760
        %v1795 = vsub.f32 %v1503, %v1794
        %v1796 = vand.u32 %v1795, 4294901760
        %1797 = vmatpush.msra.mxu0 %v1796
        %v1798 = vand.u32 %v1502, 4294901760
        %v1799 = vsub.f32 %v1502, %v1798
        %v1800 = vand.u32 %v1799, 4294901760
        %1801 = vmatpush.msra.mxu0 %v1800
        %v1802 = vand.u32 %v1501, 4294901760
        %v1803 = vsub.f32 %v1501, %v1802
        %v1804 = vand.u32 %v1803, 4294901760
        %1805 = vmatpush.msra.mxu0 %v1804
        %v1806 = vand.u32 %v1500, 4294901760
        %v1807 = vsub.f32 %v1500, %v1806
        %v1808 = vand.u32 %v1807, 4294901760
        %1809 = vmatpush.msra.mxu0 %v1808
        %v1810 = vand.u32 %v1499, 4294901760
        %v1811 = vsub.f32 %v1499, %v1810
        %v1812 = vand.u32 %v1811, 4294901760
        %1813 = vmatpush.msra.mxu0 %v1812
        %v1814 = vand.u32 %v781, 4294901760
        %1815 = vmatmul.f32.gmra.mxu0 %v1814
        %v1816 = vpop.f32.mrf.mxu0
        %v1817 = vadd.f32 %v1748, %v1816
        %1818 = vdwg.mxu0
        %v1819 = vand.u32 %v1514, 4294901760
        %1820 = vmatpush.msra.mxu0 %v1819
        %v1821 = vand.u32 %v1513, 4294901760
        %1822 = vmatpush.msra.mxu0 %v1821
        %v1823 = vand.u32 %v1512, 4294901760
        %1824 = vmatpush.msra.mxu0 %v1823
        %v1825 = vand.u32 %v1511, 4294901760
        %1826 = vmatpush.msra.mxu0 %v1825
        %v1827 = vand.u32 %v1510, 4294901760
        %1828 = vmatpush.msra.mxu0 %v1827
        %v1829 = vand.u32 %v1509, 4294901760
        %1830 = vmatpush.msra.mxu0 %v1829
        %v1831 = vand.u32 %v1508, 4294901760
        %1832 = vmatpush.msra.mxu0 %v1831
        %v1833 = vand.u32 %v1507, 4294901760
        %1834 = vmatpush.msra.mxu0 %v1833
        %v1835 = vand.u32 %v1506, 4294901760
        %1836 = vmatpush.msra.mxu0 %v1835
        %v1837 = vand.u32 %v1505, 4294901760
        %1838 = vmatpush.msra.mxu0 %v1837
        %v1839 = vand.u32 %v1504, 4294901760
        %1840 = vmatpush.msra.mxu0 %v1839
        %v1841 = vand.u32 %v1503, 4294901760
        %1842 = vmatpush.msra.mxu0 %v1841
        %v1843 = vand.u32 %v1502, 4294901760
        %1844 = vmatpush.msra.mxu0 %v1843
        %v1845 = vand.u32 %v1501, 4294901760
        %1846 = vmatpush.msra.mxu0 %v1845
        %v1847 = vand.u32 %v1500, 4294901760
        %1848 = vmatpush.msra.mxu0 %v1847
        %v1849 = vand.u32 %v1499, 4294901760
        %1850 = vmatpush.msra.mxu0 %v1849
        %v1851 = vand.u32 %v781, 4294901760
        %1852 = vmatmul.f32.gmra.mxu0 %v1851
        %v1853 = vpop.f32.mrf.mxu0
        %v1854 = vadd.f32 %v1817, %v1853
        %1855 = vdwg.mxu0
        %v1856 = vld [vmem:[#allocation14] sm:$0xff]
        %v1857 = vld [vmem:[#allocation14 + $0x8] sm:$0xff]
        %v1858 = vld [vmem:[#allocation14 + $0x10] sm:$0xff]
        %v1859 = vld [vmem:[#allocation14 + $0x18] sm:$0xff]
        %v1860 = vld [vmem:[#allocation14 + $0x20] sm:$0xff]
        %v1861 = vld [vmem:[#allocation14 + $0x28] sm:$0xff]
        %v1862 = vld [vmem:[#allocation14 + $0x30] sm:$0xff]
        %v1863 = vld [vmem:[#allocation14 + $0x38] sm:$0xff]
        %v1864 = vld [vmem:[#allocation14 + $0x40] sm:$0xff]
        %v1865 = vld [vmem:[#allocation14 + $0x48] sm:$0xff]
        %v1866 = vld [vmem:[#allocation14 + $0x50] sm:$0xff]
        %v1867 = vld [vmem:[#allocation14 + $0x58] sm:$0xff]
        %v1868 = vld [vmem:[#allocation14 + $0x60] sm:$0xff]
        %v1869 = vld [vmem:[#allocation14 + $0x68] sm:$0xff]
        %v1870 = vld [vmem:[#allocation14 + $0x70] sm:$0xff]
        %v1871 = vld [vmem:[#allocation14 + $0x78] sm:$0xff]
        %vm1872 = vcmask 130048
        %v1874 = vsel %vm1872, %v1141, 0
        %v1877 = vsel %vm1872, %v1497, 0
        %1879 = vmatpush.xpose.msra.mxu0 0.0
        %1880 = vmatpush.xpose.msra.mxu0 0.0
        %1881 = vmatpush.xpose.msra.mxu0 0.0
        %1882 = vmatpush.xpose.msra.mxu0 0.0
        %1883 = vmatpush.xpose.msra.mxu0 0.0
        %1884 = vmatpush.xpose.msra.mxu0 0.0
        %1885 = vmatpush.xpose.msra.mxu0 0.0
        %1886 = vmatpush.xpose.msra.mxu0 0.0
        %1887 = vmatpush.xpose.msra.mxu0 0.0
        %1888 = vmatpush.xpose.msra.mxu0 0.0
        %1889 = vmatpush.xpose.msra.mxu0 0.0
        %1890 = vmatpush.xpose.msra.mxu0 0.0
        %1891 = vmatpush.xpose.msra.mxu0 0.0
        %1892 = vmatpush.xpose.msra.mxu0 0.0
        %1893 = vmatpush.xpose.msra.mxu0 0.0
        %v1894 = vand.u32 %v1877, 4294901760
        %1895 = vmatpush.xpose.msra.mxu0 %v1894
        %v1896 = vand.u32 %v1874, 4294901760
        %v1897 = vsub.f32 %v1874, %v1896
        %v1898 = vand.u32 %v1897, 4294901760
        %v1899 = vsub.f32 %v1897, %v1898
        %v1900 = vand.u32 %v1899, 4294901760
        %1901 = vmatmul.f32.gmra.mxu0 %v1900
        %v1902 = vpop.f32.mrf.mxu0
        %v1903 = vadd.f32 0.0, %v1902
        %1904 = vdwg.mxu0
        %1905 = vmatpush.xpose.msra.mxu0 0.0
        %1906 = vmatpush.xpose.msra.mxu0 0.0
        %1907 = vmatpush.xpose.msra.mxu0 0.0
        %1908 = vmatpush.xpose.msra.mxu0 0.0
        %1909 = vmatpush.xpose.msra.mxu0 0.0
        %1910 = vmatpush.xpose.msra.mxu0 0.0
        %1911 = vmatpush.xpose.msra.mxu0 0.0
        %1912 = vmatpush.xpose.msra.mxu0 0.0
        %1913 = vmatpush.xpose.msra.mxu0 0.0
        %1914 = vmatpush.xpose.msra.mxu0 0.0
        %1915 = vmatpush.xpose.msra.mxu0 0.0
        %1916 = vmatpush.xpose.msra.mxu0 0.0
        %1917 = vmatpush.xpose.msra.mxu0 0.0
        %1918 = vmatpush.xpose.msra.mxu0 0.0
        %1919 = vmatpush.xpose.msra.mxu0 0.0
        %v1920 = vand.u32 %v1877, 4294901760
        %v1921 = vsub.f32 %v1877, %v1920
        %v1922 = vand.u32 %v1921, 4294901760
        %v1923 = vsub.f32 %v1921, %v1922
        %v1924 = vand.u32 %v1923, 4294901760
        %1925 = vmatpush.xpose.msra.mxu0 %v1924
        %v1926 = vand.u32 %v1874, 4294901760
        %1927 = vmatmul.f32.gmra.mxu0 %v1926
        %v1928 = vpop.f32.mrf.mxu0
        %v1929 = vadd.f32 %v1903, %v1928
        %1930 = vdwg.mxu0
        %1931 = vmatpush.xpose.msra.mxu0 0.0
        %1932 = vmatpush.xpose.msra.mxu0 0.0
        %1933 = vmatpush.xpose.msra.mxu0 0.0
        %1934 = vmatpush.xpose.msra.mxu0 0.0
        %1935 = vmatpush.xpose.msra.mxu0 0.0
        %1936 = vmatpush.xpose.msra.mxu0 0.0
        %1937 = vmatpush.xpose.msra.mxu0 0.0
        %1938 = vmatpush.xpose.msra.mxu0 0.0
        %1939 = vmatpush.xpose.msra.mxu0 0.0
        %1940 = vmatpush.xpose.msra.mxu0 0.0
        %1941 = vmatpush.xpose.msra.mxu0 0.0
        %1942 = vmatpush.xpose.msra.mxu0 0.0
        %1943 = vmatpush.xpose.msra.mxu0 0.0
        %1944 = vmatpush.xpose.msra.mxu0 0.0
        %1945 = vmatpush.xpose.msra.mxu0 0.0
        %v1946 = vand.u32 %v1877, 4294901760
        %v1947 = vsub.f32 %v1877, %v1946
        %1948 = vmatpush.xpose.msra.mxu0 %v1947
        %v1949 = vand.u32 %v1874, 4294901760
        %v1950 = vsub.f32 %v1874, %v1949
        %1951 = vmatmul.f32.gmra.mxu0 %v1950
        %v1952 = vpop.f32.mrf.mxu0
        %v1953 = vadd.f32 %v1929, %v1952
        %1954 = vdwg.mxu0
        %1955 = vmatpush.xpose.msra.mxu0 0.0
        %1956 = vmatpush.xpose.msra.mxu0 0.0
        %1957 = vmatpush.xpose.msra.mxu0 0.0
        %1958 = vmatpush.xpose.msra.mxu0 0.0
        %1959 = vmatpush.xpose.msra.mxu0 0.0
        %1960 = vmatpush.xpose.msra.mxu0 0.0
        %1961 = vmatpush.xpose.msra.mxu0 0.0
        %1962 = vmatpush.xpose.msra.mxu0 0.0
        %1963 = vmatpush.xpose.msra.mxu0 0.0
        %1964 = vmatpush.xpose.msra.mxu0 0.0
        %1965 = vmatpush.xpose.msra.mxu0 0.0
        %1966 = vmatpush.xpose.msra.mxu0 0.0
        %1967 = vmatpush.xpose.msra.mxu0 0.0
        %1968 = vmatpush.xpose.msra.mxu0 0.0
        %1969 = vmatpush.xpose.msra.mxu0 0.0
        %v1970 = vand.u32 %v1877, 4294901760
        %1971 = vmatpush.xpose.msra.mxu0 %v1970
        %v1972 = vand.u32 %v1874, 4294901760
        %v1973 = vsub.f32 %v1874, %v1972
        %v1974 = vand.u32 %v1973, 4294901760
        %1975 = vmatmul.f32.gmra.mxu0 %v1974
        %v1976 = vpop.f32.mrf.mxu0
        %v1977 = vadd.f32 %v1953, %v1976
        %1978 = vdwg.mxu0
        %1979 = vmatpush.xpose.msra.mxu0 0.0
        %1980 = vmatpush.xpose.msra.mxu0 0.0
        %1981 = vmatpush.xpose.msra.mxu0 0.0
        %1982 = vmatpush.xpose.msra.mxu0 0.0
        %1983 = vmatpush.xpose.msra.mxu0 0.0
        %1984 = vmatpush.xpose.msra.mxu0 0.0
        %1985 = vmatpush.xpose.msra.mxu0 0.0
        %1986 = vmatpush.xpose.msra.mxu0 0.0
        %1987 = vmatpush.xpose.msra.mxu0 0.0
        %1988 = vmatpush.xpose.msra.mxu0 0.0
        %1989 = vmatpush.xpose.msra.mxu0 0.0
        %1990 = vmatpush.xpose.msra.mxu0 0.0
        %1991 = vmatpush.xpose.msra.mxu0 0.0
        %1992 = vmatpush.xpose.msra.mxu0 0.0
        %1993 = vmatpush.xpose.msra.mxu0 0.0
        %v1994 = vand.u32 %v1877, 4294901760
        %v1995 = vsub.f32 %v1877, %v1994
        %v1996 = vand.u32 %v1995, 4294901760
        %1997 = vmatpush.xpose.msra.mxu0 %v1996
        %v1998 = vand.u32 %v1874, 4294901760
        %1999 = vmatmul.f32.gmra.mxu0 %v1998
        %v2000 = vpop.f32.mrf.mxu0
        %v2001 = vadd.f32 %v1977, %v2000
        %2002 = vdwg.mxu0
        %2003 = vmatpush.xpose.msra.mxu0 0.0
        %2004 = vmatpush.xpose.msra.mxu0 0.0
        %2005 = vmatpush.xpose.msra.mxu0 0.0
        %2006 = vmatpush.xpose.msra.mxu0 0.0
        %2007 = vmatpush.xpose.msra.mxu0 0.0
        %2008 = vmatpush.xpose.msra.mxu0 0.0
        %2009 = vmatpush.xpose.msra.mxu0 0.0
        %2010 = vmatpush.xpose.msra.mxu0 0.0
        %2011 = vmatpush.xpose.msra.mxu0 0.0
        %2012 = vmatpush.xpose.msra.mxu0 0.0
        %2013 = vmatpush.xpose.msra.mxu0 0.0
        %2014 = vmatpush.xpose.msra.mxu0 0.0
        %2015 = vmatpush.xpose.msra.mxu0 0.0
        %2016 = vmatpush.xpose.msra.mxu0 0.0
        %2017 = vmatpush.xpose.msra.mxu0 0.0
        %v2018 = vand.u32 %v1877, 4294901760
        %2019 = vmatpush.xpose.msra.mxu0 %v2018
        %v2020 = vand.u32 %v1874, 4294901760
        %2021 = vmatmul.f32.gmra.mxu0 %v2020
        %v2022 = vpop.f32.mrf.mxu0
        %v2023 = vadd.f32 %v2001, %v2022
        %2024 = vdwg.mxu0
        %v2025 = vsel %vm783, -8.838835e+18, %v2023
        %vm2026 = vcmask 64512
        %v2027 = vsel %vm2026, %v2025, -inf
        %2028 = vmax.xlane.f32.xlu0 %v2027
        %v2029 = vpop.xlane.xlu0 %2028
        %v2030 = vsub.f32 %v2025, %v2029
        %v2031 = vmul.f32 %v2030, 1.442695
        %v2032 = vpow.pop %v2031
        %v2033 = vsel %vm2026, %v2032, 0.0
        %2034 = vadd.xlane.f32.xlu0 %v2033
        %v2035 = vpop.xlane.xlu0 %2034
        %v2036 = vrcp.pop %v2035
        %v2037 = vmul.f32 %v2035, %v2036
        %v2038 = vsub.f32 1.0, %v2037
        %v2039 = vmul.f32 %v2036, %v2038
        %v2040 = vadd.f32 %v2036, %v2039
        %vm2041 = vweird.f32 %v2035
        %vm2042 = vweird.f32 %v2036
        %vm2043 = vmor %vm2041, %vm2042
        %v2044 = vsel %vm2043, %v2036, %v2040
        %v2045 = vand.u32 2147483647, %v2035
        %vm2046 = vcmp.eq.f32.partialorder %v2045, 8.507059e+37
        %v2047 = vand.u32 %v2035, 2147483648
        %v2048 = vor.u32 1.1754944e-38, %v2047
        %v2049 = vsel %vm2046, %v2048, %v2044
        %v2050 = vmul.f32 %v2032, %v2049
        %v2052 = vsel %vm2026, %v2050, 0
        %2054 = vmatpush.msra.mxu0 0.0
        %2055 = vmatpush.msra.mxu0 0.0
        %2056 = vmatpush.msra.mxu0 0.0
        %2057 = vmatpush.msra.mxu0 0.0
        %2058 = vmatpush.msra.mxu0 0.0
        %2059 = vmatpush.msra.mxu0 0.0
        %2060 = vmatpush.msra.mxu0 0.0
        %2061 = vmatpush.msra.mxu0 0.0
        %2062 = vmatpush.msra.mxu0 0.0
        %2063 = vmatpush.msra.mxu0 0.0
        %2064 = vmatpush.msra.mxu0 0.0
        %2065 = vmatpush.msra.mxu0 0.0
        %2066 = vmatpush.msra.mxu0 0.0
        %2067 = vmatpush.msra.mxu0 0.0
        %2068 = vmatpush.msra.mxu0 0.0
        %v2069 = vand.u32 %v1854, 4294901760
        %2070 = vmatpush.msra.mxu0 %v2069
        %v2071 = vand.u32 %v2052, 4294901760
        %v2072 = vsub.f32 %v2052, %v2071
        %v2073 = vand.u32 %v2072, 4294901760
        %v2074 = vsub.f32 %v2072, %v2073
        %v2075 = vand.u32 %v2074, 4294901760
        %2076 = vmatmul.f32.gmra.mxu0 %v2075
        %v2077 = vpop.f32.mrf.mxu0
        %v2078 = vadd.f32 0.0, %v2077
        %2079 = vdwg.mxu0
        %2080 = vmatpush.msra.mxu0 0.0
        %2081 = vmatpush.msra.mxu0 0.0
        %2082 = vmatpush.msra.mxu0 0.0
        %2083 = vmatpush.msra.mxu0 0.0
        %2084 = vmatpush.msra.mxu0 0.0
        %2085 = vmatpush.msra.mxu0 0.0
        %2086 = vmatpush.msra.mxu0 0.0
        %2087 = vmatpush.msra.mxu0 0.0
        %2088 = vmatpush.msra.mxu0 0.0
        %2089 = vmatpush.msra.mxu0 0.0
        %2090 = vmatpush.msra.mxu0 0.0
        %2091 = vmatpush.msra.mxu0 0.0
        %2092 = vmatpush.msra.mxu0 0.0
        %2093 = vmatpush.msra.mxu0 0.0
        %2094 = vmatpush.msra.mxu0 0.0
        %v2095 = vand.u32 %v1854, 4294901760
        %v2096 = vsub.f32 %v1854, %v2095
        %v2097 = vand.u32 %v2096, 4294901760
        %v2098 = vsub.f32 %v2096, %v2097
        %v2099 = vand.u32 %v2098, 4294901760
        %2100 = vmatpush.msra.mxu0 %v2099
        %v2101 = vand.u32 %v2052, 4294901760
        %2102 = vmatmul.f32.gmra.mxu0 %v2101
        %v2103 = vpop.f32.mrf.mxu0
        %v2104 = vadd.f32 %v2078, %v2103
        %2105 = vdwg.mxu0
        %2106 = vmatpush.msra.mxu0 0.0
        %2107 = vmatpush.msra.mxu0 0.0
        %2108 = vmatpush.msra.mxu0 0.0
        %2109 = vmatpush.msra.mxu0 0.0
        %2110 = vmatpush.msra.mxu0 0.0
        %2111 = vmatpush.msra.mxu0 0.0
        %2112 = vmatpush.msra.mxu0 0.0
        %2113 = vmatpush.msra.mxu0 0.0
        %2114 = vmatpush.msra.mxu0 0.0
        %2115 = vmatpush.msra.mxu0 0.0
        %2116 = vmatpush.msra.mxu0 0.0
        %2117 = vmatpush.msra.mxu0 0.0
        %2118 = vmatpush.msra.mxu0 0.0
        %2119 = vmatpush.msra.mxu0 0.0
        %2120 = vmatpush.msra.mxu0 0.0
        %v2121 = vand.u32 %v1854, 4294901760
        %v2122 = vsub.f32 %v1854, %v2121
        %2123 = vmatpush.msra.mxu0 %v2122
        %v2124 = vand.u32 %v2052, 4294901760
        %v2125 = vsub.f32 %v2052, %v2124
        %2126 = vmatmul.f32.gmra.mxu0 %v2125
        %v2127 = vpop.f32.mrf.mxu0
        %v2128 = vadd.f32 %v2104, %v2127
        %2129 = vdwg.mxu0
        %2130 = vmatpush.msra.mxu0 0.0
        %2131 = vmatpush.msra.mxu0 0.0
        %2132 = vmatpush.msra.mxu0 0.0
        %2133 = vmatpush.msra.mxu0 0.0
        %2134 = vmatpush.msra.mxu0 0.0
        %2135 = vmatpush.msra.mxu0 0.0
        %2136 = vmatpush.msra.mxu0 0.0
        %2137 = vmatpush.msra.mxu0 0.0
        %2138 = vmatpush.msra.mxu0 0.0
        %2139 = vmatpush.msra.mxu0 0.0
        %2140 = vmatpush.msra.mxu0 0.0
        %2141 = vmatpush.msra.mxu0 0.0
        %2142 = vmatpush.msra.mxu0 0.0
        %2143 = vmatpush.msra.mxu0 0.0
        %2144 = vmatpush.msra.mxu0 0.0
        %v2145 = vand.u32 %v1854, 4294901760
        %2146 = vmatpush.msra.mxu0 %v2145
        %v2147 = vand.u32 %v2052, 4294901760
        %v2148 = vsub.f32 %v2052, %v2147
        %v2149 = vand.u32 %v2148, 4294901760
        %2150 = vmatmul.f32.gmra.mxu0 %v2149
        %v2151 = vpop.f32.mrf.mxu0
        %v2152 = vadd.f32 %v2128, %v2151
        %2153 = vdwg.mxu0
        %2154 = vmatpush.msra.mxu0 0.0
        %2155 = vmatpush.msra.mxu0 0.0
        %2156 = vmatpush.msra.mxu0 0.0
        %2157 = vmatpush.msra.mxu0 0.0
        %2158 = vmatpush.msra.mxu0 0.0
        %2159 = vmatpush.msra.mxu0 0.0
        %2160 = vmatpush.msra.mxu0 0.0
        %2161 = vmatpush.msra.mxu0 0.0
        %2162 = vmatpush.msra.mxu0 0.0
        %2163 = vmatpush.msra.mxu0 0.0
        %2164 = vmatpush.msra.mxu0 0.0
        %2165 = vmatpush.msra.mxu0 0.0
        %2166 = vmatpush.msra.mxu0 0.0
        %2167 = vmatpush.msra.mxu0 0.0
        %2168 = vmatpush.msra.mxu0 0.0
        %v2169 = vand.u32 %v1854, 4294901760
        %v2170 = vsub.f32 %v1854, %v2169
        %v2171 = vand.u32 %v2170, 4294901760
        %2172 = vmatpush.msra.mxu0 %v2171
        %v2173 = vand.u32 %v2052, 4294901760
        %2174 = vmatmul.f32.gmra.mxu0 %v2173
        %v2175 = vpop.f32.mrf.mxu0
        %v2176 = vadd.f32 %v2152, %v2175
        %2177 = vdwg.mxu0
        %2178 = vmatpush.msra.mxu0 0.0
        %2179 = vmatpush.msra.mxu0 0.0
        %2180 = vmatpush.msra.mxu0 0.0
        %2181 = vmatpush.msra.mxu0 0.0
        %2182 = vmatpush.msra.mxu0 0.0
        %2183 = vmatpush.msra.mxu0 0.0
        %2184 = vmatpush.msra.mxu0 0.0
        %2185 = vmatpush.msra.mxu0 0.0
        %2186 = vmatpush.msra.mxu0 0.0
        %2187 = vmatpush.msra.mxu0 0.0
        %2188 = vmatpush.msra.mxu0 0.0
        %2189 = vmatpush.msra.mxu0 0.0
        %2190 = vmatpush.msra.mxu0 0.0
        %2191 = vmatpush.msra.mxu0 0.0
        %2192 = vmatpush.msra.mxu0 0.0
        %v2193 = vand.u32 %v1854, 4294901760
        %2194 = vmatpush.msra.mxu0 %v2193
        %v2195 = vand.u32 %v2052, 4294901760
        %2196 = vmatmul.f32.gmra.mxu0 %v2195
        %v2197 = vpop.f32.mrf.mxu0
        %v2198 = vadd.f32 %v2176, %v2197
        %2199 = vdwg.mxu0
        %2200 = vrot.lane.b32.xlu0 %v1141, 112
        %v2201 = vpop.permute.xlu0 %2200
        %2202 = vrot.lane.b32.xlu0 %v1497, 112
        %v2203 = vpop.permute.xlu0 %2202
        %v2204 = vsel %vm1872, %v2201, 0
        %v2206 = vsel %vm1872, %v2203, 0
        %2208 = vmatpush.xpose.msra.mxu0 0.0
        %2209 = vmatpush.xpose.msra.mxu0 0.0
        %2210 = vmatpush.xpose.msra.mxu0 0.0
        %2211 = vmatpush.xpose.msra.mxu0 0.0
        %2212 = vmatpush.xpose.msra.mxu0 0.0
        %2213 = vmatpush.xpose.msra.mxu0 0.0
        %2214 = vmatpush.xpose.msra.mxu0 0.0
        %2215 = vmatpush.xpose.msra.mxu0 0.0
        %2216 = vmatpush.xpose.msra.mxu0 0.0
        %2217 = vmatpush.xpose.msra.mxu0 0.0
        %2218 = vmatpush.xpose.msra.mxu0 0.0
        %2219 = vmatpush.xpose.msra.mxu0 0.0
        %2220 = vmatpush.xpose.msra.mxu0 0.0
        %2221 = vmatpush.xpose.msra.mxu0 0.0
        %2222 = vmatpush.xpose.msra.mxu0 0.0
        %v2223 = vand.u32 %v2206, 4294901760
        %2224 = vmatpush.xpose.msra.mxu0 %v2223
        %v2225 = vand.u32 %v2204, 4294901760
        %v2226 = vsub.f32 %v2204, %v2225
        %v2227 = vand.u32 %v2226, 4294901760
        %v2228 = vsub.f32 %v2226, %v2227
        %v2229 = vand.u32 %v2228, 4294901760
        %2230 = vmatmul.f32.gmra.mxu0 %v2229
        %v2231 = vpop.f32.mrf.mxu0
        %v2232 = vadd.f32 0.0, %v2231
        %2233 = vdwg.mxu0
        %2234 = vmatpush.xpose.msra.mxu0 0.0
        %2235 = vmatpush.xpose.msra.mxu0 0.0
        %2236 = vmatpush.xpose.msra.mxu0 0.0
        %2237 = vmatpush.xpose.msra.mxu0 0.0
        %2238 = vmatpush.xpose.msra.mxu0 0.0
        %2239 = vmatpush.xpose.msra.mxu0 0.0
        %2240 = vmatpush.xpose.msra.mxu0 0.0
        %2241 = vmatpush.xpose.msra.mxu0 0.0
        %2242 = vmatpush.xpose.msra.mxu0 0.0
        %2243 = vmatpush.xpose.msra.mxu0 0.0
        %2244 = vmatpush.xpose.msra.mxu0 0.0
        %2245 = vmatpush.xpose.msra.mxu0 0.0
        %2246 = vmatpush.xpose.msra.mxu0 0.0
        %2247 = vmatpush.xpose.msra.mxu0 0.0
        %2248 = vmatpush.xpose.msra.mxu0 0.0
        %v2249 = vand.u32 %v2206, 4294901760
        %v2250 = vsub.f32 %v2206, %v2249
        %v2251 = vand.u32 %v2250, 4294901760
        %v2252 = vsub.f32 %v2250, %v2251
        %v2253 = vand.u32 %v2252, 4294901760
        %2254 = vmatpush.xpose.msra.mxu0 %v2253
        %v2255 = vand.u32 %v2204, 4294901760
        %2256 = vmatmul.f32.gmra.mxu0 %v2255
        %v2257 = vpop.f32.mrf.mxu0
        %v2258 = vadd.f32 %v2232, %v2257
        %2259 = vdwg.mxu0
        %2260 = vmatpush.xpose.msra.mxu0 0.0
        %2261 = vmatpush.xpose.msra.mxu0 0.0
        %2262 = vmatpush.xpose.msra.mxu0 0.0
        %2263 = vmatpush.xpose.msra.mxu0 0.0
        %2264 = vmatpush.xpose.msra.mxu0 0.0
        %2265 = vmatpush.xpose.msra.mxu0 0.0
        %2266 = vmatpush.xpose.msra.mxu0 0.0
        %2267 = vmatpush.xpose.msra.mxu0 0.0
        %2268 = vmatpush.xpose.msra.mxu0 0.0
        %2269 = vmatpush.xpose.msra.mxu0 0.0
        %2270 = vmatpush.xpose.msra.mxu0 0.0
        %2271 = vmatpush.xpose.msra.mxu0 0.0
        %2272 = vmatpush.xpose.msra.mxu0 0.0
        %2273 = vmatpush.xpose.msra.mxu0 0.0
        %2274 = vmatpush.xpose.msra.mxu0 0.0
        %v2275 = vand.u32 %v2206, 4294901760
        %v2276 = vsub.f32 %v2206, %v2275
        %2277 = vmatpush.xpose.msra.mxu0 %v2276
        %v2278 = vand.u32 %v2204, 4294901760
        %v2279 = vsub.f32 %v2204, %v2278
        %2280 = vmatmul.f32.gmra.mxu0 %v2279
        %v2281 = vpop.f32.mrf.mxu0
        %v2282 = vadd.f32 %v2258, %v2281
        %2283 = vdwg.mxu0
        %2284 = vmatpush.xpose.msra.mxu0 0.0
        %2285 = vmatpush.xpose.msra.mxu0 0.0
        %2286 = vmatpush.xpose.msra.mxu0 0.0
        %2287 = vmatpush.xpose.msra.mxu0 0.0
        %2288 = vmatpush.xpose.msra.mxu0 0.0
        %2289 = vmatpush.xpose.msra.mxu0 0.0
        %2290 = vmatpush.xpose.msra.mxu0 0.0
        %2291 = vmatpush.xpose.msra.mxu0 0.0
        %2292 = vmatpush.xpose.msra.mxu0 0.0
        %2293 = vmatpush.xpose.msra.mxu0 0.0
        %2294 = vmatpush.xpose.msra.mxu0 0.0
        %2295 = vmatpush.xpose.msra.mxu0 0.0
        %2296 = vmatpush.xpose.msra.mxu0 0.0
        %2297 = vmatpush.xpose.msra.mxu0 0.0
        %2298 = vmatpush.xpose.msra.mxu0 0.0
        %v2299 = vand.u32 %v2206, 4294901760
        %2300 = vmatpush.xpose.msra.mxu0 %v2299
        %v2301 = vand.u32 %v2204, 4294901760
        %v2302 = vsub.f32 %v2204, %v2301
        %v2303 = vand.u32 %v2302, 4294901760
        %2304 = vmatmul.f32.gmra.mxu0 %v2303
        %v2305 = vpop.f32.mrf.mxu0
        %v2306 = vadd.f32 %v2282, %v2305
        %2307 = vdwg.mxu0
        %2308 = vmatpush.xpose.msra.mxu0 0.0
        %2309 = vmatpush.xpose.msra.mxu0 0.0
        %2310 = vmatpush.xpose.msra.mxu0 0.0
        %2311 = vmatpush.xpose.msra.mxu0 0.0
        %2312 = vmatpush.xpose.msra.mxu0 0.0
        %2313 = vmatpush.xpose.msra.mxu0 0.0
        %2314 = vmatpush.xpose.msra.mxu0 0.0
        %2315 = vmatpush.xpose.msra.mxu0 0.0
        %2316 = vmatpush.xpose.msra.mxu0 0.0
        %2317 = vmatpush.xpose.msra.mxu0 0.0
        %2318 = vmatpush.xpose.msra.mxu0 0.0
        %2319 = vmatpush.xpose.msra.mxu0 0.0
        %2320 = vmatpush.xpose.msra.mxu0 0.0
        %2321 = vmatpush.xpose.msra.mxu0 0.0
        %2322 = vmatpush.xpose.msra.mxu0 0.0
        %v2323 = vand.u32 %v2206, 4294901760
        %v2324 = vsub.f32 %v2206, %v2323
        %v2325 = vand.u32 %v2324, 4294901760
        %2326 = vmatpush.xpose.msra.mxu0 %v2325
        %v2327 = vand.u32 %v2204, 4294901760
        %2328 = vmatmul.f32.gmra.mxu0 %v2327
        %v2329 = vpop.f32.mrf.mxu0
        %v2330 = vadd.f32 %v2306, %v2329
        %2331 = vdwg.mxu0
        %2332 = vmatpush.xpose.msra.mxu0 0.0
        %2333 = vmatpush.xpose.msra.mxu0 0.0
        %2334 = vmatpush.xpose.msra.mxu0 0.0
        %2335 = vmatpush.xpose.msra.mxu0 0.0
        %2336 = vmatpush.xpose.msra.mxu0 0.0
        %2337 = vmatpush.xpose.msra.mxu0 0.0
        %2338 = vmatpush.xpose.msra.mxu0 0.0
        %2339 = vmatpush.xpose.msra.mxu0 0.0
        %2340 = vmatpush.xpose.msra.mxu0 0.0
        %2341 = vmatpush.xpose.msra.mxu0 0.0
        %2342 = vmatpush.xpose.msra.mxu0 0.0
        %2343 = vmatpush.xpose.msra.mxu0 0.0
        %2344 = vmatpush.xpose.msra.mxu0 0.0
        %2345 = vmatpush.xpose.msra.mxu0 0.0
        %2346 = vmatpush.xpose.msra.mxu0 0.0
        %v2347 = vand.u32 %v2206, 4294901760
        %2348 = vmatpush.xpose.msra.mxu0 %v2347
        %v2349 = vand.u32 %v2204, 4294901760
        %2350 = vmatmul.f32.gmra.mxu0 %v2349
        %v2351 = vpop.f32.mrf.mxu0
        %v2352 = vadd.f32 %v2330, %v2351
        %2353 = vdwg.mxu0
        %v2354 = vsel %vm783, -8.838835e+18, %v2352
        %v2355 = vsel %vm2026, %v2354, -inf
        %2356 = vmax.xlane.f32.xlu0 %v2355
        %v2357 = vpop.xlane.xlu0 %2356
        %v2358 = vsub.f32 %v2354, %v2357
        %v2359 = vmul.f32 %v2358, 1.442695
        %v2360 = vpow.pop %v2359
        %v2361 = vsel %vm2026, %v2360, 0.0
        %2362 = vadd.xlane.f32.xlu0 %v2361
        %v2363 = vpop.xlane.xlu0 %2362
        %v2364 = vrcp.pop %v2363
        %v2365 = vmul.f32 %v2363, %v2364
        %v2366 = vsub.f32 1.0, %v2365
        %v2367 = vmul.f32 %v2364, %v2366
        %v2368 = vadd.f32 %v2364, %v2367
        %vm2369 = vweird.f32 %v2363
        %vm2370 = vweird.f32 %v2364
        %vm2371 = vmor %vm2369, %vm2370
        %v2372 = vsel %vm2371, %v2364, %v2368
        %v2373 = vand.u32 2147483647, %v2363
        %vm2374 = vcmp.eq.f32.partialorder %v2373, 8.507059e+37
        %v2375 = vand.u32 %v2363, 2147483648
        %v2376 = vor.u32 1.1754944e-38, %v2375
        %v2377 = vsel %vm2374, %v2376, %v2372
        %v2378 = vmul.f32 %v2360, %v2377
        %2380 = vrot.lane.b32.xlu0 %v1854, 112
        %v2381 = vpop.permute.xlu0 %2380
        %v2384 = vsel %vm2026, %v2378, 0
        %2386 = vmatpush.msra.mxu0 0.0
        %2387 = vmatpush.msra.mxu0 0.0
        %2388 = vmatpush.msra.mxu0 0.0
        %2389 = vmatpush.msra.mxu0 0.0
        %2390 = vmatpush.msra.mxu0 0.0
        %2391 = vmatpush.msra.mxu0 0.0
        %2392 = vmatpush.msra.mxu0 0.0
        %2393 = vmatpush.msra.mxu0 0.0
        %2394 = vmatpush.msra.mxu0 0.0
        %2395 = vmatpush.msra.mxu0 0.0
        %2396 = vmatpush.msra.mxu0 0.0
        %2397 = vmatpush.msra.mxu0 0.0
        %2398 = vmatpush.msra.mxu0 0.0
        %2399 = vmatpush.msra.mxu0 0.0
        %2400 = vmatpush.msra.mxu0 0.0
        %v2401 = vand.u32 %v2381, 4294901760
        %2402 = vmatpush.msra.mxu0 %v2401
        %v2403 = vand.u32 %v2384, 4294901760
        %v2404 = vsub.f32 %v2384, %v2403
        %v2405 = vand.u32 %v2404, 4294901760
        %v2406 = vsub.f32 %v2404, %v2405
        %v2407 = vand.u32 %v2406, 4294901760
        %2408 = vmatmul.f32.gmra.mxu0 %v2407
        %v2409 = vpop.f32.mrf.mxu0
        %v2410 = vadd.f32 0.0, %v2409
        %2411 = vdwg.mxu0
        %2412 = vmatpush.msra.mxu0 0.0
        %2413 = vmatpush.msra.mxu0 0.0
        %2414 = vmatpush.msra.mxu0 0.0
        %2415 = vmatpush.msra.mxu0 0.0
        %2416 = vmatpush.msra.mxu0 0.0
        %2417 = vmatpush.msra.mxu0 0.0
        %2418 = vmatpush.msra.mxu0 0.0
        %2419 = vmatpush.msra.mxu0 0.0
        %2420 = vmatpush.msra.mxu0 0.0
        %2421 = vmatpush.msra.mxu0 0.0
        %2422 = vmatpush.msra.mxu0 0.0
        %2423 = vmatpush.msra.mxu0 0.0
        %2424 = vmatpush.msra.mxu0 0.0
        %2425 = vmatpush.msra.mxu0 0.0
        %2426 = vmatpush.msra.mxu0 0.0
        %v2427 = vand.u32 %v2381, 4294901760
        %v2428 = vsub.f32 %v2381, %v2427
        %v2429 = vand.u32 %v2428, 4294901760
        %v2430 = vsub.f32 %v2428, %v2429
        %v2431 = vand.u32 %v2430, 4294901760
        %2432 = vmatpush.msra.mxu0 %v2431
        %v2433 = vand.u32 %v2384, 4294901760
        %2434 = vmatmul.f32.gmra.mxu0 %v2433
        %v2435 = vpop.f32.mrf.mxu0
        %v2436 = vadd.f32 %v2410, %v2435
        %2437 = vdwg.mxu0
        %2438 = vmatpush.msra.mxu0 0.0
        %2439 = vmatpush.msra.mxu0 0.0
        %2440 = vmatpush.msra.mxu0 0.0
        %2441 = vmatpush.msra.mxu0 0.0
        %2442 = vmatpush.msra.mxu0 0.0
        %2443 = vmatpush.msra.mxu0 0.0
        %2444 = vmatpush.msra.mxu0 0.0
        %2445 = vmatpush.msra.mxu0 0.0
        %2446 = vmatpush.msra.mxu0 0.0
        %2447 = vmatpush.msra.mxu0 0.0
        %2448 = vmatpush.msra.mxu0 0.0
        %2449 = vmatpush.msra.mxu0 0.0
        %2450 = vmatpush.msra.mxu0 0.0
        %2451 = vmatpush.msra.mxu0 0.0
        %2452 = vmatpush.msra.mxu0 0.0
        %v2453 = vand.u32 %v2381, 4294901760
        %v2454 = vsub.f32 %v2381, %v2453
        %2455 = vmatpush.msra.mxu0 %v2454
        %v2456 = vand.u32 %v2384, 4294901760
        %v2457 = vsub.f32 %v2384, %v2456
        %2458 = vmatmul.f32.gmra.mxu0 %v2457
        %v2459 = vpop.f32.mrf.mxu0
        %v2460 = vadd.f32 %v2436, %v2459
        %2461 = vdwg.mxu0
        %2462 = vmatpush.msra.mxu0 0.0
        %2463 = vmatpush.msra.mxu0 0.0
        %2464 = vmatpush.msra.mxu0 0.0
        %2465 = vmatpush.msra.mxu0 0.0
        %2466 = vmatpush.msra.mxu0 0.0
        %2467 = vmatpush.msra.mxu0 0.0
        %2468 = vmatpush.msra.mxu0 0.0
        %2469 = vmatpush.msra.mxu0 0.0
        %2470 = vmatpush.msra.mxu0 0.0
        %2471 = vmatpush.msra.mxu0 0.0
        %2472 = vmatpush.msra.mxu0 0.0
        %2473 = vmatpush.msra.mxu0 0.0
        %2474 = vmatpush.msra.mxu0 0.0
        %2475 = vmatpush.msra.mxu0 0.0
        %2476 = vmatpush.msra.mxu0 0.0
        %v2477 = vand.u32 %v2381, 4294901760
        %2478 = vmatpush.msra.mxu0 %v2477
        %v2479 = vand.u32 %v2384, 4294901760
        %v2480 = vsub.f32 %v2384, %v2479
        %v2481 = vand.u32 %v2480, 4294901760
        %2482 = vmatmul.f32.gmra.mxu0 %v2481
        %v2483 = vpop.f32.mrf.mxu0
        %v2484 = vadd.f32 %v2460, %v2483
        %2485 = vdwg.mxu0
        %2486 = vmatpush.msra.mxu0 0.0
        %2487 = vmatpush.msra.mxu0 0.0
        %2488 = vmatpush.msra.mxu0 0.0
        %2489 = vmatpush.msra.mxu0 0.0
        %2490 = vmatpush.msra.mxu0 0.0
        %2491 = vmatpush.msra.mxu0 0.0
        %2492 = vmatpush.msra.mxu0 0.0
        %2493 = vmatpush.msra.mxu0 0.0
        %2494 = vmatpush.msra.mxu0 0.0
        %2495 = vmatpush.msra.mxu0 0.0
        %2496 = vmatpush.msra.mxu0 0.0
        %2497 = vmatpush.msra.mxu0 0.0
        %2498 = vmatpush.msra.mxu0 0.0
        %2499 = vmatpush.msra.mxu0 0.0
        %2500 = vmatpush.msra.mxu0 0.0
        %v2501 = vand.u32 %v2381, 4294901760
        %v2502 = vsub.f32 %v2381, %v2501
        %v2503 = vand.u32 %v2502, 4294901760
        %2504 = vmatpush.msra.mxu0 %v2503
        %v2505 = vand.u32 %v2384, 4294901760
        %2506 = vmatmul.f32.gmra.mxu0 %v2505
        %v2507 = vpop.f32.mrf.mxu0
        %v2508 = vadd.f32 %v2484, %v2507
        %2509 = vdwg.mxu0
        %2510 = vmatpush.msra.mxu0 0.0
        %2511 = vmatpush.msra.mxu0 0.0
        %2512 = vmatpush.msra.mxu0 0.0
        %2513 = vmatpush.msra.mxu0 0.0
        %2514 = vmatpush.msra.mxu0 0.0
        %2515 = vmatpush.msra.mxu0 0.0
        %2516 = vmatpush.msra.mxu0 0.0
        %2517 = vmatpush.msra.mxu0 0.0
        %2518 = vmatpush.msra.mxu0 0.0
        %2519 = vmatpush.msra.mxu0 0.0
        %2520 = vmatpush.msra.mxu0 0.0
        %2521 = vmatpush.msra.mxu0 0.0
        %2522 = vmatpush.msra.mxu0 0.0
        %2523 = vmatpush.msra.mxu0 0.0
        %2524 = vmatpush.msra.mxu0 0.0
        %v2525 = vand.u32 %v2381, 4294901760
        %2526 = vmatpush.msra.mxu0 %v2525
        %v2527 = vand.u32 %v2384, 4294901760
        %2528 = vmatmul.f32.gmra.mxu0 %v2527
        %v2529 = vpop.f32.mrf.mxu0
        %v2530 = vadd.f32 %v2508, %v2529
        %2531 = vdwg.mxu0
        %v2533 = vsel %vm1872, %v2530, 0
        %2535 = vmatpush.msra.mxu0 0.0
        %2536 = vmatpush.msra.mxu0 0.0
        %2537 = vmatpush.msra.mxu0 0.0
        %2538 = vmatpush.msra.mxu0 0.0
        %2539 = vmatpush.msra.mxu0 0.0
        %2540 = vmatpush.msra.mxu0 0.0
        %2541 = vmatpush.msra.mxu0 0.0
        %2542 = vmatpush.msra.mxu0 0.0
        %2543 = vmatpush.msra.mxu0 0.0
        %2544 = vmatpush.msra.mxu0 0.0
        %2545 = vmatpush.msra.mxu0 0.0
        %2546 = vmatpush.msra.mxu0 0.0
        %2547 = vmatpush.msra.mxu0 0.0
        %2548 = vmatpush.msra.mxu0 0.0
        %v2549 = vand.u32 %v1859, 4294901760
        %2550 = vmatpush.msra.mxu0 %v2549
        %v2551 = vand.u32 %v1858, 4294901760
        %2552 = vmatpush.msra.mxu0 %v2551
        %v2553 = vand.u32 %v2533, 4294901760
        %v2554 = vsub.f32 %v2533, %v2553
        %v2555 = vand.u32 %v2554, 4294901760
        %v2556 = vsub.f32 %v2554, %v2555
        %v2557 = vand.u32 %v2556, 4294901760
        %2558 = vmatmul.f32.gmra.mxu0 %v2557
        %v2559 = vpop.f32.mrf.mxu0
        %v2560 = vadd.f32 0.0, %v2559
        %2561 = vdwg.mxu0
        %2562 = vmatpush.msra.mxu0 0.0
        %2563 = vmatpush.msra.mxu0 0.0
        %2564 = vmatpush.msra.mxu0 0.0
        %2565 = vmatpush.msra.mxu0 0.0
        %2566 = vmatpush.msra.mxu0 0.0
        %2567 = vmatpush.msra.mxu0 0.0
        %2568 = vmatpush.msra.mxu0 0.0
        %2569 = vmatpush.msra.mxu0 0.0
        %2570 = vmatpush.msra.mxu0 0.0
        %2571 = vmatpush.msra.mxu0 0.0
        %2572 = vmatpush.msra.mxu0 0.0
        %2573 = vmatpush.msra.mxu0 0.0
        %2574 = vmatpush.msra.mxu0 0.0
        %2575 = vmatpush.msra.mxu0 0.0
        %v2576 = vand.u32 %v1859, 4294901760
        %v2577 = vsub.f32 %v1859, %v2576
        %v2578 = vand.u32 %v2577, 4294901760
        %v2579 = vsub.f32 %v2577, %v2578
        %v2580 = vand.u32 %v2579, 4294901760
        %2581 = vmatpush.msra.mxu0 %v2580
        %v2582 = vand.u32 %v1858, 4294901760
        %v2583 = vsub.f32 %v1858, %v2582
        %v2584 = vand.u32 %v2583, 4294901760
        %v2585 = vsub.f32 %v2583, %v2584
        %v2586 = vand.u32 %v2585, 4294901760
        %2587 = vmatpush.msra.mxu0 %v2586
        %v2588 = vand.u32 %v2533, 4294901760
        %2589 = vmatmul.f32.gmra.mxu0 %v2588
        %v2590 = vpop.f32.mrf.mxu0
        %v2591 = vadd.f32 %v2560, %v2590
        %2592 = vdwg.mxu0
        %2593 = vmatpush.msra.mxu0 0.0
        %2594 = vmatpush.msra.mxu0 0.0
        %2595 = vmatpush.msra.mxu0 0.0
        %2596 = vmatpush.msra.mxu0 0.0
        %2597 = vmatpush.msra.mxu0 0.0
        %2598 = vmatpush.msra.mxu0 0.0
        %2599 = vmatpush.msra.mxu0 0.0
        %2600 = vmatpush.msra.mxu0 0.0
        %2601 = vmatpush.msra.mxu0 0.0
        %2602 = vmatpush.msra.mxu0 0.0
        %2603 = vmatpush.msra.mxu0 0.0
        %2604 = vmatpush.msra.mxu0 0.0
        %2605 = vmatpush.msra.mxu0 0.0
        %2606 = vmatpush.msra.mxu0 0.0
        %v2607 = vand.u32 %v1859, 4294901760
        %v2608 = vsub.f32 %v1859, %v2607
        %2609 = vmatpush.msra.mxu0 %v2608
        %v2610 = vand.u32 %v1858, 4294901760
        %v2611 = vsub.f32 %v1858, %v2610
        %2612 = vmatpush.msra.mxu0 %v2611
        %v2613 = vand.u32 %v2533, 4294901760
        %v2614 = vsub.f32 %v2533, %v2613
        %2615 = vmatmul.f32.gmra.mxu0 %v2614
        %v2616 = vpop.f32.mrf.mxu0
        %v2617 = vadd.f32 %v2591, %v2616
        %2618 = vdwg.mxu0
        %2619 = vmatpush.msra.mxu0 0.0
        %2620 = vmatpush.msra.mxu0 0.0
        %2621 = vmatpush.msra.mxu0 0.0
        %2622 = vmatpush.msra.mxu0 0.0
        %2623 = vmatpush.msra.mxu0 0.0
        %2624 = vmatpush.msra.mxu0 0.0
        %2625 = vmatpush.msra.mxu0 0.0
        %2626 = vmatpush.msra.mxu0 0.0
        %2627 = vmatpush.msra.mxu0 0.0
        %2628 = vmatpush.msra.mxu0 0.0
        %2629 = vmatpush.msra.mxu0 0.0
        %2630 = vmatpush.msra.mxu0 0.0
        %2631 = vmatpush.msra.mxu0 0.0
        %2632 = vmatpush.msra.mxu0 0.0
        %v2633 = vand.u32 %v1859, 4294901760
        %2634 = vmatpush.msra.mxu0 %v2633
        %v2635 = vand.u32 %v1858, 4294901760
        %2636 = vmatpush.msra.mxu0 %v2635
        %v2637 = vand.u32 %v2533, 4294901760
        %v2638 = vsub.f32 %v2533, %v2637
        %v2639 = vand.u32 %v2638, 4294901760
        %2640 = vmatmul.f32.gmra.mxu0 %v2639
        %v2641 = vpop.f32.mrf.mxu0
        %v2642 = vadd.f32 %v2617, %v2641
        %2643 = vdwg.mxu0
        %2644 = vmatpush.msra.mxu0 0.0
        %2645 = vmatpush.msra.mxu0 0.0
        %2646 = vmatpush.msra.mxu0 0.0
        %2647 = vmatpush.msra.mxu0 0.0
        %2648 = vmatpush.msra.mxu0 0.0
        %2649 = vmatpush.msra.mxu0 0.0
        %2650 = vmatpush.msra.mxu0 0.0
        %2651 = vmatpush.msra.mxu0 0.0
        %2652 = vmatpush.msra.mxu0 0.0
        %2653 = vmatpush.msra.mxu0 0.0
        %2654 = vmatpush.msra.mxu0 0.0
        %2655 = vmatpush.msra.mxu0 0.0
        %2656 = vmatpush.msra.mxu0 0.0
        %2657 = vmatpush.msra.mxu0 0.0
        %v2658 = vand.u32 %v1859, 4294901760
        %v2659 = vsub.f32 %v1859, %v2658
        %v2660 = vand.u32 %v2659, 4294901760
        %2661 = vmatpush.msra.mxu0 %v2660
        %v2662 = vand.u32 %v1858, 4294901760
        %v2663 = vsub.f32 %v1858, %v2662
        %v2664 = vand.u32 %v2663, 4294901760
        %2665 = vmatpush.msra.mxu0 %v2664
        %v2666 = vand.u32 %v2533, 4294901760
        %2667 = vmatmul.f32.gmra.mxu0 %v2666
        %v2668 = vpop.f32.mrf.mxu0
        %v2669 = vadd.f32 %v2642, %v2668
        %2670 = vdwg.mxu0
        %2671 = vmatpush.msra.mxu0 0.0
        %2672 = vmatpush.msra.mxu0 0.0
        %2673 = vmatpush.msra.mxu0 0.0
        %2674 = vmatpush.msra.mxu0 0.0
        %2675 = vmatpush.msra.mxu0 0.0
        %2676 = vmatpush.msra.mxu0 0.0
        %2677 = vmatpush.msra.mxu0 0.0
        %2678 = vmatpush.msra.mxu0 0.0
        %2679 = vmatpush.msra.mxu0 0.0
        %2680 = vmatpush.msra.mxu0 0.0
        %2681 = vmatpush.msra.mxu0 0.0
        %2682 = vmatpush.msra.mxu0 0.0
        %2683 = vmatpush.msra.mxu0 0.0
        %2684 = vmatpush.msra.mxu0 0.0
        %v2685 = vand.u32 %v1859, 4294901760
        %2686 = vmatpush.msra.mxu0 %v2685
        %v2687 = vand.u32 %v1858, 4294901760
        %2688 = vmatpush.msra.mxu0 %v2687
        %v2689 = vand.u32 %v2533, 4294901760
        %2690 = vmatmul.f32.gmra.mxu0 %v2689
        %v2691 = vpop.f32.mrf.mxu0
        %v2692 = vadd.f32 %v2669, %v2691
        %2693 = vdwg.mxu0
        %v2695 = vsel %vm1872, %v2198, 0
        %2697 = vmatpush.msra.mxu0 0.0
        %2698 = vmatpush.msra.mxu0 0.0
        %2699 = vmatpush.msra.mxu0 0.0
        %2700 = vmatpush.msra.mxu0 0.0
        %2701 = vmatpush.msra.mxu0 0.0
        %2702 = vmatpush.msra.mxu0 0.0
        %2703 = vmatpush.msra.mxu0 0.0
        %2704 = vmatpush.msra.mxu0 0.0
        %2705 = vmatpush.msra.mxu0 0.0
        %2706 = vmatpush.msra.mxu0 0.0
        %2707 = vmatpush.msra.mxu0 0.0
        %2708 = vmatpush.msra.mxu0 0.0
        %2709 = vmatpush.msra.mxu0 0.0
        %2710 = vmatpush.msra.mxu0 0.0
        %v2711 = vand.u32 %v1857, 4294901760
        %2712 = vmatpush.msra.mxu0 %v2711
        %v2713 = vand.u32 %v1856, 4294901760
        %2714 = vmatpush.msra.mxu0 %v2713
        %v2715 = vand.u32 %v2695, 4294901760
        %v2716 = vsub.f32 %v2695, %v2715
        %v2717 = vand.u32 %v2716, 4294901760
        %v2718 = vsub.f32 %v2716, %v2717
        %v2719 = vand.u32 %v2718, 4294901760
        %2720 = vmatmul.f32.gmra.mxu0 %v2719
        %v2721 = vpop.f32.mrf.mxu0
        %v2722 = vadd.f32 %v2692, %v2721
        %2723 = vdwg.mxu0
        %2724 = vmatpush.msra.mxu0 0.0
        %2725 = vmatpush.msra.mxu0 0.0
        %2726 = vmatpush.msra.mxu0 0.0
        %2727 = vmatpush.msra.mxu0 0.0
        %2728 = vmatpush.msra.mxu0 0.0
        %2729 = vmatpush.msra.mxu0 0.0
        %2730 = vmatpush.msra.mxu0 0.0
        %2731 = vmatpush.msra.mxu0 0.0
        %2732 = vmatpush.msra.mxu0 0.0
        %2733 = vmatpush.msra.mxu0 0.0
        %2734 = vmatpush.msra.mxu0 0.0
        %2735 = vmatpush.msra.mxu0 0.0
        %2736 = vmatpush.msra.mxu0 0.0
        %2737 = vmatpush.msra.mxu0 0.0
        %v2738 = vand.u32 %v1857, 4294901760
        %v2739 = vsub.f32 %v1857, %v2738
        %v2740 = vand.u32 %v2739, 4294901760
        %v2741 = vsub.f32 %v2739, %v2740
        %v2742 = vand.u32 %v2741, 4294901760
        %2743 = vmatpush.msra.mxu0 %v2742
        %v2744 = vand.u32 %v1856, 4294901760
        %v2745 = vsub.f32 %v1856, %v2744
        %v2746 = vand.u32 %v2745, 4294901760
        %v2747 = vsub.f32 %v2745, %v2746
        %v2748 = vand.u32 %v2747, 4294901760
        %2749 = vmatpush.msra.mxu0 %v2748
        %v2750 = vand.u32 %v2695, 4294901760
        %2751 = vmatmul.f32.gmra.mxu0 %v2750
        %v2752 = vpop.f32.mrf.mxu0
        %v2753 = vadd.f32 %v2722, %v2752
        %2754 = vdwg.mxu0
        %2755 = vmatpush.msra.mxu0 0.0
        %2756 = vmatpush.msra.mxu0 0.0
        %2757 = vmatpush.msra.mxu0 0.0
        %2758 = vmatpush.msra.mxu0 0.0
        %2759 = vmatpush.msra.mxu0 0.0
        %2760 = vmatpush.msra.mxu0 0.0
        %2761 = vmatpush.msra.mxu0 0.0
        %2762 = vmatpush.msra.mxu0 0.0
        %2763 = vmatpush.msra.mxu0 0.0
        %2764 = vmatpush.msra.mxu0 0.0
        %2765 = vmatpush.msra.mxu0 0.0
        %2766 = vmatpush.msra.mxu0 0.0
        %2767 = vmatpush.msra.mxu0 0.0
        %2768 = vmatpush.msra.mxu0 0.0
        %v2769 = vand.u32 %v1857, 4294901760
        %v2770 = vsub.f32 %v1857, %v2769
        %2771 = vmatpush.msra.mxu0 %v2770
        %v2772 = vand.u32 %v1856, 4294901760
        %v2773 = vsub.f32 %v1856, %v2772
        %2774 = vmatpush.msra.mxu0 %v2773
        %v2775 = vand.u32 %v2695, 4294901760
        %v2776 = vsub.f32 %v2695, %v2775
        %2777 = vmatmul.f32.gmra.mxu0 %v2776
        %v2778 = vpop.f32.mrf.mxu0
        %v2779 = vadd.f32 %v2753, %v2778
        %2780 = vdwg.mxu0
        %2781 = vmatpush.msra.mxu0 0.0
        %2782 = vmatpush.msra.mxu0 0.0
        %2783 = vmatpush.msra.mxu0 0.0
        %2784 = vmatpush.msra.mxu0 0.0
        %2785 = vmatpush.msra.mxu0 0.0
        %2786 = vmatpush.msra.mxu0 0.0
        %2787 = vmatpush.msra.mxu0 0.0
        %2788 = vmatpush.msra.mxu0 0.0
        %2789 = vmatpush.msra.mxu0 0.0
        %2790 = vmatpush.msra.mxu0 0.0
        %2791 = vmatpush.msra.mxu0 0.0
        %2792 = vmatpush.msra.mxu0 0.0
        %2793 = vmatpush.msra.mxu0 0.0
        %2794 = vmatpush.msra.mxu0 0.0
        %v2795 = vand.u32 %v1857, 4294901760
        %2796 = vmatpush.msra.mxu0 %v2795
        %v2797 = vand.u32 %v1856, 4294901760
        %2798 = vmatpush.msra.mxu0 %v2797
        %v2799 = vand.u32 %v2695, 4294901760
        %v2800 = vsub.f32 %v2695, %v2799
        %v2801 = vand.u32 %v2800, 4294901760
        %2802 = vmatmul.f32.gmra.mxu0 %v2801
        %v2803 = vpop.f32.mrf.mxu0
        %v2804 = vadd.f32 %v2779, %v2803
        %2805 = vdwg.mxu0
        %2806 = vmatpush.msra.mxu0 0.0
        %2807 = vmatpush.msra.mxu0 0.0
        %2808 = vmatpush.msra.mxu0 0.0
        %2809 = vmatpush.msra.mxu0 0.0
        %2810 = vmatpush.msra.mxu0 0.0
        %2811 = vmatpush.msra.mxu0 0.0
        %2812 = vmatpush.msra.mxu0 0.0
        %2813 = vmatpush.msra.mxu0 0.0
        %2814 = vmatpush.msra.mxu0 0.0
        %2815 = vmatpush.msra.mxu0 0.0
        %2816 = vmatpush.msra.mxu0 0.0
        %2817 = vmatpush.msra.mxu0 0.0
        %2818 = vmatpush.msra.mxu0 0.0
        %2819 = vmatpush.msra.mxu0 0.0
        %v2820 = vand.u32 %v1857, 4294901760
        %v2821 = vsub.f32 %v1857, %v2820
        %v2822 = vand.u32 %v2821, 4294901760
        %2823 = vmatpush.msra.mxu0 %v2822
        %v2824 = vand.u32 %v1856, 4294901760
        %v2825 = vsub.f32 %v1856, %v2824
        %v2826 = vand.u32 %v2825, 4294901760
        %2827 = vmatpush.msra.mxu0 %v2826
        %v2828 = vand.u32 %v2695, 4294901760
        %2829 = vmatmul.f32.gmra.mxu0 %v2828
        %v2830 = vpop.f32.mrf.mxu0
        %v2831 = vadd.f32 %v2804, %v2830
        %2832 = vdwg.mxu0
        %2833 = vmatpush.msra.mxu0 0.0
        %2834 = vmatpush.msra.mxu0 0.0
        %2835 = vmatpush.msra.mxu0 0.0
        %2836 = vmatpush.msra.mxu0 0.0
        %2837 = vmatpush.msra.mxu0 0.0
        %2838 = vmatpush.msra.mxu0 0.0
        %2839 = vmatpush.msra.mxu0 0.0
        %2840 = vmatpush.msra.mxu0 0.0
        %2841 = vmatpush.msra.mxu0 0.0
        %2842 = vmatpush.msra.mxu0 0.0
        %2843 = vmatpush.msra.mxu0 0.0
        %2844 = vmatpush.msra.mxu0 0.0
        %2845 = vmatpush.msra.mxu0 0.0
        %2846 = vmatpush.msra.mxu0 0.0
        %v2847 = vand.u32 %v1857, 4294901760
        %2848 = vmatpush.msra.mxu0 %v2847
        %v2849 = vand.u32 %v1856, 4294901760
        %2850 = vmatpush.msra.mxu0 %v2849
        %v2851 = vand.u32 %v2695, 4294901760
        %2852 = vmatmul.f32.gmra.mxu0 %v2851
        %v2853 = vpop.f32.mrf.mxu0
        %v2854 = vadd.f32 %v2831, %v2853
        %2855 = vdwg.mxu0
        %2856 = vrot.lane.b32.xlu0 %v1141, 96
        %v2857 = vpop.permute.xlu0 %2856
        %2858 = vrot.lane.b32.xlu0 %v1497, 96
        %v2859 = vpop.permute.xlu0 %2858
        %v2860 = vsel %vm1872, %v2857, 0
        %v2862 = vsel %vm1872, %v2859, 0
        %2864 = vmatpush.xpose.msra.mxu0 0.0
        %2865 = vmatpush.xpose.msra.mxu0 0.0
        %2866 = vmatpush.xpose.msra.mxu0 0.0
        %2867 = vmatpush.xpose.msra.mxu0 0.0
        %2868 = vmatpush.xpose.msra.mxu0 0.0
        %2869 = vmatpush.xpose.msra.mxu0 0.0
        %2870 = vmatpush.xpose.msra.mxu0 0.0
        %2871 = vmatpush.xpose.msra.mxu0 0.0
        %2872 = vmatpush.xpose.msra.mxu0 0.0
        %2873 = vmatpush.xpose.msra.mxu0 0.0
        %2874 = vmatpush.xpose.msra.mxu0 0.0
        %2875 = vmatpush.xpose.msra.mxu0 0.0
        %2876 = vmatpush.xpose.msra.mxu0 0.0
        %2877 = vmatpush.xpose.msra.mxu0 0.0
        %2878 = vmatpush.xpose.msra.mxu0 0.0
        %v2879 = vand.u32 %v2862, 4294901760
        %2880 = vmatpush.xpose.msra.mxu0 %v2879
        %v2881 = vand.u32 %v2860, 4294901760
        %v2882 = vsub.f32 %v2860, %v2881
        %v2883 = vand.u32 %v2882, 4294901760
        %v2884 = vsub.f32 %v2882, %v2883
        %v2885 = vand.u32 %v2884, 4294901760
        %2886 = vmatmul.f32.gmra.mxu0 %v2885
        %v2887 = vpop.f32.mrf.mxu0
        %v2888 = vadd.f32 0.0, %v2887
        %2889 = vdwg.mxu0
        %2890 = vmatpush.xpose.msra.mxu0 0.0
        %2891 = vmatpush.xpose.msra.mxu0 0.0
        %2892 = vmatpush.xpose.msra.mxu0 0.0
        %2893 = vmatpush.xpose.msra.mxu0 0.0
        %2894 = vmatpush.xpose.msra.mxu0 0.0
        %2895 = vmatpush.xpose.msra.mxu0 0.0
        %2896 = vmatpush.xpose.msra.mxu0 0.0
        %2897 = vmatpush.xpose.msra.mxu0 0.0
        %2898 = vmatpush.xpose.msra.mxu0 0.0
        %2899 = vmatpush.xpose.msra.mxu0 0.0
        %2900 = vmatpush.xpose.msra.mxu0 0.0
        %2901 = vmatpush.xpose.msra.mxu0 0.0
        %2902 = vmatpush.xpose.msra.mxu0 0.0
        %2903 = vmatpush.xpose.msra.mxu0 0.0
        %2904 = vmatpush.xpose.msra.mxu0 0.0
        %v2905 = vand.u32 %v2862, 4294901760
        %v2906 = vsub.f32 %v2862, %v2905
        %v2907 = vand.u32 %v2906, 4294901760
        %v2908 = vsub.f32 %v2906, %v2907
        %v2909 = vand.u32 %v2908, 4294901760
        %2910 = vmatpush.xpose.msra.mxu0 %v2909
        %v2911 = vand.u32 %v2860, 4294901760
        %2912 = vmatmul.f32.gmra.mxu0 %v2911
        %v2913 = vpop.f32.mrf.mxu0
        %v2914 = vadd.f32 %v2888, %v2913
        %2915 = vdwg.mxu0
        %2916 = vmatpush.xpose.msra.mxu0 0.0
        %2917 = vmatpush.xpose.msra.mxu0 0.0
        %2918 = vmatpush.xpose.msra.mxu0 0.0
        %2919 = vmatpush.xpose.msra.mxu0 0.0
        %2920 = vmatpush.xpose.msra.mxu0 0.0
        %2921 = vmatpush.xpose.msra.mxu0 0.0
        %2922 = vmatpush.xpose.msra.mxu0 0.0
        %2923 = vmatpush.xpose.msra.mxu0 0.0
        %2924 = vmatpush.xpose.msra.mxu0 0.0
        %2925 = vmatpush.xpose.msra.mxu0 0.0
        %2926 = vmatpush.xpose.msra.mxu0 0.0
        %2927 = vmatpush.xpose.msra.mxu0 0.0
        %2928 = vmatpush.xpose.msra.mxu0 0.0
        %2929 = vmatpush.xpose.msra.mxu0 0.0
        %2930 = vmatpush.xpose.msra.mxu0 0.0
        %v2931 = vand.u32 %v2862, 4294901760
        %v2932 = vsub.f32 %v2862, %v2931
        %2933 = vmatpush.xpose.msra.mxu0 %v2932
        %v2934 = vand.u32 %v2860, 4294901760
        %v2935 = vsub.f32 %v2860, %v2934
        %2936 = vmatmul.f32.gmra.mxu0 %v2935
        %v2937 = vpop.f32.mrf.mxu0
        %v2938 = vadd.f32 %v2914, %v2937
        %2939 = vdwg.mxu0
        %2940 = vmatpush.xpose.msra.mxu0 0.0
        %2941 = vmatpush.xpose.msra.mxu0 0.0
        %2942 = vmatpush.xpose.msra.mxu0 0.0
        %2943 = vmatpush.xpose.msra.mxu0 0.0
        %2944 = vmatpush.xpose.msra.mxu0 0.0
        %2945 = vmatpush.xpose.msra.mxu0 0.0
        %2946 = vmatpush.xpose.msra.mxu0 0.0
        %2947 = vmatpush.xpose.msra.mxu0 0.0
        %2948 = vmatpush.xpose.msra.mxu0 0.0
        %2949 = vmatpush.xpose.msra.mxu0 0.0
        %2950 = vmatpush.xpose.msra.mxu0 0.0
        %2951 = vmatpush.xpose.msra.mxu0 0.0
        %2952 = vmatpush.xpose.msra.mxu0 0.0
        %2953 = vmatpush.xpose.msra.mxu0 0.0
        %2954 = vmatpush.xpose.msra.mxu0 0.0
        %v2955 = vand.u32 %v2862, 4294901760
        %2956 = vmatpush.xpose.msra.mxu0 %v2955
        %v2957 = vand.u32 %v2860, 4294901760
        %v2958 = vsub.f32 %v2860, %v2957
        %v2959 = vand.u32 %v2958, 4294901760
        %2960 = vmatmul.f32.gmra.mxu0 %v2959
        %v2961 = vpop.f32.mrf.mxu0
        %v2962 = vadd.f32 %v2938, %v2961
        %2963 = vdwg.mxu0
        %2964 = vmatpush.xpose.msra.mxu0 0.0
        %2965 = vmatpush.xpose.msra.mxu0 0.0
        %2966 = vmatpush.xpose.msra.mxu0 0.0
        %2967 = vmatpush.xpose.msra.mxu0 0.0
        %2968 = vmatpush.xpose.msra.mxu0 0.0
        %2969 = vmatpush.xpose.msra.mxu0 0.0
        %2970 = vmatpush.xpose.msra.mxu0 0.0
        %2971 = vmatpush.xpose.msra.mxu0 0.0
        %2972 = vmatpush.xpose.msra.mxu0 0.0
        %2973 = vmatpush.xpose.msra.mxu0 0.0
        %2974 = vmatpush.xpose.msra.mxu0 0.0
        %2975 = vmatpush.xpose.msra.mxu0 0.0
        %2976 = vmatpush.xpose.msra.mxu0 0.0
        %2977 = vmatpush.xpose.msra.mxu0 0.0
        %2978 = vmatpush.xpose.msra.mxu0 0.0
        %v2979 = vand.u32 %v2862, 4294901760
        %v2980 = vsub.f32 %v2862, %v2979
        %v2981 = vand.u32 %v2980, 4294901760
        %2982 = vmatpush.xpose.msra.mxu0 %v2981
        %v2983 = vand.u32 %v2860, 4294901760
        %2984 = vmatmul.f32.gmra.mxu0 %v2983
        %v2985 = vpop.f32.mrf.mxu0
        %v2986 = vadd.f32 %v2962, %v2985
        %2987 = vdwg.mxu0
        %2988 = vmatpush.xpose.msra.mxu0 0.0
        %2989 = vmatpush.xpose.msra.mxu0 0.0
        %2990 = vmatpush.xpose.msra.mxu0 0.0
        %2991 = vmatpush.xpose.msra.mxu0 0.0
        %2992 = vmatpush.xpose.msra.mxu0 0.0
        %2993 = vmatpush.xpose.msra.mxu0 0.0
        %2994 = vmatpush.xpose.msra.mxu0 0.0
        %2995 = vmatpush.xpose.msra.mxu0 0.0
        %2996 = vmatpush.xpose.msra.mxu0 0.0
        %2997 = vmatpush.xpose.msra.mxu0 0.0
        %2998 = vmatpush.xpose.msra.mxu0 0.0
        %2999 = vmatpush.xpose.msra.mxu0 0.0
        %3000 = vmatpush.xpose.msra.mxu0 0.0
        %3001 = vmatpush.xpose.msra.mxu0 0.0
        %3002 = vmatpush.xpose.msra.mxu0 0.0
        %v3003 = vand.u32 %v2862, 4294901760
        %3004 = vmatpush.xpose.msra.mxu0 %v3003
        %v3005 = vand.u32 %v2860, 4294901760
        %3006 = vmatmul.f32.gmra.mxu0 %v3005
        %v3007 = vpop.f32.mrf.mxu0
        %v3008 = vadd.f32 %v2986, %v3007
        %3009 = vdwg.mxu0
        %v3010 = vsel %vm783, -8.838835e+18, %v3008
        %v3011 = vsel %vm2026, %v3010, -inf
        %3012 = vmax.xlane.f32.xlu0 %v3011
        %v3013 = vpop.xlane.xlu0 %3012
        %v3014 = vsub.f32 %v3010, %v3013
        %v3015 = vmul.f32 %v3014, 1.442695
        %v3016 = vpow.pop %v3015
        %v3017 = vsel %vm2026, %v3016, 0.0
        %3018 = vadd.xlane.f32.xlu0 %v3017
        %v3019 = vpop.xlane.xlu0 %3018
        %v3020 = vrcp.pop %v3019
        %v3021 = vmul.f32 %v3019, %v3020
        %v3022 = vsub.f32 1.0, %v3021
        %v3023 = vmul.f32 %v3020, %v3022
        %v3024 = vadd.f32 %v3020, %v3023
        %vm3025 = vweird.f32 %v3019
        %vm3026 = vweird.f32 %v3020
        %vm3027 = vmor %vm3025, %vm3026
        %v3028 = vsel %vm3027, %v3020, %v3024
        %v3029 = vand.u32 2147483647, %v3019
        %vm3030 = vcmp.eq.f32.partialorder %v3029, 8.507059e+37
        %v3031 = vand.u32 %v3019, 2147483648
        %v3032 = vor.u32 1.1754944e-38, %v3031
        %v3033 = vsel %vm3030, %v3032, %v3028
        %v3034 = vmul.f32 %v3016, %v3033
        %3035 = vrot.lane.b32.xlu0 %v1854, 96
        %v3036 = vpop.permute.xlu0 %3035
        %v3039 = vsel %vm2026, %v3034, 0
        %3041 = vmatpush.msra.mxu0 0.0
        %3042 = vmatpush.msra.mxu0 0.0
        %3043 = vmatpush.msra.mxu0 0.0
        %3044 = vmatpush.msra.mxu0 0.0
        %3045 = vmatpush.msra.mxu0 0.0
        %3046 = vmatpush.msra.mxu0 0.0
        %3047 = vmatpush.msra.mxu0 0.0
        %3048 = vmatpush.msra.mxu0 0.0
        %3049 = vmatpush.msra.mxu0 0.0
        %3050 = vmatpush.msra.mxu0 0.0
        %3051 = vmatpush.msra.mxu0 0.0
        %3052 = vmatpush.msra.mxu0 0.0
        %3053 = vmatpush.msra.mxu0 0.0
        %3054 = vmatpush.msra.mxu0 0.0
        %3055 = vmatpush.msra.mxu0 0.0
        %v3056 = vand.u32 %v3036, 4294901760
        %3057 = vmatpush.msra.mxu0 %v3056
        %v3058 = vand.u32 %v3039, 4294901760
        %v3059 = vsub.f32 %v3039, %v3058
        %v3060 = vand.u32 %v3059, 4294901760
        %v3061 = vsub.f32 %v3059, %v3060
        %v3062 = vand.u32 %v3061, 4294901760
        %3063 = vmatmul.f32.gmra.mxu0 %v3062
        %v3064 = vpop.f32.mrf.mxu0
        %v3065 = vadd.f32 0.0, %v3064
        %3066 = vdwg.mxu0
        %3067 = vmatpush.msra.mxu0 0.0
        %3068 = vmatpush.msra.mxu0 0.0
        %3069 = vmatpush.msra.mxu0 0.0
        %3070 = vmatpush.msra.mxu0 0.0
        %3071 = vmatpush.msra.mxu0 0.0
        %3072 = vmatpush.msra.mxu0 0.0
        %3073 = vmatpush.msra.mxu0 0.0
        %3074 = vmatpush.msra.mxu0 0.0
        %3075 = vmatpush.msra.mxu0 0.0
        %3076 = vmatpush.msra.mxu0 0.0
        %3077 = vmatpush.msra.mxu0 0.0
        %3078 = vmatpush.msra.mxu0 0.0
        %3079 = vmatpush.msra.mxu0 0.0
        %3080 = vmatpush.msra.mxu0 0.0
        %3081 = vmatpush.msra.mxu0 0.0
        %v3082 = vand.u32 %v3036, 4294901760
        %v3083 = vsub.f32 %v3036, %v3082
        %v3084 = vand.u32 %v3083, 4294901760
        %v3085 = vsub.f32 %v3083, %v3084
        %v3086 = vand.u32 %v3085, 4294901760
        %3087 = vmatpush.msra.mxu0 %v3086
        %v3088 = vand.u32 %v3039, 4294901760
        %3089 = vmatmul.f32.gmra.mxu0 %v3088
        %v3090 = vpop.f32.mrf.mxu0
        %v3091 = vadd.f32 %v3065, %v3090
        %3092 = vdwg.mxu0
        %3093 = vmatpush.msra.mxu0 0.0
        %3094 = vmatpush.msra.mxu0 0.0
        %3095 = vmatpush.msra.mxu0 0.0
        %3096 = vmatpush.msra.mxu0 0.0
        %3097 = vmatpush.msra.mxu0 0.0
        %3098 = vmatpush.msra.mxu0 0.0
        %3099 = vmatpush.msra.mxu0 0.0
        %3100 = vmatpush.msra.mxu0 0.0
        %3101 = vmatpush.msra.mxu0 0.0
        %3102 = vmatpush.msra.mxu0 0.0
        %3103 = vmatpush.msra.mxu0 0.0
        %3104 = vmatpush.msra.mxu0 0.0
        %3105 = vmatpush.msra.mxu0 0.0
        %3106 = vmatpush.msra.mxu0 0.0
        %3107 = vmatpush.msra.mxu0 0.0
        %v3108 = vand.u32 %v3036, 4294901760
        %v3109 = vsub.f32 %v3036, %v3108
        %3110 = vmatpush.msra.mxu0 %v3109
        %v3111 = vand.u32 %v3039, 4294901760
        %v3112 = vsub.f32 %v3039, %v3111
        %3113 = vmatmul.f32.gmra.mxu0 %v3112
        %v3114 = vpop.f32.mrf.mxu0
        %v3115 = vadd.f32 %v3091, %v3114
        %3116 = vdwg.mxu0
        %3117 = vmatpush.msra.mxu0 0.0
        %3118 = vmatpush.msra.mxu0 0.0
        %3119 = vmatpush.msra.mxu0 0.0
        %3120 = vmatpush.msra.mxu0 0.0
        %3121 = vmatpush.msra.mxu0 0.0
        %3122 = vmatpush.msra.mxu0 0.0
        %3123 = vmatpush.msra.mxu0 0.0
        %3124 = vmatpush.msra.mxu0 0.0
        %3125 = vmatpush.msra.mxu0 0.0
        %3126 = vmatpush.msra.mxu0 0.0
        %3127 = vmatpush.msra.mxu0 0.0
        %3128 = vmatpush.msra.mxu0 0.0
        %3129 = vmatpush.msra.mxu0 0.0
        %3130 = vmatpush.msra.mxu0 0.0
        %3131 = vmatpush.msra.mxu0 0.0
        %v3132 = vand.u32 %v3036, 4294901760
        %3133 = vmatpush.msra.mxu0 %v3132
        %v3134 = vand.u32 %v3039, 4294901760
        %v3135 = vsub.f32 %v3039, %v3134
        %v3136 = vand.u32 %v3135, 4294901760
        %3137 = vmatmul.f32.gmra.mxu0 %v3136
        %v3138 = vpop.f32.mrf.mxu0
        %v3139 = vadd.f32 %v3115, %v3138
        %3140 = vdwg.mxu0
        %3141 = vmatpush.msra.mxu0 0.0
        %3142 = vmatpush.msra.mxu0 0.0
        %3143 = vmatpush.msra.mxu0 0.0
        %3144 = vmatpush.msra.mxu0 0.0
        %3145 = vmatpush.msra.mxu0 0.0
        %3146 = vmatpush.msra.mxu0 0.0
        %3147 = vmatpush.msra.mxu0 0.0
        %3148 = vmatpush.msra.mxu0 0.0
        %3149 = vmatpush.msra.mxu0 0.0
        %3150 = vmatpush.msra.mxu0 0.0
        %3151 = vmatpush.msra.mxu0 0.0
        %3152 = vmatpush.msra.mxu0 0.0
        %3153 = vmatpush.msra.mxu0 0.0
        %3154 = vmatpush.msra.mxu0 0.0
        %3155 = vmatpush.msra.mxu0 0.0
        %v3156 = vand.u32 %v3036, 4294901760
        %v3157 = vsub.f32 %v3036, %v3156
        %v3158 = vand.u32 %v3157, 4294901760
        %3159 = vmatpush.msra.mxu0 %v3158
        %v3160 = vand.u32 %v3039, 4294901760
        %3161 = vmatmul.f32.gmra.mxu0 %v3160
        %v3162 = vpop.f32.mrf.mxu0
        %v3163 = vadd.f32 %v3139, %v3162
        %3164 = vdwg.mxu0
        %3165 = vmatpush.msra.mxu0 0.0
        %3166 = vmatpush.msra.mxu0 0.0
        %3167 = vmatpush.msra.mxu0 0.0
        %3168 = vmatpush.msra.mxu0 0.0
        %3169 = vmatpush.msra.mxu0 0.0
        %3170 = vmatpush.msra.mxu0 0.0
        %3171 = vmatpush.msra.mxu0 0.0
        %3172 = vmatpush.msra.mxu0 0.0
        %3173 = vmatpush.msra.mxu0 0.0
        %3174 = vmatpush.msra.mxu0 0.0
        %3175 = vmatpush.msra.mxu0 0.0
        %3176 = vmatpush.msra.mxu0 0.0
        %3177 = vmatpush.msra.mxu0 0.0
        %3178 = vmatpush.msra.mxu0 0.0
        %3179 = vmatpush.msra.mxu0 0.0
        %v3180 = vand.u32 %v3036, 4294901760
        %3181 = vmatpush.msra.mxu0 %v3180
        %v3182 = vand.u32 %v3039, 4294901760
        %3183 = vmatmul.f32.gmra.mxu0 %v3182
        %v3184 = vpop.f32.mrf.mxu0
        %v3185 = vadd.f32 %v3163, %v3184
        %3186 = vdwg.mxu0
        %v3188 = vsel %vm1872, %v3185, 0
        %3190 = vmatpush.msra.mxu0 0.0
        %3191 = vmatpush.msra.mxu0 0.0
        %3192 = vmatpush.msra.mxu0 0.0
        %3193 = vmatpush.msra.mxu0 0.0
        %3194 = vmatpush.msra.mxu0 0.0
        %3195 = vmatpush.msra.mxu0 0.0
        %3196 = vmatpush.msra.mxu0 0.0
        %3197 = vmatpush.msra.mxu0 0.0
        %3198 = vmatpush.msra.mxu0 0.0
        %3199 = vmatpush.msra.mxu0 0.0
        %3200 = vmatpush.msra.mxu0 0.0
        %3201 = vmatpush.msra.mxu0 0.0
        %3202 = vmatpush.msra.mxu0 0.0
        %3203 = vmatpush.msra.mxu0 0.0
        %v3204 = vand.u32 %v1861, 4294901760
        %3205 = vmatpush.msra.mxu0 %v3204
        %v3206 = vand.u32 %v1860, 4294901760
        %3207 = vmatpush.msra.mxu0 %v3206
        %v3208 = vand.u32 %v3188, 4294901760
        %v3209 = vsub.f32 %v3188, %v3208
        %v3210 = vand.u32 %v3209, 4294901760
        %v3211 = vsub.f32 %v3209, %v3210
        %v3212 = vand.u32 %v3211, 4294901760
        %3213 = vmatmul.f32.gmra.mxu0 %v3212
        %v3214 = vpop.f32.mrf.mxu0
        %v3215 = vadd.f32 0.0, %v3214
        %3216 = vdwg.mxu0
        %3217 = vmatpush.msra.mxu0 0.0
        %3218 = vmatpush.msra.mxu0 0.0
        %3219 = vmatpush.msra.mxu0 0.0
        %3220 = vmatpush.msra.mxu0 0.0
        %3221 = vmatpush.msra.mxu0 0.0
        %3222 = vmatpush.msra.mxu0 0.0
        %3223 = vmatpush.msra.mxu0 0.0
        %3224 = vmatpush.msra.mxu0 0.0
        %3225 = vmatpush.msra.mxu0 0.0
        %3226 = vmatpush.msra.mxu0 0.0
        %3227 = vmatpush.msra.mxu0 0.0
        %3228 = vmatpush.msra.mxu0 0.0
        %3229 = vmatpush.msra.mxu0 0.0
        %3230 = vmatpush.msra.mxu0 0.0
        %v3231 = vand.u32 %v1861, 4294901760
        %v3232 = vsub.f32 %v1861, %v3231
        %v3233 = vand.u32 %v3232, 4294901760
        %v3234 = vsub.f32 %v3232, %v3233
        %v3235 = vand.u32 %v3234, 4294901760
        %3236 = vmatpush.msra.mxu0 %v3235
        %v3237 = vand.u32 %v1860, 4294901760
        %v3238 = vsub.f32 %v1860, %v3237
        %v3239 = vand.u32 %v3238, 4294901760
        %v3240 = vsub.f32 %v3238, %v3239
        %v3241 = vand.u32 %v3240, 4294901760
        %3242 = vmatpush.msra.mxu0 %v3241
        %v3243 = vand.u32 %v3188, 4294901760
        %3244 = vmatmul.f32.gmra.mxu0 %v3243
        %v3245 = vpop.f32.mrf.mxu0
        %v3246 = vadd.f32 %v3215, %v3245
        %3247 = vdwg.mxu0
        %3248 = vmatpush.msra.mxu0 0.0
        %3249 = vmatpush.msra.mxu0 0.0
        %3250 = vmatpush.msra.mxu0 0.0
        %3251 = vmatpush.msra.mxu0 0.0
        %3252 = vmatpush.msra.mxu0 0.0
        %3253 = vmatpush.msra.mxu0 0.0
        %3254 = vmatpush.msra.mxu0 0.0
        %3255 = vmatpush.msra.mxu0 0.0
        %3256 = vmatpush.msra.mxu0 0.0
        %3257 = vmatpush.msra.mxu0 0.0
        %3258 = vmatpush.msra.mxu0 0.0
        %3259 = vmatpush.msra.mxu0 0.0
        %3260 = vmatpush.msra.mxu0 0.0
        %3261 = vmatpush.msra.mxu0 0.0
        %v3262 = vand.u32 %v1861, 4294901760
        %v3263 = vsub.f32 %v1861, %v3262
        %3264 = vmatpush.msra.mxu0 %v3263
        %v3265 = vand.u32 %v1860, 4294901760
        %v3266 = vsub.f32 %v1860, %v3265
        %3267 = vmatpush.msra.mxu0 %v3266
        %v3268 = vand.u32 %v3188, 4294901760
        %v3269 = vsub.f32 %v3188, %v3268
        %3270 = vmatmul.f32.gmra.mxu0 %v3269
        %v3271 = vpop.f32.mrf.mxu0
        %v3272 = vadd.f32 %v3246, %v3271
        %3273 = vdwg.mxu0
        %3274 = vmatpush.msra.mxu0 0.0
        %3275 = vmatpush.msra.mxu0 0.0
        %3276 = vmatpush.msra.mxu0 0.0
        %3277 = vmatpush.msra.mxu0 0.0
        %3278 = vmatpush.msra.mxu0 0.0
        %3279 = vmatpush.msra.mxu0 0.0
        %3280 = vmatpush.msra.mxu0 0.0
        %3281 = vmatpush.msra.mxu0 0.0
        %3282 = vmatpush.msra.mxu0 0.0
        %3283 = vmatpush.msra.mxu0 0.0
        %3284 = vmatpush.msra.mxu0 0.0
        %3285 = vmatpush.msra.mxu0 0.0
        %3286 = vmatpush.msra.mxu0 0.0
        %3287 = vmatpush.msra.mxu0 0.0
        %v3288 = vand.u32 %v1861, 4294901760
        %3289 = vmatpush.msra.mxu0 %v3288
        %v3290 = vand.u32 %v1860, 4294901760
        %3291 = vmatpush.msra.mxu0 %v3290
        %v3292 = vand.u32 %v3188, 4294901760
        %v3293 = vsub.f32 %v3188, %v3292
        %v3294 = vand.u32 %v3293, 4294901760
        %3295 = vmatmul.f32.gmra.mxu0 %v3294
        %v3296 = vpop.f32.mrf.mxu0
        %v3297 = vadd.f32 %v3272, %v3296
        %3298 = vdwg.mxu0
        %3299 = vmatpush.msra.mxu0 0.0
        %3300 = vmatpush.msra.mxu0 0.0
        %3301 = vmatpush.msra.mxu0 0.0
        %3302 = vmatpush.msra.mxu0 0.0
        %3303 = vmatpush.msra.mxu0 0.0
        %3304 = vmatpush.msra.mxu0 0.0
        %3305 = vmatpush.msra.mxu0 0.0
        %3306 = vmatpush.msra.mxu0 0.0
        %3307 = vmatpush.msra.mxu0 0.0
        %3308 = vmatpush.msra.mxu0 0.0
        %3309 = vmatpush.msra.mxu0 0.0
        %3310 = vmatpush.msra.mxu0 0.0
        %3311 = vmatpush.msra.mxu0 0.0
        %3312 = vmatpush.msra.mxu0 0.0
        %v3313 = vand.u32 %v1861, 4294901760
        %v3314 = vsub.f32 %v1861, %v3313
        %v3315 = vand.u32 %v3314, 4294901760
        %3316 = vmatpush.msra.mxu0 %v3315
        %v3317 = vand.u32 %v1860, 4294901760
        %v3318 = vsub.f32 %v1860, %v3317
        %v3319 = vand.u32 %v3318, 4294901760
        %3320 = vmatpush.msra.mxu0 %v3319
        %v3321 = vand.u32 %v3188, 4294901760
        %3322 = vmatmul.f32.gmra.mxu0 %v3321
        %v3323 = vpop.f32.mrf.mxu0
        %v3324 = vadd.f32 %v3297, %v3323
        %3325 = vdwg.mxu0
        %3326 = vmatpush.msra.mxu0 0.0
        %3327 = vmatpush.msra.mxu0 0.0
        %3328 = vmatpush.msra.mxu0 0.0
        %3329 = vmatpush.msra.mxu0 0.0
        %3330 = vmatpush.msra.mxu0 0.0
        %3331 = vmatpush.msra.mxu0 0.0
        %3332 = vmatpush.msra.mxu0 0.0
        %3333 = vmatpush.msra.mxu0 0.0
        %3334 = vmatpush.msra.mxu0 0.0
        %3335 = vmatpush.msra.mxu0 0.0
        %3336 = vmatpush.msra.mxu0 0.0
        %3337 = vmatpush.msra.mxu0 0.0
        %3338 = vmatpush.msra.mxu0 0.0
        %3339 = vmatpush.msra.mxu0 0.0
        %v3340 = vand.u32 %v1861, 4294901760
        %3341 = vmatpush.msra.mxu0 %v3340
        %v3342 = vand.u32 %v1860, 4294901760
        %3343 = vmatpush.msra.mxu0 %v3342
        %v3344 = vand.u32 %v3188, 4294901760
        %3345 = vmatmul.f32.gmra.mxu0 %v3344
        %v3346 = vpop.f32.mrf.mxu0
        %v3347 = vadd.f32 %v3324, %v3346
        %3348 = vdwg.mxu0
        %v3349 = vadd.f32 %v2854, %v3347
        %3350 = vrot.lane.b32.xlu0 %v1141, 80
        %v3351 = vpop.permute.xlu0 %3350
        %3352 = vrot.lane.b32.xlu0 %v1497, 80
        %v3353 = vpop.permute.xlu0 %3352
        %v3354 = vsel %vm1872, %v3351, 0
        %v3356 = vsel %vm1872, %v3353, 0
        %3358 = vmatpush.xpose.msra.mxu0 0.0
        %3359 = vmatpush.xpose.msra.mxu0 0.0
        %3360 = vmatpush.xpose.msra.mxu0 0.0
        %3361 = vmatpush.xpose.msra.mxu0 0.0
        %3362 = vmatpush.xpose.msra.mxu0 0.0
        %3363 = vmatpush.xpose.msra.mxu0 0.0
        %3364 = vmatpush.xpose.msra.mxu0 0.0
        %3365 = vmatpush.xpose.msra.mxu0 0.0
        %3366 = vmatpush.xpose.msra.mxu0 0.0
        %3367 = vmatpush.xpose.msra.mxu0 0.0
        %3368 = vmatpush.xpose.msra.mxu0 0.0
        %3369 = vmatpush.xpose.msra.mxu0 0.0
        %3370 = vmatpush.xpose.msra.mxu0 0.0
        %3371 = vmatpush.xpose.msra.mxu0 0.0
        %3372 = vmatpush.xpose.msra.mxu0 0.0
        %v3373 = vand.u32 %v3356, 4294901760
        %3374 = vmatpush.xpose.msra.mxu0 %v3373
        %v3375 = vand.u32 %v3354, 4294901760
        %v3376 = vsub.f32 %v3354, %v3375
        %v3377 = vand.u32 %v3376, 4294901760
        %v3378 = vsub.f32 %v3376, %v3377
        %v3379 = vand.u32 %v3378, 4294901760
        %3380 = vmatmul.f32.gmra.mxu0 %v3379
        %v3381 = vpop.f32.mrf.mxu0
        %v3382 = vadd.f32 0.0, %v3381
        %3383 = vdwg.mxu0
        %3384 = vmatpush.xpose.msra.mxu0 0.0
        %3385 = vmatpush.xpose.msra.mxu0 0.0
        %3386 = vmatpush.xpose.msra.mxu0 0.0
        %3387 = vmatpush.xpose.msra.mxu0 0.0
        %3388 = vmatpush.xpose.msra.mxu0 0.0
        %3389 = vmatpush.xpose.msra.mxu0 0.0
        %3390 = vmatpush.xpose.msra.mxu0 0.0
        %3391 = vmatpush.xpose.msra.mxu0 0.0
        %3392 = vmatpush.xpose.msra.mxu0 0.0
        %3393 = vmatpush.xpose.msra.mxu0 0.0
        %3394 = vmatpush.xpose.msra.mxu0 0.0
        %3395 = vmatpush.xpose.msra.mxu0 0.0
        %3396 = vmatpush.xpose.msra.mxu0 0.0
        %3397 = vmatpush.xpose.msra.mxu0 0.0
        %3398 = vmatpush.xpose.msra.mxu0 0.0
        %v3399 = vand.u32 %v3356, 4294901760
        %v3400 = vsub.f32 %v3356, %v3399
        %v3401 = vand.u32 %v3400, 4294901760
        %v3402 = vsub.f32 %v3400, %v3401
        %v3403 = vand.u32 %v3402, 4294901760
        %3404 = vmatpush.xpose.msra.mxu0 %v3403
        %v3405 = vand.u32 %v3354, 4294901760
        %3406 = vmatmul.f32.gmra.mxu0 %v3405
        %v3407 = vpop.f32.mrf.mxu0
        %v3408 = vadd.f32 %v3382, %v3407
        %3409 = vdwg.mxu0
        %3410 = vmatpush.xpose.msra.mxu0 0.0
        %3411 = vmatpush.xpose.msra.mxu0 0.0
        %3412 = vmatpush.xpose.msra.mxu0 0.0
        %3413 = vmatpush.xpose.msra.mxu0 0.0
        %3414 = vmatpush.xpose.msra.mxu0 0.0
        %3415 = vmatpush.xpose.msra.mxu0 0.0
        %3416 = vmatpush.xpose.msra.mxu0 0.0
        %3417 = vmatpush.xpose.msra.mxu0 0.0
        %3418 = vmatpush.xpose.msra.mxu0 0.0
        %3419 = vmatpush.xpose.msra.mxu0 0.0
        %3420 = vmatpush.xpose.msra.mxu0 0.0
        %3421 = vmatpush.xpose.msra.mxu0 0.0
        %3422 = vmatpush.xpose.msra.mxu0 0.0
        %3423 = vmatpush.xpose.msra.mxu0 0.0
        %3424 = vmatpush.xpose.msra.mxu0 0.0
        %v3425 = vand.u32 %v3356, 4294901760
        %v3426 = vsub.f32 %v3356, %v3425
        %3427 = vmatpush.xpose.msra.mxu0 %v3426
        %v3428 = vand.u32 %v3354, 4294901760
        %v3429 = vsub.f32 %v3354, %v3428
        %3430 = vmatmul.f32.gmra.mxu0 %v3429
        %v3431 = vpop.f32.mrf.mxu0
        %v3432 = vadd.f32 %v3408, %v3431
        %3433 = vdwg.mxu0
        %3434 = vmatpush.xpose.msra.mxu0 0.0
        %3435 = vmatpush.xpose.msra.mxu0 0.0
        %3436 = vmatpush.xpose.msra.mxu0 0.0
        %3437 = vmatpush.xpose.msra.mxu0 0.0
        %3438 = vmatpush.xpose.msra.mxu0 0.0
        %3439 = vmatpush.xpose.msra.mxu0 0.0
        %3440 = vmatpush.xpose.msra.mxu0 0.0
        %3441 = vmatpush.xpose.msra.mxu0 0.0
        %3442 = vmatpush.xpose.msra.mxu0 0.0
        %3443 = vmatpush.xpose.msra.mxu0 0.0
        %3444 = vmatpush.xpose.msra.mxu0 0.0
        %3445 = vmatpush.xpose.msra.mxu0 0.0
        %3446 = vmatpush.xpose.msra.mxu0 0.0
        %3447 = vmatpush.xpose.msra.mxu0 0.0
        %3448 = vmatpush.xpose.msra.mxu0 0.0
        %v3449 = vand.u32 %v3356, 4294901760
        %3450 = vmatpush.xpose.msra.mxu0 %v3449
        %v3451 = vand.u32 %v3354, 4294901760
        %v3452 = vsub.f32 %v3354, %v3451
        %v3453 = vand.u32 %v3452, 4294901760
        %3454 = vmatmul.f32.gmra.mxu0 %v3453
        %v3455 = vpop.f32.mrf.mxu0
        %v3456 = vadd.f32 %v3432, %v3455
        %3457 = vdwg.mxu0
        %3458 = vmatpush.xpose.msra.mxu0 0.0
        %3459 = vmatpush.xpose.msra.mxu0 0.0
        %3460 = vmatpush.xpose.msra.mxu0 0.0
        %3461 = vmatpush.xpose.msra.mxu0 0.0
        %3462 = vmatpush.xpose.msra.mxu0 0.0
        %3463 = vmatpush.xpose.msra.mxu0 0.0
        %3464 = vmatpush.xpose.msra.mxu0 0.0
        %3465 = vmatpush.xpose.msra.mxu0 0.0
        %3466 = vmatpush.xpose.msra.mxu0 0.0
        %3467 = vmatpush.xpose.msra.mxu0 0.0
        %3468 = vmatpush.xpose.msra.mxu0 0.0
        %3469 = vmatpush.xpose.msra.mxu0 0.0
        %3470 = vmatpush.xpose.msra.mxu0 0.0
        %3471 = vmatpush.xpose.msra.mxu0 0.0
        %3472 = vmatpush.xpose.msra.mxu0 0.0
        %v3473 = vand.u32 %v3356, 4294901760
        %v3474 = vsub.f32 %v3356, %v3473
        %v3475 = vand.u32 %v3474, 4294901760
        %3476 = vmatpush.xpose.msra.mxu0 %v3475
        %v3477 = vand.u32 %v3354, 4294901760
        %3478 = vmatmul.f32.gmra.mxu0 %v3477
        %v3479 = vpop.f32.mrf.mxu0
        %v3480 = vadd.f32 %v3456, %v3479
        %3481 = vdwg.mxu0
        %3482 = vmatpush.xpose.msra.mxu0 0.0
        %3483 = vmatpush.xpose.msra.mxu0 0.0
        %3484 = vmatpush.xpose.msra.mxu0 0.0
        %3485 = vmatpush.xpose.msra.mxu0 0.0
        %3486 = vmatpush.xpose.msra.mxu0 0.0
        %3487 = vmatpush.xpose.msra.mxu0 0.0
        %3488 = vmatpush.xpose.msra.mxu0 0.0
        %3489 = vmatpush.xpose.msra.mxu0 0.0
        %3490 = vmatpush.xpose.msra.mxu0 0.0
        %3491 = vmatpush.xpose.msra.mxu0 0.0
        %3492 = vmatpush.xpose.msra.mxu0 0.0
        %3493 = vmatpush.xpose.msra.mxu0 0.0
        %3494 = vmatpush.xpose.msra.mxu0 0.0
        %3495 = vmatpush.xpose.msra.mxu0 0.0
        %3496 = vmatpush.xpose.msra.mxu0 0.0
        %v3497 = vand.u32 %v3356, 4294901760
        %3498 = vmatpush.xpose.msra.mxu0 %v3497
        %v3499 = vand.u32 %v3354, 4294901760
        %3500 = vmatmul.f32.gmra.mxu0 %v3499
        %v3501 = vpop.f32.mrf.mxu0
        %v3502 = vadd.f32 %v3480, %v3501
        %3503 = vdwg.mxu0
        %v3504 = vsel %vm783, -8.838835e+18, %v3502
        %v3505 = vsel %vm2026, %v3504, -inf
        %3506 = vmax.xlane.f32.xlu0 %v3505
        %v3507 = vpop.xlane.xlu0 %3506
        %v3508 = vsub.f32 %v3504, %v3507
        %v3509 = vmul.f32 %v3508, 1.442695
        %v3510 = vpow.pop %v3509
        %v3511 = vsel %vm2026, %v3510, 0.0
        %3512 = vadd.xlane.f32.xlu0 %v3511
        %v3513 = vpop.xlane.xlu0 %3512
        %v3514 = vrcp.pop %v3513
        %v3515 = vmul.f32 %v3513, %v3514
        %v3516 = vsub.f32 1.0, %v3515
        %v3517 = vmul.f32 %v3514, %v3516
        %v3518 = vadd.f32 %v3514, %v3517
        %vm3519 = vweird.f32 %v3513
        %vm3520 = vweird.f32 %v3514
        %vm3521 = vmor %vm3519, %vm3520
        %v3522 = vsel %vm3521, %v3514, %v3518
        %v3523 = vand.u32 2147483647, %v3513
        %vm3524 = vcmp.eq.f32.partialorder %v3523, 8.507059e+37
        %v3525 = vand.u32 %v3513, 2147483648
        %v3526 = vor.u32 1.1754944e-38, %v3525
        %v3527 = vsel %vm3524, %v3526, %v3522
        %v3528 = vmul.f32 %v3510, %v3527
        %3529 = vrot.lane.b32.xlu0 %v1854, 80
        %v3530 = vpop.permute.xlu0 %3529
        %v3533 = vsel %vm2026, %v3528, 0
        %3535 = vmatpush.msra.mxu0 0.0
        %3536 = vmatpush.msra.mxu0 0.0
        %3537 = vmatpush.msra.mxu0 0.0
        %3538 = vmatpush.msra.mxu0 0.0
        %3539 = vmatpush.msra.mxu0 0.0
        %3540 = vmatpush.msra.mxu0 0.0
        %3541 = vmatpush.msra.mxu0 0.0
        %3542 = vmatpush.msra.mxu0 0.0
        %3543 = vmatpush.msra.mxu0 0.0
        %3544 = vmatpush.msra.mxu0 0.0
        %3545 = vmatpush.msra.mxu0 0.0
        %3546 = vmatpush.msra.mxu0 0.0
        %3547 = vmatpush.msra.mxu0 0.0
        %3548 = vmatpush.msra.mxu0 0.0
        %3549 = vmatpush.msra.mxu0 0.0
        %v3550 = vand.u32 %v3530, 4294901760
        %3551 = vmatpush.msra.mxu0 %v3550
        %v3552 = vand.u32 %v3533, 4294901760
        %v3553 = vsub.f32 %v3533, %v3552
        %v3554 = vand.u32 %v3553, 4294901760
        %v3555 = vsub.f32 %v3553, %v3554
        %v3556 = vand.u32 %v3555, 4294901760
        %3557 = vmatmul.f32.gmra.mxu0 %v3556
        %v3558 = vpop.f32.mrf.mxu0
        %v3559 = vadd.f32 0.0, %v3558
        %3560 = vdwg.mxu0
        %3561 = vmatpush.msra.mxu0 0.0
        %3562 = vmatpush.msra.mxu0 0.0
        %3563 = vmatpush.msra.mxu0 0.0
        %3564 = vmatpush.msra.mxu0 0.0
        %3565 = vmatpush.msra.mxu0 0.0
        %3566 = vmatpush.msra.mxu0 0.0
        %3567 = vmatpush.msra.mxu0 0.0
        %3568 = vmatpush.msra.mxu0 0.0
        %3569 = vmatpush.msra.mxu0 0.0
        %3570 = vmatpush.msra.mxu0 0.0
        %3571 = vmatpush.msra.mxu0 0.0
        %3572 = vmatpush.msra.mxu0 0.0
        %3573 = vmatpush.msra.mxu0 0.0
        %3574 = vmatpush.msra.mxu0 0.0
        %3575 = vmatpush.msra.mxu0 0.0
        %v3576 = vand.u32 %v3530, 4294901760
        %v3577 = vsub.f32 %v3530, %v3576
        %v3578 = vand.u32 %v3577, 4294901760
        %v3579 = vsub.f32 %v3577, %v3578
        %v3580 = vand.u32 %v3579, 4294901760
        %3581 = vmatpush.msra.mxu0 %v3580
        %v3582 = vand.u32 %v3533, 4294901760
        %3583 = vmatmul.f32.gmra.mxu0 %v3582
        %v3584 = vpop.f32.mrf.mxu0
        %v3585 = vadd.f32 %v3559, %v3584
        %3586 = vdwg.mxu0
        %3587 = vmatpush.msra.mxu0 0.0
        %3588 = vmatpush.msra.mxu0 0.0
        %3589 = vmatpush.msra.mxu0 0.0
        %3590 = vmatpush.msra.mxu0 0.0
        %3591 = vmatpush.msra.mxu0 0.0
        %3592 = vmatpush.msra.mxu0 0.0
        %3593 = vmatpush.msra.mxu0 0.0
        %3594 = vmatpush.msra.mxu0 0.0
        %3595 = vmatpush.msra.mxu0 0.0
        %3596 = vmatpush.msra.mxu0 0.0
        %3597 = vmatpush.msra.mxu0 0.0
        %3598 = vmatpush.msra.mxu0 0.0
        %3599 = vmatpush.msra.mxu0 0.0
        %3600 = vmatpush.msra.mxu0 0.0
        %3601 = vmatpush.msra.mxu0 0.0
        %v3602 = vand.u32 %v3530, 4294901760
        %v3603 = vsub.f32 %v3530, %v3602
        %3604 = vmatpush.msra.mxu0 %v3603
        %v3605 = vand.u32 %v3533, 4294901760
        %v3606 = vsub.f32 %v3533, %v3605
        %3607 = vmatmul.f32.gmra.mxu0 %v3606
        %v3608 = vpop.f32.mrf.mxu0
        %v3609 = vadd.f32 %v3585, %v3608
        %3610 = vdwg.mxu0
        %3611 = vmatpush.msra.mxu0 0.0
        %3612 = vmatpush.msra.mxu0 0.0
        %3613 = vmatpush.msra.mxu0 0.0
        %3614 = vmatpush.msra.mxu0 0.0
        %3615 = vmatpush.msra.mxu0 0.0
        %3616 = vmatpush.msra.mxu0 0.0
        %3617 = vmatpush.msra.mxu0 0.0
        %3618 = vmatpush.msra.mxu0 0.0
        %3619 = vmatpush.msra.mxu0 0.0
        %3620 = vmatpush.msra.mxu0 0.0
        %3621 = vmatpush.msra.mxu0 0.0
        %3622 = vmatpush.msra.mxu0 0.0
        %3623 = vmatpush.msra.mxu0 0.0
        %3624 = vmatpush.msra.mxu0 0.0
        %3625 = vmatpush.msra.mxu0 0.0
        %v3626 = vand.u32 %v3530, 4294901760
        %3627 = vmatpush.msra.mxu0 %v3626
        %v3628 = vand.u32 %v3533, 4294901760
        %v3629 = vsub.f32 %v3533, %v3628
        %v3630 = vand.u32 %v3629, 4294901760
        %3631 = vmatmul.f32.gmra.mxu0 %v3630
        %v3632 = vpop.f32.mrf.mxu0
        %v3633 = vadd.f32 %v3609, %v3632
        %3634 = vdwg.mxu0
        %3635 = vmatpush.msra.mxu0 0.0
        %3636 = vmatpush.msra.mxu0 0.0
        %3637 = vmatpush.msra.mxu0 0.0
        %3638 = vmatpush.msra.mxu0 0.0
        %3639 = vmatpush.msra.mxu0 0.0
        %3640 = vmatpush.msra.mxu0 0.0
        %3641 = vmatpush.msra.mxu0 0.0
        %3642 = vmatpush.msra.mxu0 0.0
        %3643 = vmatpush.msra.mxu0 0.0
        %3644 = vmatpush.msra.mxu0 0.0
        %3645 = vmatpush.msra.mxu0 0.0
        %3646 = vmatpush.msra.mxu0 0.0
        %3647 = vmatpush.msra.mxu0 0.0
        %3648 = vmatpush.msra.mxu0 0.0
        %3649 = vmatpush.msra.mxu0 0.0
        %v3650 = vand.u32 %v3530, 4294901760
        %v3651 = vsub.f32 %v3530, %v3650
        %v3652 = vand.u32 %v3651, 4294901760
        %3653 = vmatpush.msra.mxu0 %v3652
        %v3654 = vand.u32 %v3533, 4294901760
        %3655 = vmatmul.f32.gmra.mxu0 %v3654
        %v3656 = vpop.f32.mrf.mxu0
        %v3657 = vadd.f32 %v3633, %v3656
        %3658 = vdwg.mxu0
        %3659 = vmatpush.msra.mxu0 0.0
        %3660 = vmatpush.msra.mxu0 0.0
        %3661 = vmatpush.msra.mxu0 0.0
        %3662 = vmatpush.msra.mxu0 0.0
        %3663 = vmatpush.msra.mxu0 0.0
        %3664 = vmatpush.msra.mxu0 0.0
        %3665 = vmatpush.msra.mxu0 0.0
        %3666 = vmatpush.msra.mxu0 0.0
        %3667 = vmatpush.msra.mxu0 0.0
        %3668 = vmatpush.msra.mxu0 0.0
        %3669 = vmatpush.msra.mxu0 0.0
        %3670 = vmatpush.msra.mxu0 0.0
        %3671 = vmatpush.msra.mxu0 0.0
        %3672 = vmatpush.msra.mxu0 0.0
        %3673 = vmatpush.msra.mxu0 0.0
        %v3674 = vand.u32 %v3530, 4294901760
        %3675 = vmatpush.msra.mxu0 %v3674
        %v3676 = vand.u32 %v3533, 4294901760
        %3677 = vmatmul.f32.gmra.mxu0 %v3676
        %v3678 = vpop.f32.mrf.mxu0
        %v3679 = vadd.f32 %v3657, %v3678
        %3680 = vdwg.mxu0
        %v3682 = vsel %vm1872, %v3679, 0
        %3684 = vmatpush.msra.mxu0 0.0
        %3685 = vmatpush.msra.mxu0 0.0
        %3686 = vmatpush.msra.mxu0 0.0
        %3687 = vmatpush.msra.mxu0 0.0
        %3688 = vmatpush.msra.mxu0 0.0
        %3689 = vmatpush.msra.mxu0 0.0
        %3690 = vmatpush.msra.mxu0 0.0
        %3691 = vmatpush.msra.mxu0 0.0
        %3692 = vmatpush.msra.mxu0 0.0
        %3693 = vmatpush.msra.mxu0 0.0
        %3694 = vmatpush.msra.mxu0 0.0
        %3695 = vmatpush.msra.mxu0 0.0
        %3696 = vmatpush.msra.mxu0 0.0
        %3697 = vmatpush.msra.mxu0 0.0
        %v3698 = vand.u32 %v1863, 4294901760
        %3699 = vmatpush.msra.mxu0 %v3698
        %v3700 = vand.u32 %v1862, 4294901760
        %3701 = vmatpush.msra.mxu0 %v3700
        %v3702 = vand.u32 %v3682, 4294901760
        %v3703 = vsub.f32 %v3682, %v3702
        %v3704 = vand.u32 %v3703, 4294901760
        %v3705 = vsub.f32 %v3703, %v3704
        %v3706 = vand.u32 %v3705, 4294901760
        %3707 = vmatmul.f32.gmra.mxu0 %v3706
        %v3708 = vpop.f32.mrf.mxu0
        %v3709 = vadd.f32 0.0, %v3708
        %3710 = vdwg.mxu0
        %3711 = vmatpush.msra.mxu0 0.0
        %3712 = vmatpush.msra.mxu0 0.0
        %3713 = vmatpush.msra.mxu0 0.0
        %3714 = vmatpush.msra.mxu0 0.0
        %3715 = vmatpush.msra.mxu0 0.0
        %3716 = vmatpush.msra.mxu0 0.0
        %3717 = vmatpush.msra.mxu0 0.0
        %3718 = vmatpush.msra.mxu0 0.0
        %3719 = vmatpush.msra.mxu0 0.0
        %3720 = vmatpush.msra.mxu0 0.0
        %3721 = vmatpush.msra.mxu0 0.0
        %3722 = vmatpush.msra.mxu0 0.0
        %3723 = vmatpush.msra.mxu0 0.0
        %3724 = vmatpush.msra.mxu0 0.0
        %v3725 = vand.u32 %v1863, 4294901760
        %v3726 = vsub.f32 %v1863, %v3725
        %v3727 = vand.u32 %v3726, 4294901760
        %v3728 = vsub.f32 %v3726, %v3727
        %v3729 = vand.u32 %v3728, 4294901760
        %3730 = vmatpush.msra.mxu0 %v3729
        %v3731 = vand.u32 %v1862, 4294901760
        %v3732 = vsub.f32 %v1862, %v3731
        %v3733 = vand.u32 %v3732, 4294901760
        %v3734 = vsub.f32 %v3732, %v3733
        %v3735 = vand.u32 %v3734, 4294901760
        %3736 = vmatpush.msra.mxu0 %v3735
        %v3737 = vand.u32 %v3682, 4294901760
        %3738 = vmatmul.f32.gmra.mxu0 %v3737
        %v3739 = vpop.f32.mrf.mxu0
        %v3740 = vadd.f32 %v3709, %v3739
        %3741 = vdwg.mxu0
        %3742 = vmatpush.msra.mxu0 0.0
        %3743 = vmatpush.msra.mxu0 0.0
        %3744 = vmatpush.msra.mxu0 0.0
        %3745 = vmatpush.msra.mxu0 0.0
        %3746 = vmatpush.msra.mxu0 0.0
        %3747 = vmatpush.msra.mxu0 0.0
        %3748 = vmatpush.msra.mxu0 0.0
        %3749 = vmatpush.msra.mxu0 0.0
        %3750 = vmatpush.msra.mxu0 0.0
        %3751 = vmatpush.msra.mxu0 0.0
        %3752 = vmatpush.msra.mxu0 0.0
        %3753 = vmatpush.msra.mxu0 0.0
        %3754 = vmatpush.msra.mxu0 0.0
        %3755 = vmatpush.msra.mxu0 0.0
        %v3756 = vand.u32 %v1863, 4294901760
        %v3757 = vsub.f32 %v1863, %v3756
        %3758 = vmatpush.msra.mxu0 %v3757
        %v3759 = vand.u32 %v1862, 4294901760
        %v3760 = vsub.f32 %v1862, %v3759
        %3761 = vmatpush.msra.mxu0 %v3760
        %v3762 = vand.u32 %v3682, 4294901760
        %v3763 = vsub.f32 %v3682, %v3762
        %3764 = vmatmul.f32.gmra.mxu0 %v3763
        %v3765 = vpop.f32.mrf.mxu0
        %v3766 = vadd.f32 %v3740, %v3765
        %3767 = vdwg.mxu0
        %3768 = vmatpush.msra.mxu0 0.0
        %3769 = vmatpush.msra.mxu0 0.0
        %3770 = vmatpush.msra.mxu0 0.0
        %3771 = vmatpush.msra.mxu0 0.0
        %3772 = vmatpush.msra.mxu0 0.0
        %3773 = vmatpush.msra.mxu0 0.0
        %3774 = vmatpush.msra.mxu0 0.0
        %3775 = vmatpush.msra.mxu0 0.0
        %3776 = vmatpush.msra.mxu0 0.0
        %3777 = vmatpush.msra.mxu0 0.0
        %3778 = vmatpush.msra.mxu0 0.0
        %3779 = vmatpush.msra.mxu0 0.0
        %3780 = vmatpush.msra.mxu0 0.0
        %3781 = vmatpush.msra.mxu0 0.0
        %v3782 = vand.u32 %v1863, 4294901760
        %3783 = vmatpush.msra.mxu0 %v3782
        %v3784 = vand.u32 %v1862, 4294901760
        %3785 = vmatpush.msra.mxu0 %v3784
        %v3786 = vand.u32 %v3682, 4294901760
        %v3787 = vsub.f32 %v3682, %v3786
        %v3788 = vand.u32 %v3787, 4294901760
        %3789 = vmatmul.f32.gmra.mxu0 %v3788
        %v3790 = vpop.f32.mrf.mxu0
        %v3791 = vadd.f32 %v3766, %v3790
        %3792 = vdwg.mxu0
        %3793 = vmatpush.msra.mxu0 0.0
        %3794 = vmatpush.msra.mxu0 0.0
        %3795 = vmatpush.msra.mxu0 0.0
        %3796 = vmatpush.msra.mxu0 0.0
        %3797 = vmatpush.msra.mxu0 0.0
        %3798 = vmatpush.msra.mxu0 0.0
        %3799 = vmatpush.msra.mxu0 0.0
        %3800 = vmatpush.msra.mxu0 0.0
        %3801 = vmatpush.msra.mxu0 0.0
        %3802 = vmatpush.msra.mxu0 0.0
        %3803 = vmatpush.msra.mxu0 0.0
        %3804 = vmatpush.msra.mxu0 0.0
        %3805 = vmatpush.msra.mxu0 0.0
        %3806 = vmatpush.msra.mxu0 0.0
        %v3807 = vand.u32 %v1863, 4294901760
        %v3808 = vsub.f32 %v1863, %v3807
        %v3809 = vand.u32 %v3808, 4294901760
        %3810 = vmatpush.msra.mxu0 %v3809
        %v3811 = vand.u32 %v1862, 4294901760
        %v3812 = vsub.f32 %v1862, %v3811
        %v3813 = vand.u32 %v3812, 4294901760
        %3814 = vmatpush.msra.mxu0 %v3813
        %v3815 = vand.u32 %v3682, 4294901760
        %3816 = vmatmul.f32.gmra.mxu0 %v3815
        %v3817 = vpop.f32.mrf.mxu0
        %v3818 = vadd.f32 %v3791, %v3817
        %3819 = vdwg.mxu0
        %3820 = vmatpush.msra.mxu0 0.0
        %3821 = vmatpush.msra.mxu0 0.0
        %3822 = vmatpush.msra.mxu0 0.0
        %3823 = vmatpush.msra.mxu0 0.0
        %3824 = vmatpush.msra.mxu0 0.0
        %3825 = vmatpush.msra.mxu0 0.0
        %3826 = vmatpush.msra.mxu0 0.0
        %3827 = vmatpush.msra.mxu0 0.0
        %3828 = vmatpush.msra.mxu0 0.0
        %3829 = vmatpush.msra.mxu0 0.0
        %3830 = vmatpush.msra.mxu0 0.0
        %3831 = vmatpush.msra.mxu0 0.0
        %3832 = vmatpush.msra.mxu0 0.0
        %3833 = vmatpush.msra.mxu0 0.0
        %v3834 = vand.u32 %v1863, 4294901760
        %3835 = vmatpush.msra.mxu0 %v3834
        %v3836 = vand.u32 %v1862, 4294901760
        %3837 = vmatpush.msra.mxu0 %v3836
        %v3838 = vand.u32 %v3682, 4294901760
        %3839 = vmatmul.f32.gmra.mxu0 %v3838
        %v3840 = vpop.f32.mrf.mxu0
        %v3841 = vadd.f32 %v3818, %v3840
        %3842 = vdwg.mxu0
        %v3843 = vadd.f32 %v3349, %v3841
        %3844 = vrot.lane.b32.xlu0 %v1141, 64
        %v3845 = vpop.permute.xlu0 %3844
        %3846 = vrot.lane.b32.xlu0 %v1497, 64
        %v3847 = vpop.permute.xlu0 %3846
        %v3848 = vsel %vm1872, %v3845, 0
        %v3850 = vsel %vm1872, %v3847, 0
        %3852 = vmatpush.xpose.msra.mxu0 0.0
        %3853 = vmatpush.xpose.msra.mxu0 0.0
        %3854 = vmatpush.xpose.msra.mxu0 0.0
        %3855 = vmatpush.xpose.msra.mxu0 0.0
        %3856 = vmatpush.xpose.msra.mxu0 0.0
        %3857 = vmatpush.xpose.msra.mxu0 0.0
        %3858 = vmatpush.xpose.msra.mxu0 0.0
        %3859 = vmatpush.xpose.msra.mxu0 0.0
        %3860 = vmatpush.xpose.msra.mxu0 0.0
        %3861 = vmatpush.xpose.msra.mxu0 0.0
        %3862 = vmatpush.xpose.msra.mxu0 0.0
        %3863 = vmatpush.xpose.msra.mxu0 0.0
        %3864 = vmatpush.xpose.msra.mxu0 0.0
        %3865 = vmatpush.xpose.msra.mxu0 0.0
        %3866 = vmatpush.xpose.msra.mxu0 0.0
        %v3867 = vand.u32 %v3850, 4294901760
        %3868 = vmatpush.xpose.msra.mxu0 %v3867
        %v3869 = vand.u32 %v3848, 4294901760
        %v3870 = vsub.f32 %v3848, %v3869
        %v3871 = vand.u32 %v3870, 4294901760
        %v3872 = vsub.f32 %v3870, %v3871
        %v3873 = vand.u32 %v3872, 4294901760
        %3874 = vmatmul.f32.gmra.mxu0 %v3873
        %v3875 = vpop.f32.mrf.mxu0
        %v3876 = vadd.f32 0.0, %v3875
        %3877 = vdwg.mxu0
        %3878 = vmatpush.xpose.msra.mxu0 0.0
        %3879 = vmatpush.xpose.msra.mxu0 0.0
        %3880 = vmatpush.xpose.msra.mxu0 0.0
        %3881 = vmatpush.xpose.msra.mxu0 0.0
        %3882 = vmatpush.xpose.msra.mxu0 0.0
        %3883 = vmatpush.xpose.msra.mxu0 0.0
        %3884 = vmatpush.xpose.msra.mxu0 0.0
        %3885 = vmatpush.xpose.msra.mxu0 0.0
        %3886 = vmatpush.xpose.msra.mxu0 0.0
        %3887 = vmatpush.xpose.msra.mxu0 0.0
        %3888 = vmatpush.xpose.msra.mxu0 0.0
        %3889 = vmatpush.xpose.msra.mxu0 0.0
        %3890 = vmatpush.xpose.msra.mxu0 0.0
        %3891 = vmatpush.xpose.msra.mxu0 0.0
        %3892 = vmatpush.xpose.msra.mxu0 0.0
        %v3893 = vand.u32 %v3850, 4294901760
        %v3894 = vsub.f32 %v3850, %v3893
        %v3895 = vand.u32 %v3894, 4294901760
        %v3896 = vsub.f32 %v3894, %v3895
        %v3897 = vand.u32 %v3896, 4294901760
        %3898 = vmatpush.xpose.msra.mxu0 %v3897
        %v3899 = vand.u32 %v3848, 4294901760
        %3900 = vmatmul.f32.gmra.mxu0 %v3899
        %v3901 = vpop.f32.mrf.mxu0
        %v3902 = vadd.f32 %v3876, %v3901
        %3903 = vdwg.mxu0
        %3904 = vmatpush.xpose.msra.mxu0 0.0
        %3905 = vmatpush.xpose.msra.mxu0 0.0
        %3906 = vmatpush.xpose.msra.mxu0 0.0
        %3907 = vmatpush.xpose.msra.mxu0 0.0
        %3908 = vmatpush.xpose.msra.mxu0 0.0
        %3909 = vmatpush.xpose.msra.mxu0 0.0
        %3910 = vmatpush.xpose.msra.mxu0 0.0
        %3911 = vmatpush.xpose.msra.mxu0 0.0
        %3912 = vmatpush.xpose.msra.mxu0 0.0
        %3913 = vmatpush.xpose.msra.mxu0 0.0
        %3914 = vmatpush.xpose.msra.mxu0 0.0
        %3915 = vmatpush.xpose.msra.mxu0 0.0
        %3916 = vmatpush.xpose.msra.mxu0 0.0
        %3917 = vmatpush.xpose.msra.mxu0 0.0
        %3918 = vmatpush.xpose.msra.mxu0 0.0
        %v3919 = vand.u32 %v3850, 4294901760
        %v3920 = vsub.f32 %v3850, %v3919
        %3921 = vmatpush.xpose.msra.mxu0 %v3920
        %v3922 = vand.u32 %v3848, 4294901760
        %v3923 = vsub.f32 %v3848, %v3922
        %3924 = vmatmul.f32.gmra.mxu0 %v3923
        %v3925 = vpop.f32.mrf.mxu0
        %v3926 = vadd.f32 %v3902, %v3925
        %3927 = vdwg.mxu0
        %3928 = vmatpush.xpose.msra.mxu0 0.0
        %3929 = vmatpush.xpose.msra.mxu0 0.0
        %3930 = vmatpush.xpose.msra.mxu0 0.0
        %3931 = vmatpush.xpose.msra.mxu0 0.0
        %3932 = vmatpush.xpose.msra.mxu0 0.0
        %3933 = vmatpush.xpose.msra.mxu0 0.0
        %3934 = vmatpush.xpose.msra.mxu0 0.0
        %3935 = vmatpush.xpose.msra.mxu0 0.0
        %3936 = vmatpush.xpose.msra.mxu0 0.0
        %3937 = vmatpush.xpose.msra.mxu0 0.0
        %3938 = vmatpush.xpose.msra.mxu0 0.0
        %3939 = vmatpush.xpose.msra.mxu0 0.0
        %3940 = vmatpush.xpose.msra.mxu0 0.0
        %3941 = vmatpush.xpose.msra.mxu0 0.0
        %3942 = vmatpush.xpose.msra.mxu0 0.0
        %v3943 = vand.u32 %v3850, 4294901760
        %3944 = vmatpush.xpose.msra.mxu0 %v3943
        %v3945 = vand.u32 %v3848, 4294901760
        %v3946 = vsub.f32 %v3848, %v3945
        %v3947 = vand.u32 %v3946, 4294901760
        %3948 = vmatmul.f32.gmra.mxu0 %v3947
        %v3949 = vpop.f32.mrf.mxu0
        %v3950 = vadd.f32 %v3926, %v3949
        %3951 = vdwg.mxu0
        %3952 = vmatpush.xpose.msra.mxu0 0.0
        %3953 = vmatpush.xpose.msra.mxu0 0.0
        %3954 = vmatpush.xpose.msra.mxu0 0.0
        %3955 = vmatpush.xpose.msra.mxu0 0.0
        %3956 = vmatpush.xpose.msra.mxu0 0.0
        %3957 = vmatpush.xpose.msra.mxu0 0.0
        %3958 = vmatpush.xpose.msra.mxu0 0.0
        %3959 = vmatpush.xpose.msra.mxu0 0.0
        %3960 = vmatpush.xpose.msra.mxu0 0.0
        %3961 = vmatpush.xpose.msra.mxu0 0.0
        %3962 = vmatpush.xpose.msra.mxu0 0.0
        %3963 = vmatpush.xpose.msra.mxu0 0.0
        %3964 = vmatpush.xpose.msra.mxu0 0.0
        %3965 = vmatpush.xpose.msra.mxu0 0.0
        %3966 = vmatpush.xpose.msra.mxu0 0.0
        %v3967 = vand.u32 %v3850, 4294901760
        %v3968 = vsub.f32 %v3850, %v3967
        %v3969 = vand.u32 %v3968, 4294901760
        %3970 = vmatpush.xpose.msra.mxu0 %v3969
        %v3971 = vand.u32 %v3848, 4294901760
        %3972 = vmatmul.f32.gmra.mxu0 %v3971
        %v3973 = vpop.f32.mrf.mxu0
        %v3974 = vadd.f32 %v3950, %v3973
        %3975 = vdwg.mxu0
        %3976 = vmatpush.xpose.msra.mxu0 0.0
        %3977 = vmatpush.xpose.msra.mxu0 0.0
        %3978 = vmatpush.xpose.msra.mxu0 0.0
        %3979 = vmatpush.xpose.msra.mxu0 0.0
        %3980 = vmatpush.xpose.msra.mxu0 0.0
        %3981 = vmatpush.xpose.msra.mxu0 0.0
        %3982 = vmatpush.xpose.msra.mxu0 0.0
        %3983 = vmatpush.xpose.msra.mxu0 0.0
        %3984 = vmatpush.xpose.msra.mxu0 0.0
        %3985 = vmatpush.xpose.msra.mxu0 0.0
        %3986 = vmatpush.xpose.msra.mxu0 0.0
        %3987 = vmatpush.xpose.msra.mxu0 0.0
        %3988 = vmatpush.xpose.msra.mxu0 0.0
        %3989 = vmatpush.xpose.msra.mxu0 0.0
        %3990 = vmatpush.xpose.msra.mxu0 0.0
        %v3991 = vand.u32 %v3850, 4294901760
        %3992 = vmatpush.xpose.msra.mxu0 %v3991
        %v3993 = vand.u32 %v3848, 4294901760
        %3994 = vmatmul.f32.gmra.mxu0 %v3993
        %v3995 = vpop.f32.mrf.mxu0
        %v3996 = vadd.f32 %v3974, %v3995
        %3997 = vdwg.mxu0
        %v3998 = vsel %vm783, -8.838835e+18, %v3996
        %v3999 = vsel %vm2026, %v3998, -inf
        %4000 = vmax.xlane.f32.xlu0 %v3999
        %v4001 = vpop.xlane.xlu0 %4000
        %v4002 = vsub.f32 %v3998, %v4001
        %v4003 = vmul.f32 %v4002, 1.442695
        %v4004 = vpow.pop %v4003
        %v4005 = vsel %vm2026, %v4004, 0.0
        %4006 = vadd.xlane.f32.xlu0 %v4005
        %v4007 = vpop.xlane.xlu0 %4006
        %v4008 = vrcp.pop %v4007
        %v4009 = vmul.f32 %v4007, %v4008
        %v4010 = vsub.f32 1.0, %v4009
        %v4011 = vmul.f32 %v4008, %v4010
        %v4012 = vadd.f32 %v4008, %v4011
        %vm4013 = vweird.f32 %v4007
        %vm4014 = vweird.f32 %v4008
        %vm4015 = vmor %vm4013, %vm4014
        %v4016 = vsel %vm4015, %v4008, %v4012
        %v4017 = vand.u32 2147483647, %v4007
        %vm4018 = vcmp.eq.f32.partialorder %v4017, 8.507059e+37
        %v4019 = vand.u32 %v4007, 2147483648
        %v4020 = vor.u32 1.1754944e-38, %v4019
        %v4021 = vsel %vm4018, %v4020, %v4016
        %v4022 = vmul.f32 %v4004, %v4021
        %4023 = vrot.lane.b32.xlu0 %v1854, 64
        %v4024 = vpop.permute.xlu0 %4023
        %v4027 = vsel %vm2026, %v4022, 0
        %4029 = vmatpush.msra.mxu0 0.0
        %4030 = vmatpush.msra.mxu0 0.0
        %4031 = vmatpush.msra.mxu0 0.0
        %4032 = vmatpush.msra.mxu0 0.0
        %4033 = vmatpush.msra.mxu0 0.0
        %4034 = vmatpush.msra.mxu0 0.0
        %4035 = vmatpush.msra.mxu0 0.0
        %4036 = vmatpush.msra.mxu0 0.0
        %4037 = vmatpush.msra.mxu0 0.0
        %4038 = vmatpush.msra.mxu0 0.0
        %4039 = vmatpush.msra.mxu0 0.0
        %4040 = vmatpush.msra.mxu0 0.0
        %4041 = vmatpush.msra.mxu0 0.0
        %4042 = vmatpush.msra.mxu0 0.0
        %4043 = vmatpush.msra.mxu0 0.0
        %v4044 = vand.u32 %v4024, 4294901760
        %4045 = vmatpush.msra.mxu0 %v4044
        %v4046 = vand.u32 %v4027, 4294901760
        %v4047 = vsub.f32 %v4027, %v4046
        %v4048 = vand.u32 %v4047, 4294901760
        %v4049 = vsub.f32 %v4047, %v4048
        %v4050 = vand.u32 %v4049, 4294901760
        %4051 = vmatmul.f32.gmra.mxu0 %v4050
        %v4052 = vpop.f32.mrf.mxu0
        %v4053 = vadd.f32 0.0, %v4052
        %4054 = vdwg.mxu0
        %4055 = vmatpush.msra.mxu0 0.0
        %4056 = vmatpush.msra.mxu0 0.0
        %4057 = vmatpush.msra.mxu0 0.0
        %4058 = vmatpush.msra.mxu0 0.0
        %4059 = vmatpush.msra.mxu0 0.0
        %4060 = vmatpush.msra.mxu0 0.0
        %4061 = vmatpush.msra.mxu0 0.0
        %4062 = vmatpush.msra.mxu0 0.0
        %4063 = vmatpush.msra.mxu0 0.0
        %4064 = vmatpush.msra.mxu0 0.0
        %4065 = vmatpush.msra.mxu0 0.0
        %4066 = vmatpush.msra.mxu0 0.0
        %4067 = vmatpush.msra.mxu0 0.0
        %4068 = vmatpush.msra.mxu0 0.0
        %4069 = vmatpush.msra.mxu0 0.0
        %v4070 = vand.u32 %v4024, 4294901760
        %v4071 = vsub.f32 %v4024, %v4070
        %v4072 = vand.u32 %v4071, 4294901760
        %v4073 = vsub.f32 %v4071, %v4072
        %v4074 = vand.u32 %v4073, 4294901760
        %4075 = vmatpush.msra.mxu0 %v4074
        %v4076 = vand.u32 %v4027, 4294901760
        %4077 = vmatmul.f32.gmra.mxu0 %v4076
        %v4078 = vpop.f32.mrf.mxu0
        %v4079 = vadd.f32 %v4053, %v4078
        %4080 = vdwg.mxu0
        %4081 = vmatpush.msra.mxu0 0.0
        %4082 = vmatpush.msra.mxu0 0.0
        %4083 = vmatpush.msra.mxu0 0.0
        %4084 = vmatpush.msra.mxu0 0.0
        %4085 = vmatpush.msra.mxu0 0.0
        %4086 = vmatpush.msra.mxu0 0.0
        %4087 = vmatpush.msra.mxu0 0.0
        %4088 = vmatpush.msra.mxu0 0.0
        %4089 = vmatpush.msra.mxu0 0.0
        %4090 = vmatpush.msra.mxu0 0.0
        %4091 = vmatpush.msra.mxu0 0.0
        %4092 = vmatpush.msra.mxu0 0.0
        %4093 = vmatpush.msra.mxu0 0.0
        %4094 = vmatpush.msra.mxu0 0.0
        %4095 = vmatpush.msra.mxu0 0.0
        %v4096 = vand.u32 %v4024, 4294901760
        %v4097 = vsub.f32 %v4024, %v4096
        %4098 = vmatpush.msra.mxu0 %v4097
        %v4099 = vand.u32 %v4027, 4294901760
        %v4100 = vsub.f32 %v4027, %v4099
        %4101 = vmatmul.f32.gmra.mxu0 %v4100
        %v4102 = vpop.f32.mrf.mxu0
        %v4103 = vadd.f32 %v4079, %v4102
        %4104 = vdwg.mxu0
        %4105 = vmatpush.msra.mxu0 0.0
        %4106 = vmatpush.msra.mxu0 0.0
        %4107 = vmatpush.msra.mxu0 0.0
        %4108 = vmatpush.msra.mxu0 0.0
        %4109 = vmatpush.msra.mxu0 0.0
        %4110 = vmatpush.msra.mxu0 0.0
        %4111 = vmatpush.msra.mxu0 0.0
        %4112 = vmatpush.msra.mxu0 0.0
        %4113 = vmatpush.msra.mxu0 0.0
        %4114 = vmatpush.msra.mxu0 0.0
        %4115 = vmatpush.msra.mxu0 0.0
        %4116 = vmatpush.msra.mxu0 0.0
        %4117 = vmatpush.msra.mxu0 0.0
        %4118 = vmatpush.msra.mxu0 0.0
        %4119 = vmatpush.msra.mxu0 0.0
        %v4120 = vand.u32 %v4024, 4294901760
        %4121 = vmatpush.msra.mxu0 %v4120
        %v4122 = vand.u32 %v4027, 4294901760
        %v4123 = vsub.f32 %v4027, %v4122
        %v4124 = vand.u32 %v4123, 4294901760
        %4125 = vmatmul.f32.gmra.mxu0 %v4124
        %v4126 = vpop.f32.mrf.mxu0
        %v4127 = vadd.f32 %v4103, %v4126
        %4128 = vdwg.mxu0
        %4129 = vmatpush.msra.mxu0 0.0
        %4130 = vmatpush.msra.mxu0 0.0
        %4131 = vmatpush.msra.mxu0 0.0
        %4132 = vmatpush.msra.mxu0 0.0
        %4133 = vmatpush.msra.mxu0 0.0
        %4134 = vmatpush.msra.mxu0 0.0
        %4135 = vmatpush.msra.mxu0 0.0
        %4136 = vmatpush.msra.mxu0 0.0
        %4137 = vmatpush.msra.mxu0 0.0
        %4138 = vmatpush.msra.mxu0 0.0
        %4139 = vmatpush.msra.mxu0 0.0
        %4140 = vmatpush.msra.mxu0 0.0
        %4141 = vmatpush.msra.mxu0 0.0
        %4142 = vmatpush.msra.mxu0 0.0
        %4143 = vmatpush.msra.mxu0 0.0
        %v4144 = vand.u32 %v4024, 4294901760
        %v4145 = vsub.f32 %v4024, %v4144
        %v4146 = vand.u32 %v4145, 4294901760
        %4147 = vmatpush.msra.mxu0 %v4146
        %v4148 = vand.u32 %v4027, 4294901760
        %4149 = vmatmul.f32.gmra.mxu0 %v4148
        %v4150 = vpop.f32.mrf.mxu0
        %v4151 = vadd.f32 %v4127, %v4150
        %4152 = vdwg.mxu0
        %4153 = vmatpush.msra.mxu0 0.0
        %4154 = vmatpush.msra.mxu0 0.0
        %4155 = vmatpush.msra.mxu0 0.0
        %4156 = vmatpush.msra.mxu0 0.0
        %4157 = vmatpush.msra.mxu0 0.0
        %4158 = vmatpush.msra.mxu0 0.0
        %4159 = vmatpush.msra.mxu0 0.0
        %4160 = vmatpush.msra.mxu0 0.0
        %4161 = vmatpush.msra.mxu0 0.0
        %4162 = vmatpush.msra.mxu0 0.0
        %4163 = vmatpush.msra.mxu0 0.0
        %4164 = vmatpush.msra.mxu0 0.0
        %4165 = vmatpush.msra.mxu0 0.0
        %4166 = vmatpush.msra.mxu0 0.0
        %4167 = vmatpush.msra.mxu0 0.0
        %v4168 = vand.u32 %v4024, 4294901760
        %4169 = vmatpush.msra.mxu0 %v4168
        %v4170 = vand.u32 %v4027, 4294901760
        %4171 = vmatmul.f32.gmra.mxu0 %v4170
        %v4172 = vpop.f32.mrf.mxu0
        %v4173 = vadd.f32 %v4151, %v4172
        %4174 = vdwg.mxu0
        %v4176 = vsel %vm1872, %v4173, 0
        %4178 = vmatpush.msra.mxu0 0.0
        %4179 = vmatpush.msra.mxu0 0.0
        %4180 = vmatpush.msra.mxu0 0.0
        %4181 = vmatpush.msra.mxu0 0.0
        %4182 = vmatpush.msra.mxu0 0.0
        %4183 = vmatpush.msra.mxu0 0.0
        %4184 = vmatpush.msra.mxu0 0.0
        %4185 = vmatpush.msra.mxu0 0.0
        %4186 = vmatpush.msra.mxu0 0.0
        %4187 = vmatpush.msra.mxu0 0.0
        %4188 = vmatpush.msra.mxu0 0.0
        %4189 = vmatpush.msra.mxu0 0.0
        %4190 = vmatpush.msra.mxu0 0.0
        %4191 = vmatpush.msra.mxu0 0.0
        %v4192 = vand.u32 %v1865, 4294901760
        %4193 = vmatpush.msra.mxu0 %v4192
        %v4194 = vand.u32 %v1864, 4294901760
        %4195 = vmatpush.msra.mxu0 %v4194
        %v4196 = vand.u32 %v4176, 4294901760
        %v4197 = vsub.f32 %v4176, %v4196
        %v4198 = vand.u32 %v4197, 4294901760
        %v4199 = vsub.f32 %v4197, %v4198
        %v4200 = vand.u32 %v4199, 4294901760
        %4201 = vmatmul.f32.gmra.mxu0 %v4200
        %v4202 = vpop.f32.mrf.mxu0
        %v4203 = vadd.f32 0.0, %v4202
        %4204 = vdwg.mxu0
        %4205 = vmatpush.msra.mxu0 0.0
        %4206 = vmatpush.msra.mxu0 0.0
        %4207 = vmatpush.msra.mxu0 0.0
        %4208 = vmatpush.msra.mxu0 0.0
        %4209 = vmatpush.msra.mxu0 0.0
        %4210 = vmatpush.msra.mxu0 0.0
        %4211 = vmatpush.msra.mxu0 0.0
        %4212 = vmatpush.msra.mxu0 0.0
        %4213 = vmatpush.msra.mxu0 0.0
        %4214 = vmatpush.msra.mxu0 0.0
        %4215 = vmatpush.msra.mxu0 0.0
        %4216 = vmatpush.msra.mxu0 0.0
        %4217 = vmatpush.msra.mxu0 0.0
        %4218 = vmatpush.msra.mxu0 0.0
        %v4219 = vand.u32 %v1865, 4294901760
        %v4220 = vsub.f32 %v1865, %v4219
        %v4221 = vand.u32 %v4220, 4294901760
        %v4222 = vsub.f32 %v4220, %v4221
        %v4223 = vand.u32 %v4222, 4294901760
        %4224 = vmatpush.msra.mxu0 %v4223
        %v4225 = vand.u32 %v1864, 4294901760
        %v4226 = vsub.f32 %v1864, %v4225
        %v4227 = vand.u32 %v4226, 4294901760
        %v4228 = vsub.f32 %v4226, %v4227
        %v4229 = vand.u32 %v4228, 4294901760
        %4230 = vmatpush.msra.mxu0 %v4229
        %v4231 = vand.u32 %v4176, 4294901760
        %4232 = vmatmul.f32.gmra.mxu0 %v4231
        %v4233 = vpop.f32.mrf.mxu0
        %v4234 = vadd.f32 %v4203, %v4233
        %4235 = vdwg.mxu0
        %4236 = vmatpush.msra.mxu0 0.0
        %4237 = vmatpush.msra.mxu0 0.0
        %4238 = vmatpush.msra.mxu0 0.0
        %4239 = vmatpush.msra.mxu0 0.0
        %4240 = vmatpush.msra.mxu0 0.0
        %4241 = vmatpush.msra.mxu0 0.0
        %4242 = vmatpush.msra.mxu0 0.0
        %4243 = vmatpush.msra.mxu0 0.0
        %4244 = vmatpush.msra.mxu0 0.0
        %4245 = vmatpush.msra.mxu0 0.0
        %4246 = vmatpush.msra.mxu0 0.0
        %4247 = vmatpush.msra.mxu0 0.0
        %4248 = vmatpush.msra.mxu0 0.0
        %4249 = vmatpush.msra.mxu0 0.0
        %v4250 = vand.u32 %v1865, 4294901760
        %v4251 = vsub.f32 %v1865, %v4250
        %4252 = vmatpush.msra.mxu0 %v4251
        %v4253 = vand.u32 %v1864, 4294901760
        %v4254 = vsub.f32 %v1864, %v4253
        %4255 = vmatpush.msra.mxu0 %v4254
        %v4256 = vand.u32 %v4176, 4294901760
        %v4257 = vsub.f32 %v4176, %v4256
        %4258 = vmatmul.f32.gmra.mxu0 %v4257
        %v4259 = vpop.f32.mrf.mxu0
        %v4260 = vadd.f32 %v4234, %v4259
        %4261 = vdwg.mxu0
        %4262 = vmatpush.msra.mxu0 0.0
        %4263 = vmatpush.msra.mxu0 0.0
        %4264 = vmatpush.msra.mxu0 0.0
        %4265 = vmatpush.msra.mxu0 0.0
        %4266 = vmatpush.msra.mxu0 0.0
        %4267 = vmatpush.msra.mxu0 0.0
        %4268 = vmatpush.msra.mxu0 0.0
        %4269 = vmatpush.msra.mxu0 0.0
        %4270 = vmatpush.msra.mxu0 0.0
        %4271 = vmatpush.msra.mxu0 0.0
        %4272 = vmatpush.msra.mxu0 0.0
        %4273 = vmatpush.msra.mxu0 0.0
        %4274 = vmatpush.msra.mxu0 0.0
        %4275 = vmatpush.msra.mxu0 0.0
        %v4276 = vand.u32 %v1865, 4294901760
        %4277 = vmatpush.msra.mxu0 %v4276
        %v4278 = vand.u32 %v1864, 4294901760
        %4279 = vmatpush.msra.mxu0 %v4278
        %v4280 = vand.u32 %v4176, 4294901760
        %v4281 = vsub.f32 %v4176, %v4280
        %v4282 = vand.u32 %v4281, 4294901760
        %4283 = vmatmul.f32.gmra.mxu0 %v4282
        %v4284 = vpop.f32.mrf.mxu0
        %v4285 = vadd.f32 %v4260, %v4284
        %4286 = vdwg.mxu0
        %4287 = vmatpush.msra.mxu0 0.0
        %4288 = vmatpush.msra.mxu0 0.0
        %4289 = vmatpush.msra.mxu0 0.0
        %4290 = vmatpush.msra.mxu0 0.0
        %4291 = vmatpush.msra.mxu0 0.0
        %4292 = vmatpush.msra.mxu0 0.0
        %4293 = vmatpush.msra.mxu0 0.0
        %4294 = vmatpush.msra.mxu0 0.0
        %4295 = vmatpush.msra.mxu0 0.0
        %4296 = vmatpush.msra.mxu0 0.0
        %4297 = vmatpush.msra.mxu0 0.0
        %4298 = vmatpush.msra.mxu0 0.0
        %4299 = vmatpush.msra.mxu0 0.0
        %4300 = vmatpush.msra.mxu0 0.0
        %v4301 = vand.u32 %v1865, 4294901760
        %v4302 = vsub.f32 %v1865, %v4301
        %v4303 = vand.u32 %v4302, 4294901760
        %4304 = vmatpush.msra.mxu0 %v4303
        %v4305 = vand.u32 %v1864, 4294901760
        %v4306 = vsub.f32 %v1864, %v4305
        %v4307 = vand.u32 %v4306, 4294901760
        %4308 = vmatpush.msra.mxu0 %v4307
        %v4309 = vand.u32 %v4176, 4294901760
        %4310 = vmatmul.f32.gmra.mxu0 %v4309
        %v4311 = vpop.f32.mrf.mxu0
        %v4312 = vadd.f32 %v4285, %v4311
        %4313 = vdwg.mxu0
        %4314 = vmatpush.msra.mxu0 0.0
        %4315 = vmatpush.msra.mxu0 0.0
        %4316 = vmatpush.msra.mxu0 0.0
        %4317 = vmatpush.msra.mxu0 0.0
        %4318 = vmatpush.msra.mxu0 0.0
        %4319 = vmatpush.msra.mxu0 0.0
        %4320 = vmatpush.msra.mxu0 0.0
        %4321 = vmatpush.msra.mxu0 0.0
        %4322 = vmatpush.msra.mxu0 0.0
        %4323 = vmatpush.msra.mxu0 0.0
        %4324 = vmatpush.msra.mxu0 0.0
        %4325 = vmatpush.msra.mxu0 0.0
        %4326 = vmatpush.msra.mxu0 0.0
        %4327 = vmatpush.msra.mxu0 0.0
        %v4328 = vand.u32 %v1865, 4294901760
        %4329 = vmatpush.msra.mxu0 %v4328
        %v4330 = vand.u32 %v1864, 4294901760
        %4331 = vmatpush.msra.mxu0 %v4330
        %v4332 = vand.u32 %v4176, 4294901760
        %4333 = vmatmul.f32.gmra.mxu0 %v4332
        %v4334 = vpop.f32.mrf.mxu0
        %v4335 = vadd.f32 %v4312, %v4334
        %4336 = vdwg.mxu0
        %v4337 = vadd.f32 %v3843, %v4335
        %4338 = vrot.lane.b32.xlu0 %v1141, 48
        %v4339 = vpop.permute.xlu0 %4338
        %4340 = vrot.lane.b32.xlu0 %v1497, 48
        %v4341 = vpop.permute.xlu0 %4340
        %v4342 = vsel %vm1872, %v4339, 0
        %v4344 = vsel %vm1872, %v4341, 0
        %4346 = vmatpush.xpose.msra.mxu0 0.0
        %4347 = vmatpush.xpose.msra.mxu0 0.0
        %4348 = vmatpush.xpose.msra.mxu0 0.0
        %4349 = vmatpush.xpose.msra.mxu0 0.0
        %4350 = vmatpush.xpose.msra.mxu0 0.0
        %4351 = vmatpush.xpose.msra.mxu0 0.0
        %4352 = vmatpush.xpose.msra.mxu0 0.0
        %4353 = vmatpush.xpose.msra.mxu0 0.0
        %4354 = vmatpush.xpose.msra.mxu0 0.0
        %4355 = vmatpush.xpose.msra.mxu0 0.0
        %4356 = vmatpush.xpose.msra.mxu0 0.0
        %4357 = vmatpush.xpose.msra.mxu0 0.0
        %4358 = vmatpush.xpose.msra.mxu0 0.0
        %4359 = vmatpush.xpose.msra.mxu0 0.0
        %4360 = vmatpush.xpose.msra.mxu0 0.0
        %v4361 = vand.u32 %v4344, 4294901760
        %4362 = vmatpush.xpose.msra.mxu0 %v4361
        %v4363 = vand.u32 %v4342, 4294901760
        %v4364 = vsub.f32 %v4342, %v4363
        %v4365 = vand.u32 %v4364, 4294901760
        %v4366 = vsub.f32 %v4364, %v4365
        %v4367 = vand.u32 %v4366, 4294901760
        %4368 = vmatmul.f32.gmra.mxu0 %v4367
        %v4369 = vpop.f32.mrf.mxu0
        %v4370 = vadd.f32 0.0, %v4369
        %4371 = vdwg.mxu0
        %4372 = vmatpush.xpose.msra.mxu0 0.0
        %4373 = vmatpush.xpose.msra.mxu0 0.0
        %4374 = vmatpush.xpose.msra.mxu0 0.0
        %4375 = vmatpush.xpose.msra.mxu0 0.0
        %4376 = vmatpush.xpose.msra.mxu0 0.0
        %4377 = vmatpush.xpose.msra.mxu0 0.0
        %4378 = vmatpush.xpose.msra.mxu0 0.0
        %4379 = vmatpush.xpose.msra.mxu0 0.0
        %4380 = vmatpush.xpose.msra.mxu0 0.0
        %4381 = vmatpush.xpose.msra.mxu0 0.0
        %4382 = vmatpush.xpose.msra.mxu0 0.0
        %4383 = vmatpush.xpose.msra.mxu0 0.0
        %4384 = vmatpush.xpose.msra.mxu0 0.0
        %4385 = vmatpush.xpose.msra.mxu0 0.0
        %4386 = vmatpush.xpose.msra.mxu0 0.0
        %v4387 = vand.u32 %v4344, 4294901760
        %v4388 = vsub.f32 %v4344, %v4387
        %v4389 = vand.u32 %v4388, 4294901760
        %v4390 = vsub.f32 %v4388, %v4389
        %v4391 = vand.u32 %v4390, 4294901760
        %4392 = vmatpush.xpose.msra.mxu0 %v4391
        %v4393 = vand.u32 %v4342, 4294901760
        %4394 = vmatmul.f32.gmra.mxu0 %v4393
        %v4395 = vpop.f32.mrf.mxu0
        %v4396 = vadd.f32 %v4370, %v4395
        %4397 = vdwg.mxu0
        %4398 = vmatpush.xpose.msra.mxu0 0.0
        %4399 = vmatpush.xpose.msra.mxu0 0.0
        %4400 = vmatpush.xpose.msra.mxu0 0.0
        %4401 = vmatpush.xpose.msra.mxu0 0.0
        %4402 = vmatpush.xpose.msra.mxu0 0.0
        %4403 = vmatpush.xpose.msra.mxu0 0.0
        %4404 = vmatpush.xpose.msra.mxu0 0.0
        %4405 = vmatpush.xpose.msra.mxu0 0.0
        %4406 = vmatpush.xpose.msra.mxu0 0.0
        %4407 = vmatpush.xpose.msra.mxu0 0.0
        %4408 = vmatpush.xpose.msra.mxu0 0.0
        %4409 = vmatpush.xpose.msra.mxu0 0.0
        %4410 = vmatpush.xpose.msra.mxu0 0.0
        %4411 = vmatpush.xpose.msra.mxu0 0.0
        %4412 = vmatpush.xpose.msra.mxu0 0.0
        %v4413 = vand.u32 %v4344, 4294901760
        %v4414 = vsub.f32 %v4344, %v4413
        %4415 = vmatpush.xpose.msra.mxu0 %v4414
        %v4416 = vand.u32 %v4342, 4294901760
        %v4417 = vsub.f32 %v4342, %v4416
        %4418 = vmatmul.f32.gmra.mxu0 %v4417
        %v4419 = vpop.f32.mrf.mxu0
        %v4420 = vadd.f32 %v4396, %v4419
        %4421 = vdwg.mxu0
        %4422 = vmatpush.xpose.msra.mxu0 0.0
        %4423 = vmatpush.xpose.msra.mxu0 0.0
        %4424 = vmatpush.xpose.msra.mxu0 0.0
        %4425 = vmatpush.xpose.msra.mxu0 0.0
        %4426 = vmatpush.xpose.msra.mxu0 0.0
        %4427 = vmatpush.xpose.msra.mxu0 0.0
        %4428 = vmatpush.xpose.msra.mxu0 0.0
        %4429 = vmatpush.xpose.msra.mxu0 0.0
        %4430 = vmatpush.xpose.msra.mxu0 0.0
        %4431 = vmatpush.xpose.msra.mxu0 0.0
        %4432 = vmatpush.xpose.msra.mxu0 0.0
        %4433 = vmatpush.xpose.msra.mxu0 0.0
        %4434 = vmatpush.xpose.msra.mxu0 0.0
        %4435 = vmatpush.xpose.msra.mxu0 0.0
        %4436 = vmatpush.xpose.msra.mxu0 0.0
        %v4437 = vand.u32 %v4344, 4294901760
        %4438 = vmatpush.xpose.msra.mxu0 %v4437
        %v4439 = vand.u32 %v4342, 4294901760
        %v4440 = vsub.f32 %v4342, %v4439
        %v4441 = vand.u32 %v4440, 4294901760
        %4442 = vmatmul.f32.gmra.mxu0 %v4441
        %v4443 = vpop.f32.mrf.mxu0
        %v4444 = vadd.f32 %v4420, %v4443
        %4445 = vdwg.mxu0
        %4446 = vmatpush.xpose.msra.mxu0 0.0
        %4447 = vmatpush.xpose.msra.mxu0 0.0
        %4448 = vmatpush.xpose.msra.mxu0 0.0
        %4449 = vmatpush.xpose.msra.mxu0 0.0
        %4450 = vmatpush.xpose.msra.mxu0 0.0
        %4451 = vmatpush.xpose.msra.mxu0 0.0
        %4452 = vmatpush.xpose.msra.mxu0 0.0
        %4453 = vmatpush.xpose.msra.mxu0 0.0
        %4454 = vmatpush.xpose.msra.mxu0 0.0
        %4455 = vmatpush.xpose.msra.mxu0 0.0
        %4456 = vmatpush.xpose.msra.mxu0 0.0
        %4457 = vmatpush.xpose.msra.mxu0 0.0
        %4458 = vmatpush.xpose.msra.mxu0 0.0
        %4459 = vmatpush.xpose.msra.mxu0 0.0
        %4460 = vmatpush.xpose.msra.mxu0 0.0
        %v4461 = vand.u32 %v4344, 4294901760
        %v4462 = vsub.f32 %v4344, %v4461
        %v4463 = vand.u32 %v4462, 4294901760
        %4464 = vmatpush.xpose.msra.mxu0 %v4463
        %v4465 = vand.u32 %v4342, 4294901760
        %4466 = vmatmul.f32.gmra.mxu0 %v4465
        %v4467 = vpop.f32.mrf.mxu0
        %v4468 = vadd.f32 %v4444, %v4467
        %4469 = vdwg.mxu0
        %4470 = vmatpush.xpose.msra.mxu0 0.0
        %4471 = vmatpush.xpose.msra.mxu0 0.0
        %4472 = vmatpush.xpose.msra.mxu0 0.0
        %4473 = vmatpush.xpose.msra.mxu0 0.0
        %4474 = vmatpush.xpose.msra.mxu0 0.0
        %4475 = vmatpush.xpose.msra.mxu0 0.0
        %4476 = vmatpush.xpose.msra.mxu0 0.0
        %4477 = vmatpush.xpose.msra.mxu0 0.0
        %4478 = vmatpush.xpose.msra.mxu0 0.0
        %4479 = vmatpush.xpose.msra.mxu0 0.0
        %4480 = vmatpush.xpose.msra.mxu0 0.0
        %4481 = vmatpush.xpose.msra.mxu0 0.0
        %4482 = vmatpush.xpose.msra.mxu0 0.0
        %4483 = vmatpush.xpose.msra.mxu0 0.0
        %4484 = vmatpush.xpose.msra.mxu0 0.0
        %v4485 = vand.u32 %v4344, 4294901760
        %4486 = vmatpush.xpose.msra.mxu0 %v4485
        %v4487 = vand.u32 %v4342, 4294901760
        %4488 = vmatmul.f32.gmra.mxu0 %v4487
        %v4489 = vpop.f32.mrf.mxu0
        %v4490 = vadd.f32 %v4468, %v4489
        %4491 = vdwg.mxu0
        %v4492 = vsel %vm783, -8.838835e+18, %v4490
        %v4493 = vsel %vm2026, %v4492, -inf
        %4494 = vmax.xlane.f32.xlu0 %v4493
        %v4495 = vpop.xlane.xlu0 %4494
        %v4496 = vsub.f32 %v4492, %v4495
        %v4497 = vmul.f32 %v4496, 1.442695
        %v4498 = vpow.pop %v4497
        %v4499 = vsel %vm2026, %v4498, 0.0
        %4500 = vadd.xlane.f32.xlu0 %v4499
        %v4501 = vpop.xlane.xlu0 %4500
        %v4502 = vrcp.pop %v4501
        %v4503 = vmul.f32 %v4501, %v4502
        %v4504 = vsub.f32 1.0, %v4503
        %v4505 = vmul.f32 %v4502, %v4504
        %v4506 = vadd.f32 %v4502, %v4505
        %vm4507 = vweird.f32 %v4501
        %vm4508 = vweird.f32 %v4502
        %vm4509 = vmor %vm4507, %vm4508
        %v4510 = vsel %vm4509, %v4502, %v4506
        %v4511 = vand.u32 2147483647, %v4501
        %vm4512 = vcmp.eq.f32.partialorder %v4511, 8.507059e+37
        %v4513 = vand.u32 %v4501, 2147483648
        %v4514 = vor.u32 1.1754944e-38, %v4513
        %v4515 = vsel %vm4512, %v4514, %v4510
        %v4516 = vmul.f32 %v4498, %v4515
        %4517 = vrot.lane.b32.xlu0 %v1854, 48
        %v4518 = vpop.permute.xlu0 %4517
        %v4521 = vsel %vm2026, %v4516, 0
        %4523 = vmatpush.msra.mxu0 0.0
        %4524 = vmatpush.msra.mxu0 0.0
        %4525 = vmatpush.msra.mxu0 0.0
        %4526 = vmatpush.msra.mxu0 0.0
        %4527 = vmatpush.msra.mxu0 0.0
        %4528 = vmatpush.msra.mxu0 0.0
        %4529 = vmatpush.msra.mxu0 0.0
        %4530 = vmatpush.msra.mxu0 0.0
        %4531 = vmatpush.msra.mxu0 0.0
        %4532 = vmatpush.msra.mxu0 0.0
        %4533 = vmatpush.msra.mxu0 0.0
        %4534 = vmatpush.msra.mxu0 0.0
        %4535 = vmatpush.msra.mxu0 0.0
        %4536 = vmatpush.msra.mxu0 0.0
        %4537 = vmatpush.msra.mxu0 0.0
        %v4538 = vand.u32 %v4518, 4294901760
        %4539 = vmatpush.msra.mxu0 %v4538
        %v4540 = vand.u32 %v4521, 4294901760
        %v4541 = vsub.f32 %v4521, %v4540
        %v4542 = vand.u32 %v4541, 4294901760
        %v4543 = vsub.f32 %v4541, %v4542
        %v4544 = vand.u32 %v4543, 4294901760
        %4545 = vmatmul.f32.gmra.mxu0 %v4544
        %v4546 = vpop.f32.mrf.mxu0
        %v4547 = vadd.f32 0.0, %v4546
        %4548 = vdwg.mxu0
        %4549 = vmatpush.msra.mxu0 0.0
        %4550 = vmatpush.msra.mxu0 0.0
        %4551 = vmatpush.msra.mxu0 0.0
        %4552 = vmatpush.msra.mxu0 0.0
        %4553 = vmatpush.msra.mxu0 0.0
        %4554 = vmatpush.msra.mxu0 0.0
        %4555 = vmatpush.msra.mxu0 0.0
        %4556 = vmatpush.msra.mxu0 0.0
        %4557 = vmatpush.msra.mxu0 0.0
        %4558 = vmatpush.msra.mxu0 0.0
        %4559 = vmatpush.msra.mxu0 0.0
        %4560 = vmatpush.msra.mxu0 0.0
        %4561 = vmatpush.msra.mxu0 0.0
        %4562 = vmatpush.msra.mxu0 0.0
        %4563 = vmatpush.msra.mxu0 0.0
        %v4564 = vand.u32 %v4518, 4294901760
        %v4565 = vsub.f32 %v4518, %v4564
        %v4566 = vand.u32 %v4565, 4294901760
        %v4567 = vsub.f32 %v4565, %v4566
        %v4568 = vand.u32 %v4567, 4294901760
        %4569 = vmatpush.msra.mxu0 %v4568
        %v4570 = vand.u32 %v4521, 4294901760
        %4571 = vmatmul.f32.gmra.mxu0 %v4570
        %v4572 = vpop.f32.mrf.mxu0
        %v4573 = vadd.f32 %v4547, %v4572
        %4574 = vdwg.mxu0
        %4575 = vmatpush.msra.mxu0 0.0
        %4576 = vmatpush.msra.mxu0 0.0
        %4577 = vmatpush.msra.mxu0 0.0
        %4578 = vmatpush.msra.mxu0 0.0
        %4579 = vmatpush.msra.mxu0 0.0
        %4580 = vmatpush.msra.mxu0 0.0
        %4581 = vmatpush.msra.mxu0 0.0
        %4582 = vmatpush.msra.mxu0 0.0
        %4583 = vmatpush.msra.mxu0 0.0
        %4584 = vmatpush.msra.mxu0 0.0
        %4585 = vmatpush.msra.mxu0 0.0
        %4586 = vmatpush.msra.mxu0 0.0
        %4587 = vmatpush.msra.mxu0 0.0
        %4588 = vmatpush.msra.mxu0 0.0
        %4589 = vmatpush.msra.mxu0 0.0
        %v4590 = vand.u32 %v4518, 4294901760
        %v4591 = vsub.f32 %v4518, %v4590
        %4592 = vmatpush.msra.mxu0 %v4591
        %v4593 = vand.u32 %v4521, 4294901760
        %v4594 = vsub.f32 %v4521, %v4593
        %4595 = vmatmul.f32.gmra.mxu0 %v4594
        %v4596 = vpop.f32.mrf.mxu0
        %v4597 = vadd.f32 %v4573, %v4596
        %4598 = vdwg.mxu0
        %4599 = vmatpush.msra.mxu0 0.0
        %4600 = vmatpush.msra.mxu0 0.0
        %4601 = vmatpush.msra.mxu0 0.0
        %4602 = vmatpush.msra.mxu0 0.0
        %4603 = vmatpush.msra.mxu0 0.0
        %4604 = vmatpush.msra.mxu0 0.0
        %4605 = vmatpush.msra.mxu0 0.0
        %4606 = vmatpush.msra.mxu0 0.0
        %4607 = vmatpush.msra.mxu0 0.0
        %4608 = vmatpush.msra.mxu0 0.0
        %4609 = vmatpush.msra.mxu0 0.0
        %4610 = vmatpush.msra.mxu0 0.0
        %4611 = vmatpush.msra.mxu0 0.0
        %4612 = vmatpush.msra.mxu0 0.0
        %4613 = vmatpush.msra.mxu0 0.0
        %v4614 = vand.u32 %v4518, 4294901760
        %4615 = vmatpush.msra.mxu0 %v4614
        %v4616 = vand.u32 %v4521, 4294901760
        %v4617 = vsub.f32 %v4521, %v4616
        %v4618 = vand.u32 %v4617, 4294901760
        %4619 = vmatmul.f32.gmra.mxu0 %v4618
        %v4620 = vpop.f32.mrf.mxu0
        %v4621 = vadd.f32 %v4597, %v4620
        %4622 = vdwg.mxu0
        %4623 = vmatpush.msra.mxu0 0.0
        %4624 = vmatpush.msra.mxu0 0.0
        %4625 = vmatpush.msra.mxu0 0.0
        %4626 = vmatpush.msra.mxu0 0.0
        %4627 = vmatpush.msra.mxu0 0.0
        %4628 = vmatpush.msra.mxu0 0.0
        %4629 = vmatpush.msra.mxu0 0.0
        %4630 = vmatpush.msra.mxu0 0.0
        %4631 = vmatpush.msra.mxu0 0.0
        %4632 = vmatpush.msra.mxu0 0.0
        %4633 = vmatpush.msra.mxu0 0.0
        %4634 = vmatpush.msra.mxu0 0.0
        %4635 = vmatpush.msra.mxu0 0.0
        %4636 = vmatpush.msra.mxu0 0.0
        %4637 = vmatpush.msra.mxu0 0.0
        %v4638 = vand.u32 %v4518, 4294901760
        %v4639 = vsub.f32 %v4518, %v4638
        %v4640 = vand.u32 %v4639, 4294901760
        %4641 = vmatpush.msra.mxu0 %v4640
        %v4642 = vand.u32 %v4521, 4294901760
        %4643 = vmatmul.f32.gmra.mxu0 %v4642
        %v4644 = vpop.f32.mrf.mxu0
        %v4645 = vadd.f32 %v4621, %v4644
        %4646 = vdwg.mxu0
        %4647 = vmatpush.msra.mxu0 0.0
        %4648 = vmatpush.msra.mxu0 0.0
        %4649 = vmatpush.msra.mxu0 0.0
        %4650 = vmatpush.msra.mxu0 0.0
        %4651 = vmatpush.msra.mxu0 0.0
        %4652 = vmatpush.msra.mxu0 0.0
        %4653 = vmatpush.msra.mxu0 0.0
        %4654 = vmatpush.msra.mxu0 0.0
        %4655 = vmatpush.msra.mxu0 0.0
        %4656 = vmatpush.msra.mxu0 0.0
        %4657 = vmatpush.msra.mxu0 0.0
        %4658 = vmatpush.msra.mxu0 0.0
        %4659 = vmatpush.msra.mxu0 0.0
        %4660 = vmatpush.msra.mxu0 0.0
        %4661 = vmatpush.msra.mxu0 0.0
        %v4662 = vand.u32 %v4518, 4294901760
        %4663 = vmatpush.msra.mxu0 %v4662
        %v4664 = vand.u32 %v4521, 4294901760
        %4665 = vmatmul.f32.gmra.mxu0 %v4664
        %v4666 = vpop.f32.mrf.mxu0
        %v4667 = vadd.f32 %v4645, %v4666
        %4668 = vdwg.mxu0
        %v4670 = vsel %vm1872, %v4667, 0
        %4672 = vmatpush.msra.mxu0 0.0
        %4673 = vmatpush.msra.mxu0 0.0
        %4674 = vmatpush.msra.mxu0 0.0
        %4675 = vmatpush.msra.mxu0 0.0
        %4676 = vmatpush.msra.mxu0 0.0
        %4677 = vmatpush.msra.mxu0 0.0
        %4678 = vmatpush.msra.mxu0 0.0
        %4679 = vmatpush.msra.mxu0 0.0
        %4680 = vmatpush.msra.mxu0 0.0
        %4681 = vmatpush.msra.mxu0 0.0
        %4682 = vmatpush.msra.mxu0 0.0
        %4683 = vmatpush.msra.mxu0 0.0
        %4684 = vmatpush.msra.mxu0 0.0
        %4685 = vmatpush.msra.mxu0 0.0
        %v4686 = vand.u32 %v1867, 4294901760
        %4687 = vmatpush.msra.mxu0 %v4686
        %v4688 = vand.u32 %v1866, 4294901760
        %4689 = vmatpush.msra.mxu0 %v4688
        %v4690 = vand.u32 %v4670, 4294901760
        %v4691 = vsub.f32 %v4670, %v4690
        %v4692 = vand.u32 %v4691, 4294901760
        %v4693 = vsub.f32 %v4691, %v4692
        %v4694 = vand.u32 %v4693, 4294901760
        %4695 = vmatmul.f32.gmra.mxu0 %v4694
        %v4696 = vpop.f32.mrf.mxu0
        %v4697 = vadd.f32 0.0, %v4696
        %4698 = vdwg.mxu0
        %4699 = vmatpush.msra.mxu0 0.0
        %4700 = vmatpush.msra.mxu0 0.0
        %4701 = vmatpush.msra.mxu0 0.0
        %4702 = vmatpush.msra.mxu0 0.0
        %4703 = vmatpush.msra.mxu0 0.0
        %4704 = vmatpush.msra.mxu0 0.0
        %4705 = vmatpush.msra.mxu0 0.0
        %4706 = vmatpush.msra.mxu0 0.0
        %4707 = vmatpush.msra.mxu0 0.0
        %4708 = vmatpush.msra.mxu0 0.0
        %4709 = vmatpush.msra.mxu0 0.0
        %4710 = vmatpush.msra.mxu0 0.0
        %4711 = vmatpush.msra.mxu0 0.0
        %4712 = vmatpush.msra.mxu0 0.0
        %v4713 = vand.u32 %v1867, 4294901760
        %v4714 = vsub.f32 %v1867, %v4713
        %v4715 = vand.u32 %v4714, 4294901760
        %v4716 = vsub.f32 %v4714, %v4715
        %v4717 = vand.u32 %v4716, 4294901760
        %4718 = vmatpush.msra.mxu0 %v4717
        %v4719 = vand.u32 %v1866, 4294901760
        %v4720 = vsub.f32 %v1866, %v4719
        %v4721 = vand.u32 %v4720, 4294901760
        %v4722 = vsub.f32 %v4720, %v4721
        %v4723 = vand.u32 %v4722, 4294901760
        %4724 = vmatpush.msra.mxu0 %v4723
        %v4725 = vand.u32 %v4670, 4294901760
        %4726 = vmatmul.f32.gmra.mxu0 %v4725
        %v4727 = vpop.f32.mrf.mxu0
        %v4728 = vadd.f32 %v4697, %v4727
        %4729 = vdwg.mxu0
        %4730 = vmatpush.msra.mxu0 0.0
        %4731 = vmatpush.msra.mxu0 0.0
        %4732 = vmatpush.msra.mxu0 0.0
        %4733 = vmatpush.msra.mxu0 0.0
        %4734 = vmatpush.msra.mxu0 0.0
        %4735 = vmatpush.msra.mxu0 0.0
        %4736 = vmatpush.msra.mxu0 0.0
        %4737 = vmatpush.msra.mxu0 0.0
        %4738 = vmatpush.msra.mxu0 0.0
        %4739 = vmatpush.msra.mxu0 0.0
        %4740 = vmatpush.msra.mxu0 0.0
        %4741 = vmatpush.msra.mxu0 0.0
        %4742 = vmatpush.msra.mxu0 0.0
        %4743 = vmatpush.msra.mxu0 0.0
        %v4744 = vand.u32 %v1867, 4294901760
        %v4745 = vsub.f32 %v1867, %v4744
        %4746 = vmatpush.msra.mxu0 %v4745
        %v4747 = vand.u32 %v1866, 4294901760
        %v4748 = vsub.f32 %v1866, %v4747
        %4749 = vmatpush.msra.mxu0 %v4748
        %v4750 = vand.u32 %v4670, 4294901760
        %v4751 = vsub.f32 %v4670, %v4750
        %4752 = vmatmul.f32.gmra.mxu0 %v4751
        %v4753 = vpop.f32.mrf.mxu0
        %v4754 = vadd.f32 %v4728, %v4753
        %4755 = vdwg.mxu0
        %4756 = vmatpush.msra.mxu0 0.0
        %4757 = vmatpush.msra.mxu0 0.0
        %4758 = vmatpush.msra.mxu0 0.0
        %4759 = vmatpush.msra.mxu0 0.0
        %4760 = vmatpush.msra.mxu0 0.0
        %4761 = vmatpush.msra.mxu0 0.0
        %4762 = vmatpush.msra.mxu0 0.0
        %4763 = vmatpush.msra.mxu0 0.0
        %4764 = vmatpush.msra.mxu0 0.0
        %4765 = vmatpush.msra.mxu0 0.0
        %4766 = vmatpush.msra.mxu0 0.0
        %4767 = vmatpush.msra.mxu0 0.0
        %4768 = vmatpush.msra.mxu0 0.0
        %4769 = vmatpush.msra.mxu0 0.0
        %v4770 = vand.u32 %v1867, 4294901760
        %4771 = vmatpush.msra.mxu0 %v4770
        %v4772 = vand.u32 %v1866, 4294901760
        %4773 = vmatpush.msra.mxu0 %v4772
        %v4774 = vand.u32 %v4670, 4294901760
        %v4775 = vsub.f32 %v4670, %v4774
        %v4776 = vand.u32 %v4775, 4294901760
        %4777 = vmatmul.f32.gmra.mxu0 %v4776
        %v4778 = vpop.f32.mrf.mxu0
        %v4779 = vadd.f32 %v4754, %v4778
        %4780 = vdwg.mxu0
        %4781 = vmatpush.msra.mxu0 0.0
        %4782 = vmatpush.msra.mxu0 0.0
        %4783 = vmatpush.msra.mxu0 0.0
        %4784 = vmatpush.msra.mxu0 0.0
        %4785 = vmatpush.msra.mxu0 0.0
        %4786 = vmatpush.msra.mxu0 0.0
        %4787 = vmatpush.msra.mxu0 0.0
        %4788 = vmatpush.msra.mxu0 0.0
        %4789 = vmatpush.msra.mxu0 0.0
        %4790 = vmatpush.msra.mxu0 0.0
        %4791 = vmatpush.msra.mxu0 0.0
        %4792 = vmatpush.msra.mxu0 0.0
        %4793 = vmatpush.msra.mxu0 0.0
        %4794 = vmatpush.msra.mxu0 0.0
        %v4795 = vand.u32 %v1867, 4294901760
        %v4796 = vsub.f32 %v1867, %v4795
        %v4797 = vand.u32 %v4796, 4294901760
        %4798 = vmatpush.msra.mxu0 %v4797
        %v4799 = vand.u32 %v1866, 4294901760
        %v4800 = vsub.f32 %v1866, %v4799
        %v4801 = vand.u32 %v4800, 4294901760
        %4802 = vmatpush.msra.mxu0 %v4801
        %v4803 = vand.u32 %v4670, 4294901760
        %4804 = vmatmul.f32.gmra.mxu0 %v4803
        %v4805 = vpop.f32.mrf.mxu0
        %v4806 = vadd.f32 %v4779, %v4805
        %4807 = vdwg.mxu0
        %4808 = vmatpush.msra.mxu0 0.0
        %4809 = vmatpush.msra.mxu0 0.0
        %4810 = vmatpush.msra.mxu0 0.0
        %4811 = vmatpush.msra.mxu0 0.0
        %4812 = vmatpush.msra.mxu0 0.0
        %4813 = vmatpush.msra.mxu0 0.0
        %4814 = vmatpush.msra.mxu0 0.0
        %4815 = vmatpush.msra.mxu0 0.0
        %4816 = vmatpush.msra.mxu0 0.0
        %4817 = vmatpush.msra.mxu0 0.0
        %4818 = vmatpush.msra.mxu0 0.0
        %4819 = vmatpush.msra.mxu0 0.0
        %4820 = vmatpush.msra.mxu0 0.0
        %4821 = vmatpush.msra.mxu0 0.0
        %v4822 = vand.u32 %v1867, 4294901760
        %4823 = vmatpush.msra.mxu0 %v4822
        %v4824 = vand.u32 %v1866, 4294901760
        %4825 = vmatpush.msra.mxu0 %v4824
        %v4826 = vand.u32 %v4670, 4294901760
        %4827 = vmatmul.f32.gmra.mxu0 %v4826
        %v4828 = vpop.f32.mrf.mxu0
        %v4829 = vadd.f32 %v4806, %v4828
        %4830 = vdwg.mxu0
        %v4831 = vadd.f32 %v4337, %v4829
        %4832 = vrot.lane.b32.xlu0 %v1141, 32
        %v4833 = vpop.permute.xlu0 %4832
        %4834 = vrot.lane.b32.xlu0 %v1497, 32
        %v4835 = vpop.permute.xlu0 %4834
        %v4836 = vsel %vm1872, %v4833, 0
        %v4838 = vsel %vm1872, %v4835, 0
        %4840 = vmatpush.xpose.msra.mxu0 0.0
        %4841 = vmatpush.xpose.msra.mxu0 0.0
        %4842 = vmatpush.xpose.msra.mxu0 0.0
        %4843 = vmatpush.xpose.msra.mxu0 0.0
        %4844 = vmatpush.xpose.msra.mxu0 0.0
        %4845 = vmatpush.xpose.msra.mxu0 0.0
        %4846 = vmatpush.xpose.msra.mxu0 0.0
        %4847 = vmatpush.xpose.msra.mxu0 0.0
        %4848 = vmatpush.xpose.msra.mxu0 0.0
        %4849 = vmatpush.xpose.msra.mxu0 0.0
        %4850 = vmatpush.xpose.msra.mxu0 0.0
        %4851 = vmatpush.xpose.msra.mxu0 0.0
        %4852 = vmatpush.xpose.msra.mxu0 0.0
        %4853 = vmatpush.xpose.msra.mxu0 0.0
        %4854 = vmatpush.xpose.msra.mxu0 0.0
        %v4855 = vand.u32 %v4838, 4294901760
        %4856 = vmatpush.xpose.msra.mxu0 %v4855
        %v4857 = vand.u32 %v4836, 4294901760
        %v4858 = vsub.f32 %v4836, %v4857
        %v4859 = vand.u32 %v4858, 4294901760
        %v4860 = vsub.f32 %v4858, %v4859
        %v4861 = vand.u32 %v4860, 4294901760
        %4862 = vmatmul.f32.gmra.mxu0 %v4861
        %v4863 = vpop.f32.mrf.mxu0
        %v4864 = vadd.f32 0.0, %v4863
        %4865 = vdwg.mxu0
        %4866 = vmatpush.xpose.msra.mxu0 0.0
        %4867 = vmatpush.xpose.msra.mxu0 0.0
        %4868 = vmatpush.xpose.msra.mxu0 0.0
        %4869 = vmatpush.xpose.msra.mxu0 0.0
        %4870 = vmatpush.xpose.msra.mxu0 0.0
        %4871 = vmatpush.xpose.msra.mxu0 0.0
        %4872 = vmatpush.xpose.msra.mxu0 0.0
        %4873 = vmatpush.xpose.msra.mxu0 0.0
        %4874 = vmatpush.xpose.msra.mxu0 0.0
        %4875 = vmatpush.xpose.msra.mxu0 0.0
        %4876 = vmatpush.xpose.msra.mxu0 0.0
        %4877 = vmatpush.xpose.msra.mxu0 0.0
        %4878 = vmatpush.xpose.msra.mxu0 0.0
        %4879 = vmatpush.xpose.msra.mxu0 0.0
        %4880 = vmatpush.xpose.msra.mxu0 0.0
        %v4881 = vand.u32 %v4838, 4294901760
        %v4882 = vsub.f32 %v4838, %v4881
        %v4883 = vand.u32 %v4882, 4294901760
        %v4884 = vsub.f32 %v4882, %v4883
        %v4885 = vand.u32 %v4884, 4294901760
        %4886 = vmatpush.xpose.msra.mxu0 %v4885
        %v4887 = vand.u32 %v4836, 4294901760
        %4888 = vmatmul.f32.gmra.mxu0 %v4887
        %v4889 = vpop.f32.mrf.mxu0
        %v4890 = vadd.f32 %v4864, %v4889
        %4891 = vdwg.mxu0
        %4892 = vmatpush.xpose.msra.mxu0 0.0
        %4893 = vmatpush.xpose.msra.mxu0 0.0
        %4894 = vmatpush.xpose.msra.mxu0 0.0
        %4895 = vmatpush.xpose.msra.mxu0 0.0
        %4896 = vmatpush.xpose.msra.mxu0 0.0
        %4897 = vmatpush.xpose.msra.mxu0 0.0
        %4898 = vmatpush.xpose.msra.mxu0 0.0
        %4899 = vmatpush.xpose.msra.mxu0 0.0
        %4900 = vmatpush.xpose.msra.mxu0 0.0
        %4901 = vmatpush.xpose.msra.mxu0 0.0
        %4902 = vmatpush.xpose.msra.mxu0 0.0
        %4903 = vmatpush.xpose.msra.mxu0 0.0
        %4904 = vmatpush.xpose.msra.mxu0 0.0
        %4905 = vmatpush.xpose.msra.mxu0 0.0
        %4906 = vmatpush.xpose.msra.mxu0 0.0
        %v4907 = vand.u32 %v4838, 4294901760
        %v4908 = vsub.f32 %v4838, %v4907
        %4909 = vmatpush.xpose.msra.mxu0 %v4908
        %v4910 = vand.u32 %v4836, 4294901760
        %v4911 = vsub.f32 %v4836, %v4910
        %4912 = vmatmul.f32.gmra.mxu0 %v4911
        %v4913 = vpop.f32.mrf.mxu0
        %v4914 = vadd.f32 %v4890, %v4913
        %4915 = vdwg.mxu0
        %4916 = vmatpush.xpose.msra.mxu0 0.0
        %4917 = vmatpush.xpose.msra.mxu0 0.0
        %4918 = vmatpush.xpose.msra.mxu0 0.0
        %4919 = vmatpush.xpose.msra.mxu0 0.0
        %4920 = vmatpush.xpose.msra.mxu0 0.0
        %4921 = vmatpush.xpose.msra.mxu0 0.0
        %4922 = vmatpush.xpose.msra.mxu0 0.0
        %4923 = vmatpush.xpose.msra.mxu0 0.0
        %4924 = vmatpush.xpose.msra.mxu0 0.0
        %4925 = vmatpush.xpose.msra.mxu0 0.0
        %4926 = vmatpush.xpose.msra.mxu0 0.0
        %4927 = vmatpush.xpose.msra.mxu0 0.0
        %4928 = vmatpush.xpose.msra.mxu0 0.0
        %4929 = vmatpush.xpose.msra.mxu0 0.0
        %4930 = vmatpush.xpose.msra.mxu0 0.0
        %v4931 = vand.u32 %v4838, 4294901760
        %4932 = vmatpush.xpose.msra.mxu0 %v4931
        %v4933 = vand.u32 %v4836, 4294901760
        %v4934 = vsub.f32 %v4836, %v4933
        %v4935 = vand.u32 %v4934, 4294901760
        %4936 = vmatmul.f32.gmra.mxu0 %v4935
        %v4937 = vpop.f32.mrf.mxu0
        %v4938 = vadd.f32 %v4914, %v4937
        %4939 = vdwg.mxu0
        %4940 = vmatpush.xpose.msra.mxu0 0.0
        %4941 = vmatpush.xpose.msra.mxu0 0.0
        %4942 = vmatpush.xpose.msra.mxu0 0.0
        %4943 = vmatpush.xpose.msra.mxu0 0.0
        %4944 = vmatpush.xpose.msra.mxu0 0.0
        %4945 = vmatpush.xpose.msra.mxu0 0.0
        %4946 = vmatpush.xpose.msra.mxu0 0.0
        %4947 = vmatpush.xpose.msra.mxu0 0.0
        %4948 = vmatpush.xpose.msra.mxu0 0.0
        %4949 = vmatpush.xpose.msra.mxu0 0.0
        %4950 = vmatpush.xpose.msra.mxu0 0.0
        %4951 = vmatpush.xpose.msra.mxu0 0.0
        %4952 = vmatpush.xpose.msra.mxu0 0.0
        %4953 = vmatpush.xpose.msra.mxu0 0.0
        %4954 = vmatpush.xpose.msra.mxu0 0.0
        %v4955 = vand.u32 %v4838, 4294901760
        %v4956 = vsub.f32 %v4838, %v4955
        %v4957 = vand.u32 %v4956, 4294901760
        %4958 = vmatpush.xpose.msra.mxu0 %v4957
        %v4959 = vand.u32 %v4836, 4294901760
        %4960 = vmatmul.f32.gmra.mxu0 %v4959
        %v4961 = vpop.f32.mrf.mxu0
        %v4962 = vadd.f32 %v4938, %v4961
        %4963 = vdwg.mxu0
        %4964 = vmatpush.xpose.msra.mxu0 0.0
        %4965 = vmatpush.xpose.msra.mxu0 0.0
        %4966 = vmatpush.xpose.msra.mxu0 0.0
        %4967 = vmatpush.xpose.msra.mxu0 0.0
        %4968 = vmatpush.xpose.msra.mxu0 0.0
        %4969 = vmatpush.xpose.msra.mxu0 0.0
        %4970 = vmatpush.xpose.msra.mxu0 0.0
        %4971 = vmatpush.xpose.msra.mxu0 0.0
        %4972 = vmatpush.xpose.msra.mxu0 0.0
        %4973 = vmatpush.xpose.msra.mxu0 0.0
        %4974 = vmatpush.xpose.msra.mxu0 0.0
        %4975 = vmatpush.xpose.msra.mxu0 0.0
        %4976 = vmatpush.xpose.msra.mxu0 0.0
        %4977 = vmatpush.xpose.msra.mxu0 0.0
        %4978 = vmatpush.xpose.msra.mxu0 0.0
        %v4979 = vand.u32 %v4838, 4294901760
        %4980 = vmatpush.xpose.msra.mxu0 %v4979
        %v4981 = vand.u32 %v4836, 4294901760
        %4982 = vmatmul.f32.gmra.mxu0 %v4981
        %v4983 = vpop.f32.mrf.mxu0
        %v4984 = vadd.f32 %v4962, %v4983
        %4985 = vdwg.mxu0
        %v4986 = vsel %vm783, -8.838835e+18, %v4984
        %v4987 = vsel %vm2026, %v4986, -inf
        %4988 = vmax.xlane.f32.xlu0 %v4987
        %v4989 = vpop.xlane.xlu0 %4988
        %v4990 = vsub.f32 %v4986, %v4989
        %v4991 = vmul.f32 %v4990, 1.442695
        %v4992 = vpow.pop %v4991
        %v4993 = vsel %vm2026, %v4992, 0.0
        %4994 = vadd.xlane.f32.xlu0 %v4993
        %v4995 = vpop.xlane.xlu0 %4994
        %v4996 = vrcp.pop %v4995
        %v4997 = vmul.f32 %v4995, %v4996
        %v4998 = vsub.f32 1.0, %v4997
        %v4999 = vmul.f32 %v4996, %v4998
        %v5000 = vadd.f32 %v4996, %v4999
        %vm5001 = vweird.f32 %v4995
        %vm5002 = vweird.f32 %v4996
        %vm5003 = vmor %vm5001, %vm5002
        %v5004 = vsel %vm5003, %v4996, %v5000
        %v5005 = vand.u32 2147483647, %v4995
        %vm5006 = vcmp.eq.f32.partialorder %v5005, 8.507059e+37
        %v5007 = vand.u32 %v4995, 2147483648
        %v5008 = vor.u32 1.1754944e-38, %v5007
        %v5009 = vsel %vm5006, %v5008, %v5004
        %v5010 = vmul.f32 %v4992, %v5009
        %5011 = vrot.lane.b32.xlu0 %v1854, 32
        %v5012 = vpop.permute.xlu0 %5011
        %v5015 = vsel %vm2026, %v5010, 0
        %5017 = vmatpush.msra.mxu0 0.0
        %5018 = vmatpush.msra.mxu0 0.0
        %5019 = vmatpush.msra.mxu0 0.0
        %5020 = vmatpush.msra.mxu0 0.0
        %5021 = vmatpush.msra.mxu0 0.0
        %5022 = vmatpush.msra.mxu0 0.0
        %5023 = vmatpush.msra.mxu0 0.0
        %5024 = vmatpush.msra.mxu0 0.0
        %5025 = vmatpush.msra.mxu0 0.0
        %5026 = vmatpush.msra.mxu0 0.0
        %5027 = vmatpush.msra.mxu0 0.0
        %5028 = vmatpush.msra.mxu0 0.0
        %5029 = vmatpush.msra.mxu0 0.0
        %5030 = vmatpush.msra.mxu0 0.0
        %5031 = vmatpush.msra.mxu0 0.0
        %v5032 = vand.u32 %v5012, 4294901760
        %5033 = vmatpush.msra.mxu0 %v5032
        %v5034 = vand.u32 %v5015, 4294901760
        %v5035 = vsub.f32 %v5015, %v5034
        %v5036 = vand.u32 %v5035, 4294901760
        %v5037 = vsub.f32 %v5035, %v5036
        %v5038 = vand.u32 %v5037, 4294901760
        %5039 = vmatmul.f32.gmra.mxu0 %v5038
        %v5040 = vpop.f32.mrf.mxu0
        %v5041 = vadd.f32 0.0, %v5040
        %5042 = vdwg.mxu0
        %5043 = vmatpush.msra.mxu0 0.0
        %5044 = vmatpush.msra.mxu0 0.0
        %5045 = vmatpush.msra.mxu0 0.0
        %5046 = vmatpush.msra.mxu0 0.0
        %5047 = vmatpush.msra.mxu0 0.0
        %5048 = vmatpush.msra.mxu0 0.0
        %5049 = vmatpush.msra.mxu0 0.0
        %5050 = vmatpush.msra.mxu0 0.0
        %5051 = vmatpush.msra.mxu0 0.0
        %5052 = vmatpush.msra.mxu0 0.0
        %5053 = vmatpush.msra.mxu0 0.0
        %5054 = vmatpush.msra.mxu0 0.0
        %5055 = vmatpush.msra.mxu0 0.0
        %5056 = vmatpush.msra.mxu0 0.0
        %5057 = vmatpush.msra.mxu0 0.0
        %v5058 = vand.u32 %v5012, 4294901760
        %v5059 = vsub.f32 %v5012, %v5058
        %v5060 = vand.u32 %v5059, 4294901760
        %v5061 = vsub.f32 %v5059, %v5060
        %v5062 = vand.u32 %v5061, 4294901760
        %5063 = vmatpush.msra.mxu0 %v5062
        %v5064 = vand.u32 %v5015, 4294901760
        %5065 = vmatmul.f32.gmra.mxu0 %v5064
        %v5066 = vpop.f32.mrf.mxu0
        %v5067 = vadd.f32 %v5041, %v5066
        %5068 = vdwg.mxu0
        %5069 = vmatpush.msra.mxu0 0.0
        %5070 = vmatpush.msra.mxu0 0.0
        %5071 = vmatpush.msra.mxu0 0.0
        %5072 = vmatpush.msra.mxu0 0.0
        %5073 = vmatpush.msra.mxu0 0.0
        %5074 = vmatpush.msra.mxu0 0.0
        %5075 = vmatpush.msra.mxu0 0.0
        %5076 = vmatpush.msra.mxu0 0.0
        %5077 = vmatpush.msra.mxu0 0.0
        %5078 = vmatpush.msra.mxu0 0.0
        %5079 = vmatpush.msra.mxu0 0.0
        %5080 = vmatpush.msra.mxu0 0.0
        %5081 = vmatpush.msra.mxu0 0.0
        %5082 = vmatpush.msra.mxu0 0.0
        %5083 = vmatpush.msra.mxu0 0.0
        %v5084 = vand.u32 %v5012, 4294901760
        %v5085 = vsub.f32 %v5012, %v5084
        %5086 = vmatpush.msra.mxu0 %v5085
        %v5087 = vand.u32 %v5015, 4294901760
        %v5088 = vsub.f32 %v5015, %v5087
        %5089 = vmatmul.f32.gmra.mxu0 %v5088
        %v5090 = vpop.f32.mrf.mxu0
        %v5091 = vadd.f32 %v5067, %v5090
        %5092 = vdwg.mxu0
        %5093 = vmatpush.msra.mxu0 0.0
        %5094 = vmatpush.msra.mxu0 0.0
        %5095 = vmatpush.msra.mxu0 0.0
        %5096 = vmatpush.msra.mxu0 0.0
        %5097 = vmatpush.msra.mxu0 0.0
        %5098 = vmatpush.msra.mxu0 0.0
        %5099 = vmatpush.msra.mxu0 0.0
        %5100 = vmatpush.msra.mxu0 0.0
        %5101 = vmatpush.msra.mxu0 0.0
        %5102 = vmatpush.msra.mxu0 0.0
        %5103 = vmatpush.msra.mxu0 0.0
        %5104 = vmatpush.msra.mxu0 0.0
        %5105 = vmatpush.msra.mxu0 0.0
        %5106 = vmatpush.msra.mxu0 0.0
        %5107 = vmatpush.msra.mxu0 0.0
        %v5108 = vand.u32 %v5012, 4294901760
        %5109 = vmatpush.msra.mxu0 %v5108
        %v5110 = vand.u32 %v5015, 4294901760
        %v5111 = vsub.f32 %v5015, %v5110
        %v5112 = vand.u32 %v5111, 4294901760
        %5113 = vmatmul.f32.gmra.mxu0 %v5112
        %v5114 = vpop.f32.mrf.mxu0
        %v5115 = vadd.f32 %v5091, %v5114
        %5116 = vdwg.mxu0
        %5117 = vmatpush.msra.mxu0 0.0
        %5118 = vmatpush.msra.mxu0 0.0
        %5119 = vmatpush.msra.mxu0 0.0
        %5120 = vmatpush.msra.mxu0 0.0
        %5121 = vmatpush.msra.mxu0 0.0
        %5122 = vmatpush.msra.mxu0 0.0
        %5123 = vmatpush.msra.mxu0 0.0
        %5124 = vmatpush.msra.mxu0 0.0
        %5125 = vmatpush.msra.mxu0 0.0
        %5126 = vmatpush.msra.mxu0 0.0
        %5127 = vmatpush.msra.mxu0 0.0
        %5128 = vmatpush.msra.mxu0 0.0
        %5129 = vmatpush.msra.mxu0 0.0
        %5130 = vmatpush.msra.mxu0 0.0
        %5131 = vmatpush.msra.mxu0 0.0
        %v5132 = vand.u32 %v5012, 4294901760
        %v5133 = vsub.f32 %v5012, %v5132
        %v5134 = vand.u32 %v5133, 4294901760
        %5135 = vmatpush.msra.mxu0 %v5134
        %v5136 = vand.u32 %v5015, 4294901760
        %5137 = vmatmul.f32.gmra.mxu0 %v5136
        %v5138 = vpop.f32.mrf.mxu0
        %v5139 = vadd.f32 %v5115, %v5138
        %5140 = vdwg.mxu0
        %5141 = vmatpush.msra.mxu0 0.0
        %5142 = vmatpush.msra.mxu0 0.0
        %5143 = vmatpush.msra.mxu0 0.0
        %5144 = vmatpush.msra.mxu0 0.0
        %5145 = vmatpush.msra.mxu0 0.0
        %5146 = vmatpush.msra.mxu0 0.0
        %5147 = vmatpush.msra.mxu0 0.0
        %5148 = vmatpush.msra.mxu0 0.0
        %5149 = vmatpush.msra.mxu0 0.0
        %5150 = vmatpush.msra.mxu0 0.0
        %5151 = vmatpush.msra.mxu0 0.0
        %5152 = vmatpush.msra.mxu0 0.0
        %5153 = vmatpush.msra.mxu0 0.0
        %5154 = vmatpush.msra.mxu0 0.0
        %5155 = vmatpush.msra.mxu0 0.0
        %v5156 = vand.u32 %v5012, 4294901760
        %5157 = vmatpush.msra.mxu0 %v5156
        %v5158 = vand.u32 %v5015, 4294901760
        %5159 = vmatmul.f32.gmra.mxu0 %v5158
        %v5160 = vpop.f32.mrf.mxu0
        %v5161 = vadd.f32 %v5139, %v5160
        %5162 = vdwg.mxu0
        %v5164 = vsel %vm1872, %v5161, 0
        %5166 = vmatpush.msra.mxu0 0.0
        %5167 = vmatpush.msra.mxu0 0.0
        %5168 = vmatpush.msra.mxu0 0.0
        %5169 = vmatpush.msra.mxu0 0.0
        %5170 = vmatpush.msra.mxu0 0.0
        %5171 = vmatpush.msra.mxu0 0.0
        %5172 = vmatpush.msra.mxu0 0.0
        %5173 = vmatpush.msra.mxu0 0.0
        %5174 = vmatpush.msra.mxu0 0.0
        %5175 = vmatpush.msra.mxu0 0.0
        %5176 = vmatpush.msra.mxu0 0.0
        %5177 = vmatpush.msra.mxu0 0.0
        %5178 = vmatpush.msra.mxu0 0.0
        %5179 = vmatpush.msra.mxu0 0.0
        %v5180 = vand.u32 %v1869, 4294901760
        %5181 = vmatpush.msra.mxu0 %v5180
        %v5182 = vand.u32 %v1868, 4294901760
        %5183 = vmatpush.msra.mxu0 %v5182
        %v5184 = vand.u32 %v5164, 4294901760
        %v5185 = vsub.f32 %v5164, %v5184
        %v5186 = vand.u32 %v5185, 4294901760
        %v5187 = vsub.f32 %v5185, %v5186
        %v5188 = vand.u32 %v5187, 4294901760
        %5189 = vmatmul.f32.gmra.mxu0 %v5188
        %v5190 = vpop.f32.mrf.mxu0
        %v5191 = vadd.f32 0.0, %v5190
        %5192 = vdwg.mxu0
        %5193 = vmatpush.msra.mxu0 0.0
        %5194 = vmatpush.msra.mxu0 0.0
        %5195 = vmatpush.msra.mxu0 0.0
        %5196 = vmatpush.msra.mxu0 0.0
        %5197 = vmatpush.msra.mxu0 0.0
        %5198 = vmatpush.msra.mxu0 0.0
        %5199 = vmatpush.msra.mxu0 0.0
        %5200 = vmatpush.msra.mxu0 0.0
        %5201 = vmatpush.msra.mxu0 0.0
        %5202 = vmatpush.msra.mxu0 0.0
        %5203 = vmatpush.msra.mxu0 0.0
        %5204 = vmatpush.msra.mxu0 0.0
        %5205 = vmatpush.msra.mxu0 0.0
        %5206 = vmatpush.msra.mxu0 0.0
        %v5207 = vand.u32 %v1869, 4294901760
        %v5208 = vsub.f32 %v1869, %v5207
        %v5209 = vand.u32 %v5208, 4294901760
        %v5210 = vsub.f32 %v5208, %v5209
        %v5211 = vand.u32 %v5210, 4294901760
        %5212 = vmatpush.msra.mxu0 %v5211
        %v5213 = vand.u32 %v1868, 4294901760
        %v5214 = vsub.f32 %v1868, %v5213
        %v5215 = vand.u32 %v5214, 4294901760
        %v5216 = vsub.f32 %v5214, %v5215
        %v5217 = vand.u32 %v5216, 4294901760
        %5218 = vmatpush.msra.mxu0 %v5217
        %v5219 = vand.u32 %v5164, 4294901760
        %5220 = vmatmul.f32.gmra.mxu0 %v5219
        %v5221 = vpop.f32.mrf.mxu0
        %v5222 = vadd.f32 %v5191, %v5221
        %5223 = vdwg.mxu0
        %5224 = vmatpush.msra.mxu0 0.0
        %5225 = vmatpush.msra.mxu0 0.0
        %5226 = vmatpush.msra.mxu0 0.0
        %5227 = vmatpush.msra.mxu0 0.0
        %5228 = vmatpush.msra.mxu0 0.0
        %5229 = vmatpush.msra.mxu0 0.0
        %5230 = vmatpush.msra.mxu0 0.0
        %5231 = vmatpush.msra.mxu0 0.0
        %5232 = vmatpush.msra.mxu0 0.0
        %5233 = vmatpush.msra.mxu0 0.0
        %5234 = vmatpush.msra.mxu0 0.0
        %5235 = vmatpush.msra.mxu0 0.0
        %5236 = vmatpush.msra.mxu0 0.0
        %5237 = vmatpush.msra.mxu0 0.0
        %v5238 = vand.u32 %v1869, 4294901760
        %v5239 = vsub.f32 %v1869, %v5238
        %5240 = vmatpush.msra.mxu0 %v5239
        %v5241 = vand.u32 %v1868, 4294901760
        %v5242 = vsub.f32 %v1868, %v5241
        %5243 = vmatpush.msra.mxu0 %v5242
        %v5244 = vand.u32 %v5164, 4294901760
        %v5245 = vsub.f32 %v5164, %v5244
        %5246 = vmatmul.f32.gmra.mxu0 %v5245
        %v5247 = vpop.f32.mrf.mxu0
        %v5248 = vadd.f32 %v5222, %v5247
        %5249 = vdwg.mxu0
        %5250 = vmatpush.msra.mxu0 0.0
        %5251 = vmatpush.msra.mxu0 0.0
        %5252 = vmatpush.msra.mxu0 0.0
        %5253 = vmatpush.msra.mxu0 0.0
        %5254 = vmatpush.msra.mxu0 0.0
        %5255 = vmatpush.msra.mxu0 0.0
        %5256 = vmatpush.msra.mxu0 0.0
        %5257 = vmatpush.msra.mxu0 0.0
        %5258 = vmatpush.msra.mxu0 0.0
        %5259 = vmatpush.msra.mxu0 0.0
        %5260 = vmatpush.msra.mxu0 0.0
        %5261 = vmatpush.msra.mxu0 0.0
        %5262 = vmatpush.msra.mxu0 0.0
        %5263 = vmatpush.msra.mxu0 0.0
        %v5264 = vand.u32 %v1869, 4294901760
        %5265 = vmatpush.msra.mxu0 %v5264
        %v5266 = vand.u32 %v1868, 4294901760
        %5267 = vmatpush.msra.mxu0 %v5266
        %v5268 = vand.u32 %v5164, 4294901760
        %v5269 = vsub.f32 %v5164, %v5268
        %v5270 = vand.u32 %v5269, 4294901760
        %5271 = vmatmul.f32.gmra.mxu0 %v5270
        %v5272 = vpop.f32.mrf.mxu0
        %v5273 = vadd.f32 %v5248, %v5272
        %5274 = vdwg.mxu0
        %5275 = vmatpush.msra.mxu0 0.0
        %5276 = vmatpush.msra.mxu0 0.0
        %5277 = vmatpush.msra.mxu0 0.0
        %5278 = vmatpush.msra.mxu0 0.0
        %5279 = vmatpush.msra.mxu0 0.0
        %5280 = vmatpush.msra.mxu0 0.0
        %5281 = vmatpush.msra.mxu0 0.0
        %5282 = vmatpush.msra.mxu0 0.0
        %5283 = vmatpush.msra.mxu0 0.0
        %5284 = vmatpush.msra.mxu0 0.0
        %5285 = vmatpush.msra.mxu0 0.0
        %5286 = vmatpush.msra.mxu0 0.0
        %5287 = vmatpush.msra.mxu0 0.0
        %5288 = vmatpush.msra.mxu0 0.0
        %v5289 = vand.u32 %v1869, 4294901760
        %v5290 = vsub.f32 %v1869, %v5289
        %v5291 = vand.u32 %v5290, 4294901760
        %5292 = vmatpush.msra.mxu0 %v5291
        %v5293 = vand.u32 %v1868, 4294901760
        %v5294 = vsub.f32 %v1868, %v5293
        %v5295 = vand.u32 %v5294, 4294901760
        %5296 = vmatpush.msra.mxu0 %v5295
        %v5297 = vand.u32 %v5164, 4294901760
        %5298 = vmatmul.f32.gmra.mxu0 %v5297
        %v5299 = vpop.f32.mrf.mxu0
        %v5300 = vadd.f32 %v5273, %v5299
        %5301 = vdwg.mxu0
        %5302 = vmatpush.msra.mxu0 0.0
        %5303 = vmatpush.msra.mxu0 0.0
        %5304 = vmatpush.msra.mxu0 0.0
        %5305 = vmatpush.msra.mxu0 0.0
        %5306 = vmatpush.msra.mxu0 0.0
        %5307 = vmatpush.msra.mxu0 0.0
        %5308 = vmatpush.msra.mxu0 0.0
        %5309 = vmatpush.msra.mxu0 0.0
        %5310 = vmatpush.msra.mxu0 0.0
        %5311 = vmatpush.msra.mxu0 0.0
        %5312 = vmatpush.msra.mxu0 0.0
        %5313 = vmatpush.msra.mxu0 0.0
        %5314 = vmatpush.msra.mxu0 0.0
        %5315 = vmatpush.msra.mxu0 0.0
        %v5316 = vand.u32 %v1869, 4294901760
        %5317 = vmatpush.msra.mxu0 %v5316
        %v5318 = vand.u32 %v1868, 4294901760
        %5319 = vmatpush.msra.mxu0 %v5318
        %v5320 = vand.u32 %v5164, 4294901760
        %5321 = vmatmul.f32.gmra.mxu0 %v5320
        %v5322 = vpop.f32.mrf.mxu0
        %v5323 = vadd.f32 %v5300, %v5322
        %5324 = vdwg.mxu0
        %v5325 = vadd.f32 %v4831, %v5323
        %5326 = vrot.lane.b32.xlu0 %v1141, 16
        %v5327 = vpop.permute.xlu0 %5326
        %5328 = vrot.lane.b32.xlu0 %v1497, 16
        %v5329 = vpop.permute.xlu0 %5328
        %v5330 = vsel %vm1872, %v5327, 0
        %v5332 = vsel %vm1872, %v5329, 0
        %5334 = vmatpush.xpose.msra.mxu0 0.0
        %5335 = vmatpush.xpose.msra.mxu0 0.0
        %5336 = vmatpush.xpose.msra.mxu0 0.0
        %5337 = vmatpush.xpose.msra.mxu0 0.0
        %5338 = vmatpush.xpose.msra.mxu0 0.0
        %5339 = vmatpush.xpose.msra.mxu0 0.0
        %5340 = vmatpush.xpose.msra.mxu0 0.0
        %5341 = vmatpush.xpose.msra.mxu0 0.0
        %5342 = vmatpush.xpose.msra.mxu0 0.0
        %5343 = vmatpush.xpose.msra.mxu0 0.0
        %5344 = vmatpush.xpose.msra.mxu0 0.0
        %5345 = vmatpush.xpose.msra.mxu0 0.0
        %5346 = vmatpush.xpose.msra.mxu0 0.0
        %5347 = vmatpush.xpose.msra.mxu0 0.0
        %5348 = vmatpush.xpose.msra.mxu0 0.0
        %v5349 = vand.u32 %v5332, 4294901760
        %5350 = vmatpush.xpose.msra.mxu0 %v5349
        %v5351 = vand.u32 %v5330, 4294901760
        %v5352 = vsub.f32 %v5330, %v5351
        %v5353 = vand.u32 %v5352, 4294901760
        %v5354 = vsub.f32 %v5352, %v5353
        %v5355 = vand.u32 %v5354, 4294901760
        %5356 = vmatmul.f32.gmra.mxu0 %v5355
        %v5357 = vpop.f32.mrf.mxu0
        %v5358 = vadd.f32 0.0, %v5357
        %5359 = vdwg.mxu0
        %5360 = vmatpush.xpose.msra.mxu0 0.0
        %5361 = vmatpush.xpose.msra.mxu0 0.0
        %5362 = vmatpush.xpose.msra.mxu0 0.0
        %5363 = vmatpush.xpose.msra.mxu0 0.0
        %5364 = vmatpush.xpose.msra.mxu0 0.0
        %5365 = vmatpush.xpose.msra.mxu0 0.0
        %5366 = vmatpush.xpose.msra.mxu0 0.0
        %5367 = vmatpush.xpose.msra.mxu0 0.0
        %5368 = vmatpush.xpose.msra.mxu0 0.0
        %5369 = vmatpush.xpose.msra.mxu0 0.0
        %5370 = vmatpush.xpose.msra.mxu0 0.0
        %5371 = vmatpush.xpose.msra.mxu0 0.0
        %5372 = vmatpush.xpose.msra.mxu0 0.0
        %5373 = vmatpush.xpose.msra.mxu0 0.0
        %5374 = vmatpush.xpose.msra.mxu0 0.0
        %v5375 = vand.u32 %v5332, 4294901760
        %v5376 = vsub.f32 %v5332, %v5375
        %v5377 = vand.u32 %v5376, 4294901760
        %v5378 = vsub.f32 %v5376, %v5377
        %v5379 = vand.u32 %v5378, 4294901760
        %5380 = vmatpush.xpose.msra.mxu0 %v5379
        %v5381 = vand.u32 %v5330, 4294901760
        %5382 = vmatmul.f32.gmra.mxu0 %v5381
        %v5383 = vpop.f32.mrf.mxu0
        %v5384 = vadd.f32 %v5358, %v5383
        %5385 = vdwg.mxu0
        %5386 = vmatpush.xpose.msra.mxu0 0.0
        %5387 = vmatpush.xpose.msra.mxu0 0.0
        %5388 = vmatpush.xpose.msra.mxu0 0.0
        %5389 = vmatpush.xpose.msra.mxu0 0.0
        %5390 = vmatpush.xpose.msra.mxu0 0.0
        %5391 = vmatpush.xpose.msra.mxu0 0.0
        %5392 = vmatpush.xpose.msra.mxu0 0.0
        %5393 = vmatpush.xpose.msra.mxu0 0.0
        %5394 = vmatpush.xpose.msra.mxu0 0.0
        %5395 = vmatpush.xpose.msra.mxu0 0.0
        %5396 = vmatpush.xpose.msra.mxu0 0.0
        %5397 = vmatpush.xpose.msra.mxu0 0.0
        %5398 = vmatpush.xpose.msra.mxu0 0.0
        %5399 = vmatpush.xpose.msra.mxu0 0.0
        %5400 = vmatpush.xpose.msra.mxu0 0.0
        %v5401 = vand.u32 %v5332, 4294901760
        %v5402 = vsub.f32 %v5332, %v5401
        %5403 = vmatpush.xpose.msra.mxu0 %v5402
        %v5404 = vand.u32 %v5330, 4294901760
        %v5405 = vsub.f32 %v5330, %v5404
        %5406 = vmatmul.f32.gmra.mxu0 %v5405
        %v5407 = vpop.f32.mrf.mxu0
        %v5408 = vadd.f32 %v5384, %v5407
        %5409 = vdwg.mxu0
        %5410 = vmatpush.xpose.msra.mxu0 0.0
        %5411 = vmatpush.xpose.msra.mxu0 0.0
        %5412 = vmatpush.xpose.msra.mxu0 0.0
        %5413 = vmatpush.xpose.msra.mxu0 0.0
        %5414 = vmatpush.xpose.msra.mxu0 0.0
        %5415 = vmatpush.xpose.msra.mxu0 0.0
        %5416 = vmatpush.xpose.msra.mxu0 0.0
        %5417 = vmatpush.xpose.msra.mxu0 0.0
        %5418 = vmatpush.xpose.msra.mxu0 0.0
        %5419 = vmatpush.xpose.msra.mxu0 0.0
        %5420 = vmatpush.xpose.msra.mxu0 0.0
        %5421 = vmatpush.xpose.msra.mxu0 0.0
        %5422 = vmatpush.xpose.msra.mxu0 0.0
        %5423 = vmatpush.xpose.msra.mxu0 0.0
        %5424 = vmatpush.xpose.msra.mxu0 0.0
        %v5425 = vand.u32 %v5332, 4294901760
        %5426 = vmatpush.xpose.msra.mxu0 %v5425
        %v5427 = vand.u32 %v5330, 4294901760
        %v5428 = vsub.f32 %v5330, %v5427
        %v5429 = vand.u32 %v5428, 4294901760
        %5430 = vmatmul.f32.gmra.mxu0 %v5429
        %v5431 = vpop.f32.mrf.mxu0
        %v5432 = vadd.f32 %v5408, %v5431
        %5433 = vdwg.mxu0
        %5434 = vmatpush.xpose.msra.mxu0 0.0
        %5435 = vmatpush.xpose.msra.mxu0 0.0
        %5436 = vmatpush.xpose.msra.mxu0 0.0
        %5437 = vmatpush.xpose.msra.mxu0 0.0
        %5438 = vmatpush.xpose.msra.mxu0 0.0
        %5439 = vmatpush.xpose.msra.mxu0 0.0
        %5440 = vmatpush.xpose.msra.mxu0 0.0
        %5441 = vmatpush.xpose.msra.mxu0 0.0
        %5442 = vmatpush.xpose.msra.mxu0 0.0
        %5443 = vmatpush.xpose.msra.mxu0 0.0
        %5444 = vmatpush.xpose.msra.mxu0 0.0
        %5445 = vmatpush.xpose.msra.mxu0 0.0
        %5446 = vmatpush.xpose.msra.mxu0 0.0
        %5447 = vmatpush.xpose.msra.mxu0 0.0
        %5448 = vmatpush.xpose.msra.mxu0 0.0
        %v5449 = vand.u32 %v5332, 4294901760
        %v5450 = vsub.f32 %v5332, %v5449
        %v5451 = vand.u32 %v5450, 4294901760
        %5452 = vmatpush.xpose.msra.mxu0 %v5451
        %v5453 = vand.u32 %v5330, 4294901760
        %5454 = vmatmul.f32.gmra.mxu0 %v5453
        %v5455 = vpop.f32.mrf.mxu0
        %v5456 = vadd.f32 %v5432, %v5455
        %5457 = vdwg.mxu0
        %5458 = vmatpush.xpose.msra.mxu0 0.0
        %5459 = vmatpush.xpose.msra.mxu0 0.0
        %5460 = vmatpush.xpose.msra.mxu0 0.0
        %5461 = vmatpush.xpose.msra.mxu0 0.0
        %5462 = vmatpush.xpose.msra.mxu0 0.0
        %5463 = vmatpush.xpose.msra.mxu0 0.0
        %5464 = vmatpush.xpose.msra.mxu0 0.0
        %5465 = vmatpush.xpose.msra.mxu0 0.0
        %5466 = vmatpush.xpose.msra.mxu0 0.0
        %5467 = vmatpush.xpose.msra.mxu0 0.0
        %5468 = vmatpush.xpose.msra.mxu0 0.0
        %5469 = vmatpush.xpose.msra.mxu0 0.0
        %5470 = vmatpush.xpose.msra.mxu0 0.0
        %5471 = vmatpush.xpose.msra.mxu0 0.0
        %5472 = vmatpush.xpose.msra.mxu0 0.0
        %v5473 = vand.u32 %v5332, 4294901760
        %5474 = vmatpush.xpose.msra.mxu0 %v5473
        %v5475 = vand.u32 %v5330, 4294901760
        %5476 = vmatmul.f32.gmra.mxu0 %v5475
        %v5477 = vpop.f32.mrf.mxu0
        %v5478 = vadd.f32 %v5456, %v5477
        %5479 = vdwg.mxu0
        %v5480 = vsel %vm783, -8.838835e+18, %v5478
        %v5481 = vsel %vm2026, %v5480, -inf
        %5482 = vmax.xlane.f32.xlu0 %v5481
        %v5483 = vpop.xlane.xlu0 %5482
        %v5484 = vsub.f32 %v5480, %v5483
        %v5485 = vmul.f32 %v5484, 1.442695
        %v5486 = vpow.pop %v5485
        %v5487 = vsel %vm2026, %v5486, 0.0
        %5488 = vadd.xlane.f32.xlu0 %v5487
        %v5489 = vpop.xlane.xlu0 %5488
        %v5490 = vrcp.pop %v5489
        %v5491 = vmul.f32 %v5489, %v5490
        %v5492 = vsub.f32 1.0, %v5491
        %v5493 = vmul.f32 %v5490, %v5492
        %v5494 = vadd.f32 %v5490, %v5493
        %vm5495 = vweird.f32 %v5489
        %vm5496 = vweird.f32 %v5490
        %vm5497 = vmor %vm5495, %vm5496
        %v5498 = vsel %vm5497, %v5490, %v5494
        %v5499 = vand.u32 2147483647, %v5489
        %vm5500 = vcmp.eq.f32.partialorder %v5499, 8.507059e+37
        %v5501 = vand.u32 %v5489, 2147483648
        %v5502 = vor.u32 1.1754944e-38, %v5501
        %v5503 = vsel %vm5500, %v5502, %v5498
        %v5504 = vmul.f32 %v5486, %v5503
        %5505 = vrot.lane.b32.xlu0 %v1854, 16
        %v5506 = vpop.permute.xlu0 %5505
        %v5509 = vsel %vm2026, %v5504, 0
        %5511 = vmatpush.msra.mxu0 0.0
        %5512 = vmatpush.msra.mxu0 0.0
        %5513 = vmatpush.msra.mxu0 0.0
        %5514 = vmatpush.msra.mxu0 0.0
        %5515 = vmatpush.msra.mxu0 0.0
        %5516 = vmatpush.msra.mxu0 0.0
        %5517 = vmatpush.msra.mxu0 0.0
        %5518 = vmatpush.msra.mxu0 0.0
        %5519 = vmatpush.msra.mxu0 0.0
        %5520 = vmatpush.msra.mxu0 0.0
        %5521 = vmatpush.msra.mxu0 0.0
        %5522 = vmatpush.msra.mxu0 0.0
        %5523 = vmatpush.msra.mxu0 0.0
        %5524 = vmatpush.msra.mxu0 0.0
        %5525 = vmatpush.msra.mxu0 0.0
        %v5526 = vand.u32 %v5506, 4294901760
        %5527 = vmatpush.msra.mxu0 %v5526
        %v5528 = vand.u32 %v5509, 4294901760
        %v5529 = vsub.f32 %v5509, %v5528
        %v5530 = vand.u32 %v5529, 4294901760
        %v5531 = vsub.f32 %v5529, %v5530
        %v5532 = vand.u32 %v5531, 4294901760
        %5533 = vmatmul.f32.gmra.mxu0 %v5532
        %v5534 = vpop.f32.mrf.mxu0
        %v5535 = vadd.f32 0.0, %v5534
        %5536 = vdwg.mxu0
        %5537 = vmatpush.msra.mxu0 0.0
        %5538 = vmatpush.msra.mxu0 0.0
        %5539 = vmatpush.msra.mxu0 0.0
        %5540 = vmatpush.msra.mxu0 0.0
        %5541 = vmatpush.msra.mxu0 0.0
        %5542 = vmatpush.msra.mxu0 0.0
        %5543 = vmatpush.msra.mxu0 0.0
        %5544 = vmatpush.msra.mxu0 0.0
        %5545 = vmatpush.msra.mxu0 0.0
        %5546 = vmatpush.msra.mxu0 0.0
        %5547 = vmatpush.msra.mxu0 0.0
        %5548 = vmatpush.msra.mxu0 0.0
        %5549 = vmatpush.msra.mxu0 0.0
        %5550 = vmatpush.msra.mxu0 0.0
        %5551 = vmatpush.msra.mxu0 0.0
        %v5552 = vand.u32 %v5506, 4294901760
        %v5553 = vsub.f32 %v5506, %v5552
        %v5554 = vand.u32 %v5553, 4294901760
        %v5555 = vsub.f32 %v5553, %v5554
        %v5556 = vand.u32 %v5555, 4294901760
        %5557 = vmatpush.msra.mxu0 %v5556
        %v5558 = vand.u32 %v5509, 4294901760
        %5559 = vmatmul.f32.gmra.mxu0 %v5558
        %v5560 = vpop.f32.mrf.mxu0
        %v5561 = vadd.f32 %v5535, %v5560
        %5562 = vdwg.mxu0
        %5563 = vmatpush.msra.mxu0 0.0
        %5564 = vmatpush.msra.mxu0 0.0
        %5565 = vmatpush.msra.mxu0 0.0
        %5566 = vmatpush.msra.mxu0 0.0
        %5567 = vmatpush.msra.mxu0 0.0
        %5568 = vmatpush.msra.mxu0 0.0
        %5569 = vmatpush.msra.mxu0 0.0
        %5570 = vmatpush.msra.mxu0 0.0
        %5571 = vmatpush.msra.mxu0 0.0
        %5572 = vmatpush.msra.mxu0 0.0
        %5573 = vmatpush.msra.mxu0 0.0
        %5574 = vmatpush.msra.mxu0 0.0
        %5575 = vmatpush.msra.mxu0 0.0
        %5576 = vmatpush.msra.mxu0 0.0
        %5577 = vmatpush.msra.mxu0 0.0
        %v5578 = vand.u32 %v5506, 4294901760
        %v5579 = vsub.f32 %v5506, %v5578
        %5580 = vmatpush.msra.mxu0 %v5579
        %v5581 = vand.u32 %v5509, 4294901760
        %v5582 = vsub.f32 %v5509, %v5581
        %5583 = vmatmul.f32.gmra.mxu0 %v5582
        %v5584 = vpop.f32.mrf.mxu0
        %v5585 = vadd.f32 %v5561, %v5584
        %5586 = vdwg.mxu0
        %5587 = vmatpush.msra.mxu0 0.0
        %5588 = vmatpush.msra.mxu0 0.0
        %5589 = vmatpush.msra.mxu0 0.0
        %5590 = vmatpush.msra.mxu0 0.0
        %5591 = vmatpush.msra.mxu0 0.0
        %5592 = vmatpush.msra.mxu0 0.0
        %5593 = vmatpush.msra.mxu0 0.0
        %5594 = vmatpush.msra.mxu0 0.0
        %5595 = vmatpush.msra.mxu0 0.0
        %5596 = vmatpush.msra.mxu0 0.0
        %5597 = vmatpush.msra.mxu0 0.0
        %5598 = vmatpush.msra.mxu0 0.0
        %5599 = vmatpush.msra.mxu0 0.0
        %5600 = vmatpush.msra.mxu0 0.0
        %5601 = vmatpush.msra.mxu0 0.0
        %v5602 = vand.u32 %v5506, 4294901760
        %5603 = vmatpush.msra.mxu0 %v5602
        %v5604 = vand.u32 %v5509, 4294901760
        %v5605 = vsub.f32 %v5509, %v5604
        %v5606 = vand.u32 %v5605, 4294901760
        %5607 = vmatmul.f32.gmra.mxu0 %v5606
        %v5608 = vpop.f32.mrf.mxu0
        %v5609 = vadd.f32 %v5585, %v5608
        %5610 = vdwg.mxu0
        %5611 = vmatpush.msra.mxu0 0.0
        %5612 = vmatpush.msra.mxu0 0.0
        %5613 = vmatpush.msra.mxu0 0.0
        %5614 = vmatpush.msra.mxu0 0.0
        %5615 = vmatpush.msra.mxu0 0.0
        %5616 = vmatpush.msra.mxu0 0.0
        %5617 = vmatpush.msra.mxu0 0.0
        %5618 = vmatpush.msra.mxu0 0.0
        %5619 = vmatpush.msra.mxu0 0.0
        %5620 = vmatpush.msra.mxu0 0.0
        %5621 = vmatpush.msra.mxu0 0.0
        %5622 = vmatpush.msra.mxu0 0.0
        %5623 = vmatpush.msra.mxu0 0.0
        %5624 = vmatpush.msra.mxu0 0.0
        %5625 = vmatpush.msra.mxu0 0.0
        %v5626 = vand.u32 %v5506, 4294901760
        %v5627 = vsub.f32 %v5506, %v5626
        %v5628 = vand.u32 %v5627, 4294901760
        %5629 = vmatpush.msra.mxu0 %v5628
        %v5630 = vand.u32 %v5509, 4294901760
        %5631 = vmatmul.f32.gmra.mxu0 %v5630
        %v5632 = vpop.f32.mrf.mxu0
        %v5633 = vadd.f32 %v5609, %v5632
        %5634 = vdwg.mxu0
        %5635 = vmatpush.msra.mxu0 0.0
        %5636 = vmatpush.msra.mxu0 0.0
        %5637 = vmatpush.msra.mxu0 0.0
        %5638 = vmatpush.msra.mxu0 0.0
        %5639 = vmatpush.msra.mxu0 0.0
        %5640 = vmatpush.msra.mxu0 0.0
        %5641 = vmatpush.msra.mxu0 0.0
        %5642 = vmatpush.msra.mxu0 0.0
        %5643 = vmatpush.msra.mxu0 0.0
        %5644 = vmatpush.msra.mxu0 0.0
        %5645 = vmatpush.msra.mxu0 0.0
        %5646 = vmatpush.msra.mxu0 0.0
        %5647 = vmatpush.msra.mxu0 0.0
        %5648 = vmatpush.msra.mxu0 0.0
        %5649 = vmatpush.msra.mxu0 0.0
        %v5650 = vand.u32 %v5506, 4294901760
        %5651 = vmatpush.msra.mxu0 %v5650
        %v5652 = vand.u32 %v5509, 4294901760
        %5653 = vmatmul.f32.gmra.mxu0 %v5652
        %v5654 = vpop.f32.mrf.mxu0
        %v5655 = vadd.f32 %v5633, %v5654
        %5656 = vdwg.mxu0
        %v5658 = vsel %vm1872, %v5655, 0
        %5660 = vmatpush.msra.mxu0 0.0
        %5661 = vmatpush.msra.mxu0 0.0
        %5662 = vmatpush.msra.mxu0 0.0
        %5663 = vmatpush.msra.mxu0 0.0
        %5664 = vmatpush.msra.mxu0 0.0
        %5665 = vmatpush.msra.mxu0 0.0
        %5666 = vmatpush.msra.mxu0 0.0
        %5667 = vmatpush.msra.mxu0 0.0
        %5668 = vmatpush.msra.mxu0 0.0
        %5669 = vmatpush.msra.mxu0 0.0
        %5670 = vmatpush.msra.mxu0 0.0
        %5671 = vmatpush.msra.mxu0 0.0
        %5672 = vmatpush.msra.mxu0 0.0
        %5673 = vmatpush.msra.mxu0 0.0
        %v5674 = vand.u32 %v1871, 4294901760
        %5675 = vmatpush.msra.mxu0 %v5674
        %v5676 = vand.u32 %v1870, 4294901760
        %5677 = vmatpush.msra.mxu0 %v5676
        %v5678 = vand.u32 %v5658, 4294901760
        %v5679 = vsub.f32 %v5658, %v5678
        %v5680 = vand.u32 %v5679, 4294901760
        %v5681 = vsub.f32 %v5679, %v5680
        %v5682 = vand.u32 %v5681, 4294901760
        %5683 = vmatmul.f32.gmra.mxu0 %v5682
        %v5684 = vpop.f32.mrf.mxu0
        %v5685 = vadd.f32 0.0, %v5684
        %5686 = vdwg.mxu0
        %5687 = vmatpush.msra.mxu0 0.0
        %5688 = vmatpush.msra.mxu0 0.0
        %5689 = vmatpush.msra.mxu0 0.0
        %5690 = vmatpush.msra.mxu0 0.0
        %5691 = vmatpush.msra.mxu0 0.0
        %5692 = vmatpush.msra.mxu0 0.0
        %5693 = vmatpush.msra.mxu0 0.0
        %5694 = vmatpush.msra.mxu0 0.0
        %5695 = vmatpush.msra.mxu0 0.0
        %5696 = vmatpush.msra.mxu0 0.0
        %5697 = vmatpush.msra.mxu0 0.0
        %5698 = vmatpush.msra.mxu0 0.0
        %5699 = vmatpush.msra.mxu0 0.0
        %5700 = vmatpush.msra.mxu0 0.0
        %v5701 = vand.u32 %v1871, 4294901760
        %v5702 = vsub.f32 %v1871, %v5701
        %v5703 = vand.u32 %v5702, 4294901760
        %v5704 = vsub.f32 %v5702, %v5703
        %v5705 = vand.u32 %v5704, 4294901760
        %5706 = vmatpush.msra.mxu0 %v5705
        %v5707 = vand.u32 %v1870, 4294901760
        %v5708 = vsub.f32 %v1870, %v5707
        %v5709 = vand.u32 %v5708, 4294901760
        %v5710 = vsub.f32 %v5708, %v5709
        %v5711 = vand.u32 %v5710, 4294901760
        %5712 = vmatpush.msra.mxu0 %v5711
        %v5713 = vand.u32 %v5658, 4294901760
        %5714 = vmatmul.f32.gmra.mxu0 %v5713
        %v5715 = vpop.f32.mrf.mxu0
        %v5716 = vadd.f32 %v5685, %v5715
        %5717 = vdwg.mxu0
        %5718 = vmatpush.msra.mxu0 0.0
        %5719 = vmatpush.msra.mxu0 0.0
        %5720 = vmatpush.msra.mxu0 0.0
        %5721 = vmatpush.msra.mxu0 0.0
        %5722 = vmatpush.msra.mxu0 0.0
        %5723 = vmatpush.msra.mxu0 0.0
        %5724 = vmatpush.msra.mxu0 0.0
        %5725 = vmatpush.msra.mxu0 0.0
        %5726 = vmatpush.msra.mxu0 0.0
        %5727 = vmatpush.msra.mxu0 0.0
        %5728 = vmatpush.msra.mxu0 0.0
        %5729 = vmatpush.msra.mxu0 0.0
        %5730 = vmatpush.msra.mxu0 0.0
        %5731 = vmatpush.msra.mxu0 0.0
        %v5732 = vand.u32 %v1871, 4294901760
        %v5733 = vsub.f32 %v1871, %v5732
        %5734 = vmatpush.msra.mxu0 %v5733
        %v5735 = vand.u32 %v1870, 4294901760
        %v5736 = vsub.f32 %v1870, %v5735
        %5737 = vmatpush.msra.mxu0 %v5736
        %v5738 = vand.u32 %v5658, 4294901760
        %v5739 = vsub.f32 %v5658, %v5738
        %5740 = vmatmul.f32.gmra.mxu0 %v5739
        %v5741 = vpop.f32.mrf.mxu0
        %v5742 = vadd.f32 %v5716, %v5741
        %5743 = vdwg.mxu0
        %5744 = vmatpush.msra.mxu0 0.0
        %5745 = vmatpush.msra.mxu0 0.0
        %5746 = vmatpush.msra.mxu0 0.0
        %5747 = vmatpush.msra.mxu0 0.0
        %5748 = vmatpush.msra.mxu0 0.0
        %5749 = vmatpush.msra.mxu0 0.0
        %5750 = vmatpush.msra.mxu0 0.0
        %5751 = vmatpush.msra.mxu0 0.0
        %5752 = vmatpush.msra.mxu0 0.0
        %5753 = vmatpush.msra.mxu0 0.0
        %5754 = vmatpush.msra.mxu0 0.0
        %5755 = vmatpush.msra.mxu0 0.0
        %5756 = vmatpush.msra.mxu0 0.0
        %5757 = vmatpush.msra.mxu0 0.0
        %v5758 = vand.u32 %v1871, 4294901760
        %5759 = vmatpush.msra.mxu0 %v5758
        %v5760 = vand.u32 %v1870, 4294901760
        %5761 = vmatpush.msra.mxu0 %v5760
        %v5762 = vand.u32 %v5658, 4294901760
        %v5763 = vsub.f32 %v5658, %v5762
        %v5764 = vand.u32 %v5763, 4294901760
        %5765 = vmatmul.f32.gmra.mxu0 %v5764
        %v5766 = vpop.f32.mrf.mxu0
        %v5767 = vadd.f32 %v5742, %v5766
        %5768 = vdwg.mxu0
        %5769 = vmatpush.msra.mxu0 0.0
        %5770 = vmatpush.msra.mxu0 0.0
        %5771 = vmatpush.msra.mxu0 0.0
        %5772 = vmatpush.msra.mxu0 0.0
        %5773 = vmatpush.msra.mxu0 0.0
        %5774 = vmatpush.msra.mxu0 0.0
        %5775 = vmatpush.msra.mxu0 0.0
        %5776 = vmatpush.msra.mxu0 0.0
        %5777 = vmatpush.msra.mxu0 0.0
        %5778 = vmatpush.msra.mxu0 0.0
        %5779 = vmatpush.msra.mxu0 0.0
        %5780 = vmatpush.msra.mxu0 0.0
        %5781 = vmatpush.msra.mxu0 0.0
        %5782 = vmatpush.msra.mxu0 0.0
        %v5783 = vand.u32 %v1871, 4294901760
        %v5784 = vsub.f32 %v1871, %v5783
        %v5785 = vand.u32 %v5784, 4294901760
        %5786 = vmatpush.msra.mxu0 %v5785
        %v5787 = vand.u32 %v1870, 4294901760
        %v5788 = vsub.f32 %v1870, %v5787
        %v5789 = vand.u32 %v5788, 4294901760
        %5790 = vmatpush.msra.mxu0 %v5789
        %v5791 = vand.u32 %v5658, 4294901760
        %5792 = vmatmul.f32.gmra.mxu0 %v5791
        %v5793 = vpop.f32.mrf.mxu0
        %v5794 = vadd.f32 %v5767, %v5793
        %5795 = vdwg.mxu0
        %5796 = vmatpush.msra.mxu0 0.0
        %5797 = vmatpush.msra.mxu0 0.0
        %5798 = vmatpush.msra.mxu0 0.0
        %5799 = vmatpush.msra.mxu0 0.0
        %5800 = vmatpush.msra.mxu0 0.0
        %5801 = vmatpush.msra.mxu0 0.0
        %5802 = vmatpush.msra.mxu0 0.0
        %5803 = vmatpush.msra.mxu0 0.0
        %5804 = vmatpush.msra.mxu0 0.0
        %5805 = vmatpush.msra.mxu0 0.0
        %5806 = vmatpush.msra.mxu0 0.0
        %5807 = vmatpush.msra.mxu0 0.0
        %5808 = vmatpush.msra.mxu0 0.0
        %5809 = vmatpush.msra.mxu0 0.0
        %v5810 = vand.u32 %v1871, 4294901760
        %5811 = vmatpush.msra.mxu0 %v5810
        %v5812 = vand.u32 %v1870, 4294901760
        %5813 = vmatpush.msra.mxu0 %v5812
        %v5814 = vand.u32 %v5658, 4294901760
        %5815 = vmatmul.f32.gmra.mxu0 %v5814
        %v5816 = vpop.f32.mrf.mxu0
        %v5817 = vadd.f32 %v5794, %v5816
        %5818 = vdwg.mxu0
        %v5819 = vadd.f32 %v5325, %v5817
        %v5820 = vld [vmem:[%s8] sm:$0x1]
        %v5822 = vperm.slane %v5820, 0
        %v5824 = vadd.f32 %v5819, %v5822
        %v5825 = vadd.f32 %v5824, %v780
        %v5826 = vld [vmem:[%s9] sm:$0x1]
        %v5827 = vld [vmem:[%s10] sm:$0x1]
        %5828 = vadd.xlane.f32.xlu0 %v5825
        %v5829 = vpop.xlane.xlu0 %5828
        %v5830 = vrcp.pop 128.0
        %v5831 = vmul.f32 128.0, %v5830
        %v5832 = vsub.f32 1.0, %v5831
        %v5833 = vmul.f32 %v5830, %v5832
        %v5834 = vadd.f32 %v5830, %v5833
        %vm5835 = vweird.f32 %v5830
        %v5836 = vsel %vm5835, %v5830, %v5834
        %v5837 = vmul.f32 %v5829, %v5836
        %v5838 = vsub.f32 %v5825, %v5837
        %v5839 = vmul.f32 %v5838, %v5838
        %5840 = vadd.xlane.f32.xlu0 %v5839
        %v5841 = vpop.xlane.xlu0 %5840
        %v5842 = vmul.f32 %v5841, %v5836
        %v5843 = vadd.f32 %v5842, 1e-05
        %v5844 = vrsqrt.pop %v5843
        %v5845 = vmul.f32 %v5844, %v5843
        %v5846 = vmul.f32 %v5845, %v5844
        %v5847 = vmul.f32 0.5, %v5846
        %v5848 = vsub.f32 1.5, %v5847
        %v5849 = vmul.f32 %v5844, %v5848
        %vm5850 = vweird.f32 %v5843
        %vm5851 = vweird.f32 %v5844
        %vm5852 = vmor %vm5850, %vm5851
        %v5853 = vsel %vm5852, %v5844, %v5849
        %v5854 = vmul.f32 %v5838, %v5853
        %v5856 = vperm.slane %v5826, 0
        %v5858 = vmul.f32 %v5854, %v5856
        %v5860 = vperm.slane %v5827, 0
        %v5862 = vadd.f32 %v5858, %v5860
        %v5863 = vld [vmem:[#allocation16] sm:$0xff]
        %v5864 = vld [vmem:[#allocation16 + $0x8] sm:$0xff]
        %v5865 = vld [vmem:[#allocation16 + $0x10] sm:$0xff]
        %v5866 = vld [vmem:[#allocation16 + $0x18] sm:$0xff]
        %v5867 = vld [vmem:[#allocation16 + $0x20] sm:$0xff]
        %v5868 = vld [vmem:[#allocation16 + $0x28] sm:$0xff]
        %v5869 = vld [vmem:[#allocation16 + $0x30] sm:$0xff]
        %v5870 = vld [vmem:[#allocation16 + $0x38] sm:$0xff]
        %v5871 = vld [vmem:[#allocation16 + $0x40] sm:$0xff]
        %v5872 = vld [vmem:[#allocation16 + $0x48] sm:$0xff]
        %v5873 = vld [vmem:[#allocation16 + $0x50] sm:$0xff]
        %v5874 = vld [vmem:[#allocation16 + $0x58] sm:$0xff]
        %v5875 = vld [vmem:[#allocation16 + $0x60] sm:$0xff]
        %v5876 = vld [vmem:[#allocation16 + $0x68] sm:$0xff]
        %v5877 = vld [vmem:[#allocation16 + $0x70] sm:$0xff]
        %v5878 = vld [vmem:[#allocation16 + $0x78] sm:$0xff]
        %v5879 = vld [vmem:[#allocation16 + $0x80] sm:$0xff]
        %v5880 = vld [vmem:[#allocation16 + $0x88] sm:$0xff]
        %v5881 = vld [vmem:[#allocation16 + $0x90] sm:$0xff]
        %v5882 = vld [vmem:[#allocation16 + $0x98] sm:$0xff]
        %v5883 = vld [vmem:[#allocation16 + $0xa0] sm:$0xff]
        %v5884 = vld [vmem:[#allocation16 + $0xa8] sm:$0xff]
        %v5885 = vld [vmem:[#allocation16 + $0xb0] sm:$0xff]
        %v5886 = vld [vmem:[#allocation16 + $0xb8] sm:$0xff]
        %v5887 = vld [vmem:[#allocation16 + $0xc0] sm:$0xff]
        %v5888 = vld [vmem:[#allocation16 + $0xc8] sm:$0xff]
        %v5889 = vld [vmem:[#allocation16 + $0xd0] sm:$0xff]
        %v5890 = vld [vmem:[#allocation16 + $0xd8] sm:$0xff]
        %v5891 = vld [vmem:[#allocation16 + $0xe0] sm:$0xff]
        %v5892 = vld [vmem:[#allocation16 + $0xe8] sm:$0xff]
        %v5893 = vld [vmem:[#allocation16 + $0xf0] sm:$0xff]
        %v5894 = vld [vmem:[#allocation16 + $0xf8] sm:$0xff]
        %v5895 = vld [vmem:[#allocation16 + $0x100] sm:$0xff]
        %v5896 = vld [vmem:[#allocation16 + $0x108] sm:$0xff]
        %v5897 = vld [vmem:[#allocation16 + $0x110] sm:$0xff]
        %v5898 = vld [vmem:[#allocation16 + $0x118] sm:$0xff]
        %v5899 = vld [vmem:[#allocation16 + $0x120] sm:$0xff]
        %v5900 = vld [vmem:[#allocation16 + $0x128] sm:$0xff]
        %v5901 = vld [vmem:[#allocation16 + $0x130] sm:$0xff]
        %v5902 = vld [vmem:[#allocation16 + $0x138] sm:$0xff]
        %v5903 = vld [vmem:[#allocation16 + $0x140] sm:$0xff]
        %v5904 = vld [vmem:[#allocation16 + $0x148] sm:$0xff]
        %v5905 = vld [vmem:[#allocation16 + $0x150] sm:$0xff]
        %v5906 = vld [vmem:[#allocation16 + $0x158] sm:$0xff]
        %v5907 = vld [vmem:[#allocation16 + $0x160] sm:$0xff]
        %v5908 = vld [vmem:[#allocation16 + $0x168] sm:$0xff]
        %v5909 = vld [vmem:[#allocation16 + $0x170] sm:$0xff]
        %v5910 = vld [vmem:[#allocation16 + $0x178] sm:$0xff]
        %v5911 = vld [vmem:[#allocation16 + $0x180] sm:$0xff]
        %v5912 = vld [vmem:[#allocation16 + $0x188] sm:$0xff]
        %v5913 = vld [vmem:[#allocation16 + $0x190] sm:$0xff]
        %v5914 = vld [vmem:[#allocation16 + $0x198] sm:$0xff]
        %v5915 = vld [vmem:[#allocation16 + $0x1a0] sm:$0xff]
        %v5916 = vld [vmem:[#allocation16 + $0x1a8] sm:$0xff]
        %v5917 = vld [vmem:[#allocation16 + $0x1b0] sm:$0xff]
        %v5918 = vld [vmem:[#allocation16 + $0x1b8] sm:$0xff]
        %v5919 = vld [vmem:[#allocation16 + $0x1c0] sm:$0xff]
        %v5920 = vld [vmem:[#allocation16 + $0x1c8] sm:$0xff]
        %v5921 = vld [vmem:[#allocation16 + $0x1d0] sm:$0xff]
        %v5922 = vld [vmem:[#allocation16 + $0x1d8] sm:$0xff]
        %v5923 = vld [vmem:[#allocation16 + $0x1e0] sm:$0xff]
        %v5924 = vld [vmem:[#allocation16 + $0x1e8] sm:$0xff]
        %v5925 = vld [vmem:[#allocation16 + $0x1f0] sm:$0xff]
        %v5926 = vld [vmem:[#allocation16 + $0x1f8] sm:$0xff]
        %v5927 = vld [vmem:[%s12] sm:$0xf]
        %v5929 = vperm.slane %v5927, 0
        %v5930 = vperm.slane %v5927, 1
        %v5931 = vperm.slane %v5927, 2
        %v5932 = vperm.slane %v5927, 3
        %v5937 = vand.u32 %v5923, 4294901760
        %5938 = vmatpush.msra.mxu0 %v5937
        %v5939 = vand.u32 %v5919, 4294901760
        %5940 = vmatpush.msra.mxu0 %v5939
        %v5941 = vand.u32 %v5915, 4294901760
        %5942 = vmatpush.msra.mxu0 %v5941
        %v5943 = vand.u32 %v5911, 4294901760
        %5944 = vmatpush.msra.mxu0 %v5943
        %v5945 = vand.u32 %v5907, 4294901760
        %5946 = vmatpush.msra.mxu0 %v5945
        %v5947 = vand.u32 %v5903, 4294901760
        %5948 = vmatpush.msra.mxu0 %v5947
        %v5949 = vand.u32 %v5899, 4294901760
        %5950 = vmatpush.msra.mxu0 %v5949
        %v5951 = vand.u32 %v5895, 4294901760
        %5952 = vmatpush.msra.mxu0 %v5951
        %v5953 = vand.u32 %v5891, 4294901760
        %5954 = vmatpush.msra.mxu0 %v5953
        %v5955 = vand.u32 %v5887, 4294901760
        %5956 = vmatpush.msra.mxu0 %v5955
        %v5957 = vand.u32 %v5883, 4294901760
        %5958 = vmatpush.msra.mxu0 %v5957
        %v5959 = vand.u32 %v5879, 4294901760
        %5960 = vmatpush.msra.mxu0 %v5959
        %v5961 = vand.u32 %v5875, 4294901760
        %5962 = vmatpush.msra.mxu0 %v5961
        %v5963 = vand.u32 %v5871, 4294901760
        %5964 = vmatpush.msra.mxu0 %v5963
        %v5965 = vand.u32 %v5867, 4294901760
        %5966 = vmatpush.msra.mxu0 %v5965
        %v5967 = vand.u32 %v5863, 4294901760
        %5968 = vmatpush.msra.mxu0 %v5967
        %v5969 = vand.u32 %v5862, 4294901760
        %v5970 = vsub.f32 %v5862, %v5969
        %v5971 = vand.u32 %v5970, 4294901760
        %v5972 = vsub.f32 %v5970, %v5971
        %v5973 = vand.u32 %v5972, 4294901760
        %5974 = vmatmul.f32.gmra.mxu0 %v5973
        %v5975 = vpop.f32.mrf.mxu0
        %v5976 = vadd.f32 %v5929, %v5975
        %5977 = vdwg.mxu0
        %v5978 = vand.u32 %v5923, 4294901760
        %v5979 = vsub.f32 %v5923, %v5978
        %v5980 = vand.u32 %v5979, 4294901760
        %v5981 = vsub.f32 %v5979, %v5980
        %v5982 = vand.u32 %v5981, 4294901760
        %5983 = vmatpush.msra.mxu0 %v5982
        %v5984 = vand.u32 %v5919, 4294901760
        %v5985 = vsub.f32 %v5919, %v5984
        %v5986 = vand.u32 %v5985, 4294901760
        %v5987 = vsub.f32 %v5985, %v5986
        %v5988 = vand.u32 %v5987, 4294901760
        %5989 = vmatpush.msra.mxu0 %v5988
        %v5990 = vand.u32 %v5915, 4294901760
        %v5991 = vsub.f32 %v5915, %v5990
        %v5992 = vand.u32 %v5991, 4294901760
        %v5993 = vsub.f32 %v5991, %v5992
        %v5994 = vand.u32 %v5993, 4294901760
        %5995 = vmatpush.msra.mxu0 %v5994
        %v5996 = vand.u32 %v5911, 4294901760
        %v5997 = vsub.f32 %v5911, %v5996
        %v5998 = vand.u32 %v5997, 4294901760
        %v5999 = vsub.f32 %v5997, %v5998
        %v6000 = vand.u32 %v5999, 4294901760
        %6001 = vmatpush.msra.mxu0 %v6000
        %v6002 = vand.u32 %v5907, 4294901760
        %v6003 = vsub.f32 %v5907, %v6002
        %v6004 = vand.u32 %v6003, 4294901760
        %v6005 = vsub.f32 %v6003, %v6004
        %v6006 = vand.u32 %v6005, 4294901760
        %6007 = vmatpush.msra.mxu0 %v6006
        %v6008 = vand.u32 %v5903, 4294901760
        %v6009 = vsub.f32 %v5903, %v6008
        %v6010 = vand.u32 %v6009, 4294901760
        %v6011 = vsub.f32 %v6009, %v6010
        %v6012 = vand.u32 %v6011, 4294901760
        %6013 = vmatpush.msra.mxu0 %v6012
        %v6014 = vand.u32 %v5899, 4294901760
        %v6015 = vsub.f32 %v5899, %v6014
        %v6016 = vand.u32 %v6015, 4294901760
        %v6017 = vsub.f32 %v6015, %v6016
        %v6018 = vand.u32 %v6017, 4294901760
        %6019 = vmatpush.msra.mxu0 %v6018
        %v6020 = vand.u32 %v5895, 4294901760
        %v6021 = vsub.f32 %v5895, %v6020
        %v6022 = vand.u32 %v6021, 4294901760
        %v6023 = vsub.f32 %v6021, %v6022
        %v6024 = vand.u32 %v6023, 4294901760
        %6025 = vmatpush.msra.mxu0 %v6024
        %v6026 = vand.u32 %v5891, 4294901760
        %v6027 = vsub.f32 %v5891, %v6026
        %v6028 = vand.u32 %v6027, 4294901760
        %v6029 = vsub.f32 %v6027, %v6028
        %v6030 = vand.u32 %v6029, 4294901760
        %6031 = vmatpush.msra.mxu0 %v6030
        %v6032 = vand.u32 %v5887, 4294901760
        %v6033 = vsub.f32 %v5887, %v6032
        %v6034 = vand.u32 %v6033, 4294901760
        %v6035 = vsub.f32 %v6033, %v6034
        %v6036 = vand.u32 %v6035, 4294901760
        %6037 = vmatpush.msra.mxu0 %v6036
        %v6038 = vand.u32 %v5883, 4294901760
        %v6039 = vsub.f32 %v5883, %v6038
        %v6040 = vand.u32 %v6039, 4294901760
        %v6041 = vsub.f32 %v6039, %v6040
        %v6042 = vand.u32 %v6041, 4294901760
        %6043 = vmatpush.msra.mxu0 %v6042
        %v6044 = vand.u32 %v5879, 4294901760
        %v6045 = vsub.f32 %v5879, %v6044
        %v6046 = vand.u32 %v6045, 4294901760
        %v6047 = vsub.f32 %v6045, %v6046
        %v6048 = vand.u32 %v6047, 4294901760
        %6049 = vmatpush.msra.mxu0 %v6048
        %v6050 = vand.u32 %v5875, 4294901760
        %v6051 = vsub.f32 %v5875, %v6050
        %v6052 = vand.u32 %v6051, 4294901760
        %v6053 = vsub.f32 %v6051, %v6052
        %v6054 = vand.u32 %v6053, 4294901760
        %6055 = vmatpush.msra.mxu0 %v6054
        %v6056 = vand.u32 %v5871, 4294901760
        %v6057 = vsub.f32 %v5871, %v6056
        %v6058 = vand.u32 %v6057, 4294901760
        %v6059 = vsub.f32 %v6057, %v6058
        %v6060 = vand.u32 %v6059, 4294901760
        %6061 = vmatpush.msra.mxu0 %v6060
        %v6062 = vand.u32 %v5867, 4294901760
        %v6063 = vsub.f32 %v5867, %v6062
        %v6064 = vand.u32 %v6063, 4294901760
        %v6065 = vsub.f32 %v6063, %v6064
        %v6066 = vand.u32 %v6065, 4294901760
        %6067 = vmatpush.msra.mxu0 %v6066
        %v6068 = vand.u32 %v5863, 4294901760
        %v6069 = vsub.f32 %v5863, %v6068
        %v6070 = vand.u32 %v6069, 4294901760
        %v6071 = vsub.f32 %v6069, %v6070
        %v6072 = vand.u32 %v6071, 4294901760
        %6073 = vmatpush.msra.mxu0 %v6072
        %v6074 = vand.u32 %v5862, 4294901760
        %6075 = vmatmul.f32.gmra.mxu0 %v6074
        %v6076 = vpop.f32.mrf.mxu0
        %v6077 = vadd.f32 %v5976, %v6076
        %6078 = vdwg.mxu0
        %v6079 = vand.u32 %v5923, 4294901760
        %v6080 = vsub.f32 %v5923, %v6079
        %6081 = vmatpush.msra.mxu0 %v6080
        %v6082 = vand.u32 %v5919, 4294901760
        %v6083 = vsub.f32 %v5919, %v6082
        %6084 = vmatpush.msra.mxu0 %v6083
        %v6085 = vand.u32 %v5915, 4294901760
        %v6086 = vsub.f32 %v5915, %v6085
        %6087 = vmatpush.msra.mxu0 %v6086
        %v6088 = vand.u32 %v5911, 4294901760
        %v6089 = vsub.f32 %v5911, %v6088
        %6090 = vmatpush.msra.mxu0 %v6089
        %v6091 = vand.u32 %v5907, 4294901760
        %v6092 = vsub.f32 %v5907, %v6091
        %6093 = vmatpush.msra.mxu0 %v6092
        %v6094 = vand.u32 %v5903, 4294901760
        %v6095 = vsub.f32 %v5903, %v6094
        %6096 = vmatpush.msra.mxu0 %v6095
        %v6097 = vand.u32 %v5899, 4294901760
        %v6098 = vsub.f32 %v5899, %v6097
        %6099 = vmatpush.msra.mxu0 %v6098
        %v6100 = vand.u32 %v5895, 4294901760
        %v6101 = vsub.f32 %v5895, %v6100
        %6102 = vmatpush.msra.mxu0 %v6101
        %v6103 = vand.u32 %v5891, 4294901760
        %v6104 = vsub.f32 %v5891, %v6103
        %6105 = vmatpush.msra.mxu0 %v6104
        %v6106 = vand.u32 %v5887, 4294901760
        %v6107 = vsub.f32 %v5887, %v6106
        %6108 = vmatpush.msra.mxu0 %v6107
        %v6109 = vand.u32 %v5883, 4294901760
        %v6110 = vsub.f32 %v5883, %v6109
        %6111 = vmatpush.msra.mxu0 %v6110
        %v6112 = vand.u32 %v5879, 4294901760
        %v6113 = vsub.f32 %v5879, %v6112
        %6114 = vmatpush.msra.mxu0 %v6113
        %v6115 = vand.u32 %v5875, 4294901760
        %v6116 = vsub.f32 %v5875, %v6115
        %6117 = vmatpush.msra.mxu0 %v6116
        %v6118 = vand.u32 %v5871, 4294901760
        %v6119 = vsub.f32 %v5871, %v6118
        %6120 = vmatpush.msra.mxu0 %v6119
        %v6121 = vand.u32 %v5867, 4294901760
        %v6122 = vsub.f32 %v5867, %v6121
        %6123 = vmatpush.msra.mxu0 %v6122
        %v6124 = vand.u32 %v5863, 4294901760
        %v6125 = vsub.f32 %v5863, %v6124
        %6126 = vmatpush.msra.mxu0 %v6125
        %v6127 = vand.u32 %v5862, 4294901760
        %v6128 = vsub.f32 %v5862, %v6127
        %6129 = vmatmul.f32.gmra.mxu0 %v6128
        %v6130 = vpop.f32.mrf.mxu0
        %v6131 = vadd.f32 %v6077, %v6130
        %6132 = vdwg.mxu0
        %v6133 = vand.u32 %v5923, 4294901760
        %6134 = vmatpush.msra.mxu0 %v6133
        %v6135 = vand.u32 %v5919, 4294901760
        %6136 = vmatpush.msra.mxu0 %v6135
        %v6137 = vand.u32 %v5915, 4294901760
        %6138 = vmatpush.msra.mxu0 %v6137
        %v6139 = vand.u32 %v5911, 4294901760
        %6140 = vmatpush.msra.mxu0 %v6139
        %v6141 = vand.u32 %v5907, 4294901760
        %6142 = vmatpush.msra.mxu0 %v6141
        %v6143 = vand.u32 %v5903, 4294901760
        %6144 = vmatpush.msra.mxu0 %v6143
        %v6145 = vand.u32 %v5899, 4294901760
        %6146 = vmatpush.msra.mxu0 %v6145
        %v6147 = vand.u32 %v5895, 4294901760
        %6148 = vmatpush.msra.mxu0 %v6147
        %v6149 = vand.u32 %v5891, 4294901760
        %6150 = vmatpush.msra.mxu0 %v6149
        %v6151 = vand.u32 %v5887, 4294901760
        %6152 = vmatpush.msra.mxu0 %v6151
        %v6153 = vand.u32 %v5883, 4294901760
        %6154 = vmatpush.msra.mxu0 %v6153
        %v6155 = vand.u32 %v5879, 4294901760
        %6156 = vmatpush.msra.mxu0 %v6155
        %v6157 = vand.u32 %v5875, 4294901760
        %6158 = vmatpush.msra.mxu0 %v6157
        %v6159 = vand.u32 %v5871, 4294901760
        %6160 = vmatpush.msra.mxu0 %v6159
        %v6161 = vand.u32 %v5867, 4294901760
        %6162 = vmatpush.msra.mxu0 %v6161
        %v6163 = vand.u32 %v5863, 4294901760
        %6164 = vmatpush.msra.mxu0 %v6163
        %v6165 = vand.u32 %v5862, 4294901760
        %v6166 = vsub.f32 %v5862, %v6165
        %v6167 = vand.u32 %v6166, 4294901760
        %6168 = vmatmul.f32.gmra.mxu0 %v6167
        %v6169 = vpop.f32.mrf.mxu0
        %v6170 = vadd.f32 %v6131, %v6169
        %6171 = vdwg.mxu0
        %v6172 = vand.u32 %v5923, 4294901760
        %v6173 = vsub.f32 %v5923, %v6172
        %v6174 = vand.u32 %v6173, 4294901760
        %6175 = vmatpush.msra.mxu0 %v6174
        %v6176 = vand.u32 %v5919, 4294901760
        %v6177 = vsub.f32 %v5919, %v6176
        %v6178 = vand.u32 %v6177, 4294901760
        %6179 = vmatpush.msra.mxu0 %v6178
        %v6180 = vand.u32 %v5915, 4294901760
        %v6181 = vsub.f32 %v5915, %v6180
        %v6182 = vand.u32 %v6181, 4294901760
        %6183 = vmatpush.msra.mxu0 %v6182
        %v6184 = vand.u32 %v5911, 4294901760
        %v6185 = vsub.f32 %v5911, %v6184
        %v6186 = vand.u32 %v6185, 4294901760
        %6187 = vmatpush.msra.mxu0 %v6186
        %v6188 = vand.u32 %v5907, 4294901760
        %v6189 = vsub.f32 %v5907, %v6188
        %v6190 = vand.u32 %v6189, 4294901760
        %6191 = vmatpush.msra.mxu0 %v6190
        %v6192 = vand.u32 %v5903, 4294901760
        %v6193 = vsub.f32 %v5903, %v6192
        %v6194 = vand.u32 %v6193, 4294901760
        %6195 = vmatpush.msra.mxu0 %v6194
        %v6196 = vand.u32 %v5899, 4294901760
        %v6197 = vsub.f32 %v5899, %v6196
        %v6198 = vand.u32 %v6197, 4294901760
        %6199 = vmatpush.msra.mxu0 %v6198
        %v6200 = vand.u32 %v5895, 4294901760
        %v6201 = vsub.f32 %v5895, %v6200
        %v6202 = vand.u32 %v6201, 4294901760
        %6203 = vmatpush.msra.mxu0 %v6202
        %v6204 = vand.u32 %v5891, 4294901760
        %v6205 = vsub.f32 %v5891, %v6204
        %v6206 = vand.u32 %v6205, 4294901760
        %6207 = vmatpush.msra.mxu0 %v6206
        %v6208 = vand.u32 %v5887, 4294901760
        %v6209 = vsub.f32 %v5887, %v6208
        %v6210 = vand.u32 %v6209, 4294901760
        %6211 = vmatpush.msra.mxu0 %v6210
        %v6212 = vand.u32 %v5883, 4294901760
        %v6213 = vsub.f32 %v5883, %v6212
        %v6214 = vand.u32 %v6213, 4294901760
        %6215 = vmatpush.msra.mxu0 %v6214
        %v6216 = vand.u32 %v5879, 4294901760
        %v6217 = vsub.f32 %v5879, %v6216
        %v6218 = vand.u32 %v6217, 4294901760
        %6219 = vmatpush.msra.mxu0 %v6218
        %v6220 = vand.u32 %v5875, 4294901760
        %v6221 = vsub.f32 %v5875, %v6220
        %v6222 = vand.u32 %v6221, 4294901760
        %6223 = vmatpush.msra.mxu0 %v6222
        %v6224 = vand.u32 %v5871, 4294901760
        %v6225 = vsub.f32 %v5871, %v6224
        %v6226 = vand.u32 %v6225, 4294901760
        %6227 = vmatpush.msra.mxu0 %v6226
        %v6228 = vand.u32 %v5867, 4294901760
        %v6229 = vsub.f32 %v5867, %v6228
        %v6230 = vand.u32 %v6229, 4294901760
        %6231 = vmatpush.msra.mxu0 %v6230
        %v6232 = vand.u32 %v5863, 4294901760
        %v6233 = vsub.f32 %v5863, %v6232
        %v6234 = vand.u32 %v6233, 4294901760
        %6235 = vmatpush.msra.mxu0 %v6234
        %v6236 = vand.u32 %v5862, 4294901760
        %6237 = vmatmul.f32.gmra.mxu0 %v6236
        %v6238 = vpop.f32.mrf.mxu0
        %v6239 = vadd.f32 %v6170, %v6238
        %6240 = vdwg.mxu0
        %v6241 = vand.u32 %v5923, 4294901760
        %6242 = vmatpush.msra.mxu0 %v6241
        %v6243 = vand.u32 %v5919, 4294901760
        %6244 = vmatpush.msra.mxu0 %v6243
        %v6245 = vand.u32 %v5915, 4294901760
        %6246 = vmatpush.msra.mxu0 %v6245
        %v6247 = vand.u32 %v5911, 4294901760
        %6248 = vmatpush.msra.mxu0 %v6247
        %v6249 = vand.u32 %v5907, 4294901760
        %6250 = vmatpush.msra.mxu0 %v6249
        %v6251 = vand.u32 %v5903, 4294901760
        %6252 = vmatpush.msra.mxu0 %v6251
        %v6253 = vand.u32 %v5899, 4294901760
        %6254 = vmatpush.msra.mxu0 %v6253
        %v6255 = vand.u32 %v5895, 4294901760
        %6256 = vmatpush.msra.mxu0 %v6255
        %v6257 = vand.u32 %v5891, 4294901760
        %6258 = vmatpush.msra.mxu0 %v6257
        %v6259 = vand.u32 %v5887, 4294901760
        %6260 = vmatpush.msra.mxu0 %v6259
        %v6261 = vand.u32 %v5883, 4294901760
        %6262 = vmatpush.msra.mxu0 %v6261
        %v6263 = vand.u32 %v5879, 4294901760
        %6264 = vmatpush.msra.mxu0 %v6263
        %v6265 = vand.u32 %v5875, 4294901760
        %6266 = vmatpush.msra.mxu0 %v6265
        %v6267 = vand.u32 %v5871, 4294901760
        %6268 = vmatpush.msra.mxu0 %v6267
        %v6269 = vand.u32 %v5867, 4294901760
        %6270 = vmatpush.msra.mxu0 %v6269
        %v6271 = vand.u32 %v5863, 4294901760
        %6272 = vmatpush.msra.mxu0 %v6271
        %v6273 = vand.u32 %v5862, 4294901760
        %6274 = vmatmul.f32.gmra.mxu0 %v6273
        %v6275 = vpop.f32.mrf.mxu0
        %v6276 = vadd.f32 %v6239, %v6275
        %6277 = vdwg.mxu0
        %v6278 = vand.u32 %v5924, 4294901760
        %6279 = vmatpush.msra.mxu0 %v6278
        %v6280 = vand.u32 %v5920, 4294901760
        %6281 = vmatpush.msra.mxu0 %v6280
        %v6282 = vand.u32 %v5916, 4294901760
        %6283 = vmatpush.msra.mxu0 %v6282
        %v6284 = vand.u32 %v5912, 4294901760
        %6285 = vmatpush.msra.mxu0 %v6284
        %v6286 = vand.u32 %v5908, 4294901760
        %6287 = vmatpush.msra.mxu0 %v6286
        %v6288 = vand.u32 %v5904, 4294901760
        %6289 = vmatpush.msra.mxu0 %v6288
        %v6290 = vand.u32 %v5900, 4294901760
        %6291 = vmatpush.msra.mxu0 %v6290
        %v6292 = vand.u32 %v5896, 4294901760
        %6293 = vmatpush.msra.mxu0 %v6292
        %v6294 = vand.u32 %v5892, 4294901760
        %6295 = vmatpush.msra.mxu0 %v6294
        %v6296 = vand.u32 %v5888, 4294901760
        %6297 = vmatpush.msra.mxu0 %v6296
        %v6298 = vand.u32 %v5884, 4294901760
        %6299 = vmatpush.msra.mxu0 %v6298
        %v6300 = vand.u32 %v5880, 4294901760
        %6301 = vmatpush.msra.mxu0 %v6300
        %v6302 = vand.u32 %v5876, 4294901760
        %6303 = vmatpush.msra.mxu0 %v6302
        %v6304 = vand.u32 %v5872, 4294901760
        %6305 = vmatpush.msra.mxu0 %v6304
        %v6306 = vand.u32 %v5868, 4294901760
        %6307 = vmatpush.msra.mxu0 %v6306
        %v6308 = vand.u32 %v5864, 4294901760
        %6309 = vmatpush.msra.mxu0 %v6308
        %v6310 = vand.u32 %v5862, 4294901760
        %v6311 = vsub.f32 %v5862, %v6310
        %v6312 = vand.u32 %v6311, 4294901760
        %v6313 = vsub.f32 %v6311, %v6312
        %v6314 = vand.u32 %v6313, 4294901760
        %6315 = vmatmul.f32.gmra.mxu0 %v6314
        %v6316 = vpop.f32.mrf.mxu0
        %v6317 = vadd.f32 %v5930, %v6316
        %6318 = vdwg.mxu0
        %v6319 = vand.u32 %v5924, 4294901760
        %v6320 = vsub.f32 %v5924, %v6319
        %v6321 = vand.u32 %v6320, 4294901760
        %v6322 = vsub.f32 %v6320, %v6321
        %v6323 = vand.u32 %v6322, 4294901760
        %6324 = vmatpush.msra.mxu0 %v6323
        %v6325 = vand.u32 %v5920, 4294901760
        %v6326 = vsub.f32 %v5920, %v6325
        %v6327 = vand.u32 %v6326, 4294901760
        %v6328 = vsub.f32 %v6326, %v6327
        %v6329 = vand.u32 %v6328, 4294901760
        %6330 = vmatpush.msra.mxu0 %v6329
        %v6331 = vand.u32 %v5916, 4294901760
        %v6332 = vsub.f32 %v5916, %v6331
        %v6333 = vand.u32 %v6332, 4294901760
        %v6334 = vsub.f32 %v6332, %v6333
        %v6335 = vand.u32 %v6334, 4294901760
        %6336 = vmatpush.msra.mxu0 %v6335
        %v6337 = vand.u32 %v5912, 4294901760
        %v6338 = vsub.f32 %v5912, %v6337
        %v6339 = vand.u32 %v6338, 4294901760
        %v6340 = vsub.f32 %v6338, %v6339
        %v6341 = vand.u32 %v6340, 4294901760
        %6342 = vmatpush.msra.mxu0 %v6341
        %v6343 = vand.u32 %v5908, 4294901760
        %v6344 = vsub.f32 %v5908, %v6343
        %v6345 = vand.u32 %v6344, 4294901760
        %v6346 = vsub.f32 %v6344, %v6345
        %v6347 = vand.u32 %v6346, 4294901760
        %6348 = vmatpush.msra.mxu0 %v6347
        %v6349 = vand.u32 %v5904, 4294901760
        %v6350 = vsub.f32 %v5904, %v6349
        %v6351 = vand.u32 %v6350, 4294901760
        %v6352 = vsub.f32 %v6350, %v6351
        %v6353 = vand.u32 %v6352, 4294901760
        %6354 = vmatpush.msra.mxu0 %v6353
        %v6355 = vand.u32 %v5900, 4294901760
        %v6356 = vsub.f32 %v5900, %v6355
        %v6357 = vand.u32 %v6356, 4294901760
        %v6358 = vsub.f32 %v6356, %v6357
        %v6359 = vand.u32 %v6358, 4294901760
        %6360 = vmatpush.msra.mxu0 %v6359
        %v6361 = vand.u32 %v5896, 4294901760
        %v6362 = vsub.f32 %v5896, %v6361
        %v6363 = vand.u32 %v6362, 4294901760
        %v6364 = vsub.f32 %v6362, %v6363
        %v6365 = vand.u32 %v6364, 4294901760
        %6366 = vmatpush.msra.mxu0 %v6365
        %v6367 = vand.u32 %v5892, 4294901760
        %v6368 = vsub.f32 %v5892, %v6367
        %v6369 = vand.u32 %v6368, 4294901760
        %v6370 = vsub.f32 %v6368, %v6369
        %v6371 = vand.u32 %v6370, 4294901760
        %6372 = vmatpush.msra.mxu0 %v6371
        %v6373 = vand.u32 %v5888, 4294901760
        %v6374 = vsub.f32 %v5888, %v6373
        %v6375 = vand.u32 %v6374, 4294901760
        %v6376 = vsub.f32 %v6374, %v6375
        %v6377 = vand.u32 %v6376, 4294901760
        %6378 = vmatpush.msra.mxu0 %v6377
        %v6379 = vand.u32 %v5884, 4294901760
        %v6380 = vsub.f32 %v5884, %v6379
        %v6381 = vand.u32 %v6380, 4294901760
        %v6382 = vsub.f32 %v6380, %v6381
        %v6383 = vand.u32 %v6382, 4294901760
        %6384 = vmatpush.msra.mxu0 %v6383
        %v6385 = vand.u32 %v5880, 4294901760
        %v6386 = vsub.f32 %v5880, %v6385
        %v6387 = vand.u32 %v6386, 4294901760
        %v6388 = vsub.f32 %v6386, %v6387
        %v6389 = vand.u32 %v6388, 4294901760
        %6390 = vmatpush.msra.mxu0 %v6389
        %v6391 = vand.u32 %v5876, 4294901760
        %v6392 = vsub.f32 %v5876, %v6391
        %v6393 = vand.u32 %v6392, 4294901760
        %v6394 = vsub.f32 %v6392, %v6393
        %v6395 = vand.u32 %v6394, 4294901760
        %6396 = vmatpush.msra.mxu0 %v6395
        %v6397 = vand.u32 %v5872, 4294901760
        %v6398 = vsub.f32 %v5872, %v6397
        %v6399 = vand.u32 %v6398, 4294901760
        %v6400 = vsub.f32 %v6398, %v6399
        %v6401 = vand.u32 %v6400, 4294901760
        %6402 = vmatpush.msra.mxu0 %v6401
        %v6403 = vand.u32 %v5868, 4294901760
        %v6404 = vsub.f32 %v5868, %v6403
        %v6405 = vand.u32 %v6404, 4294901760
        %v6406 = vsub.f32 %v6404, %v6405
        %v6407 = vand.u32 %v6406, 4294901760
        %6408 = vmatpush.msra.mxu0 %v6407
        %v6409 = vand.u32 %v5864, 4294901760
        %v6410 = vsub.f32 %v5864, %v6409
        %v6411 = vand.u32 %v6410, 4294901760
        %v6412 = vsub.f32 %v6410, %v6411
        %v6413 = vand.u32 %v6412, 4294901760
        %6414 = vmatpush.msra.mxu0 %v6413
        %v6415 = vand.u32 %v5862, 4294901760
        %6416 = vmatmul.f32.gmra.mxu0 %v6415
        %v6417 = vpop.f32.mrf.mxu0
        %v6418 = vadd.f32 %v6317, %v6417
        %6419 = vdwg.mxu0
        %v6420 = vand.u32 %v5924, 4294901760
        %v6421 = vsub.f32 %v5924, %v6420
        %6422 = vmatpush.msra.mxu0 %v6421
        %v6423 = vand.u32 %v5920, 4294901760
        %v6424 = vsub.f32 %v5920, %v6423
        %6425 = vmatpush.msra.mxu0 %v6424
        %v6426 = vand.u32 %v5916, 4294901760
        %v6427 = vsub.f32 %v5916, %v6426
        %6428 = vmatpush.msra.mxu0 %v6427
        %v6429 = vand.u32 %v5912, 4294901760
        %v6430 = vsub.f32 %v5912, %v6429
        %6431 = vmatpush.msra.mxu0 %v6430
        %v6432 = vand.u32 %v5908, 4294901760
        %v6433 = vsub.f32 %v5908, %v6432
        %6434 = vmatpush.msra.mxu0 %v6433
        %v6435 = vand.u32 %v5904, 4294901760
        %v6436 = vsub.f32 %v5904, %v6435
        %6437 = vmatpush.msra.mxu0 %v6436
        %v6438 = vand.u32 %v5900, 4294901760
        %v6439 = vsub.f32 %v5900, %v6438
        %6440 = vmatpush.msra.mxu0 %v6439
        %v6441 = vand.u32 %v5896, 4294901760
        %v6442 = vsub.f32 %v5896, %v6441
        %6443 = vmatpush.msra.mxu0 %v6442
        %v6444 = vand.u32 %v5892, 4294901760
        %v6445 = vsub.f32 %v5892, %v6444
        %6446 = vmatpush.msra.mxu0 %v6445
        %v6447 = vand.u32 %v5888, 4294901760
        %v6448 = vsub.f32 %v5888, %v6447
        %6449 = vmatpush.msra.mxu0 %v6448
        %v6450 = vand.u32 %v5884, 4294901760
        %v6451 = vsub.f32 %v5884, %v6450
        %6452 = vmatpush.msra.mxu0 %v6451
        %v6453 = vand.u32 %v5880, 4294901760
        %v6454 = vsub.f32 %v5880, %v6453
        %6455 = vmatpush.msra.mxu0 %v6454
        %v6456 = vand.u32 %v5876, 4294901760
        %v6457 = vsub.f32 %v5876, %v6456
        %6458 = vmatpush.msra.mxu0 %v6457
        %v6459 = vand.u32 %v5872, 4294901760
        %v6460 = vsub.f32 %v5872, %v6459
        %6461 = vmatpush.msra.mxu0 %v6460
        %v6462 = vand.u32 %v5868, 4294901760
        %v6463 = vsub.f32 %v5868, %v6462
        %6464 = vmatpush.msra.mxu0 %v6463
        %v6465 = vand.u32 %v5864, 4294901760
        %v6466 = vsub.f32 %v5864, %v6465
        %6467 = vmatpush.msra.mxu0 %v6466
        %v6468 = vand.u32 %v5862, 4294901760
        %v6469 = vsub.f32 %v5862, %v6468
        %6470 = vmatmul.f32.gmra.mxu0 %v6469
        %v6471 = vpop.f32.mrf.mxu0
        %v6472 = vadd.f32 %v6418, %v6471
        %6473 = vdwg.mxu0
        %v6474 = vand.u32 %v5924, 4294901760
        %6475 = vmatpush.msra.mxu0 %v6474
        %v6476 = vand.u32 %v5920, 4294901760
        %6477 = vmatpush.msra.mxu0 %v6476
        %v6478 = vand.u32 %v5916, 4294901760
        %6479 = vmatpush.msra.mxu0 %v6478
        %v6480 = vand.u32 %v5912, 4294901760
        %6481 = vmatpush.msra.mxu0 %v6480
        %v6482 = vand.u32 %v5908, 4294901760
        %6483 = vmatpush.msra.mxu0 %v6482
        %v6484 = vand.u32 %v5904, 4294901760
        %6485 = vmatpush.msra.mxu0 %v6484
        %v6486 = vand.u32 %v5900, 4294901760
        %6487 = vmatpush.msra.mxu0 %v6486
        %v6488 = vand.u32 %v5896, 4294901760
        %6489 = vmatpush.msra.mxu0 %v6488
        %v6490 = vand.u32 %v5892, 4294901760
        %6491 = vmatpush.msra.mxu0 %v6490
        %v6492 = vand.u32 %v5888, 4294901760
        %6493 = vmatpush.msra.mxu0 %v6492
        %v6494 = vand.u32 %v5884, 4294901760
        %6495 = vmatpush.msra.mxu0 %v6494
        %v6496 = vand.u32 %v5880, 4294901760
        %6497 = vmatpush.msra.mxu0 %v6496
        %v6498 = vand.u32 %v5876, 4294901760
        %6499 = vmatpush.msra.mxu0 %v6498
        %v6500 = vand.u32 %v5872, 4294901760
        %6501 = vmatpush.msra.mxu0 %v6500
        %v6502 = vand.u32 %v5868, 4294901760
        %6503 = vmatpush.msra.mxu0 %v6502
        %v6504 = vand.u32 %v5864, 4294901760
        %6505 = vmatpush.msra.mxu0 %v6504
        %v6506 = vand.u32 %v5862, 4294901760
        %v6507 = vsub.f32 %v5862, %v6506
        %v6508 = vand.u32 %v6507, 4294901760
        %6509 = vmatmul.f32.gmra.mxu0 %v6508
        %v6510 = vpop.f32.mrf.mxu0
        %v6511 = vadd.f32 %v6472, %v6510
        %6512 = vdwg.mxu0
        %v6513 = vand.u32 %v5924, 4294901760
        %v6514 = vsub.f32 %v5924, %v6513
        %v6515 = vand.u32 %v6514, 4294901760
        %6516 = vmatpush.msra.mxu0 %v6515
        %v6517 = vand.u32 %v5920, 4294901760
        %v6518 = vsub.f32 %v5920, %v6517
        %v6519 = vand.u32 %v6518, 4294901760
        %6520 = vmatpush.msra.mxu0 %v6519
        %v6521 = vand.u32 %v5916, 4294901760
        %v6522 = vsub.f32 %v5916, %v6521
        %v6523 = vand.u32 %v6522, 4294901760
        %6524 = vmatpush.msra.mxu0 %v6523
        %v6525 = vand.u32 %v5912, 4294901760
        %v6526 = vsub.f32 %v5912, %v6525
        %v6527 = vand.u32 %v6526, 4294901760
        %6528 = vmatpush.msra.mxu0 %v6527
        %v6529 = vand.u32 %v5908, 4294901760
        %v6530 = vsub.f32 %v5908, %v6529
        %v6531 = vand.u32 %v6530, 4294901760
        %6532 = vmatpush.msra.mxu0 %v6531
        %v6533 = vand.u32 %v5904, 4294901760
        %v6534 = vsub.f32 %v5904, %v6533
        %v6535 = vand.u32 %v6534, 4294901760
        %6536 = vmatpush.msra.mxu0 %v6535
        %v6537 = vand.u32 %v5900, 4294901760
        %v6538 = vsub.f32 %v5900, %v6537
        %v6539 = vand.u32 %v6538, 4294901760
        %6540 = vmatpush.msra.mxu0 %v6539
        %v6541 = vand.u32 %v5896, 4294901760
        %v6542 = vsub.f32 %v5896, %v6541
        %v6543 = vand.u32 %v6542, 4294901760
        %6544 = vmatpush.msra.mxu0 %v6543
        %v6545 = vand.u32 %v5892, 4294901760
        %v6546 = vsub.f32 %v5892, %v6545
        %v6547 = vand.u32 %v6546, 4294901760
        %6548 = vmatpush.msra.mxu0 %v6547
        %v6549 = vand.u32 %v5888, 4294901760
        %v6550 = vsub.f32 %v5888, %v6549
        %v6551 = vand.u32 %v6550, 4294901760
        %6552 = vmatpush.msra.mxu0 %v6551
        %v6553 = vand.u32 %v5884, 4294901760
        %v6554 = vsub.f32 %v5884, %v6553
        %v6555 = vand.u32 %v6554, 4294901760
        %6556 = vmatpush.msra.mxu0 %v6555
        %v6557 = vand.u32 %v5880, 4294901760
        %v6558 = vsub.f32 %v5880, %v6557
        %v6559 = vand.u32 %v6558, 4294901760
        %6560 = vmatpush.msra.mxu0 %v6559
        %v6561 = vand.u32 %v5876, 4294901760
        %v6562 = vsub.f32 %v5876, %v6561
        %v6563 = vand.u32 %v6562, 4294901760
        %6564 = vmatpush.msra.mxu0 %v6563
        %v6565 = vand.u32 %v5872, 4294901760
        %v6566 = vsub.f32 %v5872, %v6565
        %v6567 = vand.u32 %v6566, 4294901760
        %6568 = vmatpush.msra.mxu0 %v6567
        %v6569 = vand.u32 %v5868, 4294901760
        %v6570 = vsub.f32 %v5868, %v6569
        %v6571 = vand.u32 %v6570, 4294901760
        %6572 = vmatpush.msra.mxu0 %v6571
        %v6573 = vand.u32 %v5864, 4294901760
        %v6574 = vsub.f32 %v5864, %v6573
        %v6575 = vand.u32 %v6574, 4294901760
        %6576 = vmatpush.msra.mxu0 %v6575
        %v6577 = vand.u32 %v5862, 4294901760
        %6578 = vmatmul.f32.gmra.mxu0 %v6577
        %v6579 = vpop.f32.mrf.mxu0
        %v6580 = vadd.f32 %v6511, %v6579
        %6581 = vdwg.mxu0
        %v6582 = vand.u32 %v5924, 4294901760
        %6583 = vmatpush.msra.mxu0 %v6582
        %v6584 = vand.u32 %v5920, 4294901760
        %6585 = vmatpush.msra.mxu0 %v6584
        %v6586 = vand.u32 %v5916, 4294901760
        %6587 = vmatpush.msra.mxu0 %v6586
        %v6588 = vand.u32 %v5912, 4294901760
        %6589 = vmatpush.msra.mxu0 %v6588
        %v6590 = vand.u32 %v5908, 4294901760
        %6591 = vmatpush.msra.mxu0 %v6590
        %v6592 = vand.u32 %v5904, 4294901760
        %6593 = vmatpush.msra.mxu0 %v6592
        %v6594 = vand.u32 %v5900, 4294901760
        %6595 = vmatpush.msra.mxu0 %v6594
        %v6596 = vand.u32 %v5896, 4294901760
        %6597 = vmatpush.msra.mxu0 %v6596
        %v6598 = vand.u32 %v5892, 4294901760
        %6599 = vmatpush.msra.mxu0 %v6598
        %v6600 = vand.u32 %v5888, 4294901760
        %6601 = vmatpush.msra.mxu0 %v6600
        %v6602 = vand.u32 %v5884, 4294901760
        %6603 = vmatpush.msra.mxu0 %v6602
        %v6604 = vand.u32 %v5880, 4294901760
        %6605 = vmatpush.msra.mxu0 %v6604
        %v6606 = vand.u32 %v5876, 4294901760
        %6607 = vmatpush.msra.mxu0 %v6606
        %v6608 = vand.u32 %v5872, 4294901760
        %6609 = vmatpush.msra.mxu0 %v6608
        %v6610 = vand.u32 %v5868, 4294901760
        %6611 = vmatpush.msra.mxu0 %v6610
        %v6612 = vand.u32 %v5864, 4294901760
        %6613 = vmatpush.msra.mxu0 %v6612
        %v6614 = vand.u32 %v5862, 4294901760
        %6615 = vmatmul.f32.gmra.mxu0 %v6614
        %v6616 = vpop.f32.mrf.mxu0
        %v6617 = vadd.f32 %v6580, %v6616
        %6618 = vdwg.mxu0
        %v6619 = vand.u32 %v5925, 4294901760
        %6620 = vmatpush.msra.mxu0 %v6619
        %v6621 = vand.u32 %v5921, 4294901760
        %6622 = vmatpush.msra.mxu0 %v6621
        %v6623 = vand.u32 %v5917, 4294901760
        %6624 = vmatpush.msra.mxu0 %v6623
        %v6625 = vand.u32 %v5913, 4294901760
        %6626 = vmatpush.msra.mxu0 %v6625
        %v6627 = vand.u32 %v5909, 4294901760
        %6628 = vmatpush.msra.mxu0 %v6627
        %v6629 = vand.u32 %v5905, 4294901760
        %6630 = vmatpush.msra.mxu0 %v6629
        %v6631 = vand.u32 %v5901, 4294901760
        %6632 = vmatpush.msra.mxu0 %v6631
        %v6633 = vand.u32 %v5897, 4294901760
        %6634 = vmatpush.msra.mxu0 %v6633
        %v6635 = vand.u32 %v5893, 4294901760
        %6636 = vmatpush.msra.mxu0 %v6635
        %v6637 = vand.u32 %v5889, 4294901760
        %6638 = vmatpush.msra.mxu0 %v6637
        %v6639 = vand.u32 %v5885, 4294901760
        %6640 = vmatpush.msra.mxu0 %v6639
        %v6641 = vand.u32 %v5881, 4294901760
        %6642 = vmatpush.msra.mxu0 %v6641
        %v6643 = vand.u32 %v5877, 4294901760
        %6644 = vmatpush.msra.mxu0 %v6643
        %v6645 = vand.u32 %v5873, 4294901760
        %6646 = vmatpush.msra.mxu0 %v6645
        %v6647 = vand.u32 %v5869, 4294901760
        %6648 = vmatpush.msra.mxu0 %v6647
        %v6649 = vand.u32 %v5865, 4294901760
        %6650 = vmatpush.msra.mxu0 %v6649
        %v6651 = vand.u32 %v5862, 4294901760
        %v6652 = vsub.f32 %v5862, %v6651
        %v6653 = vand.u32 %v6652, 4294901760
        %v6654 = vsub.f32 %v6652, %v6653
        %v6655 = vand.u32 %v6654, 4294901760
        %6656 = vmatmul.f32.gmra.mxu0 %v6655
        %v6657 = vpop.f32.mrf.mxu0
        %v6658 = vadd.f32 %v5931, %v6657
        %6659 = vdwg.mxu0
        %v6660 = vand.u32 %v5925, 4294901760
        %v6661 = vsub.f32 %v5925, %v6660
        %v6662 = vand.u32 %v6661, 4294901760
        %v6663 = vsub.f32 %v6661, %v6662
        %v6664 = vand.u32 %v6663, 4294901760
        %6665 = vmatpush.msra.mxu0 %v6664
        %v6666 = vand.u32 %v5921, 4294901760
        %v6667 = vsub.f32 %v5921, %v6666
        %v6668 = vand.u32 %v6667, 4294901760
        %v6669 = vsub.f32 %v6667, %v6668
        %v6670 = vand.u32 %v6669, 4294901760
        %6671 = vmatpush.msra.mxu0 %v6670
        %v6672 = vand.u32 %v5917, 4294901760
        %v6673 = vsub.f32 %v5917, %v6672
        %v6674 = vand.u32 %v6673, 4294901760
        %v6675 = vsub.f32 %v6673, %v6674
        %v6676 = vand.u32 %v6675, 4294901760
        %6677 = vmatpush.msra.mxu0 %v6676
        %v6678 = vand.u32 %v5913, 4294901760
        %v6679 = vsub.f32 %v5913, %v6678
        %v6680 = vand.u32 %v6679, 4294901760
        %v6681 = vsub.f32 %v6679, %v6680
        %v6682 = vand.u32 %v6681, 4294901760
        %6683 = vmatpush.msra.mxu0 %v6682
        %v6684 = vand.u32 %v5909, 4294901760
        %v6685 = vsub.f32 %v5909, %v6684
        %v6686 = vand.u32 %v6685, 4294901760
        %v6687 = vsub.f32 %v6685, %v6686
        %v6688 = vand.u32 %v6687, 4294901760
        %6689 = vmatpush.msra.mxu0 %v6688
        %v6690 = vand.u32 %v5905, 4294901760
        %v6691 = vsub.f32 %v5905, %v6690
        %v6692 = vand.u32 %v6691, 4294901760
        %v6693 = vsub.f32 %v6691, %v6692
        %v6694 = vand.u32 %v6693, 4294901760
        %6695 = vmatpush.msra.mxu0 %v6694
        %v6696 = vand.u32 %v5901, 4294901760
        %v6697 = vsub.f32 %v5901, %v6696
        %v6698 = vand.u32 %v6697, 4294901760
        %v6699 = vsub.f32 %v6697, %v6698
        %v6700 = vand.u32 %v6699, 4294901760
        %6701 = vmatpush.msra.mxu0 %v6700
        %v6702 = vand.u32 %v5897, 4294901760
        %v6703 = vsub.f32 %v5897, %v6702
        %v6704 = vand.u32 %v6703, 4294901760
        %v6705 = vsub.f32 %v6703, %v6704
        %v6706 = vand.u32 %v6705, 4294901760
        %6707 = vmatpush.msra.mxu0 %v6706
        %v6708 = vand.u32 %v5893, 4294901760
        %v6709 = vsub.f32 %v5893, %v6708
        %v6710 = vand.u32 %v6709, 4294901760
        %v6711 = vsub.f32 %v6709, %v6710
        %v6712 = vand.u32 %v6711, 4294901760
        %6713 = vmatpush.msra.mxu0 %v6712
        %v6714 = vand.u32 %v5889, 4294901760
        %v6715 = vsub.f32 %v5889, %v6714
        %v6716 = vand.u32 %v6715, 4294901760
        %v6717 = vsub.f32 %v6715, %v6716
        %v6718 = vand.u32 %v6717, 4294901760
        %6719 = vmatpush.msra.mxu0 %v6718
        %v6720 = vand.u32 %v5885, 4294901760
        %v6721 = vsub.f32 %v5885, %v6720
        %v6722 = vand.u32 %v6721, 4294901760
        %v6723 = vsub.f32 %v6721, %v6722
        %v6724 = vand.u32 %v6723, 4294901760
        %6725 = vmatpush.msra.mxu0 %v6724
        %v6726 = vand.u32 %v5881, 4294901760
        %v6727 = vsub.f32 %v5881, %v6726
        %v6728 = vand.u32 %v6727, 4294901760
        %v6729 = vsub.f32 %v6727, %v6728
        %v6730 = vand.u32 %v6729, 4294901760
        %6731 = vmatpush.msra.mxu0 %v6730
        %v6732 = vand.u32 %v5877, 4294901760
        %v6733 = vsub.f32 %v5877, %v6732
        %v6734 = vand.u32 %v6733, 4294901760
        %v6735 = vsub.f32 %v6733, %v6734
        %v6736 = vand.u32 %v6735, 4294901760
        %6737 = vmatpush.msra.mxu0 %v6736
        %v6738 = vand.u32 %v5873, 4294901760
        %v6739 = vsub.f32 %v5873, %v6738
        %v6740 = vand.u32 %v6739, 4294901760
        %v6741 = vsub.f32 %v6739, %v6740
        %v6742 = vand.u32 %v6741, 4294901760
        %6743 = vmatpush.msra.mxu0 %v6742
        %v6744 = vand.u32 %v5869, 4294901760
        %v6745 = vsub.f32 %v5869, %v6744
        %v6746 = vand.u32 %v6745, 4294901760
        %v6747 = vsub.f32 %v6745, %v6746
        %v6748 = vand.u32 %v6747, 4294901760
        %6749 = vmatpush.msra.mxu0 %v6748
        %v6750 = vand.u32 %v5865, 4294901760
        %v6751 = vsub.f32 %v5865, %v6750
        %v6752 = vand.u32 %v6751, 4294901760
        %v6753 = vsub.f32 %v6751, %v6752
        %v6754 = vand.u32 %v6753, 4294901760
        %6755 = vmatpush.msra.mxu0 %v6754
        %v6756 = vand.u32 %v5862, 4294901760
        %6757 = vmatmul.f32.gmra.mxu0 %v6756
        %v6758 = vpop.f32.mrf.mxu0
        %v6759 = vadd.f32 %v6658, %v6758
        %6760 = vdwg.mxu0
        %v6761 = vand.u32 %v5925, 4294901760
        %v6762 = vsub.f32 %v5925, %v6761
        %6763 = vmatpush.msra.mxu0 %v6762
        %v6764 = vand.u32 %v5921, 4294901760
        %v6765 = vsub.f32 %v5921, %v6764
        %6766 = vmatpush.msra.mxu0 %v6765
        %v6767 = vand.u32 %v5917, 4294901760
        %v6768 = vsub.f32 %v5917, %v6767
        %6769 = vmatpush.msra.mxu0 %v6768
        %v6770 = vand.u32 %v5913, 4294901760
        %v6771 = vsub.f32 %v5913, %v6770
        %6772 = vmatpush.msra.mxu0 %v6771
        %v6773 = vand.u32 %v5909, 4294901760
        %v6774 = vsub.f32 %v5909, %v6773
        %6775 = vmatpush.msra.mxu0 %v6774
        %v6776 = vand.u32 %v5905, 4294901760
        %v6777 = vsub.f32 %v5905, %v6776
        %6778 = vmatpush.msra.mxu0 %v6777
        %v6779 = vand.u32 %v5901, 4294901760
        %v6780 = vsub.f32 %v5901, %v6779
        %6781 = vmatpush.msra.mxu0 %v6780
        %v6782 = vand.u32 %v5897, 4294901760
        %v6783 = vsub.f32 %v5897, %v6782
        %6784 = vmatpush.msra.mxu0 %v6783
        %v6785 = vand.u32 %v5893, 4294901760
        %v6786 = vsub.f32 %v5893, %v6785
        %6787 = vmatpush.msra.mxu0 %v6786
        %v6788 = vand.u32 %v5889, 4294901760
        %v6789 = vsub.f32 %v5889, %v6788
        %6790 = vmatpush.msra.mxu0 %v6789
        %v6791 = vand.u32 %v5885, 4294901760
        %v6792 = vsub.f32 %v5885, %v6791
        %6793 = vmatpush.msra.mxu0 %v6792
        %v6794 = vand.u32 %v5881, 4294901760
        %v6795 = vsub.f32 %v5881, %v6794
        %6796 = vmatpush.msra.mxu0 %v6795
        %v6797 = vand.u32 %v5877, 4294901760
        %v6798 = vsub.f32 %v5877, %v6797
        %6799 = vmatpush.msra.mxu0 %v6798
        %v6800 = vand.u32 %v5873, 4294901760
        %v6801 = vsub.f32 %v5873, %v6800
        %6802 = vmatpush.msra.mxu0 %v6801
        %v6803 = vand.u32 %v5869, 4294901760
        %v6804 = vsub.f32 %v5869, %v6803
        %6805 = vmatpush.msra.mxu0 %v6804
        %v6806 = vand.u32 %v5865, 4294901760
        %v6807 = vsub.f32 %v5865, %v6806
        %6808 = vmatpush.msra.mxu0 %v6807
        %v6809 = vand.u32 %v5862, 4294901760
        %v6810 = vsub.f32 %v5862, %v6809
        %6811 = vmatmul.f32.gmra.mxu0 %v6810
        %v6812 = vpop.f32.mrf.mxu0
        %v6813 = vadd.f32 %v6759, %v6812
        %6814 = vdwg.mxu0
        %v6815 = vand.u32 %v5925, 4294901760
        %6816 = vmatpush.msra.mxu0 %v6815
        %v6817 = vand.u32 %v5921, 4294901760
        %6818 = vmatpush.msra.mxu0 %v6817
        %v6819 = vand.u32 %v5917, 4294901760
        %6820 = vmatpush.msra.mxu0 %v6819
        %v6821 = vand.u32 %v5913, 4294901760
        %6822 = vmatpush.msra.mxu0 %v6821
        %v6823 = vand.u32 %v5909, 4294901760
        %6824 = vmatpush.msra.mxu0 %v6823
        %v6825 = vand.u32 %v5905, 4294901760
        %6826 = vmatpush.msra.mxu0 %v6825
        %v6827 = vand.u32 %v5901, 4294901760
        %6828 = vmatpush.msra.mxu0 %v6827
        %v6829 = vand.u32 %v5897, 4294901760
        %6830 = vmatpush.msra.mxu0 %v6829
        %v6831 = vand.u32 %v5893, 4294901760
        %6832 = vmatpush.msra.mxu0 %v6831
        %v6833 = vand.u32 %v5889, 4294901760
        %6834 = vmatpush.msra.mxu0 %v6833
        %v6835 = vand.u32 %v5885, 4294901760
        %6836 = vmatpush.msra.mxu0 %v6835
        %v6837 = vand.u32 %v5881, 4294901760
        %6838 = vmatpush.msra.mxu0 %v6837
        %v6839 = vand.u32 %v5877, 4294901760
        %6840 = vmatpush.msra.mxu0 %v6839
        %v6841 = vand.u32 %v5873, 4294901760
        %6842 = vmatpush.msra.mxu0 %v6841
        %v6843 = vand.u32 %v5869, 4294901760
        %6844 = vmatpush.msra.mxu0 %v6843
        %v6845 = vand.u32 %v5865, 4294901760
        %6846 = vmatpush.msra.mxu0 %v6845
        %v6847 = vand.u32 %v5862, 4294901760
        %v6848 = vsub.f32 %v5862, %v6847
        %v6849 = vand.u32 %v6848, 4294901760
        %6850 = vmatmul.f32.gmra.mxu0 %v6849
        %v6851 = vpop.f32.mrf.mxu0
        %v6852 = vadd.f32 %v6813, %v6851
        %6853 = vdwg.mxu0
        %v6854 = vand.u32 %v5925, 4294901760
        %v6855 = vsub.f32 %v5925, %v6854
        %v6856 = vand.u32 %v6855, 4294901760
        %6857 = vmatpush.msra.mxu0 %v6856
        %v6858 = vand.u32 %v5921, 4294901760
        %v6859 = vsub.f32 %v5921, %v6858
        %v6860 = vand.u32 %v6859, 4294901760
        %6861 = vmatpush.msra.mxu0 %v6860
        %v6862 = vand.u32 %v5917, 4294901760
        %v6863 = vsub.f32 %v5917, %v6862
        %v6864 = vand.u32 %v6863, 4294901760
        %6865 = vmatpush.msra.mxu0 %v6864
        %v6866 = vand.u32 %v5913, 4294901760
        %v6867 = vsub.f32 %v5913, %v6866
        %v6868 = vand.u32 %v6867, 4294901760
        %6869 = vmatpush.msra.mxu0 %v6868
        %v6870 = vand.u32 %v5909, 4294901760
        %v6871 = vsub.f32 %v5909, %v6870
        %v6872 = vand.u32 %v6871, 4294901760
        %6873 = vmatpush.msra.mxu0 %v6872
        %v6874 = vand.u32 %v5905, 4294901760
        %v6875 = vsub.f32 %v5905, %v6874
        %v6876 = vand.u32 %v6875, 4294901760
        %6877 = vmatpush.msra.mxu0 %v6876
        %v6878 = vand.u32 %v5901, 4294901760
        %v6879 = vsub.f32 %v5901, %v6878
        %v6880 = vand.u32 %v6879, 4294901760
        %6881 = vmatpush.msra.mxu0 %v6880
        %v6882 = vand.u32 %v5897, 4294901760
        %v6883 = vsub.f32 %v5897, %v6882
        %v6884 = vand.u32 %v6883, 4294901760
        %6885 = vmatpush.msra.mxu0 %v6884
        %v6886 = vand.u32 %v5893, 4294901760
        %v6887 = vsub.f32 %v5893, %v6886
        %v6888 = vand.u32 %v6887, 4294901760
        %6889 = vmatpush.msra.mxu0 %v6888
        %v6890 = vand.u32 %v5889, 4294901760
        %v6891 = vsub.f32 %v5889, %v6890
        %v6892 = vand.u32 %v6891, 4294901760
        %6893 = vmatpush.msra.mxu0 %v6892
        %v6894 = vand.u32 %v5885, 4294901760
        %v6895 = vsub.f32 %v5885, %v6894
        %v6896 = vand.u32 %v6895, 4294901760
        %6897 = vmatpush.msra.mxu0 %v6896
        %v6898 = vand.u32 %v5881, 4294901760
        %v6899 = vsub.f32 %v5881, %v6898
        %v6900 = vand.u32 %v6899, 4294901760
        %6901 = vmatpush.msra.mxu0 %v6900
        %v6902 = vand.u32 %v5877, 4294901760
        %v6903 = vsub.f32 %v5877, %v6902
        %v6904 = vand.u32 %v6903, 4294901760
        %6905 = vmatpush.msra.mxu0 %v6904
        %v6906 = vand.u32 %v5873, 4294901760
        %v6907 = vsub.f32 %v5873, %v6906
        %v6908 = vand.u32 %v6907, 4294901760
        %6909 = vmatpush.msra.mxu0 %v6908
        %v6910 = vand.u32 %v5869, 4294901760
        %v6911 = vsub.f32 %v5869, %v6910
        %v6912 = vand.u32 %v6911, 4294901760
        %6913 = vmatpush.msra.mxu0 %v6912
        %v6914 = vand.u32 %v5865, 4294901760
        %v6915 = vsub.f32 %v5865, %v6914
        %v6916 = vand.u32 %v6915, 4294901760
        %6917 = vmatpush.msra.mxu0 %v6916
        %v6918 = vand.u32 %v5862, 4294901760
        %6919 = vmatmul.f32.gmra.mxu0 %v6918
        %v6920 = vpop.f32.mrf.mxu0
        %v6921 = vadd.f32 %v6852, %v6920
        %6922 = vdwg.mxu0
        %v6923 = vand.u32 %v5925, 4294901760
        %6924 = vmatpush.msra.mxu0 %v6923
        %v6925 = vand.u32 %v5921, 4294901760
        %6926 = vmatpush.msra.mxu0 %v6925
        %v6927 = vand.u32 %v5917, 4294901760
        %6928 = vmatpush.msra.mxu0 %v6927
        %v6929 = vand.u32 %v5913, 4294901760
        %6930 = vmatpush.msra.mxu0 %v6929
        %v6931 = vand.u32 %v5909, 4294901760
        %6932 = vmatpush.msra.mxu0 %v6931
        %v6933 = vand.u32 %v5905, 4294901760
        %6934 = vmatpush.msra.mxu0 %v6933
        %v6935 = vand.u32 %v5901, 4294901760
        %6936 = vmatpush.msra.mxu0 %v6935
        %v6937 = vand.u32 %v5897, 4294901760
        %6938 = vmatpush.msra.mxu0 %v6937
        %v6939 = vand.u32 %v5893, 4294901760
        %6940 = vmatpush.msra.mxu0 %v6939
        %v6941 = vand.u32 %v5889, 4294901760
        %6942 = vmatpush.msra.mxu0 %v6941
        %v6943 = vand.u32 %v5885, 4294901760
        %6944 = vmatpush.msra.mxu0 %v6943
        %v6945 = vand.u32 %v5881, 4294901760
        %6946 = vmatpush.msra.mxu0 %v6945
        %v6947 = vand.u32 %v5877, 4294901760
        %6948 = vmatpush.msra.mxu0 %v6947
        %v6949 = vand.u32 %v5873, 4294901760
        %6950 = vmatpush.msra.mxu0 %v6949
        %v6951 = vand.u32 %v5869, 4294901760
        %6952 = vmatpush.msra.mxu0 %v6951
        %v6953 = vand.u32 %v5865, 4294901760
        %6954 = vmatpush.msra.mxu0 %v6953
        %v6955 = vand.u32 %v5862, 4294901760
        %6956 = vmatmul.f32.gmra.mxu0 %v6955
        %v6957 = vpop.f32.mrf.mxu0
        %v6958 = vadd.f32 %v6921, %v6957
        %6959 = vdwg.mxu0
        %v6960 = vand.u32 %v5926, 4294901760
        %6961 = vmatpush.msra.mxu0 %v6960
        %v6962 = vand.u32 %v5922, 4294901760
        %6963 = vmatpush.msra.mxu0 %v6962
        %v6964 = vand.u32 %v5918, 4294901760
        %6965 = vmatpush.msra.mxu0 %v6964
        %v6966 = vand.u32 %v5914, 4294901760
        %6967 = vmatpush.msra.mxu0 %v6966
        %v6968 = vand.u32 %v5910, 4294901760
        %6969 = vmatpush.msra.mxu0 %v6968
        %v6970 = vand.u32 %v5906, 4294901760
        %6971 = vmatpush.msra.mxu0 %v6970
        %v6972 = vand.u32 %v5902, 4294901760
        %6973 = vmatpush.msra.mxu0 %v6972
        %v6974 = vand.u32 %v5898, 4294901760
        %6975 = vmatpush.msra.mxu0 %v6974
        %v6976 = vand.u32 %v5894, 4294901760
        %6977 = vmatpush.msra.mxu0 %v6976
        %v6978 = vand.u32 %v5890, 4294901760
        %6979 = vmatpush.msra.mxu0 %v6978
        %v6980 = vand.u32 %v5886, 4294901760
        %6981 = vmatpush.msra.mxu0 %v6980
        %v6982 = vand.u32 %v5882, 4294901760
        %6983 = vmatpush.msra.mxu0 %v6982
        %v6984 = vand.u32 %v5878, 4294901760
        %6985 = vmatpush.msra.mxu0 %v6984
        %v6986 = vand.u32 %v5874, 4294901760
        %6987 = vmatpush.msra.mxu0 %v6986
        %v6988 = vand.u32 %v5870, 4294901760
        %6989 = vmatpush.msra.mxu0 %v6988
        %v6990 = vand.u32 %v5866, 4294901760
        %6991 = vmatpush.msra.mxu0 %v6990
        %v6992 = vand.u32 %v5862, 4294901760
        %v6993 = vsub.f32 %v5862, %v6992
        %v6994 = vand.u32 %v6993, 4294901760
        %v6995 = vsub.f32 %v6993, %v6994
        %v6996 = vand.u32 %v6995, 4294901760
        %6997 = vmatmul.f32.gmra.mxu0 %v6996
        %v6998 = vpop.f32.mrf.mxu0
        %v6999 = vadd.f32 %v5932, %v6998
        %7000 = vdwg.mxu0
        %v7001 = vand.u32 %v5926, 4294901760
        %v7002 = vsub.f32 %v5926, %v7001
        %v7003 = vand.u32 %v7002, 4294901760
        %v7004 = vsub.f32 %v7002, %v7003
        %v7005 = vand.u32 %v7004, 4294901760
        %7006 = vmatpush.msra.mxu0 %v7005
        %v7007 = vand.u32 %v5922, 4294901760
        %v7008 = vsub.f32 %v5922, %v7007
        %v7009 = vand.u32 %v7008, 4294901760
        %v7010 = vsub.f32 %v7008, %v7009
        %v7011 = vand.u32 %v7010, 4294901760
        %7012 = vmatpush.msra.mxu0 %v7011
        %v7013 = vand.u32 %v5918, 4294901760
        %v7014 = vsub.f32 %v5918, %v7013
        %v7015 = vand.u32 %v7014, 4294901760
        %v7016 = vsub.f32 %v7014, %v7015
        %v7017 = vand.u32 %v7016, 4294901760
        %7018 = vmatpush.msra.mxu0 %v7017
        %v7019 = vand.u32 %v5914, 4294901760
        %v7020 = vsub.f32 %v5914, %v7019
        %v7021 = vand.u32 %v7020, 4294901760
        %v7022 = vsub.f32 %v7020, %v7021
        %v7023 = vand.u32 %v7022, 4294901760
        %7024 = vmatpush.msra.mxu0 %v7023
        %v7025 = vand.u32 %v5910, 4294901760
        %v7026 = vsub.f32 %v5910, %v7025
        %v7027 = vand.u32 %v7026, 4294901760
        %v7028 = vsub.f32 %v7026, %v7027
        %v7029 = vand.u32 %v7028, 4294901760
        %7030 = vmatpush.msra.mxu0 %v7029
        %v7031 = vand.u32 %v5906, 4294901760
        %v7032 = vsub.f32 %v5906, %v7031
        %v7033 = vand.u32 %v7032, 4294901760
        %v7034 = vsub.f32 %v7032, %v7033
        %v7035 = vand.u32 %v7034, 4294901760
        %7036 = vmatpush.msra.mxu0 %v7035
        %v7037 = vand.u32 %v5902, 4294901760
        %v7038 = vsub.f32 %v5902, %v7037
        %v7039 = vand.u32 %v7038, 4294901760
        %v7040 = vsub.f32 %v7038, %v7039
        %v7041 = vand.u32 %v7040, 4294901760
        %7042 = vmatpush.msra.mxu0 %v7041
        %v7043 = vand.u32 %v5898, 4294901760
        %v7044 = vsub.f32 %v5898, %v7043
        %v7045 = vand.u32 %v7044, 4294901760
        %v7046 = vsub.f32 %v7044, %v7045
        %v7047 = vand.u32 %v7046, 4294901760
        %7048 = vmatpush.msra.mxu0 %v7047
        %v7049 = vand.u32 %v5894, 4294901760
        %v7050 = vsub.f32 %v5894, %v7049
        %v7051 = vand.u32 %v7050, 4294901760
        %v7052 = vsub.f32 %v7050, %v7051
        %v7053 = vand.u32 %v7052, 4294901760
        %7054 = vmatpush.msra.mxu0 %v7053
        %v7055 = vand.u32 %v5890, 4294901760
        %v7056 = vsub.f32 %v5890, %v7055
        %v7057 = vand.u32 %v7056, 4294901760
        %v7058 = vsub.f32 %v7056, %v7057
        %v7059 = vand.u32 %v7058, 4294901760
        %7060 = vmatpush.msra.mxu0 %v7059
        %v7061 = vand.u32 %v5886, 4294901760
        %v7062 = vsub.f32 %v5886, %v7061
        %v7063 = vand.u32 %v7062, 4294901760
        %v7064 = vsub.f32 %v7062, %v7063
        %v7065 = vand.u32 %v7064, 4294901760
        %7066 = vmatpush.msra.mxu0 %v7065
        %v7067 = vand.u32 %v5882, 4294901760
        %v7068 = vsub.f32 %v5882, %v7067
        %v7069 = vand.u32 %v7068, 4294901760
        %v7070 = vsub.f32 %v7068, %v7069
        %v7071 = vand.u32 %v7070, 4294901760
        %7072 = vmatpush.msra.mxu0 %v7071
        %v7073 = vand.u32 %v5878, 4294901760
        %v7074 = vsub.f32 %v5878, %v7073
        %v7075 = vand.u32 %v7074, 4294901760
        %v7076 = vsub.f32 %v7074, %v7075
        %v7077 = vand.u32 %v7076, 4294901760
        %7078 = vmatpush.msra.mxu0 %v7077
        %v7079 = vand.u32 %v5874, 4294901760
        %v7080 = vsub.f32 %v5874, %v7079
        %v7081 = vand.u32 %v7080, 4294901760
        %v7082 = vsub.f32 %v7080, %v7081
        %v7083 = vand.u32 %v7082, 4294901760
        %7084 = vmatpush.msra.mxu0 %v7083
        %v7085 = vand.u32 %v5870, 4294901760
        %v7086 = vsub.f32 %v5870, %v7085
        %v7087 = vand.u32 %v7086, 4294901760
        %v7088 = vsub.f32 %v7086, %v7087
        %v7089 = vand.u32 %v7088, 4294901760
        %7090 = vmatpush.msra.mxu0 %v7089
        %v7091 = vand.u32 %v5866, 4294901760
        %v7092 = vsub.f32 %v5866, %v7091
        %v7093 = vand.u32 %v7092, 4294901760
        %v7094 = vsub.f32 %v7092, %v7093
        %v7095 = vand.u32 %v7094, 4294901760
        %7096 = vmatpush.msra.mxu0 %v7095
        %v7097 = vand.u32 %v5862, 4294901760
        %7098 = vmatmul.f32.gmra.mxu0 %v7097
        %v7099 = vpop.f32.mrf.mxu0
        %v7100 = vadd.f32 %v6999, %v7099
        %7101 = vdwg.mxu0
        %v7102 = vand.u32 %v5926, 4294901760
        %v7103 = vsub.f32 %v5926, %v7102
        %7104 = vmatpush.msra.mxu0 %v7103
        %v7105 = vand.u32 %v5922, 4294901760
        %v7106 = vsub.f32 %v5922, %v7105
        %7107 = vmatpush.msra.mxu0 %v7106
        %v7108 = vand.u32 %v5918, 4294901760
        %v7109 = vsub.f32 %v5918, %v7108
        %7110 = vmatpush.msra.mxu0 %v7109
        %v7111 = vand.u32 %v5914, 4294901760
        %v7112 = vsub.f32 %v5914, %v7111
        %7113 = vmatpush.msra.mxu0 %v7112
        %v7114 = vand.u32 %v5910, 4294901760
        %v7115 = vsub.f32 %v5910, %v7114
        %7116 = vmatpush.msra.mxu0 %v7115
        %v7117 = vand.u32 %v5906, 4294901760
        %v7118 = vsub.f32 %v5906, %v7117
        %7119 = vmatpush.msra.mxu0 %v7118
        %v7120 = vand.u32 %v5902, 4294901760
        %v7121 = vsub.f32 %v5902, %v7120
        %7122 = vmatpush.msra.mxu0 %v7121
        %v7123 = vand.u32 %v5898, 4294901760
        %v7124 = vsub.f32 %v5898, %v7123
        %7125 = vmatpush.msra.mxu0 %v7124
        %v7126 = vand.u32 %v5894, 4294901760
        %v7127 = vsub.f32 %v5894, %v7126
        %7128 = vmatpush.msra.mxu0 %v7127
        %v7129 = vand.u32 %v5890, 4294901760
        %v7130 = vsub.f32 %v5890, %v7129
        %7131 = vmatpush.msra.mxu0 %v7130
        %v7132 = vand.u32 %v5886, 4294901760
        %v7133 = vsub.f32 %v5886, %v7132
        %7134 = vmatpush.msra.mxu0 %v7133
        %v7135 = vand.u32 %v5882, 4294901760
        %v7136 = vsub.f32 %v5882, %v7135
        %7137 = vmatpush.msra.mxu0 %v7136
        %v7138 = vand.u32 %v5878, 4294901760
        %v7139 = vsub.f32 %v5878, %v7138
        %7140 = vmatpush.msra.mxu0 %v7139
        %v7141 = vand.u32 %v5874, 4294901760
        %v7142 = vsub.f32 %v5874, %v7141
        %7143 = vmatpush.msra.mxu0 %v7142
        %v7144 = vand.u32 %v5870, 4294901760
        %v7145 = vsub.f32 %v5870, %v7144
        %7146 = vmatpush.msra.mxu0 %v7145
        %v7147 = vand.u32 %v5866, 4294901760
        %v7148 = vsub.f32 %v5866, %v7147
        %7149 = vmatpush.msra.mxu0 %v7148
        %v7150 = vand.u32 %v5862, 4294901760
        %v7151 = vsub.f32 %v5862, %v7150
        %7152 = vmatmul.f32.gmra.mxu0 %v7151
        %v7153 = vpop.f32.mrf.mxu0
        %v7154 = vadd.f32 %v7100, %v7153
        %7155 = vdwg.mxu0
        %v7156 = vand.u32 %v5926, 4294901760
        %7157 = vmatpush.msra.mxu0 %v7156
        %v7158 = vand.u32 %v5922, 4294901760
        %7159 = vmatpush.msra.mxu0 %v7158
        %v7160 = vand.u32 %v5918, 4294901760
        %7161 = vmatpush.msra.mxu0 %v7160
        %v7162 = vand.u32 %v5914, 4294901760
        %7163 = vmatpush.msra.mxu0 %v7162
        %v7164 = vand.u32 %v5910, 4294901760
        %7165 = vmatpush.msra.mxu0 %v7164
        %v7166 = vand.u32 %v5906, 4294901760
        %7167 = vmatpush.msra.mxu0 %v7166
        %v7168 = vand.u32 %v5902, 4294901760
        %7169 = vmatpush.msra.mxu0 %v7168
        %v7170 = vand.u32 %v5898, 4294901760
        %7171 = vmatpush.msra.mxu0 %v7170
        %v7172 = vand.u32 %v5894, 4294901760
        %7173 = vmatpush.msra.mxu0 %v7172
        %v7174 = vand.u32 %v5890, 4294901760
        %7175 = vmatpush.msra.mxu0 %v7174
        %v7176 = vand.u32 %v5886, 4294901760
        %7177 = vmatpush.msra.mxu0 %v7176
        %v7178 = vand.u32 %v5882, 4294901760
        %7179 = vmatpush.msra.mxu0 %v7178
        %v7180 = vand.u32 %v5878, 4294901760
        %7181 = vmatpush.msra.mxu0 %v7180
        %v7182 = vand.u32 %v5874, 4294901760
        %7183 = vmatpush.msra.mxu0 %v7182
        %v7184 = vand.u32 %v5870, 4294901760
        %7185 = vmatpush.msra.mxu0 %v7184
        %v7186 = vand.u32 %v5866, 4294901760
        %7187 = vmatpush.msra.mxu0 %v7186
        %v7188 = vand.u32 %v5862, 4294901760
        %v7189 = vsub.f32 %v5862, %v7188
        %v7190 = vand.u32 %v7189, 4294901760
        %7191 = vmatmul.f32.gmra.mxu0 %v7190
        %v7192 = vpop.f32.mrf.mxu0
        %v7193 = vadd.f32 %v7154, %v7192
        %7194 = vdwg.mxu0
        %v7195 = vand.u32 %v5926, 4294901760
        %v7196 = vsub.f32 %v5926, %v7195
        %v7197 = vand.u32 %v7196, 4294901760
        %7198 = vmatpush.msra.mxu0 %v7197
        %v7199 = vand.u32 %v5922, 4294901760
        %v7200 = vsub.f32 %v5922, %v7199
        %v7201 = vand.u32 %v7200, 4294901760
        %7202 = vmatpush.msra.mxu0 %v7201
        %v7203 = vand.u32 %v5918, 4294901760
        %v7204 = vsub.f32 %v5918, %v7203
        %v7205 = vand.u32 %v7204, 4294901760
        %7206 = vmatpush.msra.mxu0 %v7205
        %v7207 = vand.u32 %v5914, 4294901760
        %v7208 = vsub.f32 %v5914, %v7207
        %v7209 = vand.u32 %v7208, 4294901760
        %7210 = vmatpush.msra.mxu0 %v7209
        %v7211 = vand.u32 %v5910, 4294901760
        %v7212 = vsub.f32 %v5910, %v7211
        %v7213 = vand.u32 %v7212, 4294901760
        %7214 = vmatpush.msra.mxu0 %v7213
        %v7215 = vand.u32 %v5906, 4294901760
        %v7216 = vsub.f32 %v5906, %v7215
        %v7217 = vand.u32 %v7216, 4294901760
        %7218 = vmatpush.msra.mxu0 %v7217
        %v7219 = vand.u32 %v5902, 4294901760
        %v7220 = vsub.f32 %v5902, %v7219
        %v7221 = vand.u32 %v7220, 4294901760
        %7222 = vmatpush.msra.mxu0 %v7221
        %v7223 = vand.u32 %v5898, 4294901760
        %v7224 = vsub.f32 %v5898, %v7223
        %v7225 = vand.u32 %v7224, 4294901760
        %7226 = vmatpush.msra.mxu0 %v7225
        %v7227 = vand.u32 %v5894, 4294901760
        %v7228 = vsub.f32 %v5894, %v7227
        %v7229 = vand.u32 %v7228, 4294901760
        %7230 = vmatpush.msra.mxu0 %v7229
        %v7231 = vand.u32 %v5890, 4294901760
        %v7232 = vsub.f32 %v5890, %v7231
        %v7233 = vand.u32 %v7232, 4294901760
        %7234 = vmatpush.msra.mxu0 %v7233
        %v7235 = vand.u32 %v5886, 4294901760
        %v7236 = vsub.f32 %v5886, %v7235
        %v7237 = vand.u32 %v7236, 4294901760
        %7238 = vmatpush.msra.mxu0 %v7237
        %v7239 = vand.u32 %v5882, 4294901760
        %v7240 = vsub.f32 %v5882, %v7239
        %v7241 = vand.u32 %v7240, 4294901760
        %7242 = vmatpush.msra.mxu0 %v7241
        %v7243 = vand.u32 %v5878, 4294901760
        %v7244 = vsub.f32 %v5878, %v7243
        %v7245 = vand.u32 %v7244, 4294901760
        %7246 = vmatpush.msra.mxu0 %v7245
        %v7247 = vand.u32 %v5874, 4294901760
        %v7248 = vsub.f32 %v5874, %v7247
        %v7249 = vand.u32 %v7248, 4294901760
        %7250 = vmatpush.msra.mxu0 %v7249
        %v7251 = vand.u32 %v5870, 4294901760
        %v7252 = vsub.f32 %v5870, %v7251
        %v7253 = vand.u32 %v7252, 4294901760
        %7254 = vmatpush.msra.mxu0 %v7253
        %v7255 = vand.u32 %v5866, 4294901760
        %v7256 = vsub.f32 %v5866, %v7255
        %v7257 = vand.u32 %v7256, 4294901760
        %7258 = vmatpush.msra.mxu0 %v7257
        %v7259 = vand.u32 %v5862, 4294901760
        %7260 = vmatmul.f32.gmra.mxu0 %v7259
        %v7261 = vpop.f32.mrf.mxu0
        %v7262 = vadd.f32 %v7193, %v7261
        %7263 = vdwg.mxu0
        %v7264 = vand.u32 %v5926, 4294901760
        %7265 = vmatpush.msra.mxu0 %v7264
        %v7266 = vand.u32 %v5922, 4294901760
        %7267 = vmatpush.msra.mxu0 %v7266
        %v7268 = vand.u32 %v5918, 4294901760
        %7269 = vmatpush.msra.mxu0 %v7268
        %v7270 = vand.u32 %v5914, 4294901760
        %7271 = vmatpush.msra.mxu0 %v7270
        %v7272 = vand.u32 %v5910, 4294901760
        %7273 = vmatpush.msra.mxu0 %v7272
        %v7274 = vand.u32 %v5906, 4294901760
        %7275 = vmatpush.msra.mxu0 %v7274
        %v7276 = vand.u32 %v5902, 4294901760
        %7277 = vmatpush.msra.mxu0 %v7276
        %v7278 = vand.u32 %v5898, 4294901760
        %7279 = vmatpush.msra.mxu0 %v7278
        %v7280 = vand.u32 %v5894, 4294901760
        %7281 = vmatpush.msra.mxu0 %v7280
        %v7282 = vand.u32 %v5890, 4294901760
        %7283 = vmatpush.msra.mxu0 %v7282
        %v7284 = vand.u32 %v5886, 4294901760
        %7285 = vmatpush.msra.mxu0 %v7284
        %v7286 = vand.u32 %v5882, 4294901760
        %7287 = vmatpush.msra.mxu0 %v7286
        %v7288 = vand.u32 %v5878, 4294901760
        %7289 = vmatpush.msra.mxu0 %v7288
        %v7290 = vand.u32 %v5874, 4294901760
        %7291 = vmatpush.msra.mxu0 %v7290
        %v7292 = vand.u32 %v5870, 4294901760
        %7293 = vmatpush.msra.mxu0 %v7292
        %v7294 = vand.u32 %v5866, 4294901760
        %7295 = vmatpush.msra.mxu0 %v7294
        %v7296 = vand.u32 %v5862, 4294901760
        %7297 = vmatmul.f32.gmra.mxu0 %v7296
        %v7298 = vpop.f32.mrf.mxu0
        %v7299 = vadd.f32 %v7262, %v7298
        %7300 = vdwg.mxu0
        %v7301 = vmax.f32 %v6276, 0.0
        %v7302 = vmax.f32 %v6617, 0.0
        %v7303 = vmax.f32 %v6958, 0.0
        %v7304 = vmax.f32 %v7299, 0.0
        %v7305 = vld [vmem:[#allocation17] sm:$0xff]
        %v7306 = vld [vmem:[#allocation17 + $0x8] sm:$0xff]
        %v7307 = vld [vmem:[#allocation17 + $0x10] sm:$0xff]
        %v7308 = vld [vmem:[#allocation17 + $0x18] sm:$0xff]
        %v7309 = vld [vmem:[#allocation17 + $0x20] sm:$0xff]
        %v7310 = vld [vmem:[#allocation17 + $0x28] sm:$0xff]
        %v7311 = vld [vmem:[#allocation17 + $0x30] sm:$0xff]
        %v7312 = vld [vmem:[#allocation17 + $0x38] sm:$0xff]
        %v7313 = vld [vmem:[#allocation17 + $0x40] sm:$0xff]
        %v7314 = vld [vmem:[#allocation17 + $0x48] sm:$0xff]
        %v7315 = vld [vmem:[#allocation17 + $0x50] sm:$0xff]
        %v7316 = vld [vmem:[#allocation17 + $0x58] sm:$0xff]
        %v7317 = vld [vmem:[#allocation17 + $0x60] sm:$0xff]
        %v7318 = vld [vmem:[#allocation17 + $0x68] sm:$0xff]
        %v7319 = vld [vmem:[#allocation17 + $0x70] sm:$0xff]
        %v7320 = vld [vmem:[#allocation17 + $0x78] sm:$0xff]
        %v7321 = vld [vmem:[#allocation17 + $0x80] sm:$0xff]
        %v7322 = vld [vmem:[#allocation17 + $0x88] sm:$0xff]
        %v7323 = vld [vmem:[#allocation17 + $0x90] sm:$0xff]
        %v7324 = vld [vmem:[#allocation17 + $0x98] sm:$0xff]
        %v7325 = vld [vmem:[#allocation17 + $0xa0] sm:$0xff]
        %v7326 = vld [vmem:[#allocation17 + $0xa8] sm:$0xff]
        %v7327 = vld [vmem:[#allocation17 + $0xb0] sm:$0xff]
        %v7328 = vld [vmem:[#allocation17 + $0xb8] sm:$0xff]
        %v7329 = vld [vmem:[#allocation17 + $0xc0] sm:$0xff]
        %v7330 = vld [vmem:[#allocation17 + $0xc8] sm:$0xff]
        %v7331 = vld [vmem:[#allocation17 + $0xd0] sm:$0xff]
        %v7332 = vld [vmem:[#allocation17 + $0xd8] sm:$0xff]
        %v7333 = vld [vmem:[#allocation17 + $0xe0] sm:$0xff]
        %v7334 = vld [vmem:[#allocation17 + $0xe8] sm:$0xff]
        %v7335 = vld [vmem:[#allocation17 + $0xf0] sm:$0xff]
        %v7336 = vld [vmem:[#allocation17 + $0xf8] sm:$0xff]
        %v7337 = vld [vmem:[#allocation17 + $0x100] sm:$0xff]
        %v7338 = vld [vmem:[#allocation17 + $0x108] sm:$0xff]
        %v7339 = vld [vmem:[#allocation17 + $0x110] sm:$0xff]
        %v7340 = vld [vmem:[#allocation17 + $0x118] sm:$0xff]
        %v7341 = vld [vmem:[#allocation17 + $0x120] sm:$0xff]
        %v7342 = vld [vmem:[#allocation17 + $0x128] sm:$0xff]
        %v7343 = vld [vmem:[#allocation17 + $0x130] sm:$0xff]
        %v7344 = vld [vmem:[#allocation17 + $0x138] sm:$0xff]
        %v7345 = vld [vmem:[#allocation17 + $0x140] sm:$0xff]
        %v7346 = vld [vmem:[#allocation17 + $0x148] sm:$0xff]
        %v7347 = vld [vmem:[#allocation17 + $0x150] sm:$0xff]
        %v7348 = vld [vmem:[#allocation17 + $0x158] sm:$0xff]
        %v7349 = vld [vmem:[#allocation17 + $0x160] sm:$0xff]
        %v7350 = vld [vmem:[#allocation17 + $0x168] sm:$0xff]
        %v7351 = vld [vmem:[#allocation17 + $0x170] sm:$0xff]
        %v7352 = vld [vmem:[#allocation17 + $0x178] sm:$0xff]
        %v7353 = vld [vmem:[#allocation17 + $0x180] sm:$0xff]
        %v7354 = vld [vmem:[#allocation17 + $0x188] sm:$0xff]
        %v7355 = vld [vmem:[#allocation17 + $0x190] sm:$0xff]
        %v7356 = vld [vmem:[#allocation17 + $0x198] sm:$0xff]
        %v7357 = vld [vmem:[#allocation17 + $0x1a0] sm:$0xff]
        %v7358 = vld [vmem:[#allocation17 + $0x1a8] sm:$0xff]
        %v7359 = vld [vmem:[#allocation17 + $0x1b0] sm:$0xff]
        %v7360 = vld [vmem:[#allocation17 + $0x1b8] sm:$0xff]
        %v7361 = vld [vmem:[#allocation17 + $0x1c0] sm:$0xff]
        %v7362 = vld [vmem:[#allocation17 + $0x1c8] sm:$0xff]
        %v7363 = vld [vmem:[#allocation17 + $0x1d0] sm:$0xff]
        %v7364 = vld [vmem:[#allocation17 + $0x1d8] sm:$0xff]
        %v7365 = vld [vmem:[#allocation17 + $0x1e0] sm:$0xff]
        %v7366 = vld [vmem:[#allocation17 + $0x1e8] sm:$0xff]
        %v7367 = vld [vmem:[#allocation17 + $0x1f0] sm:$0xff]
        %v7368 = vld [vmem:[#allocation17 + $0x1f8] sm:$0xff]
        %v7369 = vld [vmem:[%s14] sm:$0x1]
        %v7371 = vperm.slane %v7369, 0
        %v7373 = vand.u32 %v7320, 4294901760
        %7374 = vmatpush.msra.mxu0 %v7373
        %v7375 = vand.u32 %v7319, 4294901760
        %7376 = vmatpush.msra.mxu0 %v7375
        %v7377 = vand.u32 %v7318, 4294901760
        %7378 = vmatpush.msra.mxu0 %v7377
        %v7379 = vand.u32 %v7317, 4294901760
        %7380 = vmatpush.msra.mxu0 %v7379
        %v7381 = vand.u32 %v7316, 4294901760
        %7382 = vmatpush.msra.mxu0 %v7381
        %v7383 = vand.u32 %v7315, 4294901760
        %7384 = vmatpush.msra.mxu0 %v7383
        %v7385 = vand.u32 %v7314, 4294901760
        %7386 = vmatpush.msra.mxu0 %v7385
        %v7387 = vand.u32 %v7313, 4294901760
        %7388 = vmatpush.msra.mxu0 %v7387
        %v7389 = vand.u32 %v7312, 4294901760
        %7390 = vmatpush.msra.mxu0 %v7389
        %v7391 = vand.u32 %v7311, 4294901760
        %7392 = vmatpush.msra.mxu0 %v7391
        %v7393 = vand.u32 %v7310, 4294901760
        %7394 = vmatpush.msra.mxu0 %v7393
        %v7395 = vand.u32 %v7309, 4294901760
        %7396 = vmatpush.msra.mxu0 %v7395
        %v7397 = vand.u32 %v7308, 4294901760
        %7398 = vmatpush.msra.mxu0 %v7397
        %v7399 = vand.u32 %v7307, 4294901760
        %7400 = vmatpush.msra.mxu0 %v7399
        %v7401 = vand.u32 %v7306, 4294901760
        %7402 = vmatpush.msra.mxu0 %v7401
        %v7403 = vand.u32 %v7305, 4294901760
        %7404 = vmatpush.msra.mxu0 %v7403
        %v7405 = vand.u32 %v7301, 4294901760
        %v7406 = vsub.f32 %v7301, %v7405
        %v7407 = vand.u32 %v7406, 4294901760
        %v7408 = vsub.f32 %v7406, %v7407
        %v7409 = vand.u32 %v7408, 4294901760
        %7410 = vmatmul.f32.gmra.mxu0 %v7409
        %v7411 = vpop.f32.mrf.mxu0
        %v7412 = vadd.f32 %v7371, %v7411
        %7413 = vdwg.mxu0
        %v7414 = vand.u32 %v7320, 4294901760
        %v7415 = vsub.f32 %v7320, %v7414
        %v7416 = vand.u32 %v7415, 4294901760
        %v7417 = vsub.f32 %v7415, %v7416
        %v7418 = vand.u32 %v7417, 4294901760
        %7419 = vmatpush.msra.mxu0 %v7418
        %v7420 = vand.u32 %v7319, 4294901760
        %v7421 = vsub.f32 %v7319, %v7420
        %v7422 = vand.u32 %v7421, 4294901760
        %v7423 = vsub.f32 %v7421, %v7422
        %v7424 = vand.u32 %v7423, 4294901760
        %7425 = vmatpush.msra.mxu0 %v7424
        %v7426 = vand.u32 %v7318, 4294901760
        %v7427 = vsub.f32 %v7318, %v7426
        %v7428 = vand.u32 %v7427, 4294901760
        %v7429 = vsub.f32 %v7427, %v7428
        %v7430 = vand.u32 %v7429, 4294901760
        %7431 = vmatpush.msra.mxu0 %v7430
        %v7432 = vand.u32 %v7317, 4294901760
        %v7433 = vsub.f32 %v7317, %v7432
        %v7434 = vand.u32 %v7433, 4294901760
        %v7435 = vsub.f32 %v7433, %v7434
        %v7436 = vand.u32 %v7435, 4294901760
        %7437 = vmatpush.msra.mxu0 %v7436
        %v7438 = vand.u32 %v7316, 4294901760
        %v7439 = vsub.f32 %v7316, %v7438
        %v7440 = vand.u32 %v7439, 4294901760
        %v7441 = vsub.f32 %v7439, %v7440
        %v7442 = vand.u32 %v7441, 4294901760
        %7443 = vmatpush.msra.mxu0 %v7442
        %v7444 = vand.u32 %v7315, 4294901760
        %v7445 = vsub.f32 %v7315, %v7444
        %v7446 = vand.u32 %v7445, 4294901760
        %v7447 = vsub.f32 %v7445, %v7446
        %v7448 = vand.u32 %v7447, 4294901760
        %7449 = vmatpush.msra.mxu0 %v7448
        %v7450 = vand.u32 %v7314, 4294901760
        %v7451 = vsub.f32 %v7314, %v7450
        %v7452 = vand.u32 %v7451, 4294901760
        %v7453 = vsub.f32 %v7451, %v7452
        %v7454 = vand.u32 %v7453, 4294901760
        %7455 = vmatpush.msra.mxu0 %v7454
        %v7456 = vand.u32 %v7313, 4294901760
        %v7457 = vsub.f32 %v7313, %v7456
        %v7458 = vand.u32 %v7457, 4294901760
        %v7459 = vsub.f32 %v7457, %v7458
        %v7460 = vand.u32 %v7459, 4294901760
        %7461 = vmatpush.msra.mxu0 %v7460
        %v7462 = vand.u32 %v7312, 4294901760
        %v7463 = vsub.f32 %v7312, %v7462
        %v7464 = vand.u32 %v7463, 4294901760
        %v7465 = vsub.f32 %v7463, %v7464
        %v7466 = vand.u32 %v7465, 4294901760
        %7467 = vmatpush.msra.mxu0 %v7466
        %v7468 = vand.u32 %v7311, 4294901760
        %v7469 = vsub.f32 %v7311, %v7468
        %v7470 = vand.u32 %v7469, 4294901760
        %v7471 = vsub.f32 %v7469, %v7470
        %v7472 = vand.u32 %v7471, 4294901760
        %7473 = vmatpush.msra.mxu0 %v7472
        %v7474 = vand.u32 %v7310, 4294901760
        %v7475 = vsub.f32 %v7310, %v7474
        %v7476 = vand.u32 %v7475, 4294901760
        %v7477 = vsub.f32 %v7475, %v7476
        %v7478 = vand.u32 %v7477, 4294901760
        %7479 = vmatpush.msra.mxu0 %v7478
        %v7480 = vand.u32 %v7309, 4294901760
        %v7481 = vsub.f32 %v7309, %v7480
        %v7482 = vand.u32 %v7481, 4294901760
        %v7483 = vsub.f32 %v7481, %v7482
        %v7484 = vand.u32 %v7483, 4294901760
        %7485 = vmatpush.msra.mxu0 %v7484
        %v7486 = vand.u32 %v7308, 4294901760
        %v7487 = vsub.f32 %v7308, %v7486
        %v7488 = vand.u32 %v7487, 4294901760
        %v7489 = vsub.f32 %v7487, %v7488
        %v7490 = vand.u32 %v7489, 4294901760
        %7491 = vmatpush.msra.mxu0 %v7490
        %v7492 = vand.u32 %v7307, 4294901760
        %v7493 = vsub.f32 %v7307, %v7492
        %v7494 = vand.u32 %v7493, 4294901760
        %v7495 = vsub.f32 %v7493, %v7494
        %v7496 = vand.u32 %v7495, 4294901760
        %7497 = vmatpush.msra.mxu0 %v7496
        %v7498 = vand.u32 %v7306, 4294901760
        %v7499 = vsub.f32 %v7306, %v7498
        %v7500 = vand.u32 %v7499, 4294901760
        %v7501 = vsub.f32 %v7499, %v7500
        %v7502 = vand.u32 %v7501, 4294901760
        %7503 = vmatpush.msra.mxu0 %v7502
        %v7504 = vand.u32 %v7305, 4294901760
        %v7505 = vsub.f32 %v7305, %v7504
        %v7506 = vand.u32 %v7505, 4294901760
        %v7507 = vsub.f32 %v7505, %v7506
        %v7508 = vand.u32 %v7507, 4294901760
        %7509 = vmatpush.msra.mxu0 %v7508
        %v7510 = vand.u32 %v7301, 4294901760
        %7511 = vmatmul.f32.gmra.mxu0 %v7510
        %v7512 = vpop.f32.mrf.mxu0
        %v7513 = vadd.f32 %v7412, %v7512
        %7514 = vdwg.mxu0
        %v7515 = vand.u32 %v7320, 4294901760
        %v7516 = vsub.f32 %v7320, %v7515
        %7517 = vmatpush.msra.mxu0 %v7516
        %v7518 = vand.u32 %v7319, 4294901760
        %v7519 = vsub.f32 %v7319, %v7518
        %7520 = vmatpush.msra.mxu0 %v7519
        %v7521 = vand.u32 %v7318, 4294901760
        %v7522 = vsub.f32 %v7318, %v7521
        %7523 = vmatpush.msra.mxu0 %v7522
        %v7524 = vand.u32 %v7317, 4294901760
        %v7525 = vsub.f32 %v7317, %v7524
        %7526 = vmatpush.msra.mxu0 %v7525
        %v7527 = vand.u32 %v7316, 4294901760
        %v7528 = vsub.f32 %v7316, %v7527
        %7529 = vmatpush.msra.mxu0 %v7528
        %v7530 = vand.u32 %v7315, 4294901760
        %v7531 = vsub.f32 %v7315, %v7530
        %7532 = vmatpush.msra.mxu0 %v7531
        %v7533 = vand.u32 %v7314, 4294901760
        %v7534 = vsub.f32 %v7314, %v7533
        %7535 = vmatpush.msra.mxu0 %v7534
        %v7536 = vand.u32 %v7313, 4294901760
        %v7537 = vsub.f32 %v7313, %v7536
        %7538 = vmatpush.msra.mxu0 %v7537
        %v7539 = vand.u32 %v7312, 4294901760
        %v7540 = vsub.f32 %v7312, %v7539
        %7541 = vmatpush.msra.mxu0 %v7540
        %v7542 = vand.u32 %v7311, 4294901760
        %v7543 = vsub.f32 %v7311, %v7542
        %7544 = vmatpush.msra.mxu0 %v7543
        %v7545 = vand.u32 %v7310, 4294901760
        %v7546 = vsub.f32 %v7310, %v7545
        %7547 = vmatpush.msra.mxu0 %v7546
        %v7548 = vand.u32 %v7309, 4294901760
        %v7549 = vsub.f32 %v7309, %v7548
        %7550 = vmatpush.msra.mxu0 %v7549
        %v7551 = vand.u32 %v7308, 4294901760
        %v7552 = vsub.f32 %v7308, %v7551
        %7553 = vmatpush.msra.mxu0 %v7552
        %v7554 = vand.u32 %v7307, 4294901760
        %v7555 = vsub.f32 %v7307, %v7554
        %7556 = vmatpush.msra.mxu0 %v7555
        %v7557 = vand.u32 %v7306, 4294901760
        %v7558 = vsub.f32 %v7306, %v7557
        %7559 = vmatpush.msra.mxu0 %v7558
        %v7560 = vand.u32 %v7305, 4294901760
        %v7561 = vsub.f32 %v7305, %v7560
        %7562 = vmatpush.msra.mxu0 %v7561
        %v7563 = vand.u32 %v7301, 4294901760
        %v7564 = vsub.f32 %v7301, %v7563
        %7565 = vmatmul.f32.gmra.mxu0 %v7564
        %v7566 = vpop.f32.mrf.mxu0
        %v7567 = vadd.f32 %v7513, %v7566
        %7568 = vdwg.mxu0
        %v7569 = vand.u32 %v7320, 4294901760
        %7570 = vmatpush.msra.mxu0 %v7569
        %v7571 = vand.u32 %v7319, 4294901760
        %7572 = vmatpush.msra.mxu0 %v7571
        %v7573 = vand.u32 %v7318, 4294901760
        %7574 = vmatpush.msra.mxu0 %v7573
        %v7575 = vand.u32 %v7317, 4294901760
        %7576 = vmatpush.msra.mxu0 %v7575
        %v7577 = vand.u32 %v7316, 4294901760
        %7578 = vmatpush.msra.mxu0 %v7577
        %v7579 = vand.u32 %v7315, 4294901760
        %7580 = vmatpush.msra.mxu0 %v7579
        %v7581 = vand.u32 %v7314, 4294901760
        %7582 = vmatpush.msra.mxu0 %v7581
        %v7583 = vand.u32 %v7313, 4294901760
        %7584 = vmatpush.msra.mxu0 %v7583
        %v7585 = vand.u32 %v7312, 4294901760
        %7586 = vmatpush.msra.mxu0 %v7585
        %v7587 = vand.u32 %v7311, 4294901760
        %7588 = vmatpush.msra.mxu0 %v7587
        %v7589 = vand.u32 %v7310, 4294901760
        %7590 = vmatpush.msra.mxu0 %v7589
        %v7591 = vand.u32 %v7309, 4294901760
        %7592 = vmatpush.msra.mxu0 %v7591
        %v7593 = vand.u32 %v7308, 4294901760
        %7594 = vmatpush.msra.mxu0 %v7593
        %v7595 = vand.u32 %v7307, 4294901760
        %7596 = vmatpush.msra.mxu0 %v7595
        %v7597 = vand.u32 %v7306, 4294901760
        %7598 = vmatpush.msra.mxu0 %v7597
        %v7599 = vand.u32 %v7305, 4294901760
        %7600 = vmatpush.msra.mxu0 %v7599
        %v7601 = vand.u32 %v7301, 4294901760
        %v7602 = vsub.f32 %v7301, %v7601
        %v7603 = vand.u32 %v7602, 4294901760
        %7604 = vmatmul.f32.gmra.mxu0 %v7603
        %v7605 = vpop.f32.mrf.mxu0
        %v7606 = vadd.f32 %v7567, %v7605
        %7607 = vdwg.mxu0
        %v7608 = vand.u32 %v7320, 4294901760
        %v7609 = vsub.f32 %v7320, %v7608
        %v7610 = vand.u32 %v7609, 4294901760
        %7611 = vmatpush.msra.mxu0 %v7610
        %v7612 = vand.u32 %v7319, 4294901760
        %v7613 = vsub.f32 %v7319, %v7612
        %v7614 = vand.u32 %v7613, 4294901760
        %7615 = vmatpush.msra.mxu0 %v7614
        %v7616 = vand.u32 %v7318, 4294901760
        %v7617 = vsub.f32 %v7318, %v7616
        %v7618 = vand.u32 %v7617, 4294901760
        %7619 = vmatpush.msra.mxu0 %v7618
        %v7620 = vand.u32 %v7317, 4294901760
        %v7621 = vsub.f32 %v7317, %v7620
        %v7622 = vand.u32 %v7621, 4294901760
        %7623 = vmatpush.msra.mxu0 %v7622
        %v7624 = vand.u32 %v7316, 4294901760
        %v7625 = vsub.f32 %v7316, %v7624
        %v7626 = vand.u32 %v7625, 4294901760
        %7627 = vmatpush.msra.mxu0 %v7626
        %v7628 = vand.u32 %v7315, 4294901760
        %v7629 = vsub.f32 %v7315, %v7628
        %v7630 = vand.u32 %v7629, 4294901760
        %7631 = vmatpush.msra.mxu0 %v7630
        %v7632 = vand.u32 %v7314, 4294901760
        %v7633 = vsub.f32 %v7314, %v7632
        %v7634 = vand.u32 %v7633, 4294901760
        %7635 = vmatpush.msra.mxu0 %v7634
        %v7636 = vand.u32 %v7313, 4294901760
        %v7637 = vsub.f32 %v7313, %v7636
        %v7638 = vand.u32 %v7637, 4294901760
        %7639 = vmatpush.msra.mxu0 %v7638
        %v7640 = vand.u32 %v7312, 4294901760
        %v7641 = vsub.f32 %v7312, %v7640
        %v7642 = vand.u32 %v7641, 4294901760
        %7643 = vmatpush.msra.mxu0 %v7642
        %v7644 = vand.u32 %v7311, 4294901760
        %v7645 = vsub.f32 %v7311, %v7644
        %v7646 = vand.u32 %v7645, 4294901760
        %7647 = vmatpush.msra.mxu0 %v7646
        %v7648 = vand.u32 %v7310, 4294901760
        %v7649 = vsub.f32 %v7310, %v7648
        %v7650 = vand.u32 %v7649, 4294901760
        %7651 = vmatpush.msra.mxu0 %v7650
        %v7652 = vand.u32 %v7309, 4294901760
        %v7653 = vsub.f32 %v7309, %v7652
        %v7654 = vand.u32 %v7653, 4294901760
        %7655 = vmatpush.msra.mxu0 %v7654
        %v7656 = vand.u32 %v7308, 4294901760
        %v7657 = vsub.f32 %v7308, %v7656
        %v7658 = vand.u32 %v7657, 4294901760
        %7659 = vmatpush.msra.mxu0 %v7658
        %v7660 = vand.u32 %v7307, 4294901760
        %v7661 = vsub.f32 %v7307, %v7660
        %v7662 = vand.u32 %v7661, 4294901760
        %7663 = vmatpush.msra.mxu0 %v7662
        %v7664 = vand.u32 %v7306, 4294901760
        %v7665 = vsub.f32 %v7306, %v7664
        %v7666 = vand.u32 %v7665, 4294901760
        %7667 = vmatpush.msra.mxu0 %v7666
        %v7668 = vand.u32 %v7305, 4294901760
        %v7669 = vsub.f32 %v7305, %v7668
        %v7670 = vand.u32 %v7669, 4294901760
        %7671 = vmatpush.msra.mxu0 %v7670
        %v7672 = vand.u32 %v7301, 4294901760
        %7673 = vmatmul.f32.gmra.mxu0 %v7672
        %v7674 = vpop.f32.mrf.mxu0
        %v7675 = vadd.f32 %v7606, %v7674
        %7676 = vdwg.mxu0
        %v7677 = vand.u32 %v7320, 4294901760
        %7678 = vmatpush.msra.mxu0 %v7677
        %v7679 = vand.u32 %v7319, 4294901760
        %7680 = vmatpush.msra.mxu0 %v7679
        %v7681 = vand.u32 %v7318, 4294901760
        %7682 = vmatpush.msra.mxu0 %v7681
        %v7683 = vand.u32 %v7317, 4294901760
        %7684 = vmatpush.msra.mxu0 %v7683
        %v7685 = vand.u32 %v7316, 4294901760
        %7686 = vmatpush.msra.mxu0 %v7685
        %v7687 = vand.u32 %v7315, 4294901760
        %7688 = vmatpush.msra.mxu0 %v7687
        %v7689 = vand.u32 %v7314, 4294901760
        %7690 = vmatpush.msra.mxu0 %v7689
        %v7691 = vand.u32 %v7313, 4294901760
        %7692 = vmatpush.msra.mxu0 %v7691
        %v7693 = vand.u32 %v7312, 4294901760
        %7694 = vmatpush.msra.mxu0 %v7693
        %v7695 = vand.u32 %v7311, 4294901760
        %7696 = vmatpush.msra.mxu0 %v7695
        %v7697 = vand.u32 %v7310, 4294901760
        %7698 = vmatpush.msra.mxu0 %v7697
        %v7699 = vand.u32 %v7309, 4294901760
        %7700 = vmatpush.msra.mxu0 %v7699
        %v7701 = vand.u32 %v7308, 4294901760
        %7702 = vmatpush.msra.mxu0 %v7701
        %v7703 = vand.u32 %v7307, 4294901760
        %7704 = vmatpush.msra.mxu0 %v7703
        %v7705 = vand.u32 %v7306, 4294901760
        %7706 = vmatpush.msra.mxu0 %v7705
        %v7707 = vand.u32 %v7305, 4294901760
        %7708 = vmatpush.msra.mxu0 %v7707
        %v7709 = vand.u32 %v7301, 4294901760
        %7710 = vmatmul.f32.gmra.mxu0 %v7709
        %v7711 = vpop.f32.mrf.mxu0
        %v7712 = vadd.f32 %v7675, %v7711
        %7713 = vdwg.mxu0
        %v7714 = vand.u32 %v7336, 4294901760
        %7715 = vmatpush.msra.mxu0 %v7714
        %v7716 = vand.u32 %v7335, 4294901760
        %7717 = vmatpush.msra.mxu0 %v7716
        %v7718 = vand.u32 %v7334, 4294901760
        %7719 = vmatpush.msra.mxu0 %v7718
        %v7720 = vand.u32 %v7333, 4294901760
        %7721 = vmatpush.msra.mxu0 %v7720
        %v7722 = vand.u32 %v7332, 4294901760
        %7723 = vmatpush.msra.mxu0 %v7722
        %v7724 = vand.u32 %v7331, 4294901760
        %7725 = vmatpush.msra.mxu0 %v7724
        %v7726 = vand.u32 %v7330, 4294901760
        %7727 = vmatpush.msra.mxu0 %v7726
        %v7728 = vand.u32 %v7329, 4294901760
        %7729 = vmatpush.msra.mxu0 %v7728
        %v7730 = vand.u32 %v7328, 4294901760
        %7731 = vmatpush.msra.mxu0 %v7730
        %v7732 = vand.u32 %v7327, 4294901760
        %7733 = vmatpush.msra.mxu0 %v7732
        %v7734 = vand.u32 %v7326, 4294901760
        %7735 = vmatpush.msra.mxu0 %v7734
        %v7736 = vand.u32 %v7325, 4294901760
        %7737 = vmatpush.msra.mxu0 %v7736
        %v7738 = vand.u32 %v7324, 4294901760
        %7739 = vmatpush.msra.mxu0 %v7738
        %v7740 = vand.u32 %v7323, 4294901760
        %7741 = vmatpush.msra.mxu0 %v7740
        %v7742 = vand.u32 %v7322, 4294901760
        %7743 = vmatpush.msra.mxu0 %v7742
        %v7744 = vand.u32 %v7321, 4294901760
        %7745 = vmatpush.msra.mxu0 %v7744
        %v7746 = vand.u32 %v7302, 4294901760
        %v7747 = vsub.f32 %v7302, %v7746
        %v7748 = vand.u32 %v7747, 4294901760
        %v7749 = vsub.f32 %v7747, %v7748
        %v7750 = vand.u32 %v7749, 4294901760
        %7751 = vmatmul.f32.gmra.mxu0 %v7750
        %v7752 = vpop.f32.mrf.mxu0
        %v7753 = vadd.f32 %v7712, %v7752
        %7754 = vdwg.mxu0
        %v7755 = vand.u32 %v7336, 4294901760
        %v7756 = vsub.f32 %v7336, %v7755
        %v7757 = vand.u32 %v7756, 4294901760
        %v7758 = vsub.f32 %v7756, %v7757
        %v7759 = vand.u32 %v7758, 4294901760
        %7760 = vmatpush.msra.mxu0 %v7759
        %v7761 = vand.u32 %v7335, 4294901760
        %v7762 = vsub.f32 %v7335, %v7761
        %v7763 = vand.u32 %v7762, 4294901760
        %v7764 = vsub.f32 %v7762, %v7763
        %v7765 = vand.u32 %v7764, 4294901760
        %7766 = vmatpush.msra.mxu0 %v7765
        %v7767 = vand.u32 %v7334, 4294901760
        %v7768 = vsub.f32 %v7334, %v7767
        %v7769 = vand.u32 %v7768, 4294901760
        %v7770 = vsub.f32 %v7768, %v7769
        %v7771 = vand.u32 %v7770, 4294901760
        %7772 = vmatpush.msra.mxu0 %v7771
        %v7773 = vand.u32 %v7333, 4294901760
        %v7774 = vsub.f32 %v7333, %v7773
        %v7775 = vand.u32 %v7774, 4294901760
        %v7776 = vsub.f32 %v7774, %v7775
        %v7777 = vand.u32 %v7776, 4294901760
        %7778 = vmatpush.msra.mxu0 %v7777
        %v7779 = vand.u32 %v7332, 4294901760
        %v7780 = vsub.f32 %v7332, %v7779
        %v7781 = vand.u32 %v7780, 4294901760
        %v7782 = vsub.f32 %v7780, %v7781
        %v7783 = vand.u32 %v7782, 4294901760
        %7784 = vmatpush.msra.mxu0 %v7783
        %v7785 = vand.u32 %v7331, 4294901760
        %v7786 = vsub.f32 %v7331, %v7785
        %v7787 = vand.u32 %v7786, 4294901760
        %v7788 = vsub.f32 %v7786, %v7787
        %v7789 = vand.u32 %v7788, 4294901760
        %7790 = vmatpush.msra.mxu0 %v7789
        %v7791 = vand.u32 %v7330, 4294901760
        %v7792 = vsub.f32 %v7330, %v7791
        %v7793 = vand.u32 %v7792, 4294901760
        %v7794 = vsub.f32 %v7792, %v7793
        %v7795 = vand.u32 %v7794, 4294901760
        %7796 = vmatpush.msra.mxu0 %v7795
        %v7797 = vand.u32 %v7329, 4294901760
        %v7798 = vsub.f32 %v7329, %v7797
        %v7799 = vand.u32 %v7798, 4294901760
        %v7800 = vsub.f32 %v7798, %v7799
        %v7801 = vand.u32 %v7800, 4294901760
        %7802 = vmatpush.msra.mxu0 %v7801
        %v7803 = vand.u32 %v7328, 4294901760
        %v7804 = vsub.f32 %v7328, %v7803
        %v7805 = vand.u32 %v7804, 4294901760
        %v7806 = vsub.f32 %v7804, %v7805
        %v7807 = vand.u32 %v7806, 4294901760
        %7808 = vmatpush.msra.mxu0 %v7807
        %v7809 = vand.u32 %v7327, 4294901760
        %v7810 = vsub.f32 %v7327, %v7809
        %v7811 = vand.u32 %v7810, 4294901760
        %v7812 = vsub.f32 %v7810, %v7811
        %v7813 = vand.u32 %v7812, 4294901760
        %7814 = vmatpush.msra.mxu0 %v7813
        %v7815 = vand.u32 %v7326, 4294901760
        %v7816 = vsub.f32 %v7326, %v7815
        %v7817 = vand.u32 %v7816, 4294901760
        %v7818 = vsub.f32 %v7816, %v7817
        %v7819 = vand.u32 %v7818, 4294901760
        %7820 = vmatpush.msra.mxu0 %v7819
        %v7821 = vand.u32 %v7325, 4294901760
        %v7822 = vsub.f32 %v7325, %v7821
        %v7823 = vand.u32 %v7822, 4294901760
        %v7824 = vsub.f32 %v7822, %v7823
        %v7825 = vand.u32 %v7824, 4294901760
        %7826 = vmatpush.msra.mxu0 %v7825
        %v7827 = vand.u32 %v7324, 4294901760
        %v7828 = vsub.f32 %v7324, %v7827
        %v7829 = vand.u32 %v7828, 4294901760
        %v7830 = vsub.f32 %v7828, %v7829
        %v7831 = vand.u32 %v7830, 4294901760
        %7832 = vmatpush.msra.mxu0 %v7831
        %v7833 = vand.u32 %v7323, 4294901760
        %v7834 = vsub.f32 %v7323, %v7833
        %v7835 = vand.u32 %v7834, 4294901760
        %v7836 = vsub.f32 %v7834, %v7835
        %v7837 = vand.u32 %v7836, 4294901760
        %7838 = vmatpush.msra.mxu0 %v7837
        %v7839 = vand.u32 %v7322, 4294901760
        %v7840 = vsub.f32 %v7322, %v7839
        %v7841 = vand.u32 %v7840, 4294901760
        %v7842 = vsub.f32 %v7840, %v7841
        %v7843 = vand.u32 %v7842, 4294901760
        %7844 = vmatpush.msra.mxu0 %v7843
        %v7845 = vand.u32 %v7321, 4294901760
        %v7846 = vsub.f32 %v7321, %v7845
        %v7847 = vand.u32 %v7846, 4294901760
        %v7848 = vsub.f32 %v7846, %v7847
        %v7849 = vand.u32 %v7848, 4294901760
        %7850 = vmatpush.msra.mxu0 %v7849
        %v7851 = vand.u32 %v7302, 4294901760
        %7852 = vmatmul.f32.gmra.mxu0 %v7851
        %v7853 = vpop.f32.mrf.mxu0
        %v7854 = vadd.f32 %v7753, %v7853
        %7855 = vdwg.mxu0
        %v7856 = vand.u32 %v7336, 4294901760
        %v7857 = vsub.f32 %v7336, %v7856
        %7858 = vmatpush.msra.mxu0 %v7857
        %v7859 = vand.u32 %v7335, 4294901760
        %v7860 = vsub.f32 %v7335, %v7859
        %7861 = vmatpush.msra.mxu0 %v7860
        %v7862 = vand.u32 %v7334, 4294901760
        %v7863 = vsub.f32 %v7334, %v7862
        %7864 = vmatpush.msra.mxu0 %v7863
        %v7865 = vand.u32 %v7333, 4294901760
        %v7866 = vsub.f32 %v7333, %v7865
        %7867 = vmatpush.msra.mxu0 %v7866
        %v7868 = vand.u32 %v7332, 4294901760
        %v7869 = vsub.f32 %v7332, %v7868
        %7870 = vmatpush.msra.mxu0 %v7869
        %v7871 = vand.u32 %v7331, 4294901760
        %v7872 = vsub.f32 %v7331, %v7871
        %7873 = vmatpush.msra.mxu0 %v7872
        %v7874 = vand.u32 %v7330, 4294901760
        %v7875 = vsub.f32 %v7330, %v7874
        %7876 = vmatpush.msra.mxu0 %v7875
        %v7877 = vand.u32 %v7329, 4294901760
        %v7878 = vsub.f32 %v7329, %v7877
        %7879 = vmatpush.msra.mxu0 %v7878
        %v7880 = vand.u32 %v7328, 4294901760
        %v7881 = vsub.f32 %v7328, %v7880
        %7882 = vmatpush.msra.mxu0 %v7881
        %v7883 = vand.u32 %v7327, 4294901760
        %v7884 = vsub.f32 %v7327, %v7883
        %7885 = vmatpush.msra.mxu0 %v7884
        %v7886 = vand.u32 %v7326, 4294901760
        %v7887 = vsub.f32 %v7326, %v7886
        %7888 = vmatpush.msra.mxu0 %v7887
        %v7889 = vand.u32 %v7325, 4294901760
        %v7890 = vsub.f32 %v7325, %v7889
        %7891 = vmatpush.msra.mxu0 %v7890
        %v7892 = vand.u32 %v7324, 4294901760
        %v7893 = vsub.f32 %v7324, %v7892
        %7894 = vmatpush.msra.mxu0 %v7893
        %v7895 = vand.u32 %v7323, 4294901760
        %v7896 = vsub.f32 %v7323, %v7895
        %7897 = vmatpush.msra.mxu0 %v7896
        %v7898 = vand.u32 %v7322, 4294901760
        %v7899 = vsub.f32 %v7322, %v7898
        %7900 = vmatpush.msra.mxu0 %v7899
        %v7901 = vand.u32 %v7321, 4294901760
        %v7902 = vsub.f32 %v7321, %v7901
        %7903 = vmatpush.msra.mxu0 %v7902
        %v7904 = vand.u32 %v7302, 4294901760
        %v7905 = vsub.f32 %v7302, %v7904
        %7906 = vmatmul.f32.gmra.mxu0 %v7905
        %v7907 = vpop.f32.mrf.mxu0
        %v7908 = vadd.f32 %v7854, %v7907
        %7909 = vdwg.mxu0
        %v7910 = vand.u32 %v7336, 4294901760
        %7911 = vmatpush.msra.mxu0 %v7910
        %v7912 = vand.u32 %v7335, 4294901760
        %7913 = vmatpush.msra.mxu0 %v7912
        %v7914 = vand.u32 %v7334, 4294901760
        %7915 = vmatpush.msra.mxu0 %v7914
        %v7916 = vand.u32 %v7333, 4294901760
        %7917 = vmatpush.msra.mxu0 %v7916
        %v7918 = vand.u32 %v7332, 4294901760
        %7919 = vmatpush.msra.mxu0 %v7918
        %v7920 = vand.u32 %v7331, 4294901760
        %7921 = vmatpush.msra.mxu0 %v7920
        %v7922 = vand.u32 %v7330, 4294901760
        %7923 = vmatpush.msra.mxu0 %v7922
        %v7924 = vand.u32 %v7329, 4294901760
        %7925 = vmatpush.msra.mxu0 %v7924
        %v7926 = vand.u32 %v7328, 4294901760
        %7927 = vmatpush.msra.mxu0 %v7926
        %v7928 = vand.u32 %v7327, 4294901760
        %7929 = vmatpush.msra.mxu0 %v7928
        %v7930 = vand.u32 %v7326, 4294901760
        %7931 = vmatpush.msra.mxu0 %v7930
        %v7932 = vand.u32 %v7325, 4294901760
        %7933 = vmatpush.msra.mxu0 %v7932
        %v7934 = vand.u32 %v7324, 4294901760
        %7935 = vmatpush.msra.mxu0 %v7934
        %v7936 = vand.u32 %v7323, 4294901760
        %7937 = vmatpush.msra.mxu0 %v7936
        %v7938 = vand.u32 %v7322, 4294901760
        %7939 = vmatpush.msra.mxu0 %v7938
        %v7940 = vand.u32 %v7321, 4294901760
        %7941 = vmatpush.msra.mxu0 %v7940
        %v7942 = vand.u32 %v7302, 4294901760
        %v7943 = vsub.f32 %v7302, %v7942
        %v7944 = vand.u32 %v7943, 4294901760
        %7945 = vmatmul.f32.gmra.mxu0 %v7944
        %v7946 = vpop.f32.mrf.mxu0
        %v7947 = vadd.f32 %v7908, %v7946
        %7948 = vdwg.mxu0
        %v7949 = vand.u32 %v7336, 4294901760
        %v7950 = vsub.f32 %v7336, %v7949
        %v7951 = vand.u32 %v7950, 4294901760
        %7952 = vmatpush.msra.mxu0 %v7951
        %v7953 = vand.u32 %v7335, 4294901760
        %v7954 = vsub.f32 %v7335, %v7953
        %v7955 = vand.u32 %v7954, 4294901760
        %7956 = vmatpush.msra.mxu0 %v7955
        %v7957 = vand.u32 %v7334, 4294901760
        %v7958 = vsub.f32 %v7334, %v7957
        %v7959 = vand.u32 %v7958, 4294901760
        %7960 = vmatpush.msra.mxu0 %v7959
        %v7961 = vand.u32 %v7333, 4294901760
        %v7962 = vsub.f32 %v7333, %v7961
        %v7963 = vand.u32 %v7962, 4294901760
        %7964 = vmatpush.msra.mxu0 %v7963
        %v7965 = vand.u32 %v7332, 4294901760
        %v7966 = vsub.f32 %v7332, %v7965
        %v7967 = vand.u32 %v7966, 4294901760
        %7968 = vmatpush.msra.mxu0 %v7967
        %v7969 = vand.u32 %v7331, 4294901760
        %v7970 = vsub.f32 %v7331, %v7969
        %v7971 = vand.u32 %v7970, 4294901760
        %7972 = vmatpush.msra.mxu0 %v7971
        %v7973 = vand.u32 %v7330, 4294901760
        %v7974 = vsub.f32 %v7330, %v7973
        %v7975 = vand.u32 %v7974, 4294901760
        %7976 = vmatpush.msra.mxu0 %v7975
        %v7977 = vand.u32 %v7329, 4294901760
        %v7978 = vsub.f32 %v7329, %v7977
        %v7979 = vand.u32 %v7978, 4294901760
        %7980 = vmatpush.msra.mxu0 %v7979
        %v7981 = vand.u32 %v7328, 4294901760
        %v7982 = vsub.f32 %v7328, %v7981
        %v7983 = vand.u32 %v7982, 4294901760
        %7984 = vmatpush.msra.mxu0 %v7983
        %v7985 = vand.u32 %v7327, 4294901760
        %v7986 = vsub.f32 %v7327, %v7985
        %v7987 = vand.u32 %v7986, 4294901760
        %7988 = vmatpush.msra.mxu0 %v7987
        %v7989 = vand.u32 %v7326, 4294901760
        %v7990 = vsub.f32 %v7326, %v7989
        %v7991 = vand.u32 %v7990, 4294901760
        %7992 = vmatpush.msra.mxu0 %v7991
        %v7993 = vand.u32 %v7325, 4294901760
        %v7994 = vsub.f32 %v7325, %v7993
        %v7995 = vand.u32 %v7994, 4294901760
        %7996 = vmatpush.msra.mxu0 %v7995
        %v7997 = vand.u32 %v7324, 4294901760
        %v7998 = vsub.f32 %v7324, %v7997
        %v7999 = vand.u32 %v7998, 4294901760
        %8000 = vmatpush.msra.mxu0 %v7999
        %v8001 = vand.u32 %v7323, 4294901760
        %v8002 = vsub.f32 %v7323, %v8001
        %v8003 = vand.u32 %v8002, 4294901760
        %8004 = vmatpush.msra.mxu0 %v8003
        %v8005 = vand.u32 %v7322, 4294901760
        %v8006 = vsub.f32 %v7322, %v8005
        %v8007 = vand.u32 %v8006, 4294901760
        %8008 = vmatpush.msra.mxu0 %v8007
        %v8009 = vand.u32 %v7321, 4294901760
        %v8010 = vsub.f32 %v7321, %v8009
        %v8011 = vand.u32 %v8010, 4294901760
        %8012 = vmatpush.msra.mxu0 %v8011
        %v8013 = vand.u32 %v7302, 4294901760
        %8014 = vmatmul.f32.gmra.mxu0 %v8013
        %v8015 = vpop.f32.mrf.mxu0
        %v8016 = vadd.f32 %v7947, %v8015
        %8017 = vdwg.mxu0
        %v8018 = vand.u32 %v7336, 4294901760
        %8019 = vmatpush.msra.mxu0 %v8018
        %v8020 = vand.u32 %v7335, 4294901760
        %8021 = vmatpush.msra.mxu0 %v8020
        %v8022 = vand.u32 %v7334, 4294901760
        %8023 = vmatpush.msra.mxu0 %v8022
        %v8024 = vand.u32 %v7333, 4294901760
        %8025 = vmatpush.msra.mxu0 %v8024
        %v8026 = vand.u32 %v7332, 4294901760
        %8027 = vmatpush.msra.mxu0 %v8026
        %v8028 = vand.u32 %v7331, 4294901760
        %8029 = vmatpush.msra.mxu0 %v8028
        %v8030 = vand.u32 %v7330, 4294901760
        %8031 = vmatpush.msra.mxu0 %v8030
        %v8032 = vand.u32 %v7329, 4294901760
        %8033 = vmatpush.msra.mxu0 %v8032
        %v8034 = vand.u32 %v7328, 4294901760
        %8035 = vmatpush.msra.mxu0 %v8034
        %v8036 = vand.u32 %v7327, 4294901760
        %8037 = vmatpush.msra.mxu0 %v8036
        %v8038 = vand.u32 %v7326, 4294901760
        %8039 = vmatpush.msra.mxu0 %v8038
        %v8040 = vand.u32 %v7325, 4294901760
        %8041 = vmatpush.msra.mxu0 %v8040
        %v8042 = vand.u32 %v7324, 4294901760
        %8043 = vmatpush.msra.mxu0 %v8042
        %v8044 = vand.u32 %v7323, 4294901760
        %8045 = vmatpush.msra.mxu0 %v8044
        %v8046 = vand.u32 %v7322, 4294901760
        %8047 = vmatpush.msra.mxu0 %v8046
        %v8048 = vand.u32 %v7321, 4294901760
        %8049 = vmatpush.msra.mxu0 %v8048
        %v8050 = vand.u32 %v7302, 4294901760
        %8051 = vmatmul.f32.gmra.mxu0 %v8050
        %v8052 = vpop.f32.mrf.mxu0
        %v8053 = vadd.f32 %v8016, %v8052
        %8054 = vdwg.mxu0
        %v8055 = vand.u32 %v7352, 4294901760
        %8056 = vmatpush.msra.mxu0 %v8055
        %v8057 = vand.u32 %v7351, 4294901760
        %8058 = vmatpush.msra.mxu0 %v8057
        %v8059 = vand.u32 %v7350, 4294901760
        %8060 = vmatpush.msra.mxu0 %v8059
        %v8061 = vand.u32 %v7349, 4294901760
        %8062 = vmatpush.msra.mxu0 %v8061
        %v8063 = vand.u32 %v7348, 4294901760
        %8064 = vmatpush.msra.mxu0 %v8063
        %v8065 = vand.u32 %v7347, 4294901760
        %8066 = vmatpush.msra.mxu0 %v8065
        %v8067 = vand.u32 %v7346, 4294901760
        %8068 = vmatpush.msra.mxu0 %v8067
        %v8069 = vand.u32 %v7345, 4294901760
        %8070 = vmatpush.msra.mxu0 %v8069
        %v8071 = vand.u32 %v7344, 4294901760
        %8072 = vmatpush.msra.mxu0 %v8071
        %v8073 = vand.u32 %v7343, 4294901760
        %8074 = vmatpush.msra.mxu0 %v8073
        %v8075 = vand.u32 %v7342, 4294901760
        %8076 = vmatpush.msra.mxu0 %v8075
        %v8077 = vand.u32 %v7341, 4294901760
        %8078 = vmatpush.msra.mxu0 %v8077
        %v8079 = vand.u32 %v7340, 4294901760
        %8080 = vmatpush.msra.mxu0 %v8079
        %v8081 = vand.u32 %v7339, 4294901760
        %8082 = vmatpush.msra.mxu0 %v8081
        %v8083 = vand.u32 %v7338, 4294901760
        %8084 = vmatpush.msra.mxu0 %v8083
        %v8085 = vand.u32 %v7337, 4294901760
        %8086 = vmatpush.msra.mxu0 %v8085
        %v8087 = vand.u32 %v7303, 4294901760
        %v8088 = vsub.f32 %v7303, %v8087
        %v8089 = vand.u32 %v8088, 4294901760
        %v8090 = vsub.f32 %v8088, %v8089
        %v8091 = vand.u32 %v8090, 4294901760
        %8092 = vmatmul.f32.gmra.mxu0 %v8091
        %v8093 = vpop.f32.mrf.mxu0
        %v8094 = vadd.f32 %v8053, %v8093
        %8095 = vdwg.mxu0
        %v8096 = vand.u32 %v7352, 4294901760
        %v8097 = vsub.f32 %v7352, %v8096
        %v8098 = vand.u32 %v8097, 4294901760
        %v8099 = vsub.f32 %v8097, %v8098
        %v8100 = vand.u32 %v8099, 4294901760
        %8101 = vmatpush.msra.mxu0 %v8100
        %v8102 = vand.u32 %v7351, 4294901760
        %v8103 = vsub.f32 %v7351, %v8102
        %v8104 = vand.u32 %v8103, 4294901760
        %v8105 = vsub.f32 %v8103, %v8104
        %v8106 = vand.u32 %v8105, 4294901760
        %8107 = vmatpush.msra.mxu0 %v8106
        %v8108 = vand.u32 %v7350, 4294901760
        %v8109 = vsub.f32 %v7350, %v8108
        %v8110 = vand.u32 %v8109, 4294901760
        %v8111 = vsub.f32 %v8109, %v8110
        %v8112 = vand.u32 %v8111, 4294901760
        %8113 = vmatpush.msra.mxu0 %v8112
        %v8114 = vand.u32 %v7349, 4294901760
        %v8115 = vsub.f32 %v7349, %v8114
        %v8116 = vand.u32 %v8115, 4294901760
        %v8117 = vsub.f32 %v8115, %v8116
        %v8118 = vand.u32 %v8117, 4294901760
        %8119 = vmatpush.msra.mxu0 %v8118
        %v8120 = vand.u32 %v7348, 4294901760
        %v8121 = vsub.f32 %v7348, %v8120
        %v8122 = vand.u32 %v8121, 4294901760
        %v8123 = vsub.f32 %v8121, %v8122
        %v8124 = vand.u32 %v8123, 4294901760
        %8125 = vmatpush.msra.mxu0 %v8124
        %v8126 = vand.u32 %v7347, 4294901760
        %v8127 = vsub.f32 %v7347, %v8126
        %v8128 = vand.u32 %v8127, 4294901760
        %v8129 = vsub.f32 %v8127, %v8128
        %v8130 = vand.u32 %v8129, 4294901760
        %8131 = vmatpush.msra.mxu0 %v8130
        %v8132 = vand.u32 %v7346, 4294901760
        %v8133 = vsub.f32 %v7346, %v8132
        %v8134 = vand.u32 %v8133, 4294901760
        %v8135 = vsub.f32 %v8133, %v8134
        %v8136 = vand.u32 %v8135, 4294901760
        %8137 = vmatpush.msra.mxu0 %v8136
        %v8138 = vand.u32 %v7345, 4294901760
        %v8139 = vsub.f32 %v7345, %v8138
        %v8140 = vand.u32 %v8139, 4294901760
        %v8141 = vsub.f32 %v8139, %v8140
        %v8142 = vand.u32 %v8141, 4294901760
        %8143 = vmatpush.msra.mxu0 %v8142
        %v8144 = vand.u32 %v7344, 4294901760
        %v8145 = vsub.f32 %v7344, %v8144
        %v8146 = vand.u32 %v8145, 4294901760
        %v8147 = vsub.f32 %v8145, %v8146
        %v8148 = vand.u32 %v8147, 4294901760
        %8149 = vmatpush.msra.mxu0 %v8148
        %v8150 = vand.u32 %v7343, 4294901760
        %v8151 = vsub.f32 %v7343, %v8150
        %v8152 = vand.u32 %v8151, 4294901760
        %v8153 = vsub.f32 %v8151, %v8152
        %v8154 = vand.u32 %v8153, 4294901760
        %8155 = vmatpush.msra.mxu0 %v8154
        %v8156 = vand.u32 %v7342, 4294901760
        %v8157 = vsub.f32 %v7342, %v8156
        %v8158 = vand.u32 %v8157, 4294901760
        %v8159 = vsub.f32 %v8157, %v8158
        %v8160 = vand.u32 %v8159, 4294901760
        %8161 = vmatpush.msra.mxu0 %v8160
        %v8162 = vand.u32 %v7341, 4294901760
        %v8163 = vsub.f32 %v7341, %v8162
        %v8164 = vand.u32 %v8163, 4294901760
        %v8165 = vsub.f32 %v8163, %v8164
        %v8166 = vand.u32 %v8165, 4294901760
        %8167 = vmatpush.msra.mxu0 %v8166
        %v8168 = vand.u32 %v7340, 4294901760
        %v8169 = vsub.f32 %v7340, %v8168
        %v8170 = vand.u32 %v8169, 4294901760
        %v8171 = vsub.f32 %v8169, %v8170
        %v8172 = vand.u32 %v8171, 4294901760
        %8173 = vmatpush.msra.mxu0 %v8172
        %v8174 = vand.u32 %v7339, 4294901760
        %v8175 = vsub.f32 %v7339, %v8174
        %v8176 = vand.u32 %v8175, 4294901760
        %v8177 = vsub.f32 %v8175, %v8176
        %v8178 = vand.u32 %v8177, 4294901760
        %8179 = vmatpush.msra.mxu0 %v8178
        %v8180 = vand.u32 %v7338, 4294901760
        %v8181 = vsub.f32 %v7338, %v8180
        %v8182 = vand.u32 %v8181, 4294901760
        %v8183 = vsub.f32 %v8181, %v8182
        %v8184 = vand.u32 %v8183, 4294901760
        %8185 = vmatpush.msra.mxu0 %v8184
        %v8186 = vand.u32 %v7337, 4294901760
        %v8187 = vsub.f32 %v7337, %v8186
        %v8188 = vand.u32 %v8187, 4294901760
        %v8189 = vsub.f32 %v8187, %v8188
        %v8190 = vand.u32 %v8189, 4294901760
        %8191 = vmatpush.msra.mxu0 %v8190
        %v8192 = vand.u32 %v7303, 4294901760
        %8193 = vmatmul.f32.gmra.mxu0 %v8192
        %v8194 = vpop.f32.mrf.mxu0
        %v8195 = vadd.f32 %v8094, %v8194
        %8196 = vdwg.mxu0
        %v8197 = vand.u32 %v7352, 4294901760
        %v8198 = vsub.f32 %v7352, %v8197
        %8199 = vmatpush.msra.mxu0 %v8198
        %v8200 = vand.u32 %v7351, 4294901760
        %v8201 = vsub.f32 %v7351, %v8200
        %8202 = vmatpush.msra.mxu0 %v8201
        %v8203 = vand.u32 %v7350, 4294901760
        %v8204 = vsub.f32 %v7350, %v8203
        %8205 = vmatpush.msra.mxu0 %v8204
        %v8206 = vand.u32 %v7349, 4294901760
        %v8207 = vsub.f32 %v7349, %v8206
        %8208 = vmatpush.msra.mxu0 %v8207
        %v8209 = vand.u32 %v7348, 4294901760
        %v8210 = vsub.f32 %v7348, %v8209
        %8211 = vmatpush.msra.mxu0 %v8210
        %v8212 = vand.u32 %v7347, 4294901760
        %v8213 = vsub.f32 %v7347, %v8212
        %8214 = vmatpush.msra.mxu0 %v8213
        %v8215 = vand.u32 %v7346, 4294901760
        %v8216 = vsub.f32 %v7346, %v8215
        %8217 = vmatpush.msra.mxu0 %v8216
        %v8218 = vand.u32 %v7345, 4294901760
        %v8219 = vsub.f32 %v7345, %v8218
        %8220 = vmatpush.msra.mxu0 %v8219
        %v8221 = vand.u32 %v7344, 4294901760
        %v8222 = vsub.f32 %v7344, %v8221
        %8223 = vmatpush.msra.mxu0 %v8222
        %v8224 = vand.u32 %v7343, 4294901760
        %v8225 = vsub.f32 %v7343, %v8224
        %8226 = vmatpush.msra.mxu0 %v8225
        %v8227 = vand.u32 %v7342, 4294901760
        %v8228 = vsub.f32 %v7342, %v8227
        %8229 = vmatpush.msra.mxu0 %v8228
        %v8230 = vand.u32 %v7341, 4294901760
        %v8231 = vsub.f32 %v7341, %v8230
        %8232 = vmatpush.msra.mxu0 %v8231
        %v8233 = vand.u32 %v7340, 4294901760
        %v8234 = vsub.f32 %v7340, %v8233
        %8235 = vmatpush.msra.mxu0 %v8234
        %v8236 = vand.u32 %v7339, 4294901760
        %v8237 = vsub.f32 %v7339, %v8236
        %8238 = vmatpush.msra.mxu0 %v8237
        %v8239 = vand.u32 %v7338, 4294901760
        %v8240 = vsub.f32 %v7338, %v8239
        %8241 = vmatpush.msra.mxu0 %v8240
        %v8242 = vand.u32 %v7337, 4294901760
        %v8243 = vsub.f32 %v7337, %v8242
        %8244 = vmatpush.msra.mxu0 %v8243
        %v8245 = vand.u32 %v7303, 4294901760
        %v8246 = vsub.f32 %v7303, %v8245
        %8247 = vmatmul.f32.gmra.mxu0 %v8246
        %v8248 = vpop.f32.mrf.mxu0
        %v8249 = vadd.f32 %v8195, %v8248
        %8250 = vdwg.mxu0
        %v8251 = vand.u32 %v7352, 4294901760
        %8252 = vmatpush.msra.mxu0 %v8251
        %v8253 = vand.u32 %v7351, 4294901760
        %8254 = vmatpush.msra.mxu0 %v8253
        %v8255 = vand.u32 %v7350, 4294901760
        %8256 = vmatpush.msra.mxu0 %v8255
        %v8257 = vand.u32 %v7349, 4294901760
        %8258 = vmatpush.msra.mxu0 %v8257
        %v8259 = vand.u32 %v7348, 4294901760
        %8260 = vmatpush.msra.mxu0 %v8259
        %v8261 = vand.u32 %v7347, 4294901760
        %8262 = vmatpush.msra.mxu0 %v8261
        %v8263 = vand.u32 %v7346, 4294901760
        %8264 = vmatpush.msra.mxu0 %v8263
        %v8265 = vand.u32 %v7345, 4294901760
        %8266 = vmatpush.msra.mxu0 %v8265
        %v8267 = vand.u32 %v7344, 4294901760
        %8268 = vmatpush.msra.mxu0 %v8267
        %v8269 = vand.u32 %v7343, 4294901760
        %8270 = vmatpush.msra.mxu0 %v8269
        %v8271 = vand.u32 %v7342, 4294901760
        %8272 = vmatpush.msra.mxu0 %v8271
        %v8273 = vand.u32 %v7341, 4294901760
        %8274 = vmatpush.msra.mxu0 %v8273
        %v8275 = vand.u32 %v7340, 4294901760
        %8276 = vmatpush.msra.mxu0 %v8275
        %v8277 = vand.u32 %v7339, 4294901760
        %8278 = vmatpush.msra.mxu0 %v8277
        %v8279 = vand.u32 %v7338, 4294901760
        %8280 = vmatpush.msra.mxu0 %v8279
        %v8281 = vand.u32 %v7337, 4294901760
        %8282 = vmatpush.msra.mxu0 %v8281
        %v8283 = vand.u32 %v7303, 4294901760
        %v8284 = vsub.f32 %v7303, %v8283
        %v8285 = vand.u32 %v8284, 4294901760
        %8286 = vmatmul.f32.gmra.mxu0 %v8285
        %v8287 = vpop.f32.mrf.mxu0
        %v8288 = vadd.f32 %v8249, %v8287
        %8289 = vdwg.mxu0
        %v8290 = vand.u32 %v7352, 4294901760
        %v8291 = vsub.f32 %v7352, %v8290
        %v8292 = vand.u32 %v8291, 4294901760
        %8293 = vmatpush.msra.mxu0 %v8292
        %v8294 = vand.u32 %v7351, 4294901760
        %v8295 = vsub.f32 %v7351, %v8294
        %v8296 = vand.u32 %v8295, 4294901760
        %8297 = vmatpush.msra.mxu0 %v8296
        %v8298 = vand.u32 %v7350, 4294901760
        %v8299 = vsub.f32 %v7350, %v8298
        %v8300 = vand.u32 %v8299, 4294901760
        %8301 = vmatpush.msra.mxu0 %v8300
        %v8302 = vand.u32 %v7349, 4294901760
        %v8303 = vsub.f32 %v7349, %v8302
        %v8304 = vand.u32 %v8303, 4294901760
        %8305 = vmatpush.msra.mxu0 %v8304
        %v8306 = vand.u32 %v7348, 4294901760
        %v8307 = vsub.f32 %v7348, %v8306
        %v8308 = vand.u32 %v8307, 4294901760
        %8309 = vmatpush.msra.mxu0 %v8308
        %v8310 = vand.u32 %v7347, 4294901760
        %v8311 = vsub.f32 %v7347, %v8310
        %v8312 = vand.u32 %v8311, 4294901760
        %8313 = vmatpush.msra.mxu0 %v8312
        %v8314 = vand.u32 %v7346, 4294901760
        %v8315 = vsub.f32 %v7346, %v8314
        %v8316 = vand.u32 %v8315, 4294901760
        %8317 = vmatpush.msra.mxu0 %v8316
        %v8318 = vand.u32 %v7345, 4294901760
        %v8319 = vsub.f32 %v7345, %v8318
        %v8320 = vand.u32 %v8319, 4294901760
        %8321 = vmatpush.msra.mxu0 %v8320
        %v8322 = vand.u32 %v7344, 4294901760
        %v8323 = vsub.f32 %v7344, %v8322
        %v8324 = vand.u32 %v8323, 4294901760
        %8325 = vmatpush.msra.mxu0 %v8324
        %v8326 = vand.u32 %v7343, 4294901760
        %v8327 = vsub.f32 %v7343, %v8326
        %v8328 = vand.u32 %v8327, 4294901760
        %8329 = vmatpush.msra.mxu0 %v8328
        %v8330 = vand.u32 %v7342, 4294901760
        %v8331 = vsub.f32 %v7342, %v8330
        %v8332 = vand.u32 %v8331, 4294901760
        %8333 = vmatpush.msra.mxu0 %v8332
        %v8334 = vand.u32 %v7341, 4294901760
        %v8335 = vsub.f32 %v7341, %v8334
        %v8336 = vand.u32 %v8335, 4294901760
        %8337 = vmatpush.msra.mxu0 %v8336
        %v8338 = vand.u32 %v7340, 4294901760
        %v8339 = vsub.f32 %v7340, %v8338
        %v8340 = vand.u32 %v8339, 4294901760
        %8341 = vmatpush.msra.mxu0 %v8340
        %v8342 = vand.u32 %v7339, 4294901760
        %v8343 = vsub.f32 %v7339, %v8342
        %v8344 = vand.u32 %v8343, 4294901760
        %8345 = vmatpush.msra.mxu0 %v8344
        %v8346 = vand.u32 %v7338, 4294901760
        %v8347 = vsub.f32 %v7338, %v8346
        %v8348 = vand.u32 %v8347, 4294901760
        %8349 = vmatpush.msra.mxu0 %v8348
        %v8350 = vand.u32 %v7337, 4294901760
        %v8351 = vsub.f32 %v7337, %v8350
        %v8352 = vand.u32 %v8351, 4294901760
        %8353 = vmatpush.msra.mxu0 %v8352
        %v8354 = vand.u32 %v7303, 4294901760
        %8355 = vmatmul.f32.gmra.mxu0 %v8354
        %v8356 = vpop.f32.mrf.mxu0
        %v8357 = vadd.f32 %v8288, %v8356
        %8358 = vdwg.mxu0
        %v8359 = vand.u32 %v7352, 4294901760
        %8360 = vmatpush.msra.mxu0 %v8359
        %v8361 = vand.u32 %v7351, 4294901760
        %8362 = vmatpush.msra.mxu0 %v8361
        %v8363 = vand.u32 %v7350, 4294901760
        %8364 = vmatpush.msra.mxu0 %v8363
        %v8365 = vand.u32 %v7349, 4294901760
        %8366 = vmatpush.msra.mxu0 %v8365
        %v8367 = vand.u32 %v7348, 4294901760
        %8368 = vmatpush.msra.mxu0 %v8367
        %v8369 = vand.u32 %v7347, 4294901760
        %8370 = vmatpush.msra.mxu0 %v8369
        %v8371 = vand.u32 %v7346, 4294901760
        %8372 = vmatpush.msra.mxu0 %v8371
        %v8373 = vand.u32 %v7345, 4294901760
        %8374 = vmatpush.msra.mxu0 %v8373
        %v8375 = vand.u32 %v7344, 4294901760
        %8376 = vmatpush.msra.mxu0 %v8375
        %v8377 = vand.u32 %v7343, 4294901760
        %8378 = vmatpush.msra.mxu0 %v8377
        %v8379 = vand.u32 %v7342, 4294901760
        %8380 = vmatpush.msra.mxu0 %v8379
        %v8381 = vand.u32 %v7341, 4294901760
        %8382 = vmatpush.msra.mxu0 %v8381
        %v8383 = vand.u32 %v7340, 4294901760
        %8384 = vmatpush.msra.mxu0 %v8383
        %v8385 = vand.u32 %v7339, 4294901760
        %8386 = vmatpush.msra.mxu0 %v8385
        %v8387 = vand.u32 %v7338, 4294901760
        %8388 = vmatpush.msra.mxu0 %v8387
        %v8389 = vand.u32 %v7337, 4294901760
        %8390 = vmatpush.msra.mxu0 %v8389
        %v8391 = vand.u32 %v7303, 4294901760
        %8392 = vmatmul.f32.gmra.mxu0 %v8391
        %v8393 = vpop.f32.mrf.mxu0
        %v8394 = vadd.f32 %v8357, %v8393
        %8395 = vdwg.mxu0
        %v8396 = vand.u32 %v7368, 4294901760
        %8397 = vmatpush.msra.mxu0 %v8396
        %v8398 = vand.u32 %v7367, 4294901760
        %8399 = vmatpush.msra.mxu0 %v8398
        %v8400 = vand.u32 %v7366, 4294901760
        %8401 = vmatpush.msra.mxu0 %v8400
        %v8402 = vand.u32 %v7365, 4294901760
        %8403 = vmatpush.msra.mxu0 %v8402
        %v8404 = vand.u32 %v7364, 4294901760
        %8405 = vmatpush.msra.mxu0 %v8404
        %v8406 = vand.u32 %v7363, 4294901760
        %8407 = vmatpush.msra.mxu0 %v8406
        %v8408 = vand.u32 %v7362, 4294901760
        %8409 = vmatpush.msra.mxu0 %v8408
        %v8410 = vand.u32 %v7361, 4294901760
        %8411 = vmatpush.msra.mxu0 %v8410
        %v8412 = vand.u32 %v7360, 4294901760
        %8413 = vmatpush.msra.mxu0 %v8412
        %v8414 = vand.u32 %v7359, 4294901760
        %8415 = vmatpush.msra.mxu0 %v8414
        %v8416 = vand.u32 %v7358, 4294901760
        %8417 = vmatpush.msra.mxu0 %v8416
        %v8418 = vand.u32 %v7357, 4294901760
        %8419 = vmatpush.msra.mxu0 %v8418
        %v8420 = vand.u32 %v7356, 4294901760
        %8421 = vmatpush.msra.mxu0 %v8420
        %v8422 = vand.u32 %v7355, 4294901760
        %8423 = vmatpush.msra.mxu0 %v8422
        %v8424 = vand.u32 %v7354, 4294901760
        %8425 = vmatpush.msra.mxu0 %v8424
        %v8426 = vand.u32 %v7353, 4294901760
        %8427 = vmatpush.msra.mxu0 %v8426
        %v8428 = vand.u32 %v7304, 4294901760
        %v8429 = vsub.f32 %v7304, %v8428
        %v8430 = vand.u32 %v8429, 4294901760
        %v8431 = vsub.f32 %v8429, %v8430
        %v8432 = vand.u32 %v8431, 4294901760
        %8433 = vmatmul.f32.gmra.mxu0 %v8432
        %v8434 = vpop.f32.mrf.mxu0
        %v8435 = vadd.f32 %v8394, %v8434
        %8436 = vdwg.mxu0
        %v8437 = vand.u32 %v7368, 4294901760
        %v8438 = vsub.f32 %v7368, %v8437
        %v8439 = vand.u32 %v8438, 4294901760
        %v8440 = vsub.f32 %v8438, %v8439
        %v8441 = vand.u32 %v8440, 4294901760
        %8442 = vmatpush.msra.mxu0 %v8441
        %v8443 = vand.u32 %v7367, 4294901760
        %v8444 = vsub.f32 %v7367, %v8443
        %v8445 = vand.u32 %v8444, 4294901760
        %v8446 = vsub.f32 %v8444, %v8445
        %v8447 = vand.u32 %v8446, 4294901760
        %8448 = vmatpush.msra.mxu0 %v8447
        %v8449 = vand.u32 %v7366, 4294901760
        %v8450 = vsub.f32 %v7366, %v8449
        %v8451 = vand.u32 %v8450, 4294901760
        %v8452 = vsub.f32 %v8450, %v8451
        %v8453 = vand.u32 %v8452, 4294901760
        %8454 = vmatpush.msra.mxu0 %v8453
        %v8455 = vand.u32 %v7365, 4294901760
        %v8456 = vsub.f32 %v7365, %v8455
        %v8457 = vand.u32 %v8456, 4294901760
        %v8458 = vsub.f32 %v8456, %v8457
        %v8459 = vand.u32 %v8458, 4294901760
        %8460 = vmatpush.msra.mxu0 %v8459
        %v8461 = vand.u32 %v7364, 4294901760
        %v8462 = vsub.f32 %v7364, %v8461
        %v8463 = vand.u32 %v8462, 4294901760
        %v8464 = vsub.f32 %v8462, %v8463
        %v8465 = vand.u32 %v8464, 4294901760
        %8466 = vmatpush.msra.mxu0 %v8465
        %v8467 = vand.u32 %v7363, 4294901760
        %v8468 = vsub.f32 %v7363, %v8467
        %v8469 = vand.u32 %v8468, 4294901760
        %v8470 = vsub.f32 %v8468, %v8469
        %v8471 = vand.u32 %v8470, 4294901760
        %8472 = vmatpush.msra.mxu0 %v8471
        %v8473 = vand.u32 %v7362, 4294901760
        %v8474 = vsub.f32 %v7362, %v8473
        %v8475 = vand.u32 %v8474, 4294901760
        %v8476 = vsub.f32 %v8474, %v8475
        %v8477 = vand.u32 %v8476, 4294901760
        %8478 = vmatpush.msra.mxu0 %v8477
        %v8479 = vand.u32 %v7361, 4294901760
        %v8480 = vsub.f32 %v7361, %v8479
        %v8481 = vand.u32 %v8480, 4294901760
        %v8482 = vsub.f32 %v8480, %v8481
        %v8483 = vand.u32 %v8482, 4294901760
        %8484 = vmatpush.msra.mxu0 %v8483
        %v8485 = vand.u32 %v7360, 4294901760
        %v8486 = vsub.f32 %v7360, %v8485
        %v8487 = vand.u32 %v8486, 4294901760
        %v8488 = vsub.f32 %v8486, %v8487
        %v8489 = vand.u32 %v8488, 4294901760
        %8490 = vmatpush.msra.mxu0 %v8489
        %v8491 = vand.u32 %v7359, 4294901760
        %v8492 = vsub.f32 %v7359, %v8491
        %v8493 = vand.u32 %v8492, 4294901760
        %v8494 = vsub.f32 %v8492, %v8493
        %v8495 = vand.u32 %v8494, 4294901760
        %8496 = vmatpush.msra.mxu0 %v8495
        %v8497 = vand.u32 %v7358, 4294901760
        %v8498 = vsub.f32 %v7358, %v8497
        %v8499 = vand.u32 %v8498, 4294901760
        %v8500 = vsub.f32 %v8498, %v8499
        %v8501 = vand.u32 %v8500, 4294901760
        %8502 = vmatpush.msra.mxu0 %v8501
        %v8503 = vand.u32 %v7357, 4294901760
        %v8504 = vsub.f32 %v7357, %v8503
        %v8505 = vand.u32 %v8504, 4294901760
        %v8506 = vsub.f32 %v8504, %v8505
        %v8507 = vand.u32 %v8506, 4294901760
        %8508 = vmatpush.msra.mxu0 %v8507
        %v8509 = vand.u32 %v7356, 4294901760
        %v8510 = vsub.f32 %v7356, %v8509
        %v8511 = vand.u32 %v8510, 4294901760
        %v8512 = vsub.f32 %v8510, %v8511
        %v8513 = vand.u32 %v8512, 4294901760
        %8514 = vmatpush.msra.mxu0 %v8513
        %v8515 = vand.u32 %v7355, 4294901760
        %v8516 = vsub.f32 %v7355, %v8515
        %v8517 = vand.u32 %v8516, 4294901760
        %v8518 = vsub.f32 %v8516, %v8517
        %v8519 = vand.u32 %v8518, 4294901760
        %8520 = vmatpush.msra.mxu0 %v8519
        %v8521 = vand.u32 %v7354, 4294901760
        %v8522 = vsub.f32 %v7354, %v8521
        %v8523 = vand.u32 %v8522, 4294901760
        %v8524 = vsub.f32 %v8522, %v8523
        %v8525 = vand.u32 %v8524, 4294901760
        %8526 = vmatpush.msra.mxu0 %v8525
        %v8527 = vand.u32 %v7353, 4294901760
        %v8528 = vsub.f32 %v7353, %v8527
        %v8529 = vand.u32 %v8528, 4294901760
        %v8530 = vsub.f32 %v8528, %v8529
        %v8531 = vand.u32 %v8530, 4294901760
        %8532 = vmatpush.msra.mxu0 %v8531
        %v8533 = vand.u32 %v7304, 4294901760
        %8534 = vmatmul.f32.gmra.mxu0 %v8533
        %v8535 = vpop.f32.mrf.mxu0
        %v8536 = vadd.f32 %v8435, %v8535
        %8537 = vdwg.mxu0
        %v8538 = vand.u32 %v7368, 4294901760
        %v8539 = vsub.f32 %v7368, %v8538
        %8540 = vmatpush.msra.mxu0 %v8539
        %v8541 = vand.u32 %v7367, 4294901760
        %v8542 = vsub.f32 %v7367, %v8541
        %8543 = vmatpush.msra.mxu0 %v8542
        %v8544 = vand.u32 %v7366, 4294901760
        %v8545 = vsub.f32 %v7366, %v8544
        %8546 = vmatpush.msra.mxu0 %v8545
        %v8547 = vand.u32 %v7365, 4294901760
        %v8548 = vsub.f32 %v7365, %v8547
        %8549 = vmatpush.msra.mxu0 %v8548
        %v8550 = vand.u32 %v7364, 4294901760
        %v8551 = vsub.f32 %v7364, %v8550
        %8552 = vmatpush.msra.mxu0 %v8551
        %v8553 = vand.u32 %v7363, 4294901760
        %v8554 = vsub.f32 %v7363, %v8553
        %8555 = vmatpush.msra.mxu0 %v8554
        %v8556 = vand.u32 %v7362, 4294901760
        %v8557 = vsub.f32 %v7362, %v8556
        %8558 = vmatpush.msra.mxu0 %v8557
        %v8559 = vand.u32 %v7361, 4294901760
        %v8560 = vsub.f32 %v7361, %v8559
        %8561 = vmatpush.msra.mxu0 %v8560
        %v8562 = vand.u32 %v7360, 4294901760
        %v8563 = vsub.f32 %v7360, %v8562
        %8564 = vmatpush.msra.mxu0 %v8563
        %v8565 = vand.u32 %v7359, 4294901760
        %v8566 = vsub.f32 %v7359, %v8565
        %8567 = vmatpush.msra.mxu0 %v8566
        %v8568 = vand.u32 %v7358, 4294901760
        %v8569 = vsub.f32 %v7358, %v8568
        %8570 = vmatpush.msra.mxu0 %v8569
        %v8571 = vand.u32 %v7357, 4294901760
        %v8572 = vsub.f32 %v7357, %v8571
        %8573 = vmatpush.msra.mxu0 %v8572
        %v8574 = vand.u32 %v7356, 4294901760
        %v8575 = vsub.f32 %v7356, %v8574
        %8576 = vmatpush.msra.mxu0 %v8575
        %v8577 = vand.u32 %v7355, 4294901760
        %v8578 = vsub.f32 %v7355, %v8577
        %8579 = vmatpush.msra.mxu0 %v8578
        %v8580 = vand.u32 %v7354, 4294901760
        %v8581 = vsub.f32 %v7354, %v8580
        %8582 = vmatpush.msra.mxu0 %v8581
        %v8583 = vand.u32 %v7353, 4294901760
        %v8584 = vsub.f32 %v7353, %v8583
        %8585 = vmatpush.msra.mxu0 %v8584
        %v8586 = vand.u32 %v7304, 4294901760
        %v8587 = vsub.f32 %v7304, %v8586
        %8588 = vmatmul.f32.gmra.mxu0 %v8587
        %v8589 = vpop.f32.mrf.mxu0
        %v8590 = vadd.f32 %v8536, %v8589
        %8591 = vdwg.mxu0
        %v8592 = vand.u32 %v7368, 4294901760
        %8593 = vmatpush.msra.mxu0 %v8592
        %v8594 = vand.u32 %v7367, 4294901760
        %8595 = vmatpush.msra.mxu0 %v8594
        %v8596 = vand.u32 %v7366, 4294901760
        %8597 = vmatpush.msra.mxu0 %v8596
        %v8598 = vand.u32 %v7365, 4294901760
        %8599 = vmatpush.msra.mxu0 %v8598
        %v8600 = vand.u32 %v7364, 4294901760
        %8601 = vmatpush.msra.mxu0 %v8600
        %v8602 = vand.u32 %v7363, 4294901760
        %8603 = vmatpush.msra.mxu0 %v8602
        %v8604 = vand.u32 %v7362, 4294901760
        %8605 = vmatpush.msra.mxu0 %v8604
        %v8606 = vand.u32 %v7361, 4294901760
        %8607 = vmatpush.msra.mxu0 %v8606
        %v8608 = vand.u32 %v7360, 4294901760
        %8609 = vmatpush.msra.mxu0 %v8608
        %v8610 = vand.u32 %v7359, 4294901760
        %8611 = vmatpush.msra.mxu0 %v8610
        %v8612 = vand.u32 %v7358, 4294901760
        %8613 = vmatpush.msra.mxu0 %v8612
        %v8614 = vand.u32 %v7357, 4294901760
        %8615 = vmatpush.msra.mxu0 %v8614
        %v8616 = vand.u32 %v7356, 4294901760
        %8617 = vmatpush.msra.mxu0 %v8616
        %v8618 = vand.u32 %v7355, 4294901760
        %8619 = vmatpush.msra.mxu0 %v8618
        %v8620 = vand.u32 %v7354, 4294901760
        %8621 = vmatpush.msra.mxu0 %v8620
        %v8622 = vand.u32 %v7353, 4294901760
        %8623 = vmatpush.msra.mxu0 %v8622
        %v8624 = vand.u32 %v7304, 4294901760
        %v8625 = vsub.f32 %v7304, %v8624
        %v8626 = vand.u32 %v8625, 4294901760
        %8627 = vmatmul.f32.gmra.mxu0 %v8626
        %v8628 = vpop.f32.mrf.mxu0
        %v8629 = vadd.f32 %v8590, %v8628
        %8630 = vdwg.mxu0
        %v8631 = vand.u32 %v7368, 4294901760
        %v8632 = vsub.f32 %v7368, %v8631
        %v8633 = vand.u32 %v8632, 4294901760
        %8634 = vmatpush.msra.mxu0 %v8633
        %v8635 = vand.u32 %v7367, 4294901760
        %v8636 = vsub.f32 %v7367, %v8635
        %v8637 = vand.u32 %v8636, 4294901760
        %8638 = vmatpush.msra.mxu0 %v8637
        %v8639 = vand.u32 %v7366, 4294901760
        %v8640 = vsub.f32 %v7366, %v8639
        %v8641 = vand.u32 %v8640, 4294901760
        %8642 = vmatpush.msra.mxu0 %v8641
        %v8643 = vand.u32 %v7365, 4294901760
        %v8644 = vsub.f32 %v7365, %v8643
        %v8645 = vand.u32 %v8644, 4294901760
        %8646 = vmatpush.msra.mxu0 %v8645
        %v8647 = vand.u32 %v7364, 4294901760
        %v8648 = vsub.f32 %v7364, %v8647
        %v8649 = vand.u32 %v8648, 4294901760
        %8650 = vmatpush.msra.mxu0 %v8649
        %v8651 = vand.u32 %v7363, 4294901760
        %v8652 = vsub.f32 %v7363, %v8651
        %v8653 = vand.u32 %v8652, 4294901760
        %8654 = vmatpush.msra.mxu0 %v8653
        %v8655 = vand.u32 %v7362, 4294901760
        %v8656 = vsub.f32 %v7362, %v8655
        %v8657 = vand.u32 %v8656, 4294901760
        %8658 = vmatpush.msra.mxu0 %v8657
        %v8659 = vand.u32 %v7361, 4294901760
        %v8660 = vsub.f32 %v7361, %v8659
        %v8661 = vand.u32 %v8660, 4294901760
        %8662 = vmatpush.msra.mxu0 %v8661
        %v8663 = vand.u32 %v7360, 4294901760
        %v8664 = vsub.f32 %v7360, %v8663
        %v8665 = vand.u32 %v8664, 4294901760
        %8666 = vmatpush.msra.mxu0 %v8665
        %v8667 = vand.u32 %v7359, 4294901760
        %v8668 = vsub.f32 %v7359, %v8667
        %v8669 = vand.u32 %v8668, 4294901760
        %8670 = vmatpush.msra.mxu0 %v8669
        %v8671 = vand.u32 %v7358, 4294901760
        %v8672 = vsub.f32 %v7358, %v8671
        %v8673 = vand.u32 %v8672, 4294901760
        %8674 = vmatpush.msra.mxu0 %v8673
        %v8675 = vand.u32 %v7357, 4294901760
        %v8676 = vsub.f32 %v7357, %v8675
        %v8677 = vand.u32 %v8676, 4294901760
        %8678 = vmatpush.msra.mxu0 %v8677
        %v8679 = vand.u32 %v7356, 4294901760
        %v8680 = vsub.f32 %v7356, %v8679
        %v8681 = vand.u32 %v8680, 4294901760
        %8682 = vmatpush.msra.mxu0 %v8681
        %v8683 = vand.u32 %v7355, 4294901760
        %v8684 = vsub.f32 %v7355, %v8683
        %v8685 = vand.u32 %v8684, 4294901760
        %8686 = vmatpush.msra.mxu0 %v8685
        %v8687 = vand.u32 %v7354, 4294901760
        %v8688 = vsub.f32 %v7354, %v8687
        %v8689 = vand.u32 %v8688, 4294901760
        %8690 = vmatpush.msra.mxu0 %v8689
        %v8691 = vand.u32 %v7353, 4294901760
        %v8692 = vsub.f32 %v7353, %v8691
        %v8693 = vand.u32 %v8692, 4294901760
        %8694 = vmatpush.msra.mxu0 %v8693
        %v8695 = vand.u32 %v7304, 4294901760
        %8696 = vmatmul.f32.gmra.mxu0 %v8695
        %v8697 = vpop.f32.mrf.mxu0
        %v8698 = vadd.f32 %v8629, %v8697
        %8699 = vdwg.mxu0
        %v8700 = vand.u32 %v7368, 4294901760
        %8701 = vmatpush.msra.mxu0 %v8700
        %v8702 = vand.u32 %v7367, 4294901760
        %8703 = vmatpush.msra.mxu0 %v8702
        %v8704 = vand.u32 %v7366, 4294901760
        %8705 = vmatpush.msra.mxu0 %v8704
        %v8706 = vand.u32 %v7365, 4294901760
        %8707 = vmatpush.msra.mxu0 %v8706
        %v8708 = vand.u32 %v7364, 4294901760
        %8709 = vmatpush.msra.mxu0 %v8708
        %v8710 = vand.u32 %v7363, 4294901760
        %8711 = vmatpush.msra.mxu0 %v8710
        %v8712 = vand.u32 %v7362, 4294901760
        %8713 = vmatpush.msra.mxu0 %v8712
        %v8714 = vand.u32 %v7361, 4294901760
        %8715 = vmatpush.msra.mxu0 %v8714
        %v8716 = vand.u32 %v7360, 4294901760
        %8717 = vmatpush.msra.mxu0 %v8716
        %v8718 = vand.u32 %v7359, 4294901760
        %8719 = vmatpush.msra.mxu0 %v8718
        %v8720 = vand.u32 %v7358, 4294901760
        %8721 = vmatpush.msra.mxu0 %v8720
        %v8722 = vand.u32 %v7357, 4294901760
        %8723 = vmatpush.msra.mxu0 %v8722
        %v8724 = vand.u32 %v7356, 4294901760
        %8725 = vmatpush.msra.mxu0 %v8724
        %v8726 = vand.u32 %v7355, 4294901760
        %8727 = vmatpush.msra.mxu0 %v8726
        %v8728 = vand.u32 %v7354, 4294901760
        %8729 = vmatpush.msra.mxu0 %v8728
        %v8730 = vand.u32 %v7353, 4294901760
        %8731 = vmatpush.msra.mxu0 %v8730
        %v8732 = vand.u32 %v7304, 4294901760
        %8733 = vmatmul.f32.gmra.mxu0 %v8732
        %v8734 = vpop.f32.mrf.mxu0
        %v8735 = vadd.f32 %v8698, %v8734
        %8736 = vdwg.mxu0
        %v8737 = vadd.f32 %v8735, %v5862
        %v8738 = vld [vmem:[%s15] sm:$0x1]
        %v8739 = vld [vmem:[%s16] sm:$0x1]
        %8740 = vadd.xlane.f32.xlu0 %v8737
        %v8741 = vpop.xlane.xlu0 %8740
        %v8742 = vmul.f32 %v8741, %v5836
        %v8743 = vsub.f32 %v8737, %v8742
        %v8744 = vmul.f32 %v8743, %v8743
        %8745 = vadd.xlane.f32.xlu0 %v8744
        %v8746 = vpop.xlane.xlu0 %8745
        %v8747 = vmul.f32 %v8746, %v5836
        %v8748 = vadd.f32 %v8747, 1e-05
        %v8749 = vrsqrt.pop %v8748
        %v8750 = vmul.f32 %v8749, %v8748
        %v8751 = vmul.f32 %v8750, %v8749
        %v8752 = vmul.f32 0.5, %v8751
        %v8753 = vsub.f32 1.5, %v8752
        %v8754 = vmul.f32 %v8749, %v8753
        %vm8755 = vweird.f32 %v8748
        %vm8756 = vweird.f32 %v8749
        %vm8757 = vmor %vm8755, %vm8756
        %v8758 = vsel %vm8757, %v8749, %v8754
        %v8759 = vmul.f32 %v8743, %v8758
        %v8761 = vperm.slane %v8738, 0
        %v8763 = vmul.f32 %v8759, %v8761
        %v8765 = vperm.slane %v8739, 0
        %v8767 = vadd.f32 %v8763, %v8765
        %8768 = vst [vmem:[%s778] sm:$0xff] %v8767
        %s8769 = sand.u32 %s428, 1
        %s8770 = scalar_lea.sflag [#allocation4], %s8769
        %s8771 = sand.u32 %s428, 1
        %s8772 = smul.addr %s8771, 8
        %s8773 = scalar_lea.vmem [#allocation19], %s8772
        // Predicated region
        $region129: #{tpu_custom_call.1} parent=87 // pred_check
          %p8774 = pneg %p438
        $region130: #{tpu_custom_call.1} parent=87 // pred_check_branch
          %8776 = sbr.rel (%p8774) target = $region132
        $region131: #{tpu_custom_call.1} parent=87 // pred_region
          %8778 = vsyncadd %s8770, 0
          %s8779 = smul.addr %s43, 8
          %s8780 = scalar_lea.hbm %s17, %s8779
          %s8782 = sshll.u32 %s8773, 4
          %s8783 = int_to_ptr.vmem [resolvable:$true] %s8782
          %s8784 = sshll.u32 %s8780, 4
          %s8785 = int_to_ptr.hbm [resolvable:$true] %s8784
          %8787 = dma.vmem_to_hbm [thread:$0]  %s8783, 128, %s8785, %s8770
        $region132: #{tpu_custom_call.1} parent=87 // pred_fallthru
          _
      $region88: #{tpu_custom_call.1} parent=5 // pred_fallthru
        _
      %p8788 = scmp.le.s32.totalorder 2, %s38
      // Predicated region
      $region133: #{tpu_custom_call.1} parent=5 // pred_check
        %p8789 = pneg %p8788
      $region134: #{tpu_custom_call.1} parent=5 // pred_check_branch
        %8791 = sbr.rel (%p8789) target = $region136
      $region135: #{tpu_custom_call.1} parent=5 // pred_region
        %s8792 = ssub.s32 %s38, 2
        // Predicated region
        $region137: #{tpu_custom_call.1} parent=135 // pred_check
          %p8793 = pneg %p444
        $region138: #{tpu_custom_call.1} parent=135 // pred_check_branch
          %8795 = sbr.rel (%p8793) target = $region140
        $region139: #{tpu_custom_call.1} parent=135 // pred_region
          %s8796 = sand.u32 %s429, 1
          %s8797 = scalar_lea.sflag [#allocation4], %s8796
          %s8798 = sand.u32 %s429, 1
          %s8799 = smul.addr %s8798, 8
          %s8800 = scalar_lea.vmem [#allocation19], %s8799
          %8802 = dma.done %s8797, 128
        $region140: #{tpu_custom_call.1} parent=135 // pred_fallthru
          _
      $region136: #{tpu_custom_call.1} parent=5 // pred_fallthru
        _
    $region6: #{tpu_custom_call.1} parent=1 // loop_footer
      %s42 = sadd.s32 1, %s38
    $region7: #{tpu_custom_call.1} parent=1 // loop_footer_branch
      %37 = sbr.rel target = $region3
    $region8: #{tpu_custom_call.1} parent=1 // loop_exit
      _
    %8803 = vsyncpa [#allocation3], 1
    %s8804 = scalar_lea.sflag [#allocation3], 1
    %8805 = vsyncpa %s8804, 1
    %8806 = vsyncpa [#allocation6], 1
    %s8807 = scalar_lea.sflag [#allocation6], 1
    %8808 = vsyncpa %s8807, 1
    %8809 = vsyncpa [#allocation9], 1
    %s8810 = scalar_lea.sflag [#allocation9], 1
    %8811 = vsyncpa %s8810, 1
    %8812 = vsyncpa [#allocation12], 1
    %8813 = vsyncpa [#allocation15], 1
    %8814 = vsyncpa [#allocation18], 1
    %8815 = vsyncpa [#allocation4], 1
    %s8816 = scalar_lea.sflag [#allocation4], 1
    %8817 = vsyncpa %s8816, 1

</llo_original>
